<compile_context>
chip_gen: v7x
topology: tpu7x:2x2x1
jax: 0.10.0
libtpu: 0.0.40
codegen_flags: <defaults>
</compile_context>

<pallas_src>
import functools
import math

import jax
import jax.numpy as jnp
from jax.experimental import pallas as pl
from jax.experimental.pallas import tpu as pltpu


def _pick_tile_rows(H, W, max_rows=256):
    """Largest divisor of H with TH*W <= max_rows (MXU-friendly LHS height)."""
    best = 1
    for th in range(1, H + 1):
        if H % th == 0 and th * W <= max_rows:
            best = th
    return best


# -----------------------------------------------------------------------------
# Fused level kernel: n_conv 3x3 "same" convs chained entirely inside VMEM.
# One grid step == one batch element.
# -----------------------------------------------------------------------------
def _fused_level_kernel(*refs, n_conv, chans, relu_flags, H, W, TH):
    """refs = (x, w0, b0, ..., w_{n-1}, b_{n-1}, o, buf_a, buf_b)

    x     : (1, H, W, chans[0])       f32, one batch element
    w_i   : (9*chans[i], chans[i+1])  bf16, im2col taps ((dy,dx) major, cin minor)
    b_i   : (1, chans[i+1])           f32
    o     : (1, H, W, chans[-1])      f32
    buf_* : (H+2, W+2, Cmax)          f32 zero-halo ping-pong VMEM scratch
    """
    x_ref = refs[0]
    w_refs = [refs[1 + 2 * i] for i in range(n_conv)]
    b_refs = [refs[2 + 2 * i] for i in range(n_conv)]
    o_ref = refs[1 + 2 * n_conv]
    buf_a = refs[2 + 2 * n_conv]
    buf_b = refs[3 + 2 * n_conv]
    c_max = buf_a.shape[-1]

    # Zero only the 1-pixel halo frame ('same' padding); the interior is fully
    # rewritten below, so no full-buffer memset.  Re-done every grid step (cheap:
    # a handful of masked stores) so correctness does not depend on which core
    # runs program_id == 0 when the parallel batch axis is split across cores.
    zrow = jnp.zeros((1, W + 2, c_max), jnp.float32)
    zcol = jnp.zeros((H, 1, c_max), jnp.float32)
    for buf in (buf_a, buf_b):
        buf[0:1, :, :] = zrow
        buf[H + 1:H + 2, :, :] = zrow
        buf[1:H + 1, 0:1, :] = zcol
        buf[1:H + 1, W + 1:W + 2, :] = zcol

    # Stage this batch element into buf_a's interior.
    buf_a[1:H + 1, 1:W + 1, :chans[0]] = x_ref[0]

    src, dst = buf_a, buf_b
    for i in range(n_conv):
        cin, cout = chans[i], chans[i + 1]
        w9 = w_refs[i][...]            # (9*cin, cout) bf16, pre-cast on host
        bias = b_refs[i][...]          # (1, cout) f32
        last = i == n_conv - 1

        for h0 in range(0, H, TH):
            # im2col: nine shifted windows -> one (TH*W, 9*cin) LHS so the 3x3
            # conv is a single MXU matmul per tile (contraction depth 9*cin)
            # instead of 9 small dots + 8 f32 VPU accumulator adds.
            pieces = [src[h0 + dy:h0 + dy + TH, dx:dx + W, :cin]
                      for dy in range(3) for dx in range(3)]
            patch = jnp.concatenate(pieces, axis=-1)            # (TH, W, 9*cin)
            patch = patch.reshape(TH * W, 9 * cin).astype(jnp.bfloat16)
            acc = jnp.dot(patch, w9, preferred_element_type=jnp.float32)
            acc = acc + bias
            if relu_flags[i]:
                acc = jnp.maximum(acc, 0.0)                     # ReLU between convs
            tile = acc.reshape(TH, W, cout)
            if last:
                o_ref[0, h0:h0 + TH, :, :] = tile
            else:
                dst[1 + h0:1 + h0 + TH, 1:W + 1, :cout] = tile

        if not last:
            src, dst = dst, src


def fused_level(x_nhwc, level_params):
    """Run ALL res_blocks of one U-Net level as a single fused Pallas kernel.

    level_params: list (per res_block) of list (per conv) of (w_hwio, b).
    Within each block, ReLU follows every conv except the block's last one
    (matching the PyTorch res_block); there is no activation between blocks.
    """
    N, H, W, cin = x_nhwc.shape
    convs = [c for blk in level_params for c in blk]
    relu_flags = []
    for blk in level_params:
        relu_flags += [j < len(blk) - 1 for j in range(len(blk))]
    n_conv = len(convs)
    chans = [cin] + [int(w.shape[-1]) for (w, _) in convs]
    assert int(convs[0][0].shape[2]) == cin
    c_max = max(chans[:-1])
    TH = _pick_tile_rows(H, W)

    kernel = functools.partial(
        _fused_level_kernel, n_conv=n_conv, chans=tuple(chans),
        relu_flags=tuple(relu_flags), H=H, W=W, TH=TH)

    in_specs = [pl.BlockSpec((1, H, W, cin), lambda n: (n, 0, 0, 0))]
    args = [x_nhwc.astype(jnp.float32)]
    for (wk, bk) in convs:
        kh, kw, ci, co = wk.shape
        assert kh == 3 and kw == 3
        # Host-side im2col weight layout + bf16 cast (no per-step in-kernel cast).
        w9 = wk.reshape(kh * kw * ci, co).astype(jnp.bfloat16)
        b2 = bk.reshape(1, co).astype(jnp.float32)
        args += [w9, b2]
        in_specs += [pl.BlockSpec(w9.shape, lambda n: (0, 0)),
                     pl.BlockSpec(b2.shape, lambda n: (0, 0))]

    out_spec = pl.BlockSpec((1, H, W, chans[-1]), lambda n: (n, 0, 0, 0))
    scratch = [pltpu.VMEM((H + 2, W + 2, c_max), jnp.float32),
               pltpu.VMEM((H + 2, W + 2, c_max), jnp.float32)]

    return pl.pallas_call(
        kernel,
        out_shape=jax.ShapeDtypeStruct((N, H, W, chans[-1]), jnp.float32),
        grid=(N,),
        in_specs=in_specs,
        out_specs=out_spec,
        scratch_shapes=scratch,
        compiler_params=pltpu.CompilerParams(
            dimension_semantics=("parallel",),
            vmem_limit_bytes=32 * 1024 * 1024),
    )(*args)


# -----------------------------------------------------------------------------
# Glue ops (tiny tensors; kept in plain JAX / XLA)
# -----------------------------------------------------------------------------
def resize_down(x, scale=2):
    # F.avg_pool2d(kernel=scale, stride=scale), NHWC.
    N, H, W, C = x.shape
    return x.reshape(N, H // scale, scale, W // scale, scale, C).mean(axis=(2, 4))


def resize_up(x, scale=2):
    # F.interpolate(scale_factor=scale, mode='nearest'), NHWC.
    return jnp.repeat(jnp.repeat(x, scale, axis=1), scale, axis=2)


def _latent_conv_1x1(x_nhwc, w, b):
    # TODO(synk): 1x1 latent conv stays in XLA; a dedicated Pallas launch for a
    # Cin<=12 -> Cout<=4 conv would be pure launch/DMA overhead.
    return jnp.einsum('nhwc,cd->nhwd', x_nhwc, w) + b


def _conv_params(key, kh, kw, cin, cout):
    # Deterministic init mimicking PyTorch Conv2d default (uniform 1/sqrt(fan_in)).
    kw_key, kb_key = jax.random.split(key)
    fan_in = cin * kh * kw
    bound = 1.0 / math.sqrt(fan_in)
    w = jax.random.uniform(kw_key, (kh, kw, cin, cout), jnp.float32, -bound, bound)
    b = jax.random.uniform(kb_key, (cout,), jnp.float32, -bound, bound)
    return w, b


# -----------------------------------------------------------------------------
# _HierarchicalCore port (public I/O is NCHW, like the PyTorch module)
# -----------------------------------------------------------------------------
class HierarchicalCorePallas:
    def __init__(self, in_channels, latent_dims, channels_per_block,
                 down_channels_per_block=None, convs_per_block=3,
                 blocks_per_level=3, param_key=None):
        self.latent_dims = tuple(latent_dims)
        self.channels_per_block = tuple(channels_per_block)
        self.down_channels_per_block = tuple(down_channels_per_block
                                             or channels_per_block)
        self.convs_per_block = convs_per_block
        self.blocks_per_level = blocks_per_level

        key = jax.random.PRNGKey(0) if param_key is None else param_key
        ctr = [0]

        def nxt():
            k = jax.random.fold_in(key, ctr[0])
            ctr[0] += 1
            return k

        def block_params(cin, out_ch, down_ch):
            params, c = [], cin
            for i in range(convs_per_block):
                co = down_ch if i < convs_per_block - 1 else out_ch
                params.append(_conv_params(nxt(), 3, 3, c, co))
                c = co
            return params

        num_levels = len(self.channels_per_block)
        num_latents = len(self.latent_dims)

        # TODO(synk): the reference PyTorch forward builds *fresh random* conv
        # layers on every call; parameters are created once here so repeated
        # forward passes are deterministic and identical.
        self.enc_params = []
        c = in_channels
        for lvl in range(num_levels):
            lvl_blocks = []
            for _ in range(blocks_per_level):
                lvl_blocks.append(block_params(
                    c, self.channels_per_block[lvl],
                    self.down_channels_per_block[lvl]))
                c = self.channels_per_block[lvl]
            self.enc_params.append(lvl_blocks)

        self.latent_params = []
        self.dec_params = []
        dec_c = self.channels_per_block[-1]
        for lvl in range(num_latents):
            ld = self.latent_dims[lvl]
            w1, b1 = _conv_params(nxt(), 1, 1, dec_c, 2 * ld)
            self.latent_params.append((w1.reshape(dec_c, 2 * ld), b1))
            skip_c = self.channels_per_block[-2 - lvl]
            c = ld + dec_c + skip_c
            lvl_blocks = []
            for _ in range(blocks_per_level):
                lvl_blocks.append(block_params(
                    c, self.channels_per_block[-2 - lvl],
                    self.down_channels_per_block[-2 - lvl]))
                c = self.channels_per_block[-2 - lvl]
            self.dec_params.append(lvl_blocks)
            dec_c = c

    def __call__(self, x_nchw, mean=False, z_q=None, sample_key=None):
        num_levels = len(self.channels_per_block)
        num_latents = len(self.latent_dims)
        if isinstance(mean, bool):
            mean = [mean] * num_latents
        if sample_key is None:
            sample_key = jax.random.PRNGKey(1)

        feats = jnp.transpose(x_nchw, (0, 2, 3, 1)).astype(jnp.float32)  # -> NHWC
        encoder_outputs = []
        distributions, used_latents = [], []

        # ----- encoder: one fused pallas_call per level -----
        for lvl in range(num_levels):
            feats = fused_level(feats, self.enc_params[lvl])
            encoder_outputs.append(feats)
            if lvl < num_levels - 1:
                feats = resize_down(feats, 2)

        # ----- decoder -----
        decoder_features = encoder_outputs[-1]
        for lvl in range(num_latents):
            ld = self.latent_dims[lvl]
            w1, b1 = self.latent_params[lvl]
            mu_logsigma = _latent_conv_1x1(decoder_features, w1, b1)
            mu, logsigma = mu_logsigma[..., :ld], mu_logsigma[..., ld:]
            # TODO(synk): torch.distributions.Independent(Normal) has no Pallas
            # equivalent; the distribution parameters are returned instead.
            distributions.append({
                'mu': jnp.transpose(mu, (0, 3, 1, 2)),
                'logsigma': jnp.transpose(logsigma, (0, 3, 1, 2)),
            })
            if z_q is not None:
                z = jnp.transpose(z_q[lvl], (0, 2, 3, 1))       # given as NCHW
            elif mean[lvl]:
                z = mu
            else:
                sample_key, sk = jax.random.split(sample_key)   # reparam. sample
                z = mu + jnp.exp(logsigma) * jax.random.normal(sk, mu.shape, mu.dtype)
            used_latents.append(jnp.transpose(z, (0, 3, 1, 2)))

            # TODO(synk): concat / nearest-upsample glue stays in XLA (tiny
            # tensors); it could be folded into the first decoder level kernel.
            decoder_lo = jnp.concatenate([z, decoder_features], axis=-1)
            decoder_hi = resize_up(decoder_lo, 2)
            decoder_features = jnp.concatenate(
                [decoder_hi, encoder_outputs[-2 - lvl]], axis=-1)
            decoder_features = fused_level(decoder_features, self.dec_params[lvl])

        return {
            'decoder_features': jnp.transpose(decoder_features, (0, 3, 1, 2)),
            'encoder_features': [jnp.transpose(e, (0, 3, 1, 2))
                                 for e in encoder_outputs],
            'distributions': distributions,
            'used_latents': used_latents,
        }


# -----------------------------------------------------------------------------
# Self-check of the fused level kernel
# -----------------------------------------------------------------------------
def _check_fused_level():
    key = jax.random.PRNGKey(42)
    N, H, W, cin = 2, 16, 16, 6
    block_chains = [[6, 10, 10, 7], [7, 10, 10, 5]]   # two res_blocks, 3 convs each
    params, kidx = [], 0
    for chain in block_chains:
        blk = []
        for i in range(len(chain) - 1):
            kw_, kb_ = jax.random.split(jax.random.fold_in(key, kidx))
            kidx += 1
            w = jax.random.normal(kw_, (3, 3, chain[i], chain[i + 1]),
                                  jnp.float32) * 0.15
            b = jax.random.normal(kb_, (chain[i + 1],), jnp.float32) * 0.1
            blk.append((w, b))
        params.append(blk)
    x = jax.random.normal(jax.random.fold_in(key, 100), (N, H, W, cin), jnp.float32)

    got = fused_level(x, params)

    convs = [c for blk in params for c in blk]
    relu_flags = []
    for blk in params:
        relu_flags += [j < len(blk) - 1 for j in range(len(blk))]

    # (1) Tight check vs a reference with identical numerics (bf16 MXU operands,
    #     f32 accumulation, same im2col tap ordering).
    def conv_bf16(h, w, b):
        Hh, Ww = h.shape[1], h.shape[2]
        hp = jnp.pad(h, ((0, 0), (1, 1), (1, 1), (0, 0)))
        pieces = [hp[:, dy:dy + Hh, dx:dx + Ww, :]
                  for dy in range(3) for dx in range(3)]
        patch = jnp.concatenate(pieces, axis=-1).astype(jnp.bfloat16)
        w9 = w.reshape(9 * w.shape[2], w.shape[3]).astype(jnp.bfloat16)
        out = jnp.einsum('nhwk,ko->nhwo', patch, w9,
                         preferred_element_type=jnp.float32)
        return out + b

    ref = x
    for (wk, bk), rl in zip(convs, relu_flags):
        ref = conv_bf16(ref, wk, bk)
        if rl:
            ref = jnp.maximum(ref, 0.0)
    rel = float(jnp.max(jnp.abs(got - ref))) / (float(jnp.max(jnp.abs(ref))) + 1e-6)
    assert rel < 2e-2, f"fused level mismatch vs bf16 reference (rel {rel})"

    # (2) Looser check vs a full-f32 lax.conv reference (catches tap-orientation,
    #     bias or ReLU-pattern bugs a matched reference could share).
    ref32 = x
    for (wk, bk), rl in zip(convs, relu_flags):
        ref32 = jax.lax.conv_general_dilated(
            ref32, wk, (1, 1), 'SAME',
            dimension_numbers=('NHWC', 'HWIO', 'NHWC'),
            precision=jax.lax.Precision.HIGHEST) + bk
        if rl:
            ref32 = jnp.maximum(ref32, 0.0)
    rel32 = (float(jnp.max(jnp.abs(got - ref32)))
             / (float(jnp.max(jnp.abs(ref32))) + 1e-6))
    assert rel32 < 1e-1, f"fused level mismatch vs f32 reference (rel {rel32})"


if __name__ == "__main__":
    _check_fused_level()

    key = jax.random.PRNGKey(0)
    kx, kp = jax.random.split(key)
    # NCHW input like the PyTorch module; spatial 16 so levels are 16 / 8 / 4.
    x = jax.random.normal(kx, (2, 4, 16, 16), jnp.float32)

    core = HierarchicalCorePallas(
        in_channels=4,
        latent_dims=(2, 2),
        channels_per_block=(4, 8, 12),
        convs_per_block=3,
        blocks_per_level=2,
        param_key=kp,
    )

    fwd = jax.jit(lambda inp: core(inp, mean=True))
    out = fwd(x)
    jax.block_until_ready(out)

    assert out['decoder_features'].shape == (2, 4, 16, 16)
    assert out['encoder_features'][0].shape == (2, 4, 16, 16)
    assert out['encoder_features'][1].shape == (2, 8, 8, 8)
    assert out['encoder_features'][2].shape == (2, 12, 4, 4)
    assert out['used_latents'][0].shape == (2, 2, 4, 4)
    assert out['used_latents'][1].shape == (2, 2, 8, 8)

    # Parameters are fixed at construction: repeated forwards are identical.
    out2 = fwd(x)
    jax.block_until_ready(out2)
    assert bool(jnp.array_equal(out['decoder_features'], out2['decoder_features']))

    print("KERNEL_OK")
</pallas_src>

<mosaic_0001>
module attributes {stable_mosaic.version = 11 : i64} {
  func.func @_fused_level_kernel(%arg0: i32, %arg1: memref<1x16x16x6xf32, #tpu.memory_space<vmem>>, %arg2: memref<54x10xbf16, #tpu.memory_space<vmem>>, %arg3: memref<1x10xf32, #tpu.memory_space<vmem>>, %arg4: memref<90x10xbf16, #tpu.memory_space<vmem>>, %arg5: memref<1x10xf32, #tpu.memory_space<vmem>>, %arg6: memref<90x7xbf16, #tpu.memory_space<vmem>>, %arg7: memref<1x7xf32, #tpu.memory_space<vmem>>, %arg8: memref<63x10xbf16, #tpu.memory_space<vmem>>, %arg9: memref<1x10xf32, #tpu.memory_space<vmem>>, %arg10: memref<90x10xbf16, #tpu.memory_space<vmem>>, %arg11: memref<1x10xf32, #tpu.memory_space<vmem>>, %arg12: memref<90x5xbf16, #tpu.memory_space<vmem>>, %arg13: memref<1x5xf32, #tpu.memory_space<vmem>>, %arg14: memref<1x16x16x5xf32, #tpu.memory_space<vmem>>, %arg15: memref<18x18x10xf32, #tpu.memory_space<vmem>>, %arg16: memref<18x18x10xf32, #tpu.memory_space<vmem>>) attributes {dimension_semantics = [#tpu.dimension_semantics<parallel>], iteration_bounds = array<i64: 2>, scalar_prefetch = 0 : i64, scratch_operands = 2 : i64, tpu.core_type = #tpu.core_type<tc>, window_params = [{transform_indices = @transform_0, window_bounds = array<i64: 1, 16, 16, 6>}, {pipeline_mode = #tpu.pipeline_mode<synchronous>, transform_indices = @transform_1, window_bounds = array<i64: 54, 10>}, {pipeline_mode = #tpu.pipeline_mode<synchronous>, transform_indices = @transform_2, window_bounds = array<i64: 1, 10>}, {pipeline_mode = #tpu.pipeline_mode<synchronous>, transform_indices = @transform_3, window_bounds = array<i64: 90, 10>}, {pipeline_mode = #tpu.pipeline_mode<synchronous>, transform_indices = @transform_4, window_bounds = array<i64: 1, 10>}, {pipeline_mode = #tpu.pipeline_mode<synchronous>, transform_indices = @transform_5, window_bounds = array<i64: 90, 7>}, {pipeline_mode = #tpu.pipeline_mode<synchronous>, transform_indices = @transform_6, window_bounds = array<i64: 1, 7>}, {pipeline_mode = #tpu.pipeline_mode<synchronous>, transform_indices = @transform_7, window_bounds = array<i64: 63, 10>}, {pipeline_mode = #tpu.pipeline_mode<synchronous>, transform_indices = @transform_8, window_bounds = array<i64: 1, 10>}, {pipeline_mode = #tpu.pipeline_mode<synchronous>, transform_indices = @transform_9, window_bounds = array<i64: 90, 10>}, {pipeline_mode = #tpu.pipeline_mode<synchronous>, transform_indices = @transform_10, window_bounds = array<i64: 1, 10>}, {pipeline_mode = #tpu.pipeline_mode<synchronous>, transform_indices = @transform_11, window_bounds = array<i64: 90, 5>}, {pipeline_mode = #tpu.pipeline_mode<synchronous>, transform_indices = @transform_12, window_bounds = array<i64: 1, 5>}, {transform_indices = @transform_13, window_bounds = array<i64: 1, 16, 16, 5>}]} {
    %cst = arith.constant 0.000000e+00 : f32
    %0 = vector.broadcast %cst : f32 to vector<1x18x10xf32>
    %cst_0 = arith.constant 0.000000e+00 : f32
    %1 = vector.broadcast %cst_0 : f32 to vector<16x1x10xf32>
    %c0 = arith.constant 0 : index
    %c0_1 = arith.constant 0 : index
    %c0_2 = arith.constant 0 : index
    %2 = vector.load %arg15[%c0, %c0_1, %c0_2] : memref<18x18x10xf32, #tpu.memory_space<vmem>>, vector<1x18x10xf32>
    tpu.vector_store %arg15[%c0, %c0_1, %c0_2], %0 {strides = array<i32>} : memref<18x18x10xf32, #tpu.memory_space<vmem>>, vector<1x18x10xf32>,
    %c17 = arith.constant 17 : index
    %c0_3 = arith.constant 0 : index
    %c0_4 = arith.constant 0 : index
    %3 = vector.load %arg15[%c17, %c0_3, %c0_4] : memref<18x18x10xf32, #tpu.memory_space<vmem>>, vector<1x18x10xf32>
    tpu.vector_store %arg15[%c17, %c0_3, %c0_4], %0 {strides = array<i32>} : memref<18x18x10xf32, #tpu.memory_space<vmem>>, vector<1x18x10xf32>,
    %c1 = arith.constant 1 : index
    %c0_5 = arith.constant 0 : index
    %c0_6 = arith.constant 0 : index
    %4 = vector.load %arg15[%c1, %c0_5, %c0_6] : memref<18x18x10xf32, #tpu.memory_space<vmem>>, vector<16x1x10xf32>
    tpu.vector_store %arg15[%c1, %c0_5, %c0_6], %1 {strides = array<i32>} : memref<18x18x10xf32, #tpu.memory_space<vmem>>, vector<16x1x10xf32>,
    %c1_7 = arith.constant 1 : index
    %c17_8 = arith.constant 17 : index
    %c0_9 = arith.constant 0 : index
    %5 = vector.load %arg15[%c1_7, %c17_8, %c0_9] : memref<18x18x10xf32, #tpu.memory_space<vmem>>, vector<16x1x10xf32>
    tpu.vector_store %arg15[%c1_7, %c17_8, %c0_9], %1 {strides = array<i32>} : memref<18x18x10xf32, #tpu.memory_space<vmem>>, vector<16x1x10xf32>,
    %c0_10 = arith.constant 0 : index
    %c0_11 = arith.constant 0 : index
    %c0_12 = arith.constant 0 : index
    %6 = vector.load %arg16[%c0_10, %c0_11, %c0_12] : memref<18x18x10xf32, #tpu.memory_space<vmem>>, vector<1x18x10xf32>
    tpu.vector_store %arg16[%c0_10, %c0_11, %c0_12], %0 {strides = array<i32>} : memref<18x18x10xf32, #tpu.memory_space<vmem>>, vector<1x18x10xf32>,
    %c17_13 = arith.constant 17 : index
    %c0_14 = arith.constant 0 : index
    %c0_15 = arith.constant 0 : index
    %7 = vector.load %arg16[%c17_13, %c0_14, %c0_15] : memref<18x18x10xf32, #tpu.memory_space<vmem>>, vector<1x18x10xf32>
    tpu.vector_store %arg16[%c17_13, %c0_14, %c0_15], %0 {strides = array<i32>} : memref<18x18x10xf32, #tpu.memory_space<vmem>>, vector<1x18x10xf32>,
    %c1_16 = arith.constant 1 : index
    %c0_17 = arith.constant 0 : index
    %c0_18 = arith.constant 0 : index
    %8 = vector.load %arg16[%c1_16, %c0_17, %c0_18] : memref<18x18x10xf32, #tpu.memory_space<vmem>>, vector<16x1x10xf32>
    tpu.vector_store %arg16[%c1_16, %c0_17, %c0_18], %1 {strides = array<i32>} : memref<18x18x10xf32, #tpu.memory_space<vmem>>, vector<16x1x10xf32>,
    %c1_19 = arith.constant 1 : index
    %c17_20 = arith.constant 17 : index
    %c0_21 = arith.constant 0 : index
    %9 = vector.load %arg16[%c1_19, %c17_20, %c0_21] : memref<18x18x10xf32, #tpu.memory_space<vmem>>, vector<16x1x10xf32>
    tpu.vector_store %arg16[%c1_19, %c17_20, %c0_21], %1 {strides = array<i32>} : memref<18x18x10xf32, #tpu.memory_space<vmem>>, vector<16x1x10xf32>,
    %c0_22 = arith.constant 0 : index
    %c0_23 = arith.constant 0 : index
    %c0_24 = arith.constant 0 : index
    %c0_25 = arith.constant 0 : index
    %10 = vector.load %arg1[%c0_22, %c0_23, %c0_24, %c0_25] : memref<1x16x16x6xf32, #tpu.memory_space<vmem>>, vector<1x16x16x6xf32>
    %11 = vector.shape_cast %10 : vector<1x16x16x6xf32> to vector<16x16x6xf32>
    %c1_26 = arith.constant 1 : index
    %c1_27 = arith.constant 1 : index
    %c0_28 = arith.constant 0 : index
    %12 = vector.load %arg15[%c1_26, %c1_27, %c0_28] : memref<18x18x10xf32, #tpu.memory_space<vmem>>, vector<16x16x6xf32>
    tpu.vector_store %arg15[%c1_26, %c1_27, %c0_28], %11 {strides = array<i32>} : memref<18x18x10xf32, #tpu.memory_space<vmem>>, vector<16x16x6xf32>,
    %c0_29 = arith.constant 0 : index
    %c0_30 = arith.constant 0 : index
    %13 = vector.load %arg2[%c0_29, %c0_30] : memref<54x10xbf16, #tpu.memory_space<vmem>>, vector<54x10xbf16>
    %c0_31 = arith.constant 0 : index
    %c0_32 = arith.constant 0 : index
    %14 = vector.load %arg3[%c0_31, %c0_32] : memref<1x10xf32, #tpu.memory_space<vmem>>, vector<1x10xf32>
    %c0_33 = arith.constant 0 : index
    %c0_34 = arith.constant 0 : index
    %c0_35 = arith.constant 0 : index
    %15 = vector.load %arg15[%c0_33, %c0_34, %c0_35] : memref<18x18x10xf32, #tpu.memory_space<vmem>>, vector<16x16x6xf32>
    %c0_36 = arith.constant 0 : index
    %c1_37 = arith.constant 1 : index
    %c0_38 = arith.constant 0 : index
    %16 = vector.load %arg15[%c0_36, %c1_37, %c0_38] : memref<18x18x10xf32, #tpu.memory_space<vmem>>, vector<16x16x6xf32>
    %c0_39 = arith.constant 0 : index
    %c2 = arith.constant 2 : index
    %c0_40 = arith.constant 0 : index
    %17 = vector.load %arg15[%c0_39, %c2, %c0_40] : memref<18x18x10xf32, #tpu.memory_space<vmem>>, vector<16x16x6xf32>
    %c1_41 = arith.constant 1 : index
    %c0_42 = arith.constant 0 : index
    %c0_43 = arith.constant 0 : index
    %18 = vector.load %arg15[%c1_41, %c0_42, %c0_43] : memref<18x18x10xf32, #tpu.memory_space<vmem>>, vector<16x16x6xf32>
    %c1_44 = arith.constant 1 : index
    %c1_45 = arith.constant 1 : index
    %c0_46 = arith.constant 0 : index
    %19 = vector.load %arg15[%c1_44, %c1_45, %c0_46] : memref<18x18x10xf32, #tpu.memory_space<vmem>>, vector<16x16x6xf32>
    %c1_47 = arith.constant 1 : index
    %c2_48 = arith.constant 2 : index
    %c0_49 = arith.constant 0 : index
    %20 = vector.load %arg15[%c1_47, %c2_48, %c0_49] : memref<18x18x10xf32, #tpu.memory_space<vmem>>, vector<16x16x6xf32>
    %c2_50 = arith.constant 2 : index
    %c0_51 = arith.constant 0 : index
    %c0_52 = arith.constant 0 : index
    %21 = vector.load %arg15[%c2_50, %c0_51, %c0_52] : memref<18x18x10xf32, #tpu.memory_space<vmem>>, vector<16x16x6xf32>
    %c2_53 = arith.constant 2 : index
    %c1_54 = arith.constant 1 : index
    %c0_55 = arith.constant 0 : index
    %22 = vector.load %arg15[%c2_53, %c1_54, %c0_55] : memref<18x18x10xf32, #tpu.memory_space<vmem>>, vector<16x16x6xf32>
    %c2_56 = arith.constant 2 : index
    %c2_57 = arith.constant 2 : index
    %c0_58 = arith.constant 0 : index
    %23 = vector.load %arg15[%c2_56, %c2_57, %c0_58] : memref<18x18x10xf32, #tpu.memory_space<vmem>>, vector<16x16x6xf32>
    %24 = tpu.concatenate %15, %16, %17, %18, %19, %20, %21, %22, %23 in 2 : vector<16x16x6xf32>, vector<16x16x6xf32>, vector<16x16x6xf32>, vector<16x16x6xf32>, vector<16x16x6xf32>, vector<16x16x6xf32>, vector<16x16x6xf32>, vector<16x16x6xf32>, vector<16x16x6xf32> -> vector<16x16x54xf32>
    %25 = vector.shape_cast %24 : vector<16x16x54xf32> to vector<256x54xf32>
    %26 = arith.truncf %25 : vector<256x54xf32> to vector<256x54xbf16>
    %cst_59 = arith.constant dense<0.000000e+00> : vector<256x10xf32>
    %27 = tpu.matmul %26, %13, %cst_59 {dimension_numbers = #tpu.dot_dimension_numbers<[1], [0], [0], [1], [0, 0, 1, 1], [], []>} : vector<256x54xbf16>, vector<54x10xbf16>, vector<256x10xf32> -> vector<256x10xf32>
    %28 = vector.broadcast %14 : vector<1x10xf32> to vector<256x10xf32>
    %29 = arith.addf %27, %28 : vector<256x10xf32>
    %cst_60 = arith.constant 0.000000e+00 : f32
    %30 = vector.broadcast %cst_60 : f32 to vector<256x10xf32>
    %31 = arith.maximumf %29, %30 : vector<256x10xf32>
    %32 = vector.shape_cast %31 : vector<256x10xf32> to vector<16x16x10xf32>
    %c1_61 = arith.constant 1 : index
    %c1_62 = arith.constant 1 : index
    %c0_63 = arith.constant 0 : index
    %33 = vector.load %arg16[%c1_61, %c1_62, %c0_63] : memref<18x18x10xf32, #tpu.memory_space<vmem>>, vector<16x16x10xf32>
    tpu.vector_store %arg16[%c1_61, %c1_62, %c0_63], %32 {strides = array<i32>} : memref<18x18x10xf32, #tpu.memory_space<vmem>>, vector<16x16x10xf32>,
    %c0_64 = arith.constant 0 : index
    %c0_65 = arith.constant 0 : index
    %34 = vector.load %arg4[%c0_64, %c0_65] : memref<90x10xbf16, #tpu.memory_space<vmem>>, vector<90x10xbf16>
    %c0_66 = arith.constant 0 : index
    %c0_67 = arith.constant 0 : index
    %35 = vector.load %arg5[%c0_66, %c0_67] : memref<1x10xf32, #tpu.memory_space<vmem>>, vector<1x10xf32>
    %c0_68 = arith.constant 0 : index
    %c0_69 = arith.constant 0 : index
    %c0_70 = arith.constant 0 : index
    %36 = vector.load %arg16[%c0_68, %c0_69, %c0_70] : memref<18x18x10xf32, #tpu.memory_space<vmem>>, vector<16x16x10xf32>
    %c0_71 = arith.constant 0 : index
    %c1_72 = arith.constant 1 : index
    %c0_73 = arith.constant 0 : index
    %37 = vector.load %arg16[%c0_71, %c1_72, %c0_73] : memref<18x18x10xf32, #tpu.memory_space<vmem>>, vector<16x16x10xf32>
    %c0_74 = arith.constant 0 : index
    %c2_75 = arith.constant 2 : index
    %c0_76 = arith.constant 0 : index
    %38 = vector.load %arg16[%c0_74, %c2_75, %c0_76] : memref<18x18x10xf32, #tpu.memory_space<vmem>>, vector<16x16x10xf32>
    %c1_77 = arith.constant 1 : index
    %c0_78 = arith.constant 0 : index
    %c0_79 = arith.constant 0 : index
    %39 = vector.load %arg16[%c1_77, %c0_78, %c0_79] : memref<18x18x10xf32, #tpu.memory_space<vmem>>, vector<16x16x10xf32>
    %c1_80 = arith.constant 1 : index
    %c1_81 = arith.constant 1 : index
    %c0_82 = arith.constant 0 : index
    %40 = vector.load %arg16[%c1_80, %c1_81, %c0_82] : memref<18x18x10xf32, #tpu.memory_space<vmem>>, vector<16x16x10xf32>
    %c1_83 = arith.constant 1 : index
    %c2_84 = arith.constant 2 : index
    %c0_85 = arith.constant 0 : index
    %41 = vector.load %arg16[%c1_83, %c2_84, %c0_85] : memref<18x18x10xf32, #tpu.memory_space<vmem>>, vector<16x16x10xf32>
    %c2_86 = arith.constant 2 : index
    %c0_87 = arith.constant 0 : index
    %c0_88 = arith.constant 0 : index
    %42 = vector.load %arg16[%c2_86, %c0_87, %c0_88] : memref<18x18x10xf32, #tpu.memory_space<vmem>>, vector<16x16x10xf32>
    %c2_89 = arith.constant 2 : index
    %c1_90 = arith.constant 1 : index
    %c0_91 = arith.constant 0 : index
    %43 = vector.load %arg16[%c2_89, %c1_90, %c0_91] : memref<18x18x10xf32, #tpu.memory_space<vmem>>, vector<16x16x10xf32>
    %c2_92 = arith.constant 2 : index
    %c2_93 = arith.constant 2 : index
    %c0_94 = arith.constant 0 : index
    %44 = vector.load %arg16[%c2_92, %c2_93, %c0_94] : memref<18x18x10xf32, #tpu.memory_space<vmem>>, vector<16x16x10xf32>
    %45 = tpu.concatenate %36, %37, %38, %39, %40, %41, %42, %43, %44 in 2 : vector<16x16x10xf32>, vector<16x16x10xf32>, vector<16x16x10xf32>, vector<16x16x10xf32>, vector<16x16x10xf32>, vector<16x16x10xf32>, vector<16x16x10xf32>, vector<16x16x10xf32>, vector<16x16x10xf32> -> vector<16x16x90xf32>
    %46 = vector.shape_cast %45 : vector<16x16x90xf32> to vector<256x90xf32>
    %47 = arith.truncf %46 : vector<256x90xf32> to vector<256x90xbf16>
    %cst_95 = arith.constant dense<0.000000e+00> : vector<256x10xf32>
    %48 = tpu.matmul %47, %34, %cst_95 {dimension_numbers = #tpu.dot_dimension_numbers<[1], [0], [0], [1], [0, 0, 1, 1], [], []>} : vector<256x90xbf16>, vector<90x10xbf16>, vector<256x10xf32> -> vector<256x10xf32>
    %49 = vector.broadcast %35 : vector<1x10xf32> to vector<256x10xf32>
    %50 = arith.addf %48, %49 : vector<256x10xf32>
    %cst_96 = arith.constant 0.000000e+00 : f32
    %51 = vector.broadcast %cst_96 : f32 to vector<256x10xf32>
    %52 = arith.maximumf %50, %51 : vector<256x10xf32>
    %53 = vector.shape_cast %52 : vector<256x10xf32> to vector<16x16x10xf32>
    %c1_97 = arith.constant 1 : index
    %c1_98 = arith.constant 1 : index
    %c0_99 = arith.constant 0 : index
    %54 = vector.load %arg15[%c1_97, %c1_98, %c0_99] : memref<18x18x10xf32, #tpu.memory_space<vmem>>, vector<16x16x10xf32>
    tpu.vector_store %arg15[%c1_97, %c1_98, %c0_99], %53 {strides = array<i32>} : memref<18x18x10xf32, #tpu.memory_space<vmem>>, vector<16x16x10xf32>,
    %c0_100 = arith.constant 0 : index
    %c0_101 = arith.constant 0 : index
    %55 = vector.load %arg6[%c0_100, %c0_101] : memref<90x7xbf16, #tpu.memory_space<vmem>>, vector<90x7xbf16>
    %c0_102 = arith.constant 0 : index
    %c0_103 = arith.constant 0 : index
    %56 = vector.load %arg7[%c0_102, %c0_103] : memref<1x7xf32, #tpu.memory_space<vmem>>, vector<1x7xf32>
    %c0_104 = arith.constant 0 : index
    %c0_105 = arith.constant 0 : index
    %c0_106 = arith.constant 0 : index
    %57 = vector.load %arg15[%c0_104, %c0_105, %c0_106] : memref<18x18x10xf32, #tpu.memory_space<vmem>>, vector<16x16x10xf32>
    %c0_107 = arith.constant 0 : index
    %c1_108 = arith.constant 1 : index
    %c0_109 = arith.constant 0 : index
    %58 = vector.load %arg15[%c0_107, %c1_108, %c0_109] : memref<18x18x10xf32, #tpu.memory_space<vmem>>, vector<16x16x10xf32>
    %c0_110 = arith.constant 0 : index
    %c2_111 = arith.constant 2 : index
    %c0_112 = arith.constant 0 : index
    %59 = vector.load %arg15[%c0_110, %c2_111, %c0_112] : memref<18x18x10xf32, #tpu.memory_space<vmem>>, vector<16x16x10xf32>
    %c1_113 = arith.constant 1 : index
    %c0_114 = arith.constant 0 : index
    %c0_115 = arith.constant 0 : index
    %60 = vector.load %arg15[%c1_113, %c0_114, %c0_115] : memref<18x18x10xf32, #tpu.memory_space<vmem>>, vector<16x16x10xf32>
    %c1_116 = arith.constant 1 : index
    %c1_117 = arith.constant 1 : index
    %c0_118 = arith.constant 0 : index
    %61 = vector.load %arg15[%c1_116, %c1_117, %c0_118] : memref<18x18x10xf32, #tpu.memory_space<vmem>>, vector<16x16x10xf32>
    %c1_119 = arith.constant 1 : index
    %c2_120 = arith.constant 2 : index
    %c0_121 = arith.constant 0 : index
    %62 = vector.load %arg15[%c1_119, %c2_120, %c0_121] : memref<18x18x10xf32, #tpu.memory_space<vmem>>, vector<16x16x10xf32>
    %c2_122 = arith.constant 2 : index
    %c0_123 = arith.constant 0 : index
    %c0_124 = arith.constant 0 : index
    %63 = vector.load %arg15[%c2_122, %c0_123, %c0_124] : memref<18x18x10xf32, #tpu.memory_space<vmem>>, vector<16x16x10xf32>
    %c2_125 = arith.constant 2 : index
    %c1_126 = arith.constant 1 : index
    %c0_127 = arith.constant 0 : index
    %64 = vector.load %arg15[%c2_125, %c1_126, %c0_127] : memref<18x18x10xf32, #tpu.memory_space<vmem>>, vector<16x16x10xf32>
    %c2_128 = arith.constant 2 : index
    %c2_129 = arith.constant 2 : index
    %c0_130 = arith.constant 0 : index
    %65 = vector.load %arg15[%c2_128, %c2_129, %c0_130] : memref<18x18x10xf32, #tpu.memory_space<vmem>>, vector<16x16x10xf32>
    %66 = tpu.concatenate %57, %58, %59, %60, %61, %62, %63, %64, %65 in 2 : vector<16x16x10xf32>, vector<16x16x10xf32>, vector<16x16x10xf32>, vector<16x16x10xf32>, vector<16x16x10xf32>, vector<16x16x10xf32>, vector<16x16x10xf32>, vector<16x16x10xf32>, vector<16x16x10xf32> -> vector<16x16x90xf32>
    %67 = vector.shape_cast %66 : vector<16x16x90xf32> to vector<256x90xf32>
    %68 = arith.truncf %67 : vector<256x90xf32> to vector<256x90xbf16>
    %cst_131 = arith.constant dense<0.000000e+00> : vector<256x7xf32>
    %69 = tpu.matmul %68, %55, %cst_131 {dimension_numbers = #tpu.dot_dimension_numbers<[1], [0], [0], [1], [0, 0, 1, 1], [], []>} : vector<256x90xbf16>, vector<90x7xbf16>, vector<256x7xf32> -> vector<256x7xf32>
    %70 = vector.broadcast %56 : vector<1x7xf32> to vector<256x7xf32>
    %71 = arith.addf %69, %70 : vector<256x7xf32>
    %72 = vector.shape_cast %71 : vector<256x7xf32> to vector<16x16x7xf32>
    %c1_132 = arith.constant 1 : index
    %c1_133 = arith.constant 1 : index
    %c0_134 = arith.constant 0 : index
    %73 = vector.load %arg16[%c1_132, %c1_133, %c0_134] : memref<18x18x10xf32, #tpu.memory_space<vmem>>, vector<16x16x7xf32>
    tpu.vector_store %arg16[%c1_132, %c1_133, %c0_134], %72 {strides = array<i32>} : memref<18x18x10xf32, #tpu.memory_space<vmem>>, vector<16x16x7xf32>,
    %c0_135 = arith.constant 0 : index
    %c0_136 = arith.constant 0 : index
    %74 = vector.load %arg8[%c0_135, %c0_136] : memref<63x10xbf16, #tpu.memory_space<vmem>>, vector<63x10xbf16>
    %c0_137 = arith.constant 0 : index
    %c0_138 = arith.constant 0 : index
    %75 = vector.load %arg9[%c0_137, %c0_138] : memref<1x10xf32, #tpu.memory_space<vmem>>, vector<1x10xf32>
    %c0_139 = arith.constant 0 : index
    %c0_140 = arith.constant 0 : index
    %c0_141 = arith.constant 0 : index
    %76 = vector.load %arg16[%c0_139, %c0_140, %c0_141] : memref<18x18x10xf32, #tpu.memory_space<vmem>>, vector<16x16x7xf32>
    %c0_142 = arith.constant 0 : index
    %c1_143 = arith.constant 1 : index
    %c0_144 = arith.constant 0 : index
    %77 = vector.load %arg16[%c0_142, %c1_143, %c0_144] : memref<18x18x10xf32, #tpu.memory_space<vmem>>, vector<16x16x7xf32>
    %c0_145 = arith.constant 0 : index
    %c2_146 = arith.constant 2 : index
    %c0_147 = arith.constant 0 : index
    %78 = vector.load %arg16[%c0_145, %c2_146, %c0_147] : memref<18x18x10xf32, #tpu.memory_space<vmem>>, vector<16x16x7xf32>
    %c1_148 = arith.constant 1 : index
    %c0_149 = arith.constant 0 : index
    %c0_150 = arith.constant 0 : index
    %79 = vector.load %arg16[%c1_148, %c0_149, %c0_150] : memref<18x18x10xf32, #tpu.memory_space<vmem>>, vector<16x16x7xf32>
    %c1_151 = arith.constant 1 : index
    %c1_152 = arith.constant 1 : index
    %c0_153 = arith.constant 0 : index
    %80 = vector.load %arg16[%c1_151, %c1_152, %c0_153] : memref<18x18x10xf32, #tpu.memory_space<vmem>>, vector<16x16x7xf32>
    %c1_154 = arith.constant 1 : index
    %c2_155 = arith.constant 2 : index
    %c0_156 = arith.constant 0 : index
    %81 = vector.load %arg16[%c1_154, %c2_155, %c0_156] : memref<18x18x10xf32, #tpu.memory_space<vmem>>, vector<16x16x7xf32>
    %c2_157 = arith.constant 2 : index
    %c0_158 = arith.constant 0 : index
    %c0_159 = arith.constant 0 : index
    %82 = vector.load %arg16[%c2_157, %c0_158, %c0_159] : memref<18x18x10xf32, #tpu.memory_space<vmem>>, vector<16x16x7xf32>
    %c2_160 = arith.constant 2 : index
    %c1_161 = arith.constant 1 : index
    %c0_162 = arith.constant 0 : index
    %83 = vector.load %arg16[%c2_160, %c1_161, %c0_162] : memref<18x18x10xf32, #tpu.memory_space<vmem>>, vector<16x16x7xf32>
    %c2_163 = arith.constant 2 : index
    %c2_164 = arith.constant 2 : index
    %c0_165 = arith.constant 0 : index
    %84 = vector.load %arg16[%c2_163, %c2_164, %c0_165] : memref<18x18x10xf32, #tpu.memory_space<vmem>>, vector<16x16x7xf32>
    %85 = tpu.concatenate %76, %77, %78, %79, %80, %81, %82, %83, %84 in 2 : vector<16x16x7xf32>, vector<16x16x7xf32>, vector<16x16x7xf32>, vector<16x16x7xf32>, vector<16x16x7xf32>, vector<16x16x7xf32>, vector<16x16x7xf32>, vector<16x16x7xf32>, vector<16x16x7xf32> -> vector<16x16x63xf32>
    %86 = vector.shape_cast %85 : vector<16x16x63xf32> to vector<256x63xf32>
    %87 = arith.truncf %86 : vector<256x63xf32> to vector<256x63xbf16>
    %cst_166 = arith.constant dense<0.000000e+00> : vector<256x10xf32>
    %88 = tpu.matmul %87, %74, %cst_166 {dimension_numbers = #tpu.dot_dimension_numbers<[1], [0], [0], [1], [0, 0, 1, 1], [], []>} : vector<256x63xbf16>, vector<63x10xbf16>, vector<256x10xf32> -> vector<256x10xf32>
    %89 = vector.broadcast %75 : vector<1x10xf32> to vector<256x10xf32>
    %90 = arith.addf %88, %89 : vector<256x10xf32>
    %cst_167 = arith.constant 0.000000e+00 : f32
    %91 = vector.broadcast %cst_167 : f32 to vector<256x10xf32>
    %92 = arith.maximumf %90, %91 : vector<256x10xf32>
    %93 = vector.shape_cast %92 : vector<256x10xf32> to vector<16x16x10xf32>
    %c1_168 = arith.constant 1 : index
    %c1_169 = arith.constant 1 : index
    %c0_170 = arith.constant 0 : index
    %94 = vector.load %arg15[%c1_168, %c1_169, %c0_170] : memref<18x18x10xf32, #tpu.memory_space<vmem>>, vector<16x16x10xf32>
    tpu.vector_store %arg15[%c1_168, %c1_169, %c0_170], %93 {strides = array<i32>} : memref<18x18x10xf32, #tpu.memory_space<vmem>>, vector<16x16x10xf32>,
    %c0_171 = arith.constant 0 : index
    %c0_172 = arith.constant 0 : index
    %95 = vector.load %arg10[%c0_171, %c0_172] : memref<90x10xbf16, #tpu.memory_space<vmem>>, vector<90x10xbf16>
    %c0_173 = arith.constant 0 : index
    %c0_174 = arith.constant 0 : index
    %96 = vector.load %arg11[%c0_173, %c0_174] : memref<1x10xf32, #tpu.memory_space<vmem>>, vector<1x10xf32>
    %c0_175 = arith.constant 0 : index
    %c0_176 = arith.constant 0 : index
    %c0_177 = arith.constant 0 : index
    %97 = vector.load %arg15[%c0_175, %c0_176, %c0_177] : memref<18x18x10xf32, #tpu.memory_space<vmem>>, vector<16x16x10xf32>
    %c0_178 = arith.constant 0 : index
    %c1_179 = arith.constant 1 : index
    %c0_180 = arith.constant 0 : index
    %98 = vector.load %arg15[%c0_178, %c1_179, %c0_180] : memref<18x18x10xf32, #tpu.memory_space<vmem>>, vector<16x16x10xf32>
    %c0_181 = arith.constant 0 : index
    %c2_182 = arith.constant 2 : index
    %c0_183 = arith.constant 0 : index
    %99 = vector.load %arg15[%c0_181, %c2_182, %c0_183] : memref<18x18x10xf32, #tpu.memory_space<vmem>>, vector<16x16x10xf32>
    %c1_184 = arith.constant 1 : index
    %c0_185 = arith.constant 0 : index
    %c0_186 = arith.constant 0 : index
    %100 = vector.load %arg15[%c1_184, %c0_185, %c0_186] : memref<18x18x10xf32, #tpu.memory_space<vmem>>, vector<16x16x10xf32>
    %c1_187 = arith.constant 1 : index
    %c1_188 = arith.constant 1 : index
    %c0_189 = arith.constant 0 : index
    %101 = vector.load %arg15[%c1_187, %c1_188, %c0_189] : memref<18x18x10xf32, #tpu.memory_space<vmem>>, vector<16x16x10xf32>
    %c1_190 = arith.constant 1 : index
    %c2_191 = arith.constant 2 : index
    %c0_192 = arith.constant 0 : index
    %102 = vector.load %arg15[%c1_190, %c2_191, %c0_192] : memref<18x18x10xf32, #tpu.memory_space<vmem>>, vector<16x16x10xf32>
    %c2_193 = arith.constant 2 : index
    %c0_194 = arith.constant 0 : index
    %c0_195 = arith.constant 0 : index
    %103 = vector.load %arg15[%c2_193, %c0_194, %c0_195] : memref<18x18x10xf32, #tpu.memory_space<vmem>>, vector<16x16x10xf32>
    %c2_196 = arith.constant 2 : index
    %c1_197 = arith.constant 1 : index
    %c0_198 = arith.constant 0 : index
    %104 = vector.load %arg15[%c2_196, %c1_197, %c0_198] : memref<18x18x10xf32, #tpu.memory_space<vmem>>, vector<16x16x10xf32>
    %c2_199 = arith.constant 2 : index
    %c2_200 = arith.constant 2 : index
    %c0_201 = arith.constant 0 : index
    %105 = vector.load %arg15[%c2_199, %c2_200, %c0_201] : memref<18x18x10xf32, #tpu.memory_space<vmem>>, vector<16x16x10xf32>
    %106 = tpu.concatenate %97, %98, %99, %100, %101, %102, %103, %104, %105 in 2 : vector<16x16x10xf32>, vector<16x16x10xf32>, vector<16x16x10xf32>, vector<16x16x10xf32>, vector<16x16x10xf32>, vector<16x16x10xf32>, vector<16x16x10xf32>, vector<16x16x10xf32>, vector<16x16x10xf32> -> vector<16x16x90xf32>
    %107 = vector.shape_cast %106 : vector<16x16x90xf32> to vector<256x90xf32>
    %108 = arith.truncf %107 : vector<256x90xf32> to vector<256x90xbf16>
    %cst_202 = arith.constant dense<0.000000e+00> : vector<256x10xf32>
    %109 = tpu.matmul %108, %95, %cst_202 {dimension_numbers = #tpu.dot_dimension_numbers<[1], [0], [0], [1], [0, 0, 1, 1], [], []>} : vector<256x90xbf16>, vector<90x10xbf16>, vector<256x10xf32> -> vector<256x10xf32>
    %110 = vector.broadcast %96 : vector<1x10xf32> to vector<256x10xf32>
    %111 = arith.addf %109, %110 : vector<256x10xf32>
    %cst_203 = arith.constant 0.000000e+00 : f32
    %112 = vector.broadcast %cst_203 : f32 to vector<256x10xf32>
    %113 = arith.maximumf %111, %112 : vector<256x10xf32>
    %114 = vector.shape_cast %113 : vector<256x10xf32> to vector<16x16x10xf32>
    %c1_204 = arith.constant 1 : index
    %c1_205 = arith.constant 1 : index
    %c0_206 = arith.constant 0 : index
    %115 = vector.load %arg16[%c1_204, %c1_205, %c0_206] : memref<18x18x10xf32, #tpu.memory_space<vmem>>, vector<16x16x10xf32>
    tpu.vector_store %arg16[%c1_204, %c1_205, %c0_206], %114 {strides = array<i32>} : memref<18x18x10xf32, #tpu.memory_space<vmem>>, vector<16x16x10xf32>,
    %c0_207 = arith.constant 0 : index
    %c0_208 = arith.constant 0 : index
    %116 = vector.load %arg12[%c0_207, %c0_208] : memref<90x5xbf16, #tpu.memory_space<vmem>>, vector<90x5xbf16>
    %c0_209 = arith.constant 0 : index
    %c0_210 = arith.constant 0 : index
    %117 = vector.load %arg13[%c0_209, %c0_210] : memref<1x5xf32, #tpu.memory_space<vmem>>, vector<1x5xf32>
    %c0_211 = arith.constant 0 : index
    %c0_212 = arith.constant 0 : index
    %c0_213 = arith.constant 0 : index
    %118 = vector.load %arg16[%c0_211, %c0_212, %c0_213] : memref<18x18x10xf32, #tpu.memory_space<vmem>>, vector<16x16x10xf32>
    %c0_214 = arith.constant 0 : index
    %c1_215 = arith.constant 1 : index
    %c0_216 = arith.constant 0 : index
    %119 = vector.load %arg16[%c0_214, %c1_215, %c0_216] : memref<18x18x10xf32, #tpu.memory_space<vmem>>, vector<16x16x10xf32>
    %c0_217 = arith.constant 0 : index
    %c2_218 = arith.constant 2 : index
    %c0_219 = arith.constant 0 : index
    %120 = vector.load %arg16[%c0_217, %c2_218, %c0_219] : memref<18x18x10xf32, #tpu.memory_space<vmem>>, vector<16x16x10xf32>
    %c1_220 = arith.constant 1 : index
    %c0_221 = arith.constant 0 : index
    %c0_222 = arith.constant 0 : index
    %121 = vector.load %arg16[%c1_220, %c0_221, %c0_222] : memref<18x18x10xf32, #tpu.memory_space<vmem>>, vector<16x16x10xf32>
    %c1_223 = arith.constant 1 : index
    %c1_224 = arith.constant 1 : index
    %c0_225 = arith.constant 0 : index
    %122 = vector.load %arg16[%c1_223, %c1_224, %c0_225] : memref<18x18x10xf32, #tpu.memory_space<vmem>>, vector<16x16x10xf32>
    %c1_226 = arith.constant 1 : index
    %c2_227 = arith.constant 2 : index
    %c0_228 = arith.constant 0 : index
    %123 = vector.load %arg16[%c1_226, %c2_227, %c0_228] : memref<18x18x10xf32, #tpu.memory_space<vmem>>, vector<16x16x10xf32>
    %c2_229 = arith.constant 2 : index
    %c0_230 = arith.constant 0 : index
    %c0_231 = arith.constant 0 : index
    %124 = vector.load %arg16[%c2_229, %c0_230, %c0_231] : memref<18x18x10xf32, #tpu.memory_space<vmem>>, vector<16x16x10xf32>
    %c2_232 = arith.constant 2 : index
    %c1_233 = arith.constant 1 : index
    %c0_234 = arith.constant 0 : index
    %125 = vector.load %arg16[%c2_232, %c1_233, %c0_234] : memref<18x18x10xf32, #tpu.memory_space<vmem>>, vector<16x16x10xf32>
    %c2_235 = arith.constant 2 : index
    %c2_236 = arith.constant 2 : index
    %c0_237 = arith.constant 0 : index
    %126 = vector.load %arg16[%c2_235, %c2_236, %c0_237] : memref<18x18x10xf32, #tpu.memory_space<vmem>>, vector<16x16x10xf32>
    %127 = tpu.concatenate %118, %119, %120, %121, %122, %123, %124, %125, %126 in 2 : vector<16x16x10xf32>, vector<16x16x10xf32>, vector<16x16x10xf32>, vector<16x16x10xf32>, vector<16x16x10xf32>, vector<16x16x10xf32>, vector<16x16x10xf32>, vector<16x16x10xf32>, vector<16x16x10xf32> -> vector<16x16x90xf32>
    %128 = vector.shape_cast %127 : vector<16x16x90xf32> to vector<256x90xf32>
    %129 = arith.truncf %128 : vector<256x90xf32> to vector<256x90xbf16>
    %cst_238 = arith.constant dense<0.000000e+00> : vector<256x5xf32>
    %130 = tpu.matmul %129, %116, %cst_238 {dimension_numbers = #tpu.dot_dimension_numbers<[1], [0], [0], [1], [0, 0, 1, 1], [], []>} : vector<256x90xbf16>, vector<90x5xbf16>, vector<256x5xf32> -> vector<256x5xf32>
    %131 = vector.broadcast %117 : vector<1x5xf32> to vector<256x5xf32>
    %132 = arith.addf %130, %131 : vector<256x5xf32>
    %133 = vector.shape_cast %132 : vector<256x5xf32> to vector<16x16x5xf32>
    %c0_239 = arith.constant 0 : index
    %c0_240 = arith.constant 0 : index
    %c0_241 = arith.constant 0 : index
    %c0_242 = arith.constant 0 : index
    %134 = vector.load %arg14[%c0_239, %c0_240, %c0_241, %c0_242] : memref<1x16x16x5xf32, #tpu.memory_space<vmem>>, vector<1x16x16x5xf32>
    %135 = vector.shape_cast %134 : vector<1x16x16x5xf32> to vector<16x16x5xf32>
    %136 = vector.shape_cast %133 : vector<16x16x5xf32> to vector<1x16x16x5xf32>
    tpu.vector_store %arg14[%c0_239, %c0_240, %c0_241, %c0_242], %136 {strides = array<i32>} : memref<1x16x16x5xf32, #tpu.memory_space<vmem>>, vector<1x16x16x5xf32>,
    return
  }
  func.func @transform_0(%arg0: i32) -> (i32, i32, i32, i32) {
    %c0_i32 = arith.constant 0 : i32
    %c0_i32_0 = arith.constant 0 : i32
    %c0_i32_1 = arith.constant 0 : i32
    %c0_i32_2 = arith.constant 0 : i32
    return %arg0, %c0_i32, %c0_i32_0, %c0_i32_1 : i32, i32, i32, i32
  }
  func.func @transform_1(%arg0: i32) -> (i32, i32) {
    %c0_i32 = arith.constant 0 : i32
    %c0_i32_0 = arith.constant 0 : i32
    %c0_i32_1 = arith.constant 0 : i32
    return %c0_i32, %c0_i32_0 : i32, i32
  }
  func.func @transform_2(%arg0: i32) -> (i32, i32) {
    %c0_i32 = arith.constant 0 : i32
    %c0_i32_0 = arith.constant 0 : i32
    %c0_i32_1 = arith.constant 0 : i32
    return %c0_i32, %c0_i32_0 : i32, i32
  }
  func.func @transform_3(%arg0: i32) -> (i32, i32) {
    %c0_i32 = arith.constant 0 : i32
    %c0_i32_0 = arith.constant 0 : i32
    %c0_i32_1 = arith.constant 0 : i32
    return %c0_i32, %c0_i32_0 : i32, i32
  }
  func.func @transform_4(%arg0: i32) -> (i32, i32) {
    %c0_i32 = arith.constant 0 : i32
    %c0_i32_0 = arith.constant 0 : i32
    %c0_i32_1 = arith.constant 0 : i32
    return %c0_i32, %c0_i32_0 : i32, i32
  }
  func.func @transform_5(%arg0: i32) -> (i32, i32) {
    %c0_i32 = arith.constant 0 : i32
    %c0_i32_0 = arith.constant 0 : i32
    %c0_i32_1 = arith.constant 0 : i32
    return %c0_i32, %c0_i32_0 : i32, i32
  }
  func.func @transform_6(%arg0: i32) -> (i32, i32) {
    %c0_i32 = arith.constant 0 : i32
    %c0_i32_0 = arith.constant 0 : i32
    %c0_i32_1 = arith.constant 0 : i32
    return %c0_i32, %c0_i32_0 : i32, i32
  }
  func.func @transform_7(%arg0: i32) -> (i32, i32) {
    %c0_i32 = arith.constant 0 : i32
    %c0_i32_0 = arith.constant 0 : i32
    %c0_i32_1 = arith.constant 0 : i32
    return %c0_i32, %c0_i32_0 : i32, i32
  }
  func.func @transform_8(%arg0: i32) -> (i32, i32) {
    %c0_i32 = arith.constant 0 : i32
    %c0_i32_0 = arith.constant 0 : i32
    %c0_i32_1 = arith.constant 0 : i32
    return %c0_i32, %c0_i32_0 : i32, i32
  }
  func.func @transform_9(%arg0: i32) -> (i32, i32) {
    %c0_i32 = arith.constant 0 : i32
    %c0_i32_0 = arith.constant 0 : i32
    %c0_i32_1 = arith.constant 0 : i32
    return %c0_i32, %c0_i32_0 : i32, i32
  }
  func.func @transform_10(%arg0: i32) -> (i32, i32) {
    %c0_i32 = arith.constant 0 : i32
    %c0_i32_0 = arith.constant 0 : i32
    %c0_i32_1 = arith.constant 0 : i32
    return %c0_i32, %c0_i32_0 : i32, i32
  }
  func.func @transform_11(%arg0: i32) -> (i32, i32) {
    %c0_i32 = arith.constant 0 : i32
    %c0_i32_0 = arith.constant 0 : i32
    %c0_i32_1 = arith.constant 0 : i32
    return %c0_i32, %c0_i32_0 : i32, i32
  }
  func.func @transform_12(%arg0: i32) -> (i32, i32) {
    %c0_i32 = arith.constant 0 : i32
    %c0_i32_0 = arith.constant 0 : i32
    %c0_i32_1 = arith.constant 0 : i32
    return %c0_i32, %c0_i32_0 : i32, i32
  }
  func.func @transform_13(%arg0: i32) -> (i32, i32, i32, i32) {
    %c0_i32 = arith.constant 0 : i32
    %c0_i32_0 = arith.constant 0 : i32
    %c0_i32_1 = arith.constant 0 : i32
    %c0_i32_2 = arith.constant 0 : i32
    return %arg0, %c0_i32, %c0_i32_0, %c0_i32_1 : i32, i32, i32, i32
  }
}

</mosaic_0001>

<llo_original>
// kernel: tpu_custom_call.1
$region0: #{tpu_custom_call.1}
  #allocation0 [shape = 'u32[]', space=smem, size = 0x4, offset = 0x4, fixed_abs, tag = 'smem constant byte address 0x4 - core index']
  #allocation1 [shape = 'u32[144,128]{1,0:T(1,128)}', space=vmem, size = 0x12000, scoped, tag = 'internal scratch']
  #allocation2 [shape = 'f32[18,18,10]{2,1,0:T(8,128)}', space=vmem, size = 0x36000, scoped, tag = 'scratch operand']
  #allocation3 [shape = 'f32[18,18,10]{2,1,0:T(8,128)}', space=vmem, size = 0x36000, scoped, tag = 'scratch operand']
  %s0 = inlined_call_operand.vmem [shape: f32[2,16,16,6], index: 0, kind: input, shape index: {}]
  %s1 = inlined_call_operand.vmem [shape: bf16[54,10], index: 1, kind: input, shape index: {}]
  %s2 = inlined_call_operand.vmem [shape: f32[1,10], index: 2, kind: input, shape index: {}]
  %s3 = inlined_call_operand.vmem [shape: bf16[90,10], index: 3, kind: input, shape index: {}]
  %s4 = inlined_call_operand.vmem [shape: f32[1,10], index: 4, kind: input, shape index: {}]
  %s5 = inlined_call_operand.vmem [shape: bf16[90,7], index: 5, kind: input, shape index: {}]
  %s6 = inlined_call_operand.vmem [shape: f32[1,7], index: 6, kind: input, shape index: {}]
  %s7 = inlined_call_operand.vmem [shape: bf16[63,10], index: 7, kind: input, shape index: {}]
  %s8 = inlined_call_operand.vmem [shape: f32[1,10], index: 8, kind: input, shape index: {}]
  %s9 = inlined_call_operand.vmem [shape: bf16[90,10], index: 9, kind: input, shape index: {}]
  %s10 = inlined_call_operand.vmem [shape: f32[1,10], index: 10, kind: input, shape index: {}]
  %s11 = inlined_call_operand.vmem [shape: bf16[90,5], index: 11, kind: input, shape index: {}]
  %s12 = inlined_call_operand.vmem [shape: f32[1,5], index: 12, kind: input, shape index: {}]
  %s13 = inlined_call_operand.vmem [shape: f32[2,16,16,5], index: 13, kind: output, shape index: {}]
  %s14 = sld [smem:[#allocation0]]
  $region85: #{tpu_custom_call.1} parent=0
    _
  %s16 = ssub.s32 1, %s14
  %s17 = scalar_select 0, %s16, %s14
  loop: start=0, step=1, limit=4
  $region2: #{tpu_custom_call.1} parent=0 // loop_pre_header
    _
  $region3: #{tpu_custom_call.1} parent=0 // loop_header
    %s19 = sphi 0, %s23
    %p20 = scmp.ge.s32.totalorder %s19, 4
    %s29 = sphi 0, %s31
    %s32 = sphi 0, %s29
    %s33 = sphi 0, %s32
    %s49 = sphi 0, %s33
    %s53 = sphi 0, %s53
    %s55 = sphi 0, %s53
    %s56 = sphi 0, %s55
    %s70 = sphi 0, %s56
    %s74 = sphi 0, %s74
    %s76 = sphi 0, %s74
    %s77 = sphi 0, %s76
    %s91 = sphi 0, %s77
    %s95 = sphi 0, %s95
    %s97 = sphi 0, %s95
    %s98 = sphi 0, %s97
    %s112 = sphi 0, %s98
    %s116 = sphi 0, %s116
    %s118 = sphi 0, %s116
    %s119 = sphi 0, %s118
    %s133 = sphi 0, %s119
    %s137 = sphi 0, %s137
    %s139 = sphi 0, %s137
    %s140 = sphi 0, %s139
    %s154 = sphi 0, %s140
    %s158 = sphi 0, %s158
    %s160 = sphi 0, %s158
    %s161 = sphi 0, %s160
    %s175 = sphi 0, %s161
    %s179 = sphi 0, %s179
    %s181 = sphi 0, %s179
    %s182 = sphi 0, %s181
    %s196 = sphi 0, %s182
    %s200 = sphi 0, %s200
    %s202 = sphi 0, %s200
    %s203 = sphi 0, %s202
    %s217 = sphi 0, %s203
    %s221 = sphi 0, %s221
    %s223 = sphi 0, %s221
    %s224 = sphi 0, %s223
    %s238 = sphi 0, %s224
    %s242 = sphi 0, %s242
    %s244 = sphi 0, %s242
    %s245 = sphi 0, %s244
    %s259 = sphi 0, %s245
    %s263 = sphi 0, %s263
    %s265 = sphi 0, %s263
    %s266 = sphi 0, %s265
    %s280 = sphi 0, %s266
    %s284 = sphi 0, %s284
    %s286 = sphi 0, %s284
    %s287 = sphi 0, %s286
    %s301 = sphi 0, %s287
    %s307 = sphi 0, %s309
    %s310 = sphi 0, %s307
    %s311 = sphi 0, %s310
    %s327 = sphi 0, %s311
  $region4: #{tpu_custom_call.1} parent=0 // loop_header_branch
    %22 = sbr.rel (%p20) target = $region8
  $region5: #{tpu_custom_call.1} parent=0 // loop_body
    %s24 = ssub.s32 %s19, 1
    %s25 = ssub.s32 %s19, 2
    %s26 = sadd.s32 %s19, 1
    %s27 = ssub.s32 %s19, %s26
    %p28 = scmp.eq.s32.totalorder %s27, 0
    %s30 = sadd.s32 %s29, 1
    %s31 = scalar_select %p28, %s29, %s30
    %p34 = pneg %p28
    %p35 = scmp.eq.s32.totalorder %s19, 1
    %p36 = por %p34, %p35
    %p37 = scmp.ne.s32.totalorder %s29, %s32
    %p38 = scmp.eq.s32.totalorder %s19, 0
    %p39 = por %p37, %p38
    %p40 = scmp.ne.s32.totalorder %s29, %s32
    %p41 = scmp.eq.s32.totalorder %s24, 1
    %p42 = por %p40, %p41
    %p43 = scmp.ne.s32.totalorder %s32, %s33
    %p44 = scmp.eq.s32.totalorder %s24, 0
    %p45 = por %p43, %p44
    %p46 = scmp.ne.s32.totalorder %s32, %s33
    %p47 = scmp.eq.s32.totalorder %s25, 1
    %p48 = por %p46, %p47
    %p50 = scmp.ne.s32.totalorder %s33, %s49
    %p51 = scmp.eq.s32.totalorder %s25, 0
    %p52 = por %p50, %p51
    %s54 = sadd.s32 %s53, 1
    %p57 = scmp.eq.s32.totalorder %s19, 1
    %p58 = scmp.ne.s32.totalorder %s53, %s55
    %p59 = scmp.eq.s32.totalorder %s19, 0
    %p60 = por %p58, %p59
    %p61 = scmp.ne.s32.totalorder %s53, %s55
    %p62 = scmp.eq.s32.totalorder %s24, 1
    %p63 = por %p61, %p62
    %p64 = scmp.ne.s32.totalorder %s55, %s56
    %p65 = scmp.eq.s32.totalorder %s24, 0
    %p66 = por %p64, %p65
    %p67 = scmp.ne.s32.totalorder %s55, %s56
    %p68 = scmp.eq.s32.totalorder %s25, 1
    %p69 = por %p67, %p68
    %p71 = scmp.ne.s32.totalorder %s56, %s70
    %p72 = scmp.eq.s32.totalorder %s25, 0
    %p73 = por %p71, %p72
    %s75 = sadd.s32 %s74, 1
    %p78 = scmp.eq.s32.totalorder %s19, 1
    %p79 = scmp.ne.s32.totalorder %s74, %s76
    %p80 = scmp.eq.s32.totalorder %s19, 0
    %p81 = por %p79, %p80
    %p82 = scmp.ne.s32.totalorder %s74, %s76
    %p83 = scmp.eq.s32.totalorder %s24, 1
    %p84 = por %p82, %p83
    %p85 = scmp.ne.s32.totalorder %s76, %s77
    %p86 = scmp.eq.s32.totalorder %s24, 0
    %p87 = por %p85, %p86
    %p88 = scmp.ne.s32.totalorder %s76, %s77
    %p89 = scmp.eq.s32.totalorder %s25, 1
    %p90 = por %p88, %p89
    %p92 = scmp.ne.s32.totalorder %s77, %s91
    %p93 = scmp.eq.s32.totalorder %s25, 0
    %p94 = por %p92, %p93
    %s96 = sadd.s32 %s95, 1
    %p99 = scmp.eq.s32.totalorder %s19, 1
    %p100 = scmp.ne.s32.totalorder %s95, %s97
    %p101 = scmp.eq.s32.totalorder %s19, 0
    %p102 = por %p100, %p101
    %p103 = scmp.ne.s32.totalorder %s95, %s97
    %p104 = scmp.eq.s32.totalorder %s24, 1
    %p105 = por %p103, %p104
    %p106 = scmp.ne.s32.totalorder %s97, %s98
    %p107 = scmp.eq.s32.totalorder %s24, 0
    %p108 = por %p106, %p107
    %p109 = scmp.ne.s32.totalorder %s97, %s98
    %p110 = scmp.eq.s32.totalorder %s25, 1
    %p111 = por %p109, %p110
    %p113 = scmp.ne.s32.totalorder %s98, %s112
    %p114 = scmp.eq.s32.totalorder %s25, 0
    %p115 = por %p113, %p114
    %s117 = sadd.s32 %s116, 1
    %p120 = scmp.eq.s32.totalorder %s19, 1
    %p121 = scmp.ne.s32.totalorder %s116, %s118
    %p122 = scmp.eq.s32.totalorder %s19, 0
    %p123 = por %p121, %p122
    %p124 = scmp.ne.s32.totalorder %s116, %s118
    %p125 = scmp.eq.s32.totalorder %s24, 1
    %p126 = por %p124, %p125
    %p127 = scmp.ne.s32.totalorder %s118, %s119
    %p128 = scmp.eq.s32.totalorder %s24, 0
    %p129 = por %p127, %p128
    %p130 = scmp.ne.s32.totalorder %s118, %s119
    %p131 = scmp.eq.s32.totalorder %s25, 1
    %p132 = por %p130, %p131
    %p134 = scmp.ne.s32.totalorder %s119, %s133
    %p135 = scmp.eq.s32.totalorder %s25, 0
    %p136 = por %p134, %p135
    %s138 = sadd.s32 %s137, 1
    %p141 = scmp.eq.s32.totalorder %s19, 1
    %p142 = scmp.ne.s32.totalorder %s137, %s139
    %p143 = scmp.eq.s32.totalorder %s19, 0
    %p144 = por %p142, %p143
    %p145 = scmp.ne.s32.totalorder %s137, %s139
    %p146 = scmp.eq.s32.totalorder %s24, 1
    %p147 = por %p145, %p146
    %p148 = scmp.ne.s32.totalorder %s139, %s140
    %p149 = scmp.eq.s32.totalorder %s24, 0
    %p150 = por %p148, %p149
    %p151 = scmp.ne.s32.totalorder %s139, %s140
    %p152 = scmp.eq.s32.totalorder %s25, 1
    %p153 = por %p151, %p152
    %p155 = scmp.ne.s32.totalorder %s140, %s154
    %p156 = scmp.eq.s32.totalorder %s25, 0
    %p157 = por %p155, %p156
    %s159 = sadd.s32 %s158, 1
    %p162 = scmp.eq.s32.totalorder %s19, 1
    %p163 = scmp.ne.s32.totalorder %s158, %s160
    %p164 = scmp.eq.s32.totalorder %s19, 0
    %p165 = por %p163, %p164
    %p166 = scmp.ne.s32.totalorder %s158, %s160
    %p167 = scmp.eq.s32.totalorder %s24, 1
    %p168 = por %p166, %p167
    %p169 = scmp.ne.s32.totalorder %s160, %s161
    %p170 = scmp.eq.s32.totalorder %s24, 0
    %p171 = por %p169, %p170
    %p172 = scmp.ne.s32.totalorder %s160, %s161
    %p173 = scmp.eq.s32.totalorder %s25, 1
    %p174 = por %p172, %p173
    %p176 = scmp.ne.s32.totalorder %s161, %s175
    %p177 = scmp.eq.s32.totalorder %s25, 0
    %p178 = por %p176, %p177
    %s180 = sadd.s32 %s179, 1
    %p183 = scmp.eq.s32.totalorder %s19, 1
    %p184 = scmp.ne.s32.totalorder %s179, %s181
    %p185 = scmp.eq.s32.totalorder %s19, 0
    %p186 = por %p184, %p185
    %p187 = scmp.ne.s32.totalorder %s179, %s181
    %p188 = scmp.eq.s32.totalorder %s24, 1
    %p189 = por %p187, %p188
    %p190 = scmp.ne.s32.totalorder %s181, %s182
    %p191 = scmp.eq.s32.totalorder %s24, 0
    %p192 = por %p190, %p191
    %p193 = scmp.ne.s32.totalorder %s181, %s182
    %p194 = scmp.eq.s32.totalorder %s25, 1
    %p195 = por %p193, %p194
    %p197 = scmp.ne.s32.totalorder %s182, %s196
    %p198 = scmp.eq.s32.totalorder %s25, 0
    %p199 = por %p197, %p198
    %s201 = sadd.s32 %s200, 1
    %p204 = scmp.eq.s32.totalorder %s19, 1
    %p205 = scmp.ne.s32.totalorder %s200, %s202
    %p206 = scmp.eq.s32.totalorder %s19, 0
    %p207 = por %p205, %p206
    %p208 = scmp.ne.s32.totalorder %s200, %s202
    %p209 = scmp.eq.s32.totalorder %s24, 1
    %p210 = por %p208, %p209
    %p211 = scmp.ne.s32.totalorder %s202, %s203
    %p212 = scmp.eq.s32.totalorder %s24, 0
    %p213 = por %p211, %p212
    %p214 = scmp.ne.s32.totalorder %s202, %s203
    %p215 = scmp.eq.s32.totalorder %s25, 1
    %p216 = por %p214, %p215
    %p218 = scmp.ne.s32.totalorder %s203, %s217
    %p219 = scmp.eq.s32.totalorder %s25, 0
    %p220 = por %p218, %p219
    %s222 = sadd.s32 %s221, 1
    %p225 = scmp.eq.s32.totalorder %s19, 1
    %p226 = scmp.ne.s32.totalorder %s221, %s223
    %p227 = scmp.eq.s32.totalorder %s19, 0
    %p228 = por %p226, %p227
    %p229 = scmp.ne.s32.totalorder %s221, %s223
    %p230 = scmp.eq.s32.totalorder %s24, 1
    %p231 = por %p229, %p230
    %p232 = scmp.ne.s32.totalorder %s223, %s224
    %p233 = scmp.eq.s32.totalorder %s24, 0
    %p234 = por %p232, %p233
    %p235 = scmp.ne.s32.totalorder %s223, %s224
    %p236 = scmp.eq.s32.totalorder %s25, 1
    %p237 = por %p235, %p236
    %p239 = scmp.ne.s32.totalorder %s224, %s238
    %p240 = scmp.eq.s32.totalorder %s25, 0
    %p241 = por %p239, %p240
    %s243 = sadd.s32 %s242, 1
    %p246 = scmp.eq.s32.totalorder %s19, 1
    %p247 = scmp.ne.s32.totalorder %s242, %s244
    %p248 = scmp.eq.s32.totalorder %s19, 0
    %p249 = por %p247, %p248
    %p250 = scmp.ne.s32.totalorder %s242, %s244
    %p251 = scmp.eq.s32.totalorder %s24, 1
    %p252 = por %p250, %p251
    %p253 = scmp.ne.s32.totalorder %s244, %s245
    %p254 = scmp.eq.s32.totalorder %s24, 0
    %p255 = por %p253, %p254
    %p256 = scmp.ne.s32.totalorder %s244, %s245
    %p257 = scmp.eq.s32.totalorder %s25, 1
    %p258 = por %p256, %p257
    %p260 = scmp.ne.s32.totalorder %s245, %s259
    %p261 = scmp.eq.s32.totalorder %s25, 0
    %p262 = por %p260, %p261
    %s264 = sadd.s32 %s263, 1
    %p267 = scmp.eq.s32.totalorder %s19, 1
    %p268 = scmp.ne.s32.totalorder %s263, %s265
    %p269 = scmp.eq.s32.totalorder %s19, 0
    %p270 = por %p268, %p269
    %p271 = scmp.ne.s32.totalorder %s263, %s265
    %p272 = scmp.eq.s32.totalorder %s24, 1
    %p273 = por %p271, %p272
    %p274 = scmp.ne.s32.totalorder %s265, %s266
    %p275 = scmp.eq.s32.totalorder %s24, 0
    %p276 = por %p274, %p275
    %p277 = scmp.ne.s32.totalorder %s265, %s266
    %p278 = scmp.eq.s32.totalorder %s25, 1
    %p279 = por %p277, %p278
    %p281 = scmp.ne.s32.totalorder %s266, %s280
    %p282 = scmp.eq.s32.totalorder %s25, 0
    %p283 = por %p281, %p282
    %s285 = sadd.s32 %s284, 1
    %p288 = scmp.eq.s32.totalorder %s19, 1
    %p289 = scmp.ne.s32.totalorder %s284, %s286
    %p290 = scmp.eq.s32.totalorder %s19, 0
    %p291 = por %p289, %p290
    %p292 = scmp.ne.s32.totalorder %s284, %s286
    %p293 = scmp.eq.s32.totalorder %s24, 1
    %p294 = por %p292, %p293
    %p295 = scmp.ne.s32.totalorder %s286, %s287
    %p296 = scmp.eq.s32.totalorder %s24, 0
    %p297 = por %p295, %p296
    %p298 = scmp.ne.s32.totalorder %s286, %s287
    %p299 = scmp.eq.s32.totalorder %s25, 1
    %p300 = por %p298, %p299
    %p302 = scmp.ne.s32.totalorder %s287, %s301
    %p303 = scmp.eq.s32.totalorder %s25, 0
    %p304 = por %p302, %p303
    %s305 = ssub.s32 %s19, %s26
    %p306 = scmp.eq.s32.totalorder %s305, 0
    %s308 = sadd.s32 %s307, 1
    %s309 = scalar_select %p306, %s307, %s308
    %p312 = pneg %p306
    %p313 = scmp.eq.s32.totalorder %s19, 1
    %p314 = por %p312, %p313
    %p315 = scmp.ne.s32.totalorder %s307, %s310
    %p316 = scmp.eq.s32.totalorder %s19, 0
    %p317 = por %p315, %p316
    %p318 = scmp.ne.s32.totalorder %s307, %s310
    %p319 = scmp.eq.s32.totalorder %s24, 1
    %p320 = por %p318, %p319
    %p321 = scmp.ne.s32.totalorder %s310, %s311
    %p322 = scmp.eq.s32.totalorder %s24, 0
    %p323 = por %p321, %p322
    %p324 = scmp.ne.s32.totalorder %s310, %s311
    %p325 = scmp.eq.s32.totalorder %s25, 1
    %p326 = por %p324, %p325
    %p328 = scmp.ne.s32.totalorder %s311, %s327
    %p329 = scmp.eq.s32.totalorder %s25, 0
    %p330 = por %p328, %p329
    %p331 = scmp.le.s32.totalorder 1, %s19
    %p332 = scmp.lt.s32.totalorder %s19, 3
    %p333 = pnand %p331, %p332
    %p334 = pneg %p333
    // Predicated region
    $region9: #{tpu_custom_call.1} parent=5 // pred_check
      _
    $region10: #{tpu_custom_call.1} parent=5 // pred_check_branch
      %336 = sbr.rel (%p333) target = $region12
    $region11: #{tpu_custom_call.1} parent=5 // pred_region
      %s337 = ssub.s32 %s19, 1
      // Predicated region
      $region13: #{tpu_custom_call.1} parent=11 // pred_check
        %p338 = pneg %p66
      $region14: #{tpu_custom_call.1} parent=11 // pred_check_branch
        %340 = sbr.rel (%p338) target = $region16
      $region15: #{tpu_custom_call.1} parent=11 // pred_region
        _
      $region16: #{tpu_custom_call.1} parent=11 // pred_fallthru
        _
      // Predicated region
      $region17: #{tpu_custom_call.1} parent=11 // pred_check
        %p341 = pneg %p87
      $region18: #{tpu_custom_call.1} parent=11 // pred_check_branch
        %343 = sbr.rel (%p341) target = $region20
      $region19: #{tpu_custom_call.1} parent=11 // pred_region
        _
      $region20: #{tpu_custom_call.1} parent=11 // pred_fallthru
        _
      // Predicated region
      $region21: #{tpu_custom_call.1} parent=11 // pred_check
        %p344 = pneg %p108
      $region22: #{tpu_custom_call.1} parent=11 // pred_check_branch
        %346 = sbr.rel (%p344) target = $region24
      $region23: #{tpu_custom_call.1} parent=11 // pred_region
        _
      $region24: #{tpu_custom_call.1} parent=11 // pred_fallthru
        _
      // Predicated region
      $region25: #{tpu_custom_call.1} parent=11 // pred_check
        %p347 = pneg %p129
      $region26: #{tpu_custom_call.1} parent=11 // pred_check_branch
        %349 = sbr.rel (%p347) target = $region28
      $region27: #{tpu_custom_call.1} parent=11 // pred_region
        _
      $region28: #{tpu_custom_call.1} parent=11 // pred_fallthru
        _
      // Predicated region
      $region29: #{tpu_custom_call.1} parent=11 // pred_check
        %p350 = pneg %p150
      $region30: #{tpu_custom_call.1} parent=11 // pred_check_branch
        %352 = sbr.rel (%p350) target = $region32
      $region31: #{tpu_custom_call.1} parent=11 // pred_region
        _
      $region32: #{tpu_custom_call.1} parent=11 // pred_fallthru
        _
      // Predicated region
      $region33: #{tpu_custom_call.1} parent=11 // pred_check
        %p353 = pneg %p171
      $region34: #{tpu_custom_call.1} parent=11 // pred_check_branch
        %355 = sbr.rel (%p353) target = $region36
      $region35: #{tpu_custom_call.1} parent=11 // pred_region
        _
      $region36: #{tpu_custom_call.1} parent=11 // pred_fallthru
        _
      // Predicated region
      $region37: #{tpu_custom_call.1} parent=11 // pred_check
        %p356 = pneg %p192
      $region38: #{tpu_custom_call.1} parent=11 // pred_check_branch
        %358 = sbr.rel (%p356) target = $region40
      $region39: #{tpu_custom_call.1} parent=11 // pred_region
        _
      $region40: #{tpu_custom_call.1} parent=11 // pred_fallthru
        _
      // Predicated region
      $region41: #{tpu_custom_call.1} parent=11 // pred_check
        %p359 = pneg %p213
      $region42: #{tpu_custom_call.1} parent=11 // pred_check_branch
        %361 = sbr.rel (%p359) target = $region44
      $region43: #{tpu_custom_call.1} parent=11 // pred_region
        _
      $region44: #{tpu_custom_call.1} parent=11 // pred_fallthru
        _
      // Predicated region
      $region45: #{tpu_custom_call.1} parent=11 // pred_check
        %p362 = pneg %p234
      $region46: #{tpu_custom_call.1} parent=11 // pred_check_branch
        %364 = sbr.rel (%p362) target = $region48
      $region47: #{tpu_custom_call.1} parent=11 // pred_region
        _
      $region48: #{tpu_custom_call.1} parent=11 // pred_fallthru
        _
      // Predicated region
      $region49: #{tpu_custom_call.1} parent=11 // pred_check
        %p365 = pneg %p255
      $region50: #{tpu_custom_call.1} parent=11 // pred_check_branch
        %367 = sbr.rel (%p365) target = $region52
      $region51: #{tpu_custom_call.1} parent=11 // pred_region
        _
      $region52: #{tpu_custom_call.1} parent=11 // pred_fallthru
        _
      // Predicated region
      $region53: #{tpu_custom_call.1} parent=11 // pred_check
        %p368 = pneg %p276
      $region54: #{tpu_custom_call.1} parent=11 // pred_check_branch
        %370 = sbr.rel (%p368) target = $region56
      $region55: #{tpu_custom_call.1} parent=11 // pred_region
        _
      $region56: #{tpu_custom_call.1} parent=11 // pred_fallthru
        _
      // Predicated region
      $region57: #{tpu_custom_call.1} parent=11 // pred_check
        %p371 = pneg %p297
      $region58: #{tpu_custom_call.1} parent=11 // pred_check_branch
        %373 = sbr.rel (%p371) target = $region60
      $region59: #{tpu_custom_call.1} parent=11 // pred_region
        _
      $region60: #{tpu_custom_call.1} parent=11 // pred_fallthru
        _
    $region12: #{tpu_custom_call.1} parent=5 // pred_fallthru
      _
    %p374 = scmp.lt.s32.totalorder %s19, 2
    // Predicated region
    $region61: #{tpu_custom_call.1} parent=5 // pred_check
      %p375 = pneg %p374
    $region62: #{tpu_custom_call.1} parent=5 // pred_check_branch
      %377 = sbr.rel (%p375) target = $region64
    $region63: #{tpu_custom_call.1} parent=5 // pred_region
      // Predicated region
      $region65: #{tpu_custom_call.1} parent=63 // pred_check
        %p378 = pneg %p39
      $region66: #{tpu_custom_call.1} parent=63 // pred_check_branch
        %380 = sbr.rel (%p378) target = $region68
      $region67: #{tpu_custom_call.1} parent=63 // pred_region
        %p381 = scmp.lt.s32.totalorder %s19, 1
        %s382 = scalar_select %p381, %s19, 1
        %s383 = smul.addr %s382, 32
        %s384 = smul.addr %s383, 8
        %s385 = scalar_lea.vmem %s0, %s384
      $region68: #{tpu_custom_call.1} parent=63 // pred_fallthru
        _
    $region64: #{tpu_custom_call.1} parent=5 // pred_fallthru
      _
    %p386 = scmp.le.s32.totalorder 1, %s19
    %p387 = scmp.lt.s32.totalorder %s19, 3
    %p388 = pnand %p386, %p387
    %p389 = pneg %p388
    // Predicated region
    $region69: #{tpu_custom_call.1} parent=5 // pred_check
      _
    $region70: #{tpu_custom_call.1} parent=5 // pred_check_branch
      %391 = sbr.rel (%p388) target = $region72
    $region71: #{tpu_custom_call.1} parent=5 // pred_region
      %s392 = ssub.s32 %s19, 1
      %p393 = scmp.lt.s32.totalorder %s24, 1
      %s394 = scalar_select %p393, %s24, 1
      %s395 = smul.addr %s394, 32
      %s396 = smul.addr %s395, 8
      %s397 = scalar_lea.vmem %s0, %s396
      %p398 = pneg %p45
      %p399 = pneg %p42
      %p400 = pneg %p66
      %p401 = pneg %p63
      %p402 = pneg %p87
      %p403 = pneg %p84
      %p404 = pneg %p108
      %p405 = pneg %p105
      %p406 = pneg %p129
      %p407 = pneg %p126
      %p408 = pneg %p150
      %p409 = pneg %p147
      %p410 = pneg %p171
      %p411 = pneg %p168
      %p412 = pneg %p192
      %p413 = pneg %p189
      %p414 = pneg %p213
      %p415 = pneg %p210
      %p416 = pneg %p234
      %p417 = pneg %p231
      %p418 = pneg %p255
      %p419 = pneg %p252
      %p420 = pneg %p276
      %p421 = pneg %p273
      %p422 = pneg %p297
      %p423 = pneg %p294
      %p424 = pneg %p323
      %p425 = pneg %p320
      %p426 = scmp.lt.s32.totalorder %s24, 1
      %s427 = scalar_select %p426, %s24, 1
      %s428 = smul.addr %s427, 32
      %s429 = smul.addr %s428, 8
      %s430 = scalar_lea.vmem %s13, %s429
      %p431 = scmp.lt.s32.totalorder %s24, 1
      %s432 = scalar_select %p431, %s24, 1
      %s433 = smul.addr %s432, 32
      %s434 = smul.addr %s433, 8
      %s435 = scalar_lea.vmem %s0, %s434
      %p436 = scmp.lt.s32.totalorder %s24, 1
      %s437 = scalar_select %p436, %s24, 1
      %s438 = smul.addr %s437, 32
      %s439 = smul.addr %s438, 8
      %s440 = scalar_lea.vmem %s13, %s439
      %vm442 = vcmask 80896
      %443 = vst.msk [vmem:[#allocation2] sm:$0xff] %vm442, 0.0
      %444 = vst.msk [vmem:[#allocation2 + $0x8] sm:$0xff] %vm442, 0.0
      %vm445 = vcmask 74752
      %446 = vst.msk [vmem:[#allocation2 + $0x10] sm:$0x3] %vm445, 0.0
      %s447 = scalar_lea.vmem [#allocation2], 408
      %448 = vst.msk [vmem:[%s447] sm:$0xff] %vm442, 0.0
      %449 = vst.msk [vmem:[%s447 + $0x8] sm:$0xff] %vm442, 0.0
      %450 = vst.msk [vmem:[%s447 + $0x10] sm:$0x3] %vm445, 0.0
      %s451 = scalar_lea.vmem [#allocation2], 24
      %vm452 = vcmask 73728
      %453 = vst.msk [vmem:[%s451] sm:$0x1] %vm452, 0.0
      %454 = vst.msk [vmem:[%s451 + $0x18] sm:$0x1] %vm452, 0.0
      %455 = vst.msk [vmem:[%s451 + $0x30] sm:$0x1] %vm452, 0.0
      %456 = vst.msk [vmem:[%s451 + $0x48] sm:$0x1] %vm452, 0.0
      %457 = vst.msk [vmem:[%s451 + $0x60] sm:$0x1] %vm452, 0.0
      %458 = vst.msk [vmem:[%s451 + $0x78] sm:$0x1] %vm452, 0.0
      %459 = vst.msk [vmem:[%s451 + $0x90] sm:$0x1] %vm452, 0.0
      %460 = vst.msk [vmem:[%s451 + $0xa8] sm:$0x1] %vm452, 0.0
      %461 = vst.msk [vmem:[%s451 + $0xc0] sm:$0x1] %vm452, 0.0
      %462 = vst.msk [vmem:[%s451 + $0xd8] sm:$0x1] %vm452, 0.0
      %463 = vst.msk [vmem:[%s451 + $0xf0] sm:$0x1] %vm452, 0.0
      %464 = vst.msk [vmem:[%s451 + $0x108] sm:$0x1] %vm452, 0.0
      %465 = vst.msk [vmem:[%s451 + $0x120] sm:$0x1] %vm452, 0.0
      %466 = vst.msk [vmem:[%s451 + $0x138] sm:$0x1] %vm452, 0.0
      %467 = vst.msk [vmem:[%s451 + $0x150] sm:$0x1] %vm452, 0.0
      %468 = vst.msk [vmem:[%s451 + $0x168] sm:$0x1] %vm452, 0.0
      %469 = vst.msk [vmem:[%s451 + $0x11] sm:$0x1] %vm452, 0.0
      %470 = vst.msk [vmem:[%s451 + $0x29] sm:$0x1] %vm452, 0.0
      %471 = vst.msk [vmem:[%s451 + $0x41] sm:$0x1] %vm452, 0.0
      %472 = vst.msk [vmem:[%s451 + $0x59] sm:$0x1] %vm452, 0.0
      %473 = vst.msk [vmem:[%s451 + $0x71] sm:$0x1] %vm452, 0.0
      %474 = vst.msk [vmem:[%s451 + $0x89] sm:$0x1] %vm452, 0.0
      %475 = vst.msk [vmem:[%s451 + $0xa1] sm:$0x1] %vm452, 0.0
      %476 = vst.msk [vmem:[%s451 + $0xb9] sm:$0x1] %vm452, 0.0
      %477 = vst.msk [vmem:[%s451 + $0xd1] sm:$0x1] %vm452, 0.0
      %478 = vst.msk [vmem:[%s451 + $0xe9] sm:$0x1] %vm452, 0.0
      %479 = vst.msk [vmem:[%s451 + $0x101] sm:$0x1] %vm452, 0.0
      %480 = vst.msk [vmem:[%s451 + $0x119] sm:$0x1] %vm452, 0.0
      %481 = vst.msk [vmem:[%s451 + $0x131] sm:$0x1] %vm452, 0.0
      %482 = vst.msk [vmem:[%s451 + $0x149] sm:$0x1] %vm452, 0.0
      %483 = vst.msk [vmem:[%s451 + $0x161] sm:$0x1] %vm452, 0.0
      %484 = vst.msk [vmem:[%s451 + $0x179] sm:$0x1] %vm452, 0.0
      %485 = vst.msk [vmem:[#allocation3] sm:$0xff] %vm442, 0.0
      %486 = vst.msk [vmem:[#allocation3 + $0x8] sm:$0xff] %vm442, 0.0
      %487 = vst.msk [vmem:[#allocation3 + $0x10] sm:$0x3] %vm445, 0.0
      %s488 = scalar_lea.vmem [#allocation3], 408
      %489 = vst.msk [vmem:[%s488] sm:$0xff] %vm442, 0.0
      %490 = vst.msk [vmem:[%s488 + $0x8] sm:$0xff] %vm442, 0.0
      %491 = vst.msk [vmem:[%s488 + $0x10] sm:$0x3] %vm445, 0.0
      %s492 = scalar_lea.vmem [#allocation3], 24
      %493 = vst.msk [vmem:[%s492] sm:$0x1] %vm452, 0.0
      %494 = vst.msk [vmem:[%s492 + $0x18] sm:$0x1] %vm452, 0.0
      %495 = vst.msk [vmem:[%s492 + $0x30] sm:$0x1] %vm452, 0.0
      %496 = vst.msk [vmem:[%s492 + $0x48] sm:$0x1] %vm452, 0.0
      %497 = vst.msk [vmem:[%s492 + $0x60] sm:$0x1] %vm452, 0.0
      %498 = vst.msk [vmem:[%s492 + $0x78] sm:$0x1] %vm452, 0.0
      %499 = vst.msk [vmem:[%s492 + $0x90] sm:$0x1] %vm452, 0.0
      %500 = vst.msk [vmem:[%s492 + $0xa8] sm:$0x1] %vm452, 0.0
      %501 = vst.msk [vmem:[%s492 + $0xc0] sm:$0x1] %vm452, 0.0
      %502 = vst.msk [vmem:[%s492 + $0xd8] sm:$0x1] %vm452, 0.0
      %503 = vst.msk [vmem:[%s492 + $0xf0] sm:$0x1] %vm452, 0.0
      %504 = vst.msk [vmem:[%s492 + $0x108] sm:$0x1] %vm452, 0.0
      %505 = vst.msk [vmem:[%s492 + $0x120] sm:$0x1] %vm452, 0.0
      %506 = vst.msk [vmem:[%s492 + $0x138] sm:$0x1] %vm452, 0.0
      %507 = vst.msk [vmem:[%s492 + $0x150] sm:$0x1] %vm452, 0.0
      %508 = vst.msk [vmem:[%s492 + $0x168] sm:$0x1] %vm452, 0.0
      %509 = vst.msk [vmem:[%s492 + $0x11] sm:$0x1] %vm452, 0.0
      %510 = vst.msk [vmem:[%s492 + $0x29] sm:$0x1] %vm452, 0.0
      %511 = vst.msk [vmem:[%s492 + $0x41] sm:$0x1] %vm452, 0.0
      %512 = vst.msk [vmem:[%s492 + $0x59] sm:$0x1] %vm452, 0.0
      %513 = vst.msk [vmem:[%s492 + $0x71] sm:$0x1] %vm452, 0.0
      %514 = vst.msk [vmem:[%s492 + $0x89] sm:$0x1] %vm452, 0.0
      %515 = vst.msk [vmem:[%s492 + $0xa1] sm:$0x1] %vm452, 0.0
      %516 = vst.msk [vmem:[%s492 + $0xb9] sm:$0x1] %vm452, 0.0
      %517 = vst.msk [vmem:[%s492 + $0xd1] sm:$0x1] %vm452, 0.0
      %518 = vst.msk [vmem:[%s492 + $0xe9] sm:$0x1] %vm452, 0.0
      %519 = vst.msk [vmem:[%s492 + $0x101] sm:$0x1] %vm452, 0.0
      %520 = vst.msk [vmem:[%s492 + $0x119] sm:$0x1] %vm452, 0.0
      %521 = vst.msk [vmem:[%s492 + $0x131] sm:$0x1] %vm452, 0.0
      %522 = vst.msk [vmem:[%s492 + $0x149] sm:$0x1] %vm452, 0.0
      %523 = vst.msk [vmem:[%s492 + $0x161] sm:$0x1] %vm452, 0.0
      %524 = vst.msk [vmem:[%s492 + $0x179] sm:$0x1] %vm452, 0.0
      %v525 = vld [vmem:[%s435] sm:$0xff]
      %v526 = vld [vmem:[%s435 + $0x8] sm:$0xff]
      %v527 = vld [vmem:[%s435 + $0x10] sm:$0xff]
      %v528 = vld [vmem:[%s435 + $0x18] sm:$0xff]
      %v529 = vld [vmem:[%s435 + $0x20] sm:$0xff]
      %v530 = vld [vmem:[%s435 + $0x28] sm:$0xff]
      %v531 = vld [vmem:[%s435 + $0x30] sm:$0xff]
      %v532 = vld [vmem:[%s435 + $0x38] sm:$0xff]
      %v533 = vld [vmem:[%s435 + $0x40] sm:$0xff]
      %v534 = vld [vmem:[%s435 + $0x48] sm:$0xff]
      %v535 = vld [vmem:[%s435 + $0x50] sm:$0xff]
      %v536 = vld [vmem:[%s435 + $0x58] sm:$0xff]
      %v537 = vld [vmem:[%s435 + $0x60] sm:$0xff]
      %v538 = vld [vmem:[%s435 + $0x68] sm:$0xff]
      %v539 = vld [vmem:[%s435 + $0x70] sm:$0xff]
      %v540 = vld [vmem:[%s435 + $0x78] sm:$0xff]
      %v541 = vld [vmem:[%s435 + $0x80] sm:$0xff]
      %v542 = vld [vmem:[%s435 + $0x88] sm:$0xff]
      %v543 = vld [vmem:[%s435 + $0x90] sm:$0xff]
      %v544 = vld [vmem:[%s435 + $0x98] sm:$0xff]
      %v545 = vld [vmem:[%s435 + $0xa0] sm:$0xff]
      %v546 = vld [vmem:[%s435 + $0xa8] sm:$0xff]
      %v547 = vld [vmem:[%s435 + $0xb0] sm:$0xff]
      %v548 = vld [vmem:[%s435 + $0xb8] sm:$0xff]
      %v549 = vld [vmem:[%s435 + $0xc0] sm:$0xff]
      %v550 = vld [vmem:[%s435 + $0xc8] sm:$0xff]
      %v551 = vld [vmem:[%s435 + $0xd0] sm:$0xff]
      %v552 = vld [vmem:[%s435 + $0xd8] sm:$0xff]
      %v553 = vld [vmem:[%s435 + $0xe0] sm:$0xff]
      %v554 = vld [vmem:[%s435 + $0xe8] sm:$0xff]
      %v555 = vld [vmem:[%s435 + $0xf0] sm:$0xff]
      %v556 = vld [vmem:[%s435 + $0xf8] sm:$0xff]
      %vm557 = vcmask 48128
      %558 = vst.msk [vmem:[%s451 + $0x1] sm:$0xff] %vm557, %v525
      %559 = vst.msk [vmem:[%s451 + $0x9] sm:$0xff] %vm557, %v526
      %560 = vst.msk [vmem:[%s451 + $0x19] sm:$0xff] %vm557, %v527
      %561 = vst.msk [vmem:[%s451 + $0x21] sm:$0xff] %vm557, %v528
      %562 = vst.msk [vmem:[%s451 + $0x31] sm:$0xff] %vm557, %v529
      %563 = vst.msk [vmem:[%s451 + $0x39] sm:$0xff] %vm557, %v530
      %564 = vst.msk [vmem:[%s451 + $0x49] sm:$0xff] %vm557, %v531
      %565 = vst.msk [vmem:[%s451 + $0x51] sm:$0xff] %vm557, %v532
      %566 = vst.msk [vmem:[%s451 + $0x61] sm:$0xff] %vm557, %v533
      %567 = vst.msk [vmem:[%s451 + $0x69] sm:$0xff] %vm557, %v534
      %568 = vst.msk [vmem:[%s451 + $0x79] sm:$0xff] %vm557, %v535
      %569 = vst.msk [vmem:[%s451 + $0x81] sm:$0xff] %vm557, %v536
      %570 = vst.msk [vmem:[%s451 + $0x91] sm:$0xff] %vm557, %v537
      %571 = vst.msk [vmem:[%s451 + $0x99] sm:$0xff] %vm557, %v538
      %572 = vst.msk [vmem:[%s451 + $0xa9] sm:$0xff] %vm557, %v539
      %573 = vst.msk [vmem:[%s451 + $0xb1] sm:$0xff] %vm557, %v540
      %574 = vst.msk [vmem:[%s451 + $0xc1] sm:$0xff] %vm557, %v541
      %575 = vst.msk [vmem:[%s451 + $0xc9] sm:$0xff] %vm557, %v542
      %576 = vst.msk [vmem:[%s451 + $0xd9] sm:$0xff] %vm557, %v543
      %577 = vst.msk [vmem:[%s451 + $0xe1] sm:$0xff] %vm557, %v544
      %578 = vst.msk [vmem:[%s451 + $0xf1] sm:$0xff] %vm557, %v545
      %579 = vst.msk [vmem:[%s451 + $0xf9] sm:$0xff] %vm557, %v546
      %580 = vst.msk [vmem:[%s451 + $0x109] sm:$0xff] %vm557, %v547
      %581 = vst.msk [vmem:[%s451 + $0x111] sm:$0xff] %vm557, %v548
      %582 = vst.msk [vmem:[%s451 + $0x121] sm:$0xff] %vm557, %v549
      %583 = vst.msk [vmem:[%s451 + $0x129] sm:$0xff] %vm557, %v550
      %584 = vst.msk [vmem:[%s451 + $0x139] sm:$0xff] %vm557, %v551
      %585 = vst.msk [vmem:[%s451 + $0x141] sm:$0xff] %vm557, %v552
      %586 = vst.msk [vmem:[%s451 + $0x151] sm:$0xff] %vm557, %v553
      %587 = vst.msk [vmem:[%s451 + $0x159] sm:$0xff] %vm557, %v554
      %588 = vst.msk [vmem:[%s451 + $0x169] sm:$0xff] %vm557, %v555
      %589 = vst.msk [vmem:[%s451 + $0x171] sm:$0xff] %vm557, %v556
      %v590 = vld [vmem:[%s1] sm:$0xf]
      %v591 = vld [vmem:[%s1 + $0x4] sm:$0xf]
      %v592 = vld [vmem:[%s1 + $0x8] sm:$0xf]
      %v593 = vld [vmem:[%s1 + $0xc] sm:$0xf]
      %v594 = vld [vmem:[%s1 + $0x10] sm:$0xf]
      %v595 = vld [vmem:[%s1 + $0x14] sm:$0xf]
      %v596 = vld [vmem:[%s1 + $0x18] sm:$0x7]
      %v597 = vld [vmem:[%s2] sm:$0x1]
      %v598 = vld [vmem:[#allocation2] sm:$0xff]
      %v599 = vld [vmem:[#allocation2 + $0x8] sm:$0xff]
      %v600 = vld [vmem:[#allocation2 + $0x18] sm:$0xff]
      %v601 = vld [vmem:[#allocation2 + $0x20] sm:$0xff]
      %v602 = vld [vmem:[#allocation2 + $0x30] sm:$0xff]
      %v603 = vld [vmem:[#allocation2 + $0x38] sm:$0xff]
      %v604 = vld [vmem:[#allocation2 + $0x48] sm:$0xff]
      %v605 = vld [vmem:[#allocation2 + $0x50] sm:$0xff]
      %v606 = vld [vmem:[#allocation2 + $0x60] sm:$0xff]
      %v607 = vld [vmem:[#allocation2 + $0x68] sm:$0xff]
      %v608 = vld [vmem:[#allocation2 + $0x78] sm:$0xff]
      %v609 = vld [vmem:[#allocation2 + $0x80] sm:$0xff]
      %v610 = vld [vmem:[#allocation2 + $0x90] sm:$0xff]
      %v611 = vld [vmem:[#allocation2 + $0x98] sm:$0xff]
      %v612 = vld [vmem:[#allocation2 + $0xa8] sm:$0xff]
      %v613 = vld [vmem:[#allocation2 + $0xb0] sm:$0xff]
      %v614 = vld [vmem:[#allocation2 + $0xc0] sm:$0xff]
      %v615 = vld [vmem:[#allocation2 + $0xc8] sm:$0xff]
      %v616 = vld [vmem:[#allocation2 + $0xd8] sm:$0xff]
      %v617 = vld [vmem:[#allocation2 + $0xe0] sm:$0xff]
      %v618 = vld [vmem:[#allocation2 + $0xf0] sm:$0xff]
      %v619 = vld [vmem:[#allocation2 + $0xf8] sm:$0xff]
      %v620 = vld [vmem:[#allocation2 + $0x108] sm:$0xff]
      %v621 = vld [vmem:[#allocation2 + $0x110] sm:$0xff]
      %v622 = vld [vmem:[#allocation2 + $0x120] sm:$0xff]
      %v623 = vld [vmem:[#allocation2 + $0x128] sm:$0xff]
      %v624 = vld [vmem:[#allocation2 + $0x138] sm:$0xff]
      %v625 = vld [vmem:[#allocation2 + $0x140] sm:$0xff]
      %v626 = vld [vmem:[#allocation2 + $0x150] sm:$0xff]
      %v627 = vld [vmem:[#allocation2 + $0x158] sm:$0xff]
      %v628 = vld [vmem:[#allocation2 + $0x168] sm:$0xff]
      %v629 = vld [vmem:[#allocation2 + $0x170] sm:$0xff]
      %v630 = vld [vmem:[#allocation2 + $0x1] sm:$0xff]
      %v631 = vld [vmem:[#allocation2 + $0x9] sm:$0xff]
      %v632 = vld [vmem:[#allocation2 + $0x19] sm:$0xff]
      %v633 = vld [vmem:[#allocation2 + $0x21] sm:$0xff]
      %v634 = vld [vmem:[#allocation2 + $0x31] sm:$0xff]
      %v635 = vld [vmem:[#allocation2 + $0x39] sm:$0xff]
      %v636 = vld [vmem:[#allocation2 + $0x49] sm:$0xff]
      %v637 = vld [vmem:[#allocation2 + $0x51] sm:$0xff]
      %v638 = vld [vmem:[#allocation2 + $0x61] sm:$0xff]
      %v639 = vld [vmem:[#allocation2 + $0x69] sm:$0xff]
      %v640 = vld [vmem:[#allocation2 + $0x79] sm:$0xff]
      %v641 = vld [vmem:[#allocation2 + $0x81] sm:$0xff]
      %v642 = vld [vmem:[#allocation2 + $0x91] sm:$0xff]
      %v643 = vld [vmem:[#allocation2 + $0x99] sm:$0xff]
      %v644 = vld [vmem:[#allocation2 + $0xa9] sm:$0xff]
      %v645 = vld [vmem:[#allocation2 + $0xb1] sm:$0xff]
      %v646 = vld [vmem:[#allocation2 + $0xc1] sm:$0xff]
      %v647 = vld [vmem:[#allocation2 + $0xc9] sm:$0xff]
      %v648 = vld [vmem:[#allocation2 + $0xd9] sm:$0xff]
      %v649 = vld [vmem:[#allocation2 + $0xe1] sm:$0xff]
      %v650 = vld [vmem:[#allocation2 + $0xf1] sm:$0xff]
      %v651 = vld [vmem:[#allocation2 + $0xf9] sm:$0xff]
      %v652 = vld [vmem:[#allocation2 + $0x109] sm:$0xff]
      %v653 = vld [vmem:[#allocation2 + $0x111] sm:$0xff]
      %v654 = vld [vmem:[#allocation2 + $0x121] sm:$0xff]
      %v655 = vld [vmem:[#allocation2 + $0x129] sm:$0xff]
      %v656 = vld [vmem:[#allocation2 + $0x139] sm:$0xff]
      %v657 = vld [vmem:[#allocation2 + $0x141] sm:$0xff]
      %v658 = vld [vmem:[#allocation2 + $0x151] sm:$0xff]
      %v659 = vld [vmem:[#allocation2 + $0x159] sm:$0xff]
      %v660 = vld [vmem:[#allocation2 + $0x169] sm:$0xff]
      %v661 = vld [vmem:[#allocation2 + $0x171] sm:$0xff]
      %v662 = vld [vmem:[#allocation2 + $0x2] sm:$0xff]
      %v663 = vld [vmem:[#allocation2 + $0xa] sm:$0xff]
      %v664 = vld [vmem:[#allocation2 + $0x1a] sm:$0xff]
      %v665 = vld [vmem:[#allocation2 + $0x22] sm:$0xff]
      %v666 = vld [vmem:[#allocation2 + $0x32] sm:$0xff]
      %v667 = vld [vmem:[#allocation2 + $0x3a] sm:$0xff]
      %v668 = vld [vmem:[#allocation2 + $0x4a] sm:$0xff]
      %v669 = vld [vmem:[#allocation2 + $0x52] sm:$0xff]
      %v670 = vld [vmem:[#allocation2 + $0x62] sm:$0xff]
      %v671 = vld [vmem:[#allocation2 + $0x6a] sm:$0xff]
      %v672 = vld [vmem:[#allocation2 + $0x7a] sm:$0xff]
      %v673 = vld [vmem:[#allocation2 + $0x82] sm:$0xff]
      %v674 = vld [vmem:[#allocation2 + $0x92] sm:$0xff]
      %v675 = vld [vmem:[#allocation2 + $0x9a] sm:$0xff]
      %v676 = vld [vmem:[#allocation2 + $0xaa] sm:$0xff]
      %v677 = vld [vmem:[#allocation2 + $0xb2] sm:$0xff]
      %v678 = vld [vmem:[#allocation2 + $0xc2] sm:$0xff]
      %v679 = vld [vmem:[#allocation2 + $0xca] sm:$0xff]
      %v680 = vld [vmem:[#allocation2 + $0xda] sm:$0xff]
      %v681 = vld [vmem:[#allocation2 + $0xe2] sm:$0xff]
      %v682 = vld [vmem:[#allocation2 + $0xf2] sm:$0xff]
      %v683 = vld [vmem:[#allocation2 + $0xfa] sm:$0xff]
      %v684 = vld [vmem:[#allocation2 + $0x10a] sm:$0xff]
      %v685 = vld [vmem:[#allocation2 + $0x112] sm:$0xff]
      %v686 = vld [vmem:[#allocation2 + $0x122] sm:$0xff]
      %v687 = vld [vmem:[#allocation2 + $0x12a] sm:$0xff]
      %v688 = vld [vmem:[#allocation2 + $0x13a] sm:$0xff]
      %v689 = vld [vmem:[#allocation2 + $0x142] sm:$0xff]
      %v690 = vld [vmem:[#allocation2 + $0x152] sm:$0xff]
      %v691 = vld [vmem:[#allocation2 + $0x15a] sm:$0xff]
      %v692 = vld [vmem:[#allocation2 + $0x16a] sm:$0xff]
      %v693 = vld [vmem:[#allocation2 + $0x172] sm:$0xff]
      %v694 = vld [vmem:[%s451] sm:$0xff]
      %v695 = vld [vmem:[%s451 + $0x8] sm:$0xff]
      %v696 = vld [vmem:[%s451 + $0x18] sm:$0xff]
      %v697 = vld [vmem:[%s451 + $0x20] sm:$0xff]
      %v698 = vld [vmem:[%s451 + $0x30] sm:$0xff]
      %v699 = vld [vmem:[%s451 + $0x38] sm:$0xff]
      %v700 = vld [vmem:[%s451 + $0x48] sm:$0xff]
      %v701 = vld [vmem:[%s451 + $0x50] sm:$0xff]
      %v702 = vld [vmem:[%s451 + $0x60] sm:$0xff]
      %v703 = vld [vmem:[%s451 + $0x68] sm:$0xff]
      %v704 = vld [vmem:[%s451 + $0x78] sm:$0xff]
      %v705 = vld [vmem:[%s451 + $0x80] sm:$0xff]
      %v706 = vld [vmem:[%s451 + $0x90] sm:$0xff]
      %v707 = vld [vmem:[%s451 + $0x98] sm:$0xff]
      %v708 = vld [vmem:[%s451 + $0xa8] sm:$0xff]
      %v709 = vld [vmem:[%s451 + $0xb0] sm:$0xff]
      %v710 = vld [vmem:[%s451 + $0xc0] sm:$0xff]
      %v711 = vld [vmem:[%s451 + $0xc8] sm:$0xff]
      %v712 = vld [vmem:[%s451 + $0xd8] sm:$0xff]
      %v713 = vld [vmem:[%s451 + $0xe0] sm:$0xff]
      %v714 = vld [vmem:[%s451 + $0xf0] sm:$0xff]
      %v715 = vld [vmem:[%s451 + $0xf8] sm:$0xff]
      %v716 = vld [vmem:[%s451 + $0x108] sm:$0xff]
      %v717 = vld [vmem:[%s451 + $0x110] sm:$0xff]
      %v718 = vld [vmem:[%s451 + $0x120] sm:$0xff]
      %v719 = vld [vmem:[%s451 + $0x128] sm:$0xff]
      %v720 = vld [vmem:[%s451 + $0x138] sm:$0xff]
      %v721 = vld [vmem:[%s451 + $0x140] sm:$0xff]
      %v722 = vld [vmem:[%s451 + $0x150] sm:$0xff]
      %v723 = vld [vmem:[%s451 + $0x158] sm:$0xff]
      %v724 = vld [vmem:[%s451 + $0x168] sm:$0xff]
      %v725 = vld [vmem:[%s451 + $0x170] sm:$0xff]
      %v726 = vld [vmem:[%s451 + $0x1] sm:$0xff]
      %v727 = vld [vmem:[%s451 + $0x9] sm:$0xff]
      %v728 = vld [vmem:[%s451 + $0x19] sm:$0xff]
      %v729 = vld [vmem:[%s451 + $0x21] sm:$0xff]
      %v730 = vld [vmem:[%s451 + $0x31] sm:$0xff]
      %v731 = vld [vmem:[%s451 + $0x39] sm:$0xff]
      %v732 = vld [vmem:[%s451 + $0x49] sm:$0xff]
      %v733 = vld [vmem:[%s451 + $0x51] sm:$0xff]
      %v734 = vld [vmem:[%s451 + $0x61] sm:$0xff]
      %v735 = vld [vmem:[%s451 + $0x69] sm:$0xff]
      %v736 = vld [vmem:[%s451 + $0x79] sm:$0xff]
      %v737 = vld [vmem:[%s451 + $0x81] sm:$0xff]
      %v738 = vld [vmem:[%s451 + $0x91] sm:$0xff]
      %v739 = vld [vmem:[%s451 + $0x99] sm:$0xff]
      %v740 = vld [vmem:[%s451 + $0xa9] sm:$0xff]
      %v741 = vld [vmem:[%s451 + $0xb1] sm:$0xff]
      %v742 = vld [vmem:[%s451 + $0xc1] sm:$0xff]
      %v743 = vld [vmem:[%s451 + $0xc9] sm:$0xff]
      %v744 = vld [vmem:[%s451 + $0xd9] sm:$0xff]
      %v745 = vld [vmem:[%s451 + $0xe1] sm:$0xff]
      %v746 = vld [vmem:[%s451 + $0xf1] sm:$0xff]
      %v747 = vld [vmem:[%s451 + $0xf9] sm:$0xff]
      %v748 = vld [vmem:[%s451 + $0x109] sm:$0xff]
      %v749 = vld [vmem:[%s451 + $0x111] sm:$0xff]
      %v750 = vld [vmem:[%s451 + $0x121] sm:$0xff]
      %v751 = vld [vmem:[%s451 + $0x129] sm:$0xff]
      %v752 = vld [vmem:[%s451 + $0x139] sm:$0xff]
      %v753 = vld [vmem:[%s451 + $0x141] sm:$0xff]
      %v754 = vld [vmem:[%s451 + $0x151] sm:$0xff]
      %v755 = vld [vmem:[%s451 + $0x159] sm:$0xff]
      %v756 = vld [vmem:[%s451 + $0x169] sm:$0xff]
      %v757 = vld [vmem:[%s451 + $0x171] sm:$0xff]
      %v758 = vld [vmem:[%s451 + $0x2] sm:$0xff]
      %v759 = vld [vmem:[%s451 + $0xa] sm:$0xff]
      %v760 = vld [vmem:[%s451 + $0x1a] sm:$0xff]
      %v761 = vld [vmem:[%s451 + $0x22] sm:$0xff]
      %v762 = vld [vmem:[%s451 + $0x32] sm:$0xff]
      %v763 = vld [vmem:[%s451 + $0x3a] sm:$0xff]
      %v764 = vld [vmem:[%s451 + $0x4a] sm:$0xff]
      %v765 = vld [vmem:[%s451 + $0x52] sm:$0xff]
      %v766 = vld [vmem:[%s451 + $0x62] sm:$0xff]
      %v767 = vld [vmem:[%s451 + $0x6a] sm:$0xff]
      %v768 = vld [vmem:[%s451 + $0x7a] sm:$0xff]
      %v769 = vld [vmem:[%s451 + $0x82] sm:$0xff]
      %v770 = vld [vmem:[%s451 + $0x92] sm:$0xff]
      %v771 = vld [vmem:[%s451 + $0x9a] sm:$0xff]
      %v772 = vld [vmem:[%s451 + $0xaa] sm:$0xff]
      %v773 = vld [vmem:[%s451 + $0xb2] sm:$0xff]
      %v774 = vld [vmem:[%s451 + $0xc2] sm:$0xff]
      %v775 = vld [vmem:[%s451 + $0xca] sm:$0xff]
      %v776 = vld [vmem:[%s451 + $0xda] sm:$0xff]
      %v777 = vld [vmem:[%s451 + $0xe2] sm:$0xff]
      %v778 = vld [vmem:[%s451 + $0xf2] sm:$0xff]
      %v779 = vld [vmem:[%s451 + $0xfa] sm:$0xff]
      %v780 = vld [vmem:[%s451 + $0x10a] sm:$0xff]
      %v781 = vld [vmem:[%s451 + $0x112] sm:$0xff]
      %v782 = vld [vmem:[%s451 + $0x122] sm:$0xff]
      %v783 = vld [vmem:[%s451 + $0x12a] sm:$0xff]
      %v784 = vld [vmem:[%s451 + $0x13a] sm:$0xff]
      %v785 = vld [vmem:[%s451 + $0x142] sm:$0xff]
      %v786 = vld [vmem:[%s451 + $0x152] sm:$0xff]
      %v787 = vld [vmem:[%s451 + $0x15a] sm:$0xff]
      %v788 = vld [vmem:[%s451 + $0x16a] sm:$0xff]
      %v789 = vld [vmem:[%s451 + $0x172] sm:$0xff]
      %s790 = scalar_lea.vmem [#allocation2], 48
      %v791 = vld [vmem:[%s790] sm:$0xff]
      %v792 = vld [vmem:[%s790 + $0x8] sm:$0xff]
      %v793 = vld [vmem:[%s790 + $0x18] sm:$0xff]
      %v794 = vld [vmem:[%s790 + $0x20] sm:$0xff]
      %v795 = vld [vmem:[%s790 + $0x30] sm:$0xff]
      %v796 = vld [vmem:[%s790 + $0x38] sm:$0xff]
      %v797 = vld [vmem:[%s790 + $0x48] sm:$0xff]
      %v798 = vld [vmem:[%s790 + $0x50] sm:$0xff]
      %v799 = vld [vmem:[%s790 + $0x60] sm:$0xff]
      %v800 = vld [vmem:[%s790 + $0x68] sm:$0xff]
      %v801 = vld [vmem:[%s790 + $0x78] sm:$0xff]
      %v802 = vld [vmem:[%s790 + $0x80] sm:$0xff]
      %v803 = vld [vmem:[%s790 + $0x90] sm:$0xff]
      %v804 = vld [vmem:[%s790 + $0x98] sm:$0xff]
      %v805 = vld [vmem:[%s790 + $0xa8] sm:$0xff]
      %v806 = vld [vmem:[%s790 + $0xb0] sm:$0xff]
      %v807 = vld [vmem:[%s790 + $0xc0] sm:$0xff]
      %v808 = vld [vmem:[%s790 + $0xc8] sm:$0xff]
      %v809 = vld [vmem:[%s790 + $0xd8] sm:$0xff]
      %v810 = vld [vmem:[%s790 + $0xe0] sm:$0xff]
      %v811 = vld [vmem:[%s790 + $0xf0] sm:$0xff]
      %v812 = vld [vmem:[%s790 + $0xf8] sm:$0xff]
      %v813 = vld [vmem:[%s790 + $0x108] sm:$0xff]
      %v814 = vld [vmem:[%s790 + $0x110] sm:$0xff]
      %v815 = vld [vmem:[%s790 + $0x120] sm:$0xff]
      %v816 = vld [vmem:[%s790 + $0x128] sm:$0xff]
      %v817 = vld [vmem:[%s790 + $0x138] sm:$0xff]
      %v818 = vld [vmem:[%s790 + $0x140] sm:$0xff]
      %v819 = vld [vmem:[%s790 + $0x150] sm:$0xff]
      %v820 = vld [vmem:[%s790 + $0x158] sm:$0xff]
      %v821 = vld [vmem:[%s790 + $0x168] sm:$0xff]
      %v822 = vld [vmem:[%s790 + $0x170] sm:$0xff]
      %v823 = vld [vmem:[%s790 + $0x1] sm:$0xff]
      %v824 = vld [vmem:[%s790 + $0x9] sm:$0xff]
      %v825 = vld [vmem:[%s790 + $0x19] sm:$0xff]
      %v826 = vld [vmem:[%s790 + $0x21] sm:$0xff]
      %v827 = vld [vmem:[%s790 + $0x31] sm:$0xff]
      %v828 = vld [vmem:[%s790 + $0x39] sm:$0xff]
      %v829 = vld [vmem:[%s790 + $0x49] sm:$0xff]
      %v830 = vld [vmem:[%s790 + $0x51] sm:$0xff]
      %v831 = vld [vmem:[%s790 + $0x61] sm:$0xff]
      %v832 = vld [vmem:[%s790 + $0x69] sm:$0xff]
      %v833 = vld [vmem:[%s790 + $0x79] sm:$0xff]
      %v834 = vld [vmem:[%s790 + $0x81] sm:$0xff]
      %v835 = vld [vmem:[%s790 + $0x91] sm:$0xff]
      %v836 = vld [vmem:[%s790 + $0x99] sm:$0xff]
      %v837 = vld [vmem:[%s790 + $0xa9] sm:$0xff]
      %v838 = vld [vmem:[%s790 + $0xb1] sm:$0xff]
      %v839 = vld [vmem:[%s790 + $0xc1] sm:$0xff]
      %v840 = vld [vmem:[%s790 + $0xc9] sm:$0xff]
      %v841 = vld [vmem:[%s790 + $0xd9] sm:$0xff]
      %v842 = vld [vmem:[%s790 + $0xe1] sm:$0xff]
      %v843 = vld [vmem:[%s790 + $0xf1] sm:$0xff]
      %v844 = vld [vmem:[%s790 + $0xf9] sm:$0xff]
      %v845 = vld [vmem:[%s790 + $0x109] sm:$0xff]
      %v846 = vld [vmem:[%s790 + $0x111] sm:$0xff]
      %v847 = vld [vmem:[%s790 + $0x121] sm:$0xff]
      %v848 = vld [vmem:[%s790 + $0x129] sm:$0xff]
      %v849 = vld [vmem:[%s790 + $0x139] sm:$0xff]
      %v850 = vld [vmem:[%s790 + $0x141] sm:$0xff]
      %v851 = vld [vmem:[%s790 + $0x151] sm:$0xff]
      %v852 = vld [vmem:[%s790 + $0x159] sm:$0xff]
      %v853 = vld [vmem:[%s790 + $0x169] sm:$0xff]
      %v854 = vld [vmem:[%s790 + $0x171] sm:$0xff]
      %v855 = vld [vmem:[%s790 + $0x2] sm:$0xff]
      %v856 = vld [vmem:[%s790 + $0xa] sm:$0xff]
      %v857 = vld [vmem:[%s790 + $0x1a] sm:$0xff]
      %v858 = vld [vmem:[%s790 + $0x22] sm:$0xff]
      %v859 = vld [vmem:[%s790 + $0x32] sm:$0xff]
      %v860 = vld [vmem:[%s790 + $0x3a] sm:$0xff]
      %v861 = vld [vmem:[%s790 + $0x4a] sm:$0xff]
      %v862 = vld [vmem:[%s790 + $0x52] sm:$0xff]
      %v863 = vld [vmem:[%s790 + $0x62] sm:$0xff]
      %v864 = vld [vmem:[%s790 + $0x6a] sm:$0xff]
      %v865 = vld [vmem:[%s790 + $0x7a] sm:$0xff]
      %v866 = vld [vmem:[%s790 + $0x82] sm:$0xff]
      %v867 = vld [vmem:[%s790 + $0x92] sm:$0xff]
      %v868 = vld [vmem:[%s790 + $0x9a] sm:$0xff]
      %v869 = vld [vmem:[%s790 + $0xaa] sm:$0xff]
      %v870 = vld [vmem:[%s790 + $0xb2] sm:$0xff]
      %v871 = vld [vmem:[%s790 + $0xc2] sm:$0xff]
      %v872 = vld [vmem:[%s790 + $0xca] sm:$0xff]
      %v873 = vld [vmem:[%s790 + $0xda] sm:$0xff]
      %v874 = vld [vmem:[%s790 + $0xe2] sm:$0xff]
      %v875 = vld [vmem:[%s790 + $0xf2] sm:$0xff]
      %v876 = vld [vmem:[%s790 + $0xfa] sm:$0xff]
      %v877 = vld [vmem:[%s790 + $0x10a] sm:$0xff]
      %v878 = vld [vmem:[%s790 + $0x112] sm:$0xff]
      %v879 = vld [vmem:[%s790 + $0x122] sm:$0xff]
      %v880 = vld [vmem:[%s790 + $0x12a] sm:$0xff]
      %v881 = vld [vmem:[%s790 + $0x13a] sm:$0xff]
      %v882 = vld [vmem:[%s790 + $0x142] sm:$0xff]
      %v883 = vld [vmem:[%s790 + $0x152] sm:$0xff]
      %v884 = vld [vmem:[%s790 + $0x15a] sm:$0xff]
      %v885 = vld [vmem:[%s790 + $0x16a] sm:$0xff]
      %v886 = vld [vmem:[%s790 + $0x172] sm:$0xff]
      %919 = vrot.lane.b32.xlu0 %v630, 6
      %v920 = vpop.permute.xlu0 %919
      %921 = vrot.lane.b32.xlu0 %v631, 6
      %v922 = vpop.permute.xlu0 %921
      %923 = vrot.lane.b32.xlu0 %v632, 6
      %v924 = vpop.permute.xlu0 %923
      %925 = vrot.lane.b32.xlu0 %v633, 6
      %v926 = vpop.permute.xlu0 %925
      %927 = vrot.lane.b32.xlu0 %v634, 6
      %v928 = vpop.permute.xlu0 %927
      %929 = vrot.lane.b32.xlu0 %v635, 6
      %v930 = vpop.permute.xlu0 %929
      %931 = vrot.lane.b32.xlu0 %v636, 6
      %v932 = vpop.permute.xlu0 %931
      %933 = vrot.lane.b32.xlu0 %v637, 6
      %v934 = vpop.permute.xlu0 %933
      %935 = vrot.lane.b32.xlu0 %v638, 6
      %v936 = vpop.permute.xlu0 %935
      %937 = vrot.lane.b32.xlu0 %v639, 6
      %v938 = vpop.permute.xlu0 %937
      %939 = vrot.lane.b32.xlu0 %v640, 6
      %v940 = vpop.permute.xlu0 %939
      %941 = vrot.lane.b32.xlu0 %v641, 6
      %v942 = vpop.permute.xlu0 %941
      %943 = vrot.lane.b32.xlu0 %v642, 6
      %v944 = vpop.permute.xlu0 %943
      %945 = vrot.lane.b32.xlu0 %v643, 6
      %v946 = vpop.permute.xlu0 %945
      %947 = vrot.lane.b32.xlu0 %v644, 6
      %v948 = vpop.permute.xlu0 %947
      %949 = vrot.lane.b32.xlu0 %v645, 6
      %v950 = vpop.permute.xlu0 %949
      %951 = vrot.lane.b32.xlu0 %v646, 6
      %v952 = vpop.permute.xlu0 %951
      %953 = vrot.lane.b32.xlu0 %v647, 6
      %v954 = vpop.permute.xlu0 %953
      %955 = vrot.lane.b32.xlu0 %v648, 6
      %v956 = vpop.permute.xlu0 %955
      %957 = vrot.lane.b32.xlu0 %v649, 6
      %v958 = vpop.permute.xlu0 %957
      %959 = vrot.lane.b32.xlu0 %v650, 6
      %v960 = vpop.permute.xlu0 %959
      %961 = vrot.lane.b32.xlu0 %v651, 6
      %v962 = vpop.permute.xlu0 %961
      %963 = vrot.lane.b32.xlu0 %v652, 6
      %v964 = vpop.permute.xlu0 %963
      %965 = vrot.lane.b32.xlu0 %v653, 6
      %v966 = vpop.permute.xlu0 %965
      %967 = vrot.lane.b32.xlu0 %v654, 6
      %v968 = vpop.permute.xlu0 %967
      %969 = vrot.lane.b32.xlu0 %v655, 6
      %v970 = vpop.permute.xlu0 %969
      %971 = vrot.lane.b32.xlu0 %v656, 6
      %v972 = vpop.permute.xlu0 %971
      %973 = vrot.lane.b32.xlu0 %v657, 6
      %v974 = vpop.permute.xlu0 %973
      %975 = vrot.lane.b32.xlu0 %v658, 6
      %v976 = vpop.permute.xlu0 %975
      %977 = vrot.lane.b32.xlu0 %v659, 6
      %v978 = vpop.permute.xlu0 %977
      %979 = vrot.lane.b32.xlu0 %v660, 6
      %v980 = vpop.permute.xlu0 %979
      %981 = vrot.lane.b32.xlu0 %v661, 6
      %v982 = vpop.permute.xlu0 %981
      %1047 = vrot.lane.b32.xlu0 %v662, 12
      %v1048 = vpop.permute.xlu0 %1047
      %1049 = vrot.lane.b32.xlu0 %v663, 12
      %v1050 = vpop.permute.xlu0 %1049
      %1051 = vrot.lane.b32.xlu0 %v664, 12
      %v1052 = vpop.permute.xlu0 %1051
      %1053 = vrot.lane.b32.xlu0 %v665, 12
      %v1054 = vpop.permute.xlu0 %1053
      %1055 = vrot.lane.b32.xlu0 %v666, 12
      %v1056 = vpop.permute.xlu0 %1055
      %1057 = vrot.lane.b32.xlu0 %v667, 12
      %v1058 = vpop.permute.xlu0 %1057
      %1059 = vrot.lane.b32.xlu0 %v668, 12
      %v1060 = vpop.permute.xlu0 %1059
      %1061 = vrot.lane.b32.xlu0 %v669, 12
      %v1062 = vpop.permute.xlu0 %1061
      %1063 = vrot.lane.b32.xlu0 %v670, 12
      %v1064 = vpop.permute.xlu0 %1063
      %1065 = vrot.lane.b32.xlu0 %v671, 12
      %v1066 = vpop.permute.xlu0 %1065
      %1067 = vrot.lane.b32.xlu0 %v672, 12
      %v1068 = vpop.permute.xlu0 %1067
      %1069 = vrot.lane.b32.xlu0 %v673, 12
      %v1070 = vpop.permute.xlu0 %1069
      %1071 = vrot.lane.b32.xlu0 %v674, 12
      %v1072 = vpop.permute.xlu0 %1071
      %1073 = vrot.lane.b32.xlu0 %v675, 12
      %v1074 = vpop.permute.xlu0 %1073
      %1075 = vrot.lane.b32.xlu0 %v676, 12
      %v1076 = vpop.permute.xlu0 %1075
      %1077 = vrot.lane.b32.xlu0 %v677, 12
      %v1078 = vpop.permute.xlu0 %1077
      %1079 = vrot.lane.b32.xlu0 %v678, 12
      %v1080 = vpop.permute.xlu0 %1079
      %1081 = vrot.lane.b32.xlu0 %v679, 12
      %v1082 = vpop.permute.xlu0 %1081
      %1083 = vrot.lane.b32.xlu0 %v680, 12
      %v1084 = vpop.permute.xlu0 %1083
      %1085 = vrot.lane.b32.xlu0 %v681, 12
      %v1086 = vpop.permute.xlu0 %1085
      %1087 = vrot.lane.b32.xlu0 %v682, 12
      %v1088 = vpop.permute.xlu0 %1087
      %1089 = vrot.lane.b32.xlu0 %v683, 12
      %v1090 = vpop.permute.xlu0 %1089
      %1091 = vrot.lane.b32.xlu0 %v684, 12
      %v1092 = vpop.permute.xlu0 %1091
      %1093 = vrot.lane.b32.xlu0 %v685, 12
      %v1094 = vpop.permute.xlu0 %1093
      %1095 = vrot.lane.b32.xlu0 %v686, 12
      %v1096 = vpop.permute.xlu0 %1095
      %1097 = vrot.lane.b32.xlu0 %v687, 12
      %v1098 = vpop.permute.xlu0 %1097
      %1099 = vrot.lane.b32.xlu0 %v688, 12
      %v1100 = vpop.permute.xlu0 %1099
      %1101 = vrot.lane.b32.xlu0 %v689, 12
      %v1102 = vpop.permute.xlu0 %1101
      %1103 = vrot.lane.b32.xlu0 %v690, 12
      %v1104 = vpop.permute.xlu0 %1103
      %1105 = vrot.lane.b32.xlu0 %v691, 12
      %v1106 = vpop.permute.xlu0 %1105
      %1107 = vrot.lane.b32.xlu0 %v692, 12
      %v1108 = vpop.permute.xlu0 %1107
      %1109 = vrot.lane.b32.xlu0 %v693, 12
      %v1110 = vpop.permute.xlu0 %1109
      %1175 = vrot.lane.b32.xlu0 %v694, 18
      %v1176 = vpop.permute.xlu0 %1175
      %1177 = vrot.lane.b32.xlu0 %v695, 18
      %v1178 = vpop.permute.xlu0 %1177
      %1179 = vrot.lane.b32.xlu0 %v696, 18
      %v1180 = vpop.permute.xlu0 %1179
      %1181 = vrot.lane.b32.xlu0 %v697, 18
      %v1182 = vpop.permute.xlu0 %1181
      %1183 = vrot.lane.b32.xlu0 %v698, 18
      %v1184 = vpop.permute.xlu0 %1183
      %1185 = vrot.lane.b32.xlu0 %v699, 18
      %v1186 = vpop.permute.xlu0 %1185
      %1187 = vrot.lane.b32.xlu0 %v700, 18
      %v1188 = vpop.permute.xlu0 %1187
      %1189 = vrot.lane.b32.xlu0 %v701, 18
      %v1190 = vpop.permute.xlu0 %1189
      %1191 = vrot.lane.b32.xlu0 %v702, 18
      %v1192 = vpop.permute.xlu0 %1191
      %1193 = vrot.lane.b32.xlu0 %v703, 18
      %v1194 = vpop.permute.xlu0 %1193
      %1195 = vrot.lane.b32.xlu0 %v704, 18
      %v1196 = vpop.permute.xlu0 %1195
      %1197 = vrot.lane.b32.xlu0 %v705, 18
      %v1198 = vpop.permute.xlu0 %1197
      %1199 = vrot.lane.b32.xlu0 %v706, 18
      %v1200 = vpop.permute.xlu0 %1199
      %1201 = vrot.lane.b32.xlu0 %v707, 18
      %v1202 = vpop.permute.xlu0 %1201
      %1203 = vrot.lane.b32.xlu0 %v708, 18
      %v1204 = vpop.permute.xlu0 %1203
      %1205 = vrot.lane.b32.xlu0 %v709, 18
      %v1206 = vpop.permute.xlu0 %1205
      %1207 = vrot.lane.b32.xlu0 %v710, 18
      %v1208 = vpop.permute.xlu0 %1207
      %1209 = vrot.lane.b32.xlu0 %v711, 18
      %v1210 = vpop.permute.xlu0 %1209
      %1211 = vrot.lane.b32.xlu0 %v712, 18
      %v1212 = vpop.permute.xlu0 %1211
      %1213 = vrot.lane.b32.xlu0 %v713, 18
      %v1214 = vpop.permute.xlu0 %1213
      %1215 = vrot.lane.b32.xlu0 %v714, 18
      %v1216 = vpop.permute.xlu0 %1215
      %1217 = vrot.lane.b32.xlu0 %v715, 18
      %v1218 = vpop.permute.xlu0 %1217
      %1219 = vrot.lane.b32.xlu0 %v716, 18
      %v1220 = vpop.permute.xlu0 %1219
      %1221 = vrot.lane.b32.xlu0 %v717, 18
      %v1222 = vpop.permute.xlu0 %1221
      %1223 = vrot.lane.b32.xlu0 %v718, 18
      %v1224 = vpop.permute.xlu0 %1223
      %1225 = vrot.lane.b32.xlu0 %v719, 18
      %v1226 = vpop.permute.xlu0 %1225
      %1227 = vrot.lane.b32.xlu0 %v720, 18
      %v1228 = vpop.permute.xlu0 %1227
      %1229 = vrot.lane.b32.xlu0 %v721, 18
      %v1230 = vpop.permute.xlu0 %1229
      %1231 = vrot.lane.b32.xlu0 %v722, 18
      %v1232 = vpop.permute.xlu0 %1231
      %1233 = vrot.lane.b32.xlu0 %v723, 18
      %v1234 = vpop.permute.xlu0 %1233
      %1235 = vrot.lane.b32.xlu0 %v724, 18
      %v1236 = vpop.permute.xlu0 %1235
      %1237 = vrot.lane.b32.xlu0 %v725, 18
      %v1238 = vpop.permute.xlu0 %1237
      %1303 = vrot.lane.b32.xlu0 %v726, 24
      %v1304 = vpop.permute.xlu0 %1303
      %1305 = vrot.lane.b32.xlu0 %v727, 24
      %v1306 = vpop.permute.xlu0 %1305
      %1307 = vrot.lane.b32.xlu0 %v728, 24
      %v1308 = vpop.permute.xlu0 %1307
      %1309 = vrot.lane.b32.xlu0 %v729, 24
      %v1310 = vpop.permute.xlu0 %1309
      %1311 = vrot.lane.b32.xlu0 %v730, 24
      %v1312 = vpop.permute.xlu0 %1311
      %1313 = vrot.lane.b32.xlu0 %v731, 24
      %v1314 = vpop.permute.xlu0 %1313
      %1315 = vrot.lane.b32.xlu0 %v732, 24
      %v1316 = vpop.permute.xlu0 %1315
      %1317 = vrot.lane.b32.xlu0 %v733, 24
      %v1318 = vpop.permute.xlu0 %1317
      %1319 = vrot.lane.b32.xlu0 %v734, 24
      %v1320 = vpop.permute.xlu0 %1319
      %1321 = vrot.lane.b32.xlu0 %v735, 24
      %v1322 = vpop.permute.xlu0 %1321
      %1323 = vrot.lane.b32.xlu0 %v736, 24
      %v1324 = vpop.permute.xlu0 %1323
      %1325 = vrot.lane.b32.xlu0 %v737, 24
      %v1326 = vpop.permute.xlu0 %1325
      %1327 = vrot.lane.b32.xlu0 %v738, 24
      %v1328 = vpop.permute.xlu0 %1327
      %1329 = vrot.lane.b32.xlu0 %v739, 24
      %v1330 = vpop.permute.xlu0 %1329
      %1331 = vrot.lane.b32.xlu0 %v740, 24
      %v1332 = vpop.permute.xlu0 %1331
      %1333 = vrot.lane.b32.xlu0 %v741, 24
      %v1334 = vpop.permute.xlu0 %1333
      %1335 = vrot.lane.b32.xlu0 %v742, 24
      %v1336 = vpop.permute.xlu0 %1335
      %1337 = vrot.lane.b32.xlu0 %v743, 24
      %v1338 = vpop.permute.xlu0 %1337
      %1339 = vrot.lane.b32.xlu0 %v744, 24
      %v1340 = vpop.permute.xlu0 %1339
      %1341 = vrot.lane.b32.xlu0 %v745, 24
      %v1342 = vpop.permute.xlu0 %1341
      %1343 = vrot.lane.b32.xlu0 %v746, 24
      %v1344 = vpop.permute.xlu0 %1343
      %1345 = vrot.lane.b32.xlu0 %v747, 24
      %v1346 = vpop.permute.xlu0 %1345
      %1347 = vrot.lane.b32.xlu0 %v748, 24
      %v1348 = vpop.permute.xlu0 %1347
      %1349 = vrot.lane.b32.xlu0 %v749, 24
      %v1350 = vpop.permute.xlu0 %1349
      %1351 = vrot.lane.b32.xlu0 %v750, 24
      %v1352 = vpop.permute.xlu0 %1351
      %1353 = vrot.lane.b32.xlu0 %v751, 24
      %v1354 = vpop.permute.xlu0 %1353
      %1355 = vrot.lane.b32.xlu0 %v752, 24
      %v1356 = vpop.permute.xlu0 %1355
      %1357 = vrot.lane.b32.xlu0 %v753, 24
      %v1358 = vpop.permute.xlu0 %1357
      %1359 = vrot.lane.b32.xlu0 %v754, 24
      %v1360 = vpop.permute.xlu0 %1359
      %1361 = vrot.lane.b32.xlu0 %v755, 24
      %v1362 = vpop.permute.xlu0 %1361
      %1363 = vrot.lane.b32.xlu0 %v756, 24
      %v1364 = vpop.permute.xlu0 %1363
      %1365 = vrot.lane.b32.xlu0 %v757, 24
      %v1366 = vpop.permute.xlu0 %1365
      %1431 = vrot.lane.b32.xlu0 %v758, 30
      %v1432 = vpop.permute.xlu0 %1431
      %1433 = vrot.lane.b32.xlu0 %v759, 30
      %v1434 = vpop.permute.xlu0 %1433
      %1435 = vrot.lane.b32.xlu0 %v760, 30
      %v1436 = vpop.permute.xlu0 %1435
      %1437 = vrot.lane.b32.xlu0 %v761, 30
      %v1438 = vpop.permute.xlu0 %1437
      %1439 = vrot.lane.b32.xlu0 %v762, 30
      %v1440 = vpop.permute.xlu0 %1439
      %1441 = vrot.lane.b32.xlu0 %v763, 30
      %v1442 = vpop.permute.xlu0 %1441
      %1443 = vrot.lane.b32.xlu0 %v764, 30
      %v1444 = vpop.permute.xlu0 %1443
      %1445 = vrot.lane.b32.xlu0 %v765, 30
      %v1446 = vpop.permute.xlu0 %1445
      %1447 = vrot.lane.b32.xlu0 %v766, 30
      %v1448 = vpop.permute.xlu0 %1447
      %1449 = vrot.lane.b32.xlu0 %v767, 30
      %v1450 = vpop.permute.xlu0 %1449
      %1451 = vrot.lane.b32.xlu0 %v768, 30
      %v1452 = vpop.permute.xlu0 %1451
      %1453 = vrot.lane.b32.xlu0 %v769, 30
      %v1454 = vpop.permute.xlu0 %1453
      %1455 = vrot.lane.b32.xlu0 %v770, 30
      %v1456 = vpop.permute.xlu0 %1455
      %1457 = vrot.lane.b32.xlu0 %v771, 30
      %v1458 = vpop.permute.xlu0 %1457
      %1459 = vrot.lane.b32.xlu0 %v772, 30
      %v1460 = vpop.permute.xlu0 %1459
      %1461 = vrot.lane.b32.xlu0 %v773, 30
      %v1462 = vpop.permute.xlu0 %1461
      %1463 = vrot.lane.b32.xlu0 %v774, 30
      %v1464 = vpop.permute.xlu0 %1463
      %1465 = vrot.lane.b32.xlu0 %v775, 30
      %v1466 = vpop.permute.xlu0 %1465
      %1467 = vrot.lane.b32.xlu0 %v776, 30
      %v1468 = vpop.permute.xlu0 %1467
      %1469 = vrot.lane.b32.xlu0 %v777, 30
      %v1470 = vpop.permute.xlu0 %1469
      %1471 = vrot.lane.b32.xlu0 %v778, 30
      %v1472 = vpop.permute.xlu0 %1471
      %1473 = vrot.lane.b32.xlu0 %v779, 30
      %v1474 = vpop.permute.xlu0 %1473
      %1475 = vrot.lane.b32.xlu0 %v780, 30
      %v1476 = vpop.permute.xlu0 %1475
      %1477 = vrot.lane.b32.xlu0 %v781, 30
      %v1478 = vpop.permute.xlu0 %1477
      %1479 = vrot.lane.b32.xlu0 %v782, 30
      %v1480 = vpop.permute.xlu0 %1479
      %1481 = vrot.lane.b32.xlu0 %v783, 30
      %v1482 = vpop.permute.xlu0 %1481
      %1483 = vrot.lane.b32.xlu0 %v784, 30
      %v1484 = vpop.permute.xlu0 %1483
      %1485 = vrot.lane.b32.xlu0 %v785, 30
      %v1486 = vpop.permute.xlu0 %1485
      %1487 = vrot.lane.b32.xlu0 %v786, 30
      %v1488 = vpop.permute.xlu0 %1487
      %1489 = vrot.lane.b32.xlu0 %v787, 30
      %v1490 = vpop.permute.xlu0 %1489
      %1491 = vrot.lane.b32.xlu0 %v788, 30
      %v1492 = vpop.permute.xlu0 %1491
      %1493 = vrot.lane.b32.xlu0 %v789, 30
      %v1494 = vpop.permute.xlu0 %1493
      %1559 = vrot.lane.b32.xlu0 %v791, 36
      %v1560 = vpop.permute.xlu0 %1559
      %1561 = vrot.lane.b32.xlu0 %v792, 36
      %v1562 = vpop.permute.xlu0 %1561
      %1563 = vrot.lane.b32.xlu0 %v793, 36
      %v1564 = vpop.permute.xlu0 %1563
      %1565 = vrot.lane.b32.xlu0 %v794, 36
      %v1566 = vpop.permute.xlu0 %1565
      %1567 = vrot.lane.b32.xlu0 %v795, 36
      %v1568 = vpop.permute.xlu0 %1567
      %1569 = vrot.lane.b32.xlu0 %v796, 36
      %v1570 = vpop.permute.xlu0 %1569
      %1571 = vrot.lane.b32.xlu0 %v797, 36
      %v1572 = vpop.permute.xlu0 %1571
      %1573 = vrot.lane.b32.xlu0 %v798, 36
      %v1574 = vpop.permute.xlu0 %1573
      %1575 = vrot.lane.b32.xlu0 %v799, 36
      %v1576 = vpop.permute.xlu0 %1575
      %1577 = vrot.lane.b32.xlu0 %v800, 36
      %v1578 = vpop.permute.xlu0 %1577
      %1579 = vrot.lane.b32.xlu0 %v801, 36
      %v1580 = vpop.permute.xlu0 %1579
      %1581 = vrot.lane.b32.xlu0 %v802, 36
      %v1582 = vpop.permute.xlu0 %1581
      %1583 = vrot.lane.b32.xlu0 %v803, 36
      %v1584 = vpop.permute.xlu0 %1583
      %1585 = vrot.lane.b32.xlu0 %v804, 36
      %v1586 = vpop.permute.xlu0 %1585
      %1587 = vrot.lane.b32.xlu0 %v805, 36
      %v1588 = vpop.permute.xlu0 %1587
      %1589 = vrot.lane.b32.xlu0 %v806, 36
      %v1590 = vpop.permute.xlu0 %1589
      %1591 = vrot.lane.b32.xlu0 %v807, 36
      %v1592 = vpop.permute.xlu0 %1591
      %1593 = vrot.lane.b32.xlu0 %v808, 36
      %v1594 = vpop.permute.xlu0 %1593
      %1595 = vrot.lane.b32.xlu0 %v809, 36
      %v1596 = vpop.permute.xlu0 %1595
      %1597 = vrot.lane.b32.xlu0 %v810, 36
      %v1598 = vpop.permute.xlu0 %1597
      %1599 = vrot.lane.b32.xlu0 %v811, 36
      %v1600 = vpop.permute.xlu0 %1599
      %1601 = vrot.lane.b32.xlu0 %v812, 36
      %v1602 = vpop.permute.xlu0 %1601
      %1603 = vrot.lane.b32.xlu0 %v813, 36
      %v1604 = vpop.permute.xlu0 %1603
      %1605 = vrot.lane.b32.xlu0 %v814, 36
      %v1606 = vpop.permute.xlu0 %1605
      %1607 = vrot.lane.b32.xlu0 %v815, 36
      %v1608 = vpop.permute.xlu0 %1607
      %1609 = vrot.lane.b32.xlu0 %v816, 36
      %v1610 = vpop.permute.xlu0 %1609
      %1611 = vrot.lane.b32.xlu0 %v817, 36
      %v1612 = vpop.permute.xlu0 %1611
      %1613 = vrot.lane.b32.xlu0 %v818, 36
      %v1614 = vpop.permute.xlu0 %1613
      %1615 = vrot.lane.b32.xlu0 %v819, 36
      %v1616 = vpop.permute.xlu0 %1615
      %1617 = vrot.lane.b32.xlu0 %v820, 36
      %v1618 = vpop.permute.xlu0 %1617
      %1619 = vrot.lane.b32.xlu0 %v821, 36
      %v1620 = vpop.permute.xlu0 %1619
      %1621 = vrot.lane.b32.xlu0 %v822, 36
      %v1622 = vpop.permute.xlu0 %1621
      %1687 = vrot.lane.b32.xlu0 %v823, 42
      %v1688 = vpop.permute.xlu0 %1687
      %1689 = vrot.lane.b32.xlu0 %v824, 42
      %v1690 = vpop.permute.xlu0 %1689
      %1691 = vrot.lane.b32.xlu0 %v825, 42
      %v1692 = vpop.permute.xlu0 %1691
      %1693 = vrot.lane.b32.xlu0 %v826, 42
      %v1694 = vpop.permute.xlu0 %1693
      %1695 = vrot.lane.b32.xlu0 %v827, 42
      %v1696 = vpop.permute.xlu0 %1695
      %1697 = vrot.lane.b32.xlu0 %v828, 42
      %v1698 = vpop.permute.xlu0 %1697
      %1699 = vrot.lane.b32.xlu0 %v829, 42
      %v1700 = vpop.permute.xlu0 %1699
      %1701 = vrot.lane.b32.xlu0 %v830, 42
      %v1702 = vpop.permute.xlu0 %1701
      %1703 = vrot.lane.b32.xlu0 %v831, 42
      %v1704 = vpop.permute.xlu0 %1703
      %1705 = vrot.lane.b32.xlu0 %v832, 42
      %v1706 = vpop.permute.xlu0 %1705
      %1707 = vrot.lane.b32.xlu0 %v833, 42
      %v1708 = vpop.permute.xlu0 %1707
      %1709 = vrot.lane.b32.xlu0 %v834, 42
      %v1710 = vpop.permute.xlu0 %1709
      %1711 = vrot.lane.b32.xlu0 %v835, 42
      %v1712 = vpop.permute.xlu0 %1711
      %1713 = vrot.lane.b32.xlu0 %v836, 42
      %v1714 = vpop.permute.xlu0 %1713
      %1715 = vrot.lane.b32.xlu0 %v837, 42
      %v1716 = vpop.permute.xlu0 %1715
      %1717 = vrot.lane.b32.xlu0 %v838, 42
      %v1718 = vpop.permute.xlu0 %1717
      %1719 = vrot.lane.b32.xlu0 %v839, 42
      %v1720 = vpop.permute.xlu0 %1719
      %1721 = vrot.lane.b32.xlu0 %v840, 42
      %v1722 = vpop.permute.xlu0 %1721
      %1723 = vrot.lane.b32.xlu0 %v841, 42
      %v1724 = vpop.permute.xlu0 %1723
      %1725 = vrot.lane.b32.xlu0 %v842, 42
      %v1726 = vpop.permute.xlu0 %1725
      %1727 = vrot.lane.b32.xlu0 %v843, 42
      %v1728 = vpop.permute.xlu0 %1727
      %1729 = vrot.lane.b32.xlu0 %v844, 42
      %v1730 = vpop.permute.xlu0 %1729
      %1731 = vrot.lane.b32.xlu0 %v845, 42
      %v1732 = vpop.permute.xlu0 %1731
      %1733 = vrot.lane.b32.xlu0 %v846, 42
      %v1734 = vpop.permute.xlu0 %1733
      %1735 = vrot.lane.b32.xlu0 %v847, 42
      %v1736 = vpop.permute.xlu0 %1735
      %1737 = vrot.lane.b32.xlu0 %v848, 42
      %v1738 = vpop.permute.xlu0 %1737
      %1739 = vrot.lane.b32.xlu0 %v849, 42
      %v1740 = vpop.permute.xlu0 %1739
      %1741 = vrot.lane.b32.xlu0 %v850, 42
      %v1742 = vpop.permute.xlu0 %1741
      %1743 = vrot.lane.b32.xlu0 %v851, 42
      %v1744 = vpop.permute.xlu0 %1743
      %1745 = vrot.lane.b32.xlu0 %v852, 42
      %v1746 = vpop.permute.xlu0 %1745
      %1747 = vrot.lane.b32.xlu0 %v853, 42
      %v1748 = vpop.permute.xlu0 %1747
      %1749 = vrot.lane.b32.xlu0 %v854, 42
      %v1750 = vpop.permute.xlu0 %1749
      %1815 = vrot.lane.b32.xlu0 %v855, 48
      %v1816 = vpop.permute.xlu0 %1815
      %1817 = vrot.lane.b32.xlu0 %v856, 48
      %v1818 = vpop.permute.xlu0 %1817
      %1819 = vrot.lane.b32.xlu0 %v857, 48
      %v1820 = vpop.permute.xlu0 %1819
      %1821 = vrot.lane.b32.xlu0 %v858, 48
      %v1822 = vpop.permute.xlu0 %1821
      %1823 = vrot.lane.b32.xlu0 %v859, 48
      %v1824 = vpop.permute.xlu0 %1823
      %1825 = vrot.lane.b32.xlu0 %v860, 48
      %v1826 = vpop.permute.xlu0 %1825
      %1827 = vrot.lane.b32.xlu0 %v861, 48
      %v1828 = vpop.permute.xlu0 %1827
      %1829 = vrot.lane.b32.xlu0 %v862, 48
      %v1830 = vpop.permute.xlu0 %1829
      %1831 = vrot.lane.b32.xlu0 %v863, 48
      %v1832 = vpop.permute.xlu0 %1831
      %1833 = vrot.lane.b32.xlu0 %v864, 48
      %v1834 = vpop.permute.xlu0 %1833
      %1835 = vrot.lane.b32.xlu0 %v865, 48
      %v1836 = vpop.permute.xlu0 %1835
      %1837 = vrot.lane.b32.xlu0 %v866, 48
      %v1838 = vpop.permute.xlu0 %1837
      %1839 = vrot.lane.b32.xlu0 %v867, 48
      %v1840 = vpop.permute.xlu0 %1839
      %1841 = vrot.lane.b32.xlu0 %v868, 48
      %v1842 = vpop.permute.xlu0 %1841
      %1843 = vrot.lane.b32.xlu0 %v869, 48
      %v1844 = vpop.permute.xlu0 %1843
      %1845 = vrot.lane.b32.xlu0 %v870, 48
      %v1846 = vpop.permute.xlu0 %1845
      %1847 = vrot.lane.b32.xlu0 %v871, 48
      %v1848 = vpop.permute.xlu0 %1847
      %1849 = vrot.lane.b32.xlu0 %v872, 48
      %v1850 = vpop.permute.xlu0 %1849
      %1851 = vrot.lane.b32.xlu0 %v873, 48
      %v1852 = vpop.permute.xlu0 %1851
      %1853 = vrot.lane.b32.xlu0 %v874, 48
      %v1854 = vpop.permute.xlu0 %1853
      %1855 = vrot.lane.b32.xlu0 %v875, 48
      %v1856 = vpop.permute.xlu0 %1855
      %1857 = vrot.lane.b32.xlu0 %v876, 48
      %v1858 = vpop.permute.xlu0 %1857
      %1859 = vrot.lane.b32.xlu0 %v877, 48
      %v1860 = vpop.permute.xlu0 %1859
      %1861 = vrot.lane.b32.xlu0 %v878, 48
      %v1862 = vpop.permute.xlu0 %1861
      %1863 = vrot.lane.b32.xlu0 %v879, 48
      %v1864 = vpop.permute.xlu0 %1863
      %1865 = vrot.lane.b32.xlu0 %v880, 48
      %v1866 = vpop.permute.xlu0 %1865
      %1867 = vrot.lane.b32.xlu0 %v881, 48
      %v1868 = vpop.permute.xlu0 %1867
      %1869 = vrot.lane.b32.xlu0 %v882, 48
      %v1870 = vpop.permute.xlu0 %1869
      %1871 = vrot.lane.b32.xlu0 %v883, 48
      %v1872 = vpop.permute.xlu0 %1871
      %1873 = vrot.lane.b32.xlu0 %v884, 48
      %v1874 = vpop.permute.xlu0 %1873
      %1875 = vrot.lane.b32.xlu0 %v885, 48
      %v1876 = vpop.permute.xlu0 %1875
      %1877 = vrot.lane.b32.xlu0 %v886, 48
      %v1878 = vpop.permute.xlu0 %1877
      %v1911 = vsel %vm557, %v598, %v920
      %v1912 = vsel %vm557, %v599, %v922
      %v1913 = vsel %vm557, %v600, %v924
      %v1914 = vsel %vm557, %v601, %v926
      %v1915 = vsel %vm557, %v602, %v928
      %v1916 = vsel %vm557, %v603, %v930
      %v1917 = vsel %vm557, %v604, %v932
      %v1918 = vsel %vm557, %v605, %v934
      %v1919 = vsel %vm557, %v606, %v936
      %v1920 = vsel %vm557, %v607, %v938
      %v1921 = vsel %vm557, %v608, %v940
      %v1922 = vsel %vm557, %v609, %v942
      %v1923 = vsel %vm557, %v610, %v944
      %v1924 = vsel %vm557, %v611, %v946
      %v1925 = vsel %vm557, %v612, %v948
      %v1926 = vsel %vm557, %v613, %v950
      %v1927 = vsel %vm557, %v614, %v952
      %v1928 = vsel %vm557, %v615, %v954
      %v1929 = vsel %vm557, %v616, %v956
      %v1930 = vsel %vm557, %v617, %v958
      %v1931 = vsel %vm557, %v618, %v960
      %v1932 = vsel %vm557, %v619, %v962
      %v1933 = vsel %vm557, %v620, %v964
      %v1934 = vsel %vm557, %v621, %v966
      %v1935 = vsel %vm557, %v622, %v968
      %v1936 = vsel %vm557, %v623, %v970
      %v1937 = vsel %vm557, %v624, %v972
      %v1938 = vsel %vm557, %v625, %v974
      %v1939 = vsel %vm557, %v626, %v976
      %v1940 = vsel %vm557, %v627, %v978
      %v1941 = vsel %vm557, %v628, %v980
      %v1942 = vsel %vm557, %v629, %v982
      %vm1943 = vcmask 97280
      %v1944 = vsel %vm1943, %v1911, %v1048
      %v1945 = vsel %vm1943, %v1912, %v1050
      %v1946 = vsel %vm1943, %v1913, %v1052
      %v1947 = vsel %vm1943, %v1914, %v1054
      %v1948 = vsel %vm1943, %v1915, %v1056
      %v1949 = vsel %vm1943, %v1916, %v1058
      %v1950 = vsel %vm1943, %v1917, %v1060
      %v1951 = vsel %vm1943, %v1918, %v1062
      %v1952 = vsel %vm1943, %v1919, %v1064
      %v1953 = vsel %vm1943, %v1920, %v1066
      %v1954 = vsel %vm1943, %v1921, %v1068
      %v1955 = vsel %vm1943, %v1922, %v1070
      %v1956 = vsel %vm1943, %v1923, %v1072
      %v1957 = vsel %vm1943, %v1924, %v1074
      %v1958 = vsel %vm1943, %v1925, %v1076
      %v1959 = vsel %vm1943, %v1926, %v1078
      %v1960 = vsel %vm1943, %v1927, %v1080
      %v1961 = vsel %vm1943, %v1928, %v1082
      %v1962 = vsel %vm1943, %v1929, %v1084
      %v1963 = vsel %vm1943, %v1930, %v1086
      %v1964 = vsel %vm1943, %v1931, %v1088
      %v1965 = vsel %vm1943, %v1932, %v1090
      %v1966 = vsel %vm1943, %v1933, %v1092
      %v1967 = vsel %vm1943, %v1934, %v1094
      %v1968 = vsel %vm1943, %v1935, %v1096
      %v1969 = vsel %vm1943, %v1936, %v1098
      %v1970 = vsel %vm1943, %v1937, %v1100
      %v1971 = vsel %vm1943, %v1938, %v1102
      %v1972 = vsel %vm1943, %v1939, %v1104
      %v1973 = vsel %vm1943, %v1940, %v1106
      %v1974 = vsel %vm1943, %v1941, %v1108
      %v1975 = vsel %vm1943, %v1942, %v1110
      %vm1976 = vcmask 146432
      %v1977 = vsel %vm1976, %v1944, %v1176
      %v1978 = vsel %vm1976, %v1945, %v1178
      %v1979 = vsel %vm1976, %v1946, %v1180
      %v1980 = vsel %vm1976, %v1947, %v1182
      %v1981 = vsel %vm1976, %v1948, %v1184
      %v1982 = vsel %vm1976, %v1949, %v1186
      %v1983 = vsel %vm1976, %v1950, %v1188
      %v1984 = vsel %vm1976, %v1951, %v1190
      %v1985 = vsel %vm1976, %v1952, %v1192
      %v1986 = vsel %vm1976, %v1953, %v1194
      %v1987 = vsel %vm1976, %v1954, %v1196
      %v1988 = vsel %vm1976, %v1955, %v1198
      %v1989 = vsel %vm1976, %v1956, %v1200
      %v1990 = vsel %vm1976, %v1957, %v1202
      %v1991 = vsel %vm1976, %v1958, %v1204
      %v1992 = vsel %vm1976, %v1959, %v1206
      %v1993 = vsel %vm1976, %v1960, %v1208
      %v1994 = vsel %vm1976, %v1961, %v1210
      %v1995 = vsel %vm1976, %v1962, %v1212
      %v1996 = vsel %vm1976, %v1963, %v1214
      %v1997 = vsel %vm1976, %v1964, %v1216
      %v1998 = vsel %vm1976, %v1965, %v1218
      %v1999 = vsel %vm1976, %v1966, %v1220
      %v2000 = vsel %vm1976, %v1967, %v1222
      %v2001 = vsel %vm1976, %v1968, %v1224
      %v2002 = vsel %vm1976, %v1969, %v1226
      %v2003 = vsel %vm1976, %v1970, %v1228
      %v2004 = vsel %vm1976, %v1971, %v1230
      %v2005 = vsel %vm1976, %v1972, %v1232
      %v2006 = vsel %vm1976, %v1973, %v1234
      %v2007 = vsel %vm1976, %v1974, %v1236
      %v2008 = vsel %vm1976, %v1975, %v1238
      %vm2009 = vcmask 195584
      %v2010 = vsel %vm2009, %v1977, %v1304
      %v2011 = vsel %vm2009, %v1978, %v1306
      %v2012 = vsel %vm2009, %v1979, %v1308
      %v2013 = vsel %vm2009, %v1980, %v1310
      %v2014 = vsel %vm2009, %v1981, %v1312
      %v2015 = vsel %vm2009, %v1982, %v1314
      %v2016 = vsel %vm2009, %v1983, %v1316
      %v2017 = vsel %vm2009, %v1984, %v1318
      %v2018 = vsel %vm2009, %v1985, %v1320
      %v2019 = vsel %vm2009, %v1986, %v1322
      %v2020 = vsel %vm2009, %v1987, %v1324
      %v2021 = vsel %vm2009, %v1988, %v1326
      %v2022 = vsel %vm2009, %v1989, %v1328
      %v2023 = vsel %vm2009, %v1990, %v1330
      %v2024 = vsel %vm2009, %v1991, %v1332
      %v2025 = vsel %vm2009, %v1992, %v1334
      %v2026 = vsel %vm2009, %v1993, %v1336
      %v2027 = vsel %vm2009, %v1994, %v1338
      %v2028 = vsel %vm2009, %v1995, %v1340
      %v2029 = vsel %vm2009, %v1996, %v1342
      %v2030 = vsel %vm2009, %v1997, %v1344
      %v2031 = vsel %vm2009, %v1998, %v1346
      %v2032 = vsel %vm2009, %v1999, %v1348
      %v2033 = vsel %vm2009, %v2000, %v1350
      %v2034 = vsel %vm2009, %v2001, %v1352
      %v2035 = vsel %vm2009, %v2002, %v1354
      %v2036 = vsel %vm2009, %v2003, %v1356
      %v2037 = vsel %vm2009, %v2004, %v1358
      %v2038 = vsel %vm2009, %v2005, %v1360
      %v2039 = vsel %vm2009, %v2006, %v1362
      %v2040 = vsel %vm2009, %v2007, %v1364
      %v2041 = vsel %vm2009, %v2008, %v1366
      %vm2042 = vcmask 244736
      %v2043 = vsel %vm2042, %v2010, %v1432
      %v2044 = vsel %vm2042, %v2011, %v1434
      %v2045 = vsel %vm2042, %v2012, %v1436
      %v2046 = vsel %vm2042, %v2013, %v1438
      %v2047 = vsel %vm2042, %v2014, %v1440
      %v2048 = vsel %vm2042, %v2015, %v1442
      %v2049 = vsel %vm2042, %v2016, %v1444
      %v2050 = vsel %vm2042, %v2017, %v1446
      %v2051 = vsel %vm2042, %v2018, %v1448
      %v2052 = vsel %vm2042, %v2019, %v1450
      %v2053 = vsel %vm2042, %v2020, %v1452
      %v2054 = vsel %vm2042, %v2021, %v1454
      %v2055 = vsel %vm2042, %v2022, %v1456
      %v2056 = vsel %vm2042, %v2023, %v1458
      %v2057 = vsel %vm2042, %v2024, %v1460
      %v2058 = vsel %vm2042, %v2025, %v1462
      %v2059 = vsel %vm2042, %v2026, %v1464
      %v2060 = vsel %vm2042, %v2027, %v1466
      %v2061 = vsel %vm2042, %v2028, %v1468
      %v2062 = vsel %vm2042, %v2029, %v1470
      %v2063 = vsel %vm2042, %v2030, %v1472
      %v2064 = vsel %vm2042, %v2031, %v1474
      %v2065 = vsel %vm2042, %v2032, %v1476
      %v2066 = vsel %vm2042, %v2033, %v1478
      %v2067 = vsel %vm2042, %v2034, %v1480
      %v2068 = vsel %vm2042, %v2035, %v1482
      %v2069 = vsel %vm2042, %v2036, %v1484
      %v2070 = vsel %vm2042, %v2037, %v1486
      %v2071 = vsel %vm2042, %v2038, %v1488
      %v2072 = vsel %vm2042, %v2039, %v1490
      %v2073 = vsel %vm2042, %v2040, %v1492
      %v2074 = vsel %vm2042, %v2041, %v1494
      %vm2075 = vcmask 293888
      %v2076 = vsel %vm2075, %v2043, %v1560
      %v2077 = vsel %vm2075, %v2044, %v1562
      %v2078 = vsel %vm2075, %v2045, %v1564
      %v2079 = vsel %vm2075, %v2046, %v1566
      %v2080 = vsel %vm2075, %v2047, %v1568
      %v2081 = vsel %vm2075, %v2048, %v1570
      %v2082 = vsel %vm2075, %v2049, %v1572
      %v2083 = vsel %vm2075, %v2050, %v1574
      %v2084 = vsel %vm2075, %v2051, %v1576
      %v2085 = vsel %vm2075, %v2052, %v1578
      %v2086 = vsel %vm2075, %v2053, %v1580
      %v2087 = vsel %vm2075, %v2054, %v1582
      %v2088 = vsel %vm2075, %v2055, %v1584
      %v2089 = vsel %vm2075, %v2056, %v1586
      %v2090 = vsel %vm2075, %v2057, %v1588
      %v2091 = vsel %vm2075, %v2058, %v1590
      %v2092 = vsel %vm2075, %v2059, %v1592
      %v2093 = vsel %vm2075, %v2060, %v1594
      %v2094 = vsel %vm2075, %v2061, %v1596
      %v2095 = vsel %vm2075, %v2062, %v1598
      %v2096 = vsel %vm2075, %v2063, %v1600
      %v2097 = vsel %vm2075, %v2064, %v1602
      %v2098 = vsel %vm2075, %v2065, %v1604
      %v2099 = vsel %vm2075, %v2066, %v1606
      %v2100 = vsel %vm2075, %v2067, %v1608
      %v2101 = vsel %vm2075, %v2068, %v1610
      %v2102 = vsel %vm2075, %v2069, %v1612
      %v2103 = vsel %vm2075, %v2070, %v1614
      %v2104 = vsel %vm2075, %v2071, %v1616
      %v2105 = vsel %vm2075, %v2072, %v1618
      %v2106 = vsel %vm2075, %v2073, %v1620
      %v2107 = vsel %vm2075, %v2074, %v1622
      %vm2108 = vcmask 343040
      %v2109 = vsel %vm2108, %v2076, %v1688
      %v2110 = vsel %vm2108, %v2077, %v1690
      %v2111 = vsel %vm2108, %v2078, %v1692
      %v2112 = vsel %vm2108, %v2079, %v1694
      %v2113 = vsel %vm2108, %v2080, %v1696
      %v2114 = vsel %vm2108, %v2081, %v1698
      %v2115 = vsel %vm2108, %v2082, %v1700
      %v2116 = vsel %vm2108, %v2083, %v1702
      %v2117 = vsel %vm2108, %v2084, %v1704
      %v2118 = vsel %vm2108, %v2085, %v1706
      %v2119 = vsel %vm2108, %v2086, %v1708
      %v2120 = vsel %vm2108, %v2087, %v1710
      %v2121 = vsel %vm2108, %v2088, %v1712
      %v2122 = vsel %vm2108, %v2089, %v1714
      %v2123 = vsel %vm2108, %v2090, %v1716
      %v2124 = vsel %vm2108, %v2091, %v1718
      %v2125 = vsel %vm2108, %v2092, %v1720
      %v2126 = vsel %vm2108, %v2093, %v1722
      %v2127 = vsel %vm2108, %v2094, %v1724
      %v2128 = vsel %vm2108, %v2095, %v1726
      %v2129 = vsel %vm2108, %v2096, %v1728
      %v2130 = vsel %vm2108, %v2097, %v1730
      %v2131 = vsel %vm2108, %v2098, %v1732
      %v2132 = vsel %vm2108, %v2099, %v1734
      %v2133 = vsel %vm2108, %v2100, %v1736
      %v2134 = vsel %vm2108, %v2101, %v1738
      %v2135 = vsel %vm2108, %v2102, %v1740
      %v2136 = vsel %vm2108, %v2103, %v1742
      %v2137 = vsel %vm2108, %v2104, %v1744
      %v2138 = vsel %vm2108, %v2105, %v1746
      %v2139 = vsel %vm2108, %v2106, %v1748
      %v2140 = vsel %vm2108, %v2107, %v1750
      %vm2141 = vcmask 392192
      %v2142 = vsel %vm2141, %v2109, %v1816
      %v2143 = vsel %vm2141, %v2110, %v1818
      %v2144 = vsel %vm2141, %v2111, %v1820
      %v2145 = vsel %vm2141, %v2112, %v1822
      %v2146 = vsel %vm2141, %v2113, %v1824
      %v2147 = vsel %vm2141, %v2114, %v1826
      %v2148 = vsel %vm2141, %v2115, %v1828
      %v2149 = vsel %vm2141, %v2116, %v1830
      %v2150 = vsel %vm2141, %v2117, %v1832
      %v2151 = vsel %vm2141, %v2118, %v1834
      %v2152 = vsel %vm2141, %v2119, %v1836
      %v2153 = vsel %vm2141, %v2120, %v1838
      %v2154 = vsel %vm2141, %v2121, %v1840
      %v2155 = vsel %vm2141, %v2122, %v1842
      %v2156 = vsel %vm2141, %v2123, %v1844
      %v2157 = vsel %vm2141, %v2124, %v1846
      %v2158 = vsel %vm2141, %v2125, %v1848
      %v2159 = vsel %vm2141, %v2126, %v1850
      %v2160 = vsel %vm2141, %v2127, %v1852
      %v2161 = vsel %vm2141, %v2128, %v1854
      %v2162 = vsel %vm2141, %v2129, %v1856
      %v2163 = vsel %vm2141, %v2130, %v1858
      %v2164 = vsel %vm2141, %v2131, %v1860
      %v2165 = vsel %vm2141, %v2132, %v1862
      %v2166 = vsel %vm2141, %v2133, %v1864
      %v2167 = vsel %vm2141, %v2134, %v1866
      %v2168 = vsel %vm2141, %v2135, %v1868
      %v2169 = vsel %vm2141, %v2136, %v1870
      %v2170 = vsel %vm2141, %v2137, %v1872
      %v2171 = vsel %vm2141, %v2138, %v1874
      %v2172 = vsel %vm2141, %v2139, %v1876
      %v2173 = vsel %vm2141, %v2140, %v1878
      %v2174 = vpack.c.bf16 %v2143, %v2142
      %v2175 = vpack.c.bf16 %v2145, %v2144
      %v2176 = vpack.c.bf16 %v2147, %v2146
      %v2177 = vpack.c.bf16 %v2149, %v2148
      %v2178 = vpack.c.bf16 %v2151, %v2150
      %v2179 = vpack.c.bf16 %v2153, %v2152
      %v2180 = vpack.c.bf16 %v2155, %v2154
      %v2181 = vpack.c.bf16 %v2157, %v2156
      %v2182 = vpack.c.bf16 %v2159, %v2158
      %v2183 = vpack.c.bf16 %v2161, %v2160
      %v2184 = vpack.c.bf16 %v2163, %v2162
      %v2185 = vpack.c.bf16 %v2165, %v2164
      %v2186 = vpack.c.bf16 %v2167, %v2166
      %v2187 = vpack.c.bf16 %v2169, %v2168
      %v2188 = vpack.c.bf16 %v2171, %v2170
      %v2189 = vpack.c.bf16 %v2173, %v2172
      %v2191 = vlaneseq
      %v2192 = vshrl.u32 %v2191, 7
      %v2193 = vsub.s32 0, %v2192
      %v2194 = vrot.slane %v597, %v2193
      %v2203 = vunpack.c.l.b16 %v590
      %v2204 = vunpack.c.l.b16 %v591
      %v2205 = vunpack.c.l.b16 %v592
      %v2206 = vunpack.c.l.b16 %v593
      %v2207 = vunpack.c.l.b16 %v594
      %v2208 = vunpack.c.l.b16 %v595
      %v2209 = vunpack.c.l.b16 %v596
      %v2210 = vpack.c.b16 %v2204, %v2203
      %v2211 = vpack.c.b16 %v2206, %v2205
      %v2212 = vpack.c.b16 %v2208, %v2207
      %v2213 = vpack.c.b16 %v2209, %v2209
      %vm2217 = vcmask 441344
      %v2219 = vsel %vm2217, %v2174, 0
      %v2222 = vsel %vm2217, %v2175, 0
      %v2225 = vsel %vm2217, %v2176, 0
      %v2228 = vsel %vm2217, %v2177, 0
      %v2231 = vsel %vm2217, %v2178, 0
      %v2234 = vsel %vm2217, %v2179, 0
      %v2237 = vsel %vm2217, %v2180, 0
      %v2240 = vsel %vm2217, %v2181, 0
      %v2243 = vsel %vm2217, %v2182, 0
      %v2246 = vsel %vm2217, %v2183, 0
      %v2249 = vsel %vm2217, %v2184, 0
      %v2252 = vsel %vm2217, %v2185, 0
      %v2255 = vsel %vm2217, %v2186, 0
      %v2258 = vsel %vm2217, %v2187, 0
      %v2261 = vsel %vm2217, %v2188, 0
      %v2264 = vsel %vm2217, %v2189, 0
      %vm2266 = vcmask 1042432
      %v2268 = vsel %vm2266, %v2213, 0
      %2270 = vmatprep.subr.bf16.mxu0 0
      %2271 = vmatpush1.bf16.msra.mxu0 %v2210
      %2272 = vmatprep.subr.bf16.mxu0 0
      %2273 = vmatpush1.bf16.msra.mxu0 %v2211
      %2274 = vmatprep.subr.bf16.mxu0 0
      %2275 = vmatpush1.bf16.msra.mxu0 %v2212
      %2276 = vmatprep.subr.bf16.mxu0 0
      %2277 = vmatpush1.bf16.msra.mxu0 %v2268
      %2278 = vmatprep.subr.bf16.mxu0 0
      %2279 = vmatpush1.bf16.msra.mxu0 0
      %2280 = vmatprep.subr.bf16.mxu0 0
      %2281 = vmatpush1.bf16.msra.mxu0 0
      %2282 = vmatprep.subr.bf16.mxu0 0
      %2283 = vmatpush1.bf16.msra.mxu0 0
      %2284 = vmatprep.subr.bf16.mxu0 0
      %2285 = vmatpush1.bf16.msra.mxu0 0
      %2286 = vmatprep.subr.bf16.mxu0 0
      %2287 = vmatpush1.bf16.msra.mxu0 0
      %2288 = vmatprep.subr.bf16.mxu0 0
      %2289 = vmatpush1.bf16.msra.mxu0 0
      %2290 = vmatprep.subr.bf16.mxu0 0
      %2291 = vmatpush1.bf16.msra.mxu0 0
      %2292 = vmatprep.subr.bf16.mxu0 0
      %2293 = vmatpush1.bf16.msra.mxu0 0
      %2294 = vmatprep.subr.bf16.mxu0 0
      %2295 = vmatpush1.bf16.msra.mxu0 0
      %2296 = vmatprep.subr.bf16.mxu0 0
      %2297 = vmatpush1.bf16.msra.mxu0 0
      %2298 = vmatprep.subr.bf16.mxu0 0
      %2299 = vmatpush1.bf16.msra.mxu0 0
      %2300 = vmatprep.subr.bf16.mxu0 0
      %2301 = vmatpush1.bf16.msra.mxu0 0
      %2302 = vmatprep.mubr.bf16.mxu0 0
      %2303 = vmatmul.mubr.bf16.gmra.mrb[0].mxu0 %v2219
      %v2304 = vpop.f32.mrb[0].mxu0
      %v2305 = vadd.f32 %v2194, %v2304
      %v2306 = vpop.f32.mrb[0].mxu0
      %v2307 = vpop.f32.mrb[0].mxu0
      %v2308 = vadd.f32 %v2194, %v2307
      %v2309 = vpop.f32.mrb[0].mxu0
      %2310 = vmatprep.mubr.bf16.mxu0 0
      %2311 = vmatmul.mubr.bf16.gmra.mrb[0].mxu0 %v2222
      %v2312 = vpop.f32.mrb[0].mxu0
      %v2313 = vadd.f32 %v2194, %v2312
      %v2314 = vpop.f32.mrb[0].mxu0
      %v2315 = vpop.f32.mrb[0].mxu0
      %v2316 = vadd.f32 %v2194, %v2315
      %v2317 = vpop.f32.mrb[0].mxu0
      %2318 = vmatprep.mubr.bf16.mxu0 0
      %2319 = vmatmul.mubr.bf16.gmra.mrb[0].mxu0 %v2225
      %v2320 = vpop.f32.mrb[0].mxu0
      %v2321 = vadd.f32 %v2194, %v2320
      %v2322 = vpop.f32.mrb[0].mxu0
      %v2323 = vpop.f32.mrb[0].mxu0
      %v2324 = vadd.f32 %v2194, %v2323
      %v2325 = vpop.f32.mrb[0].mxu0
      %2326 = vmatprep.mubr.bf16.mxu0 0
      %2327 = vmatmul.mubr.bf16.gmra.mrb[0].mxu0 %v2228
      %v2328 = vpop.f32.mrb[0].mxu0
      %v2329 = vadd.f32 %v2194, %v2328
      %v2330 = vpop.f32.mrb[0].mxu0
      %v2331 = vpop.f32.mrb[0].mxu0
      %v2332 = vadd.f32 %v2194, %v2331
      %v2333 = vpop.f32.mrb[0].mxu0
      %2334 = vmatprep.mubr.bf16.mxu0 0
      %2335 = vmatmul.mubr.bf16.gmra.mrb[0].mxu0 %v2231
      %v2336 = vpop.f32.mrb[0].mxu0
      %v2337 = vadd.f32 %v2194, %v2336
      %v2338 = vpop.f32.mrb[0].mxu0
      %v2339 = vpop.f32.mrb[0].mxu0
      %v2340 = vadd.f32 %v2194, %v2339
      %v2341 = vpop.f32.mrb[0].mxu0
      %2342 = vmatprep.mubr.bf16.mxu0 0
      %2343 = vmatmul.mubr.bf16.gmra.mrb[0].mxu0 %v2234
      %v2344 = vpop.f32.mrb[0].mxu0
      %v2345 = vadd.f32 %v2194, %v2344
      %v2346 = vpop.f32.mrb[0].mxu0
      %v2347 = vpop.f32.mrb[0].mxu0
      %v2348 = vadd.f32 %v2194, %v2347
      %v2349 = vpop.f32.mrb[0].mxu0
      %2350 = vmatprep.mubr.bf16.mxu0 0
      %2351 = vmatmul.mubr.bf16.gmra.mrb[0].mxu0 %v2237
      %v2352 = vpop.f32.mrb[0].mxu0
      %v2353 = vadd.f32 %v2194, %v2352
      %v2354 = vpop.f32.mrb[0].mxu0
      %v2355 = vpop.f32.mrb[0].mxu0
      %v2356 = vadd.f32 %v2194, %v2355
      %v2357 = vpop.f32.mrb[0].mxu0
      %2358 = vmatprep.mubr.bf16.mxu0 0
      %2359 = vmatmul.mubr.bf16.gmra.mrb[0].mxu0 %v2240
      %v2360 = vpop.f32.mrb[0].mxu0
      %v2361 = vadd.f32 %v2194, %v2360
      %v2362 = vpop.f32.mrb[0].mxu0
      %v2363 = vpop.f32.mrb[0].mxu0
      %v2364 = vadd.f32 %v2194, %v2363
      %v2365 = vpop.f32.mrb[0].mxu0
      %2366 = vmatprep.mubr.bf16.mxu0 0
      %2367 = vmatmul.mubr.bf16.gmra.mrb[0].mxu0 %v2243
      %v2368 = vpop.f32.mrb[0].mxu0
      %v2369 = vadd.f32 %v2194, %v2368
      %v2370 = vpop.f32.mrb[0].mxu0
      %v2371 = vpop.f32.mrb[0].mxu0
      %v2372 = vadd.f32 %v2194, %v2371
      %v2373 = vpop.f32.mrb[0].mxu0
      %2374 = vmatprep.mubr.bf16.mxu0 0
      %2375 = vmatmul.mubr.bf16.gmra.mrb[0].mxu0 %v2246
      %v2376 = vpop.f32.mrb[0].mxu0
      %v2377 = vadd.f32 %v2194, %v2376
      %v2378 = vpop.f32.mrb[0].mxu0
      %v2379 = vpop.f32.mrb[0].mxu0
      %v2380 = vadd.f32 %v2194, %v2379
      %v2381 = vpop.f32.mrb[0].mxu0
      %2382 = vmatprep.mubr.bf16.mxu0 0
      %2383 = vmatmul.mubr.bf16.gmra.mrb[0].mxu0 %v2249
      %v2384 = vpop.f32.mrb[0].mxu0
      %v2385 = vadd.f32 %v2194, %v2384
      %v2386 = vpop.f32.mrb[0].mxu0
      %v2387 = vpop.f32.mrb[0].mxu0
      %v2388 = vadd.f32 %v2194, %v2387
      %v2389 = vpop.f32.mrb[0].mxu0
      %2390 = vmatprep.mubr.bf16.mxu0 0
      %2391 = vmatmul.mubr.bf16.gmra.mrb[0].mxu0 %v2252
      %v2392 = vpop.f32.mrb[0].mxu0
      %v2393 = vadd.f32 %v2194, %v2392
      %v2394 = vpop.f32.mrb[0].mxu0
      %v2395 = vpop.f32.mrb[0].mxu0
      %v2396 = vadd.f32 %v2194, %v2395
      %v2397 = vpop.f32.mrb[0].mxu0
      %2398 = vmatprep.mubr.bf16.mxu0 0
      %2399 = vmatmul.mubr.bf16.gmra.mrb[0].mxu0 %v2255
      %v2400 = vpop.f32.mrb[0].mxu0
      %v2401 = vadd.f32 %v2194, %v2400
      %v2402 = vpop.f32.mrb[0].mxu0
      %v2403 = vpop.f32.mrb[0].mxu0
      %v2404 = vadd.f32 %v2194, %v2403
      %v2405 = vpop.f32.mrb[0].mxu0
      %2406 = vmatprep.mubr.bf16.mxu0 0
      %2407 = vmatmul.mubr.bf16.gmra.mrb[0].mxu0 %v2258
      %v2408 = vpop.f32.mrb[0].mxu0
      %v2409 = vadd.f32 %v2194, %v2408
      %v2410 = vpop.f32.mrb[0].mxu0
      %v2411 = vpop.f32.mrb[0].mxu0
      %v2412 = vadd.f32 %v2194, %v2411
      %v2413 = vpop.f32.mrb[0].mxu0
      %2414 = vmatprep.mubr.bf16.mxu0 0
      %2415 = vmatmul.mubr.bf16.gmra.mrb[0].mxu0 %v2261
      %v2416 = vpop.f32.mrb[0].mxu0
      %v2417 = vadd.f32 %v2194, %v2416
      %v2418 = vpop.f32.mrb[0].mxu0
      %v2419 = vpop.f32.mrb[0].mxu0
      %v2420 = vadd.f32 %v2194, %v2419
      %v2421 = vpop.f32.mrb[0].mxu0
      %2422 = vmatprep.mubr.bf16.mxu0 0
      %2423 = vmatmul.mubr.bf16.gmra.mrb[0].mxu0 %v2264
      %v2424 = vpop.f32.mrb[0].mxu0
      %v2425 = vadd.f32 %v2194, %v2424
      %v2426 = vpop.f32.mrb[0].mxu0
      %v2427 = vpop.f32.mrb[0].mxu0
      %v2428 = vadd.f32 %v2194, %v2427
      %v2429 = vpop.f32.mrb[0].mxu0
      %2430 = vdwg.mxu0
      %v2431 = vmax.f32 %v2305, 0.0
      %v2432 = vmax.f32 %v2308, 0.0
      %v2433 = vmax.f32 %v2313, 0.0
      %v2434 = vmax.f32 %v2316, 0.0
      %v2435 = vmax.f32 %v2321, 0.0
      %v2436 = vmax.f32 %v2324, 0.0
      %v2437 = vmax.f32 %v2329, 0.0
      %v2438 = vmax.f32 %v2332, 0.0
      %v2439 = vmax.f32 %v2337, 0.0
      %v2440 = vmax.f32 %v2340, 0.0
      %v2441 = vmax.f32 %v2345, 0.0
      %v2442 = vmax.f32 %v2348, 0.0
      %v2443 = vmax.f32 %v2353, 0.0
      %v2444 = vmax.f32 %v2356, 0.0
      %v2445 = vmax.f32 %v2361, 0.0
      %v2446 = vmax.f32 %v2364, 0.0
      %v2447 = vmax.f32 %v2369, 0.0
      %v2448 = vmax.f32 %v2372, 0.0
      %v2449 = vmax.f32 %v2377, 0.0
      %v2450 = vmax.f32 %v2380, 0.0
      %v2451 = vmax.f32 %v2385, 0.0
      %v2452 = vmax.f32 %v2388, 0.0
      %v2453 = vmax.f32 %v2393, 0.0
      %v2454 = vmax.f32 %v2396, 0.0
      %v2455 = vmax.f32 %v2401, 0.0
      %v2456 = vmax.f32 %v2404, 0.0
      %v2457 = vmax.f32 %v2409, 0.0
      %v2458 = vmax.f32 %v2412, 0.0
      %v2459 = vmax.f32 %v2417, 0.0
      %v2460 = vmax.f32 %v2420, 0.0
      %v2461 = vmax.f32 %v2425, 0.0
      %v2462 = vmax.f32 %v2428, 0.0
      %2463 = vst.msk [vmem:[%s492 + $0x1] sm:$0xff] %vm442, %v2431
      %2464 = vst.msk [vmem:[%s492 + $0x9] sm:$0xff] %vm442, %v2432
      %2465 = vst.msk [vmem:[%s492 + $0x19] sm:$0xff] %vm442, %v2433
      %2466 = vst.msk [vmem:[%s492 + $0x21] sm:$0xff] %vm442, %v2434
      %2467 = vst.msk [vmem:[%s492 + $0x31] sm:$0xff] %vm442, %v2435
      %2468 = vst.msk [vmem:[%s492 + $0x39] sm:$0xff] %vm442, %v2436
      %2469 = vst.msk [vmem:[%s492 + $0x49] sm:$0xff] %vm442, %v2437
      %2470 = vst.msk [vmem:[%s492 + $0x51] sm:$0xff] %vm442, %v2438
      %2471 = vst.msk [vmem:[%s492 + $0x61] sm:$0xff] %vm442, %v2439
      %2472 = vst.msk [vmem:[%s492 + $0x69] sm:$0xff] %vm442, %v2440
      %2473 = vst.msk [vmem:[%s492 + $0x79] sm:$0xff] %vm442, %v2441
      %2474 = vst.msk [vmem:[%s492 + $0x81] sm:$0xff] %vm442, %v2442
      %2475 = vst.msk [vmem:[%s492 + $0x91] sm:$0xff] %vm442, %v2443
      %2476 = vst.msk [vmem:[%s492 + $0x99] sm:$0xff] %vm442, %v2444
      %2477 = vst.msk [vmem:[%s492 + $0xa9] sm:$0xff] %vm442, %v2445
      %2478 = vst.msk [vmem:[%s492 + $0xb1] sm:$0xff] %vm442, %v2446
      %2479 = vst.msk [vmem:[%s492 + $0xc1] sm:$0xff] %vm442, %v2447
      %2480 = vst.msk [vmem:[%s492 + $0xc9] sm:$0xff] %vm442, %v2448
      %2481 = vst.msk [vmem:[%s492 + $0xd9] sm:$0xff] %vm442, %v2449
      %2482 = vst.msk [vmem:[%s492 + $0xe1] sm:$0xff] %vm442, %v2450
      %2483 = vst.msk [vmem:[%s492 + $0xf1] sm:$0xff] %vm442, %v2451
      %2484 = vst.msk [vmem:[%s492 + $0xf9] sm:$0xff] %vm442, %v2452
      %2485 = vst.msk [vmem:[%s492 + $0x109] sm:$0xff] %vm442, %v2453
      %2486 = vst.msk [vmem:[%s492 + $0x111] sm:$0xff] %vm442, %v2454
      %2487 = vst.msk [vmem:[%s492 + $0x121] sm:$0xff] %vm442, %v2455
      %2488 = vst.msk [vmem:[%s492 + $0x129] sm:$0xff] %vm442, %v2456
      %2489 = vst.msk [vmem:[%s492 + $0x139] sm:$0xff] %vm442, %v2457
      %2490 = vst.msk [vmem:[%s492 + $0x141] sm:$0xff] %vm442, %v2458
      %2491 = vst.msk [vmem:[%s492 + $0x151] sm:$0xff] %vm442, %v2459
      %2492 = vst.msk [vmem:[%s492 + $0x159] sm:$0xff] %vm442, %v2460
      %2493 = vst.msk [vmem:[%s492 + $0x169] sm:$0xff] %vm442, %v2461
      %2494 = vst.msk [vmem:[%s492 + $0x171] sm:$0xff] %vm442, %v2462
      %v2495 = vld [vmem:[%s3] sm:$0xf]
      %v2496 = vld [vmem:[%s3 + $0x4] sm:$0xf]
      %v2497 = vld [vmem:[%s3 + $0x8] sm:$0xf]
      %v2498 = vld [vmem:[%s3 + $0xc] sm:$0xf]
      %v2499 = vld [vmem:[%s3 + $0x10] sm:$0xf]
      %v2500 = vld [vmem:[%s3 + $0x14] sm:$0xf]
      %v2501 = vld [vmem:[%s3 + $0x18] sm:$0xf]
      %v2502 = vld [vmem:[%s3 + $0x1c] sm:$0xf]
      %v2503 = vld [vmem:[%s3 + $0x20] sm:$0xf]
      %v2504 = vld [vmem:[%s3 + $0x24] sm:$0xf]
      %v2505 = vld [vmem:[%s3 + $0x28] sm:$0xf]
      %v2506 = vld [vmem:[%s3 + $0x2c] sm:$0x1]
      %v2507 = vld [vmem:[%s4] sm:$0x1]
      %v2508 = vld [vmem:[#allocation3] sm:$0xff]
      %v2509 = vld [vmem:[#allocation3 + $0x8] sm:$0xff]
      %v2510 = vld [vmem:[#allocation3 + $0x18] sm:$0xff]
      %v2511 = vld [vmem:[#allocation3 + $0x20] sm:$0xff]
      %v2512 = vld [vmem:[#allocation3 + $0x30] sm:$0xff]
      %v2513 = vld [vmem:[#allocation3 + $0x38] sm:$0xff]
      %v2514 = vld [vmem:[#allocation3 + $0x48] sm:$0xff]
      %v2515 = vld [vmem:[#allocation3 + $0x50] sm:$0xff]
      %v2516 = vld [vmem:[#allocation3 + $0x60] sm:$0xff]
      %v2517 = vld [vmem:[#allocation3 + $0x68] sm:$0xff]
      %v2518 = vld [vmem:[#allocation3 + $0x78] sm:$0xff]
      %v2519 = vld [vmem:[#allocation3 + $0x80] sm:$0xff]
      %v2520 = vld [vmem:[#allocation3 + $0x90] sm:$0xff]
      %v2521 = vld [vmem:[#allocation3 + $0x98] sm:$0xff]
      %v2522 = vld [vmem:[#allocation3 + $0xa8] sm:$0xff]
      %v2523 = vld [vmem:[#allocation3 + $0xb0] sm:$0xff]
      %v2524 = vld [vmem:[#allocation3 + $0xc0] sm:$0xff]
      %v2525 = vld [vmem:[#allocation3 + $0xc8] sm:$0xff]
      %v2526 = vld [vmem:[#allocation3 + $0xd8] sm:$0xff]
      %v2527 = vld [vmem:[#allocation3 + $0xe0] sm:$0xff]
      %v2528 = vld [vmem:[#allocation3 + $0xf0] sm:$0xff]
      %v2529 = vld [vmem:[#allocation3 + $0xf8] sm:$0xff]
      %v2530 = vld [vmem:[#allocation3 + $0x108] sm:$0xff]
      %v2531 = vld [vmem:[#allocation3 + $0x110] sm:$0xff]
      %v2532 = vld [vmem:[#allocation3 + $0x120] sm:$0xff]
      %v2533 = vld [vmem:[#allocation3 + $0x128] sm:$0xff]
      %v2534 = vld [vmem:[#allocation3 + $0x138] sm:$0xff]
      %v2535 = vld [vmem:[#allocation3 + $0x140] sm:$0xff]
      %v2536 = vld [vmem:[#allocation3 + $0x150] sm:$0xff]
      %v2537 = vld [vmem:[#allocation3 + $0x158] sm:$0xff]
      %v2538 = vld [vmem:[#allocation3 + $0x168] sm:$0xff]
      %v2539 = vld [vmem:[#allocation3 + $0x170] sm:$0xff]
      %v2540 = vld [vmem:[#allocation3 + $0x1] sm:$0xff]
      %v2541 = vld [vmem:[#allocation3 + $0x9] sm:$0xff]
      %v2542 = vld [vmem:[#allocation3 + $0x19] sm:$0xff]
      %v2543 = vld [vmem:[#allocation3 + $0x21] sm:$0xff]
      %v2544 = vld [vmem:[#allocation3 + $0x31] sm:$0xff]
      %v2545 = vld [vmem:[#allocation3 + $0x39] sm:$0xff]
      %v2546 = vld [vmem:[#allocation3 + $0x49] sm:$0xff]
      %v2547 = vld [vmem:[#allocation3 + $0x51] sm:$0xff]
      %v2548 = vld [vmem:[#allocation3 + $0x61] sm:$0xff]
      %v2549 = vld [vmem:[#allocation3 + $0x69] sm:$0xff]
      %v2550 = vld [vmem:[#allocation3 + $0x79] sm:$0xff]
      %v2551 = vld [vmem:[#allocation3 + $0x81] sm:$0xff]
      %v2552 = vld [vmem:[#allocation3 + $0x91] sm:$0xff]
      %v2553 = vld [vmem:[#allocation3 + $0x99] sm:$0xff]
      %v2554 = vld [vmem:[#allocation3 + $0xa9] sm:$0xff]
      %v2555 = vld [vmem:[#allocation3 + $0xb1] sm:$0xff]
      %v2556 = vld [vmem:[#allocation3 + $0xc1] sm:$0xff]
      %v2557 = vld [vmem:[#allocation3 + $0xc9] sm:$0xff]
      %v2558 = vld [vmem:[#allocation3 + $0xd9] sm:$0xff]
      %v2559 = vld [vmem:[#allocation3 + $0xe1] sm:$0xff]
      %v2560 = vld [vmem:[#allocation3 + $0xf1] sm:$0xff]
      %v2561 = vld [vmem:[#allocation3 + $0xf9] sm:$0xff]
      %v2562 = vld [vmem:[#allocation3 + $0x109] sm:$0xff]
      %v2563 = vld [vmem:[#allocation3 + $0x111] sm:$0xff]
      %v2564 = vld [vmem:[#allocation3 + $0x121] sm:$0xff]
      %v2565 = vld [vmem:[#allocation3 + $0x129] sm:$0xff]
      %v2566 = vld [vmem:[#allocation3 + $0x139] sm:$0xff]
      %v2567 = vld [vmem:[#allocation3 + $0x141] sm:$0xff]
      %v2568 = vld [vmem:[#allocation3 + $0x151] sm:$0xff]
      %v2569 = vld [vmem:[#allocation3 + $0x159] sm:$0xff]
      %v2570 = vld [vmem:[#allocation3 + $0x169] sm:$0xff]
      %v2571 = vld [vmem:[#allocation3 + $0x171] sm:$0xff]
      %v2572 = vld [vmem:[#allocation3 + $0x2] sm:$0xff]
      %v2573 = vld [vmem:[#allocation3 + $0xa] sm:$0xff]
      %v2574 = vld [vmem:[#allocation3 + $0x1a] sm:$0xff]
      %v2575 = vld [vmem:[#allocation3 + $0x22] sm:$0xff]
      %v2576 = vld [vmem:[#allocation3 + $0x32] sm:$0xff]
      %v2577 = vld [vmem:[#allocation3 + $0x3a] sm:$0xff]
      %v2578 = vld [vmem:[#allocation3 + $0x4a] sm:$0xff]
      %v2579 = vld [vmem:[#allocation3 + $0x52] sm:$0xff]
      %v2580 = vld [vmem:[#allocation3 + $0x62] sm:$0xff]
      %v2581 = vld [vmem:[#allocation3 + $0x6a] sm:$0xff]
      %v2582 = vld [vmem:[#allocation3 + $0x7a] sm:$0xff]
      %v2583 = vld [vmem:[#allocation3 + $0x82] sm:$0xff]
      %v2584 = vld [vmem:[#allocation3 + $0x92] sm:$0xff]
      %v2585 = vld [vmem:[#allocation3 + $0x9a] sm:$0xff]
      %v2586 = vld [vmem:[#allocation3 + $0xaa] sm:$0xff]
      %v2587 = vld [vmem:[#allocation3 + $0xb2] sm:$0xff]
      %v2588 = vld [vmem:[#allocation3 + $0xc2] sm:$0xff]
      %v2589 = vld [vmem:[#allocation3 + $0xca] sm:$0xff]
      %v2590 = vld [vmem:[#allocation3 + $0xda] sm:$0xff]
      %v2591 = vld [vmem:[#allocation3 + $0xe2] sm:$0xff]
      %v2592 = vld [vmem:[#allocation3 + $0xf2] sm:$0xff]
      %v2593 = vld [vmem:[#allocation3 + $0xfa] sm:$0xff]
      %v2594 = vld [vmem:[#allocation3 + $0x10a] sm:$0xff]
      %v2595 = vld [vmem:[#allocation3 + $0x112] sm:$0xff]
      %v2596 = vld [vmem:[#allocation3 + $0x122] sm:$0xff]
      %v2597 = vld [vmem:[#allocation3 + $0x12a] sm:$0xff]
      %v2598 = vld [vmem:[#allocation3 + $0x13a] sm:$0xff]
      %v2599 = vld [vmem:[#allocation3 + $0x142] sm:$0xff]
      %v2600 = vld [vmem:[#allocation3 + $0x152] sm:$0xff]
      %v2601 = vld [vmem:[#allocation3 + $0x15a] sm:$0xff]
      %v2602 = vld [vmem:[#allocation3 + $0x16a] sm:$0xff]
      %v2603 = vld [vmem:[#allocation3 + $0x172] sm:$0xff]
      %v2604 = vld [vmem:[%s492] sm:$0xff]
      %v2605 = vld [vmem:[%s492 + $0x8] sm:$0xff]
      %v2606 = vld [vmem:[%s492 + $0x18] sm:$0xff]
      %v2607 = vld [vmem:[%s492 + $0x20] sm:$0xff]
      %v2608 = vld [vmem:[%s492 + $0x30] sm:$0xff]
      %v2609 = vld [vmem:[%s492 + $0x38] sm:$0xff]
      %v2610 = vld [vmem:[%s492 + $0x48] sm:$0xff]
      %v2611 = vld [vmem:[%s492 + $0x50] sm:$0xff]
      %v2612 = vld [vmem:[%s492 + $0x60] sm:$0xff]
      %v2613 = vld [vmem:[%s492 + $0x68] sm:$0xff]
      %v2614 = vld [vmem:[%s492 + $0x78] sm:$0xff]
      %v2615 = vld [vmem:[%s492 + $0x80] sm:$0xff]
      %v2616 = vld [vmem:[%s492 + $0x90] sm:$0xff]
      %v2617 = vld [vmem:[%s492 + $0x98] sm:$0xff]
      %v2618 = vld [vmem:[%s492 + $0xa8] sm:$0xff]
      %v2619 = vld [vmem:[%s492 + $0xb0] sm:$0xff]
      %v2620 = vld [vmem:[%s492 + $0xc0] sm:$0xff]
      %v2621 = vld [vmem:[%s492 + $0xc8] sm:$0xff]
      %v2622 = vld [vmem:[%s492 + $0xd8] sm:$0xff]
      %v2623 = vld [vmem:[%s492 + $0xe0] sm:$0xff]
      %v2624 = vld [vmem:[%s492 + $0xf0] sm:$0xff]
      %v2625 = vld [vmem:[%s492 + $0xf8] sm:$0xff]
      %v2626 = vld [vmem:[%s492 + $0x108] sm:$0xff]
      %v2627 = vld [vmem:[%s492 + $0x110] sm:$0xff]
      %v2628 = vld [vmem:[%s492 + $0x120] sm:$0xff]
      %v2629 = vld [vmem:[%s492 + $0x128] sm:$0xff]
      %v2630 = vld [vmem:[%s492 + $0x138] sm:$0xff]
      %v2631 = vld [vmem:[%s492 + $0x140] sm:$0xff]
      %v2632 = vld [vmem:[%s492 + $0x150] sm:$0xff]
      %v2633 = vld [vmem:[%s492 + $0x158] sm:$0xff]
      %v2634 = vld [vmem:[%s492 + $0x168] sm:$0xff]
      %v2635 = vld [vmem:[%s492 + $0x170] sm:$0xff]
      %v2636 = vld [vmem:[%s492 + $0x1] sm:$0xff]
      %v2637 = vld [vmem:[%s492 + $0x9] sm:$0xff]
      %v2638 = vld [vmem:[%s492 + $0x19] sm:$0xff]
      %v2639 = vld [vmem:[%s492 + $0x21] sm:$0xff]
      %v2640 = vld [vmem:[%s492 + $0x31] sm:$0xff]
      %v2641 = vld [vmem:[%s492 + $0x39] sm:$0xff]
      %v2642 = vld [vmem:[%s492 + $0x49] sm:$0xff]
      %v2643 = vld [vmem:[%s492 + $0x51] sm:$0xff]
      %v2644 = vld [vmem:[%s492 + $0x61] sm:$0xff]
      %v2645 = vld [vmem:[%s492 + $0x69] sm:$0xff]
      %v2646 = vld [vmem:[%s492 + $0x79] sm:$0xff]
      %v2647 = vld [vmem:[%s492 + $0x81] sm:$0xff]
      %v2648 = vld [vmem:[%s492 + $0x91] sm:$0xff]
      %v2649 = vld [vmem:[%s492 + $0x99] sm:$0xff]
      %v2650 = vld [vmem:[%s492 + $0xa9] sm:$0xff]
      %v2651 = vld [vmem:[%s492 + $0xb1] sm:$0xff]
      %v2652 = vld [vmem:[%s492 + $0xc1] sm:$0xff]
      %v2653 = vld [vmem:[%s492 + $0xc9] sm:$0xff]
      %v2654 = vld [vmem:[%s492 + $0xd9] sm:$0xff]
      %v2655 = vld [vmem:[%s492 + $0xe1] sm:$0xff]
      %v2656 = vld [vmem:[%s492 + $0xf1] sm:$0xff]
      %v2657 = vld [vmem:[%s492 + $0xf9] sm:$0xff]
      %v2658 = vld [vmem:[%s492 + $0x109] sm:$0xff]
      %v2659 = vld [vmem:[%s492 + $0x111] sm:$0xff]
      %v2660 = vld [vmem:[%s492 + $0x121] sm:$0xff]
      %v2661 = vld [vmem:[%s492 + $0x129] sm:$0xff]
      %v2662 = vld [vmem:[%s492 + $0x139] sm:$0xff]
      %v2663 = vld [vmem:[%s492 + $0x141] sm:$0xff]
      %v2664 = vld [vmem:[%s492 + $0x151] sm:$0xff]
      %v2665 = vld [vmem:[%s492 + $0x159] sm:$0xff]
      %v2666 = vld [vmem:[%s492 + $0x169] sm:$0xff]
      %v2667 = vld [vmem:[%s492 + $0x171] sm:$0xff]
      %v2668 = vld [vmem:[%s492 + $0x2] sm:$0xff]
      %v2669 = vld [vmem:[%s492 + $0xa] sm:$0xff]
      %v2670 = vld [vmem:[%s492 + $0x1a] sm:$0xff]
      %v2671 = vld [vmem:[%s492 + $0x22] sm:$0xff]
      %v2672 = vld [vmem:[%s492 + $0x32] sm:$0xff]
      %v2673 = vld [vmem:[%s492 + $0x3a] sm:$0xff]
      %v2674 = vld [vmem:[%s492 + $0x4a] sm:$0xff]
      %v2675 = vld [vmem:[%s492 + $0x52] sm:$0xff]
      %v2676 = vld [vmem:[%s492 + $0x62] sm:$0xff]
      %v2677 = vld [vmem:[%s492 + $0x6a] sm:$0xff]
      %v2678 = vld [vmem:[%s492 + $0x7a] sm:$0xff]
      %v2679 = vld [vmem:[%s492 + $0x82] sm:$0xff]
      %v2680 = vld [vmem:[%s492 + $0x92] sm:$0xff]
      %v2681 = vld [vmem:[%s492 + $0x9a] sm:$0xff]
      %v2682 = vld [vmem:[%s492 + $0xaa] sm:$0xff]
      %v2683 = vld [vmem:[%s492 + $0xb2] sm:$0xff]
      %v2684 = vld [vmem:[%s492 + $0xc2] sm:$0xff]
      %v2685 = vld [vmem:[%s492 + $0xca] sm:$0xff]
      %v2686 = vld [vmem:[%s492 + $0xda] sm:$0xff]
      %v2687 = vld [vmem:[%s492 + $0xe2] sm:$0xff]
      %v2688 = vld [vmem:[%s492 + $0xf2] sm:$0xff]
      %v2689 = vld [vmem:[%s492 + $0xfa] sm:$0xff]
      %v2690 = vld [vmem:[%s492 + $0x10a] sm:$0xff]
      %v2691 = vld [vmem:[%s492 + $0x112] sm:$0xff]
      %v2692 = vld [vmem:[%s492 + $0x122] sm:$0xff]
      %v2693 = vld [vmem:[%s492 + $0x12a] sm:$0xff]
      %v2694 = vld [vmem:[%s492 + $0x13a] sm:$0xff]
      %v2695 = vld [vmem:[%s492 + $0x142] sm:$0xff]
      %v2696 = vld [vmem:[%s492 + $0x152] sm:$0xff]
      %v2697 = vld [vmem:[%s492 + $0x15a] sm:$0xff]
      %v2698 = vld [vmem:[%s492 + $0x16a] sm:$0xff]
      %v2699 = vld [vmem:[%s492 + $0x172] sm:$0xff]
      %s2700 = scalar_lea.vmem [#allocation3], 48
      %v2701 = vld [vmem:[%s2700] sm:$0xff]
      %v2702 = vld [vmem:[%s2700 + $0x8] sm:$0xff]
      %v2703 = vld [vmem:[%s2700 + $0x18] sm:$0xff]
      %v2704 = vld [vmem:[%s2700 + $0x20] sm:$0xff]
      %v2705 = vld [vmem:[%s2700 + $0x30] sm:$0xff]
      %v2706 = vld [vmem:[%s2700 + $0x38] sm:$0xff]
      %v2707 = vld [vmem:[%s2700 + $0x48] sm:$0xff]
      %v2708 = vld [vmem:[%s2700 + $0x50] sm:$0xff]
      %v2709 = vld [vmem:[%s2700 + $0x60] sm:$0xff]
      %v2710 = vld [vmem:[%s2700 + $0x68] sm:$0xff]
      %v2711 = vld [vmem:[%s2700 + $0x78] sm:$0xff]
      %v2712 = vld [vmem:[%s2700 + $0x80] sm:$0xff]
      %v2713 = vld [vmem:[%s2700 + $0x90] sm:$0xff]
      %v2714 = vld [vmem:[%s2700 + $0x98] sm:$0xff]
      %v2715 = vld [vmem:[%s2700 + $0xa8] sm:$0xff]
      %v2716 = vld [vmem:[%s2700 + $0xb0] sm:$0xff]
      %v2717 = vld [vmem:[%s2700 + $0xc0] sm:$0xff]
      %v2718 = vld [vmem:[%s2700 + $0xc8] sm:$0xff]
      %v2719 = vld [vmem:[%s2700 + $0xd8] sm:$0xff]
      %v2720 = vld [vmem:[%s2700 + $0xe0] sm:$0xff]
      %v2721 = vld [vmem:[%s2700 + $0xf0] sm:$0xff]
      %v2722 = vld [vmem:[%s2700 + $0xf8] sm:$0xff]
      %v2723 = vld [vmem:[%s2700 + $0x108] sm:$0xff]
      %v2724 = vld [vmem:[%s2700 + $0x110] sm:$0xff]
      %v2725 = vld [vmem:[%s2700 + $0x120] sm:$0xff]
      %v2726 = vld [vmem:[%s2700 + $0x128] sm:$0xff]
      %v2727 = vld [vmem:[%s2700 + $0x138] sm:$0xff]
      %v2728 = vld [vmem:[%s2700 + $0x140] sm:$0xff]
      %v2729 = vld [vmem:[%s2700 + $0x150] sm:$0xff]
      %v2730 = vld [vmem:[%s2700 + $0x158] sm:$0xff]
      %v2731 = vld [vmem:[%s2700 + $0x168] sm:$0xff]
      %v2732 = vld [vmem:[%s2700 + $0x170] sm:$0xff]
      %v2733 = vld [vmem:[%s2700 + $0x1] sm:$0xff]
      %v2734 = vld [vmem:[%s2700 + $0x9] sm:$0xff]
      %v2735 = vld [vmem:[%s2700 + $0x19] sm:$0xff]
      %v2736 = vld [vmem:[%s2700 + $0x21] sm:$0xff]
      %v2737 = vld [vmem:[%s2700 + $0x31] sm:$0xff]
      %v2738 = vld [vmem:[%s2700 + $0x39] sm:$0xff]
      %v2739 = vld [vmem:[%s2700 + $0x49] sm:$0xff]
      %v2740 = vld [vmem:[%s2700 + $0x51] sm:$0xff]
      %v2741 = vld [vmem:[%s2700 + $0x61] sm:$0xff]
      %v2742 = vld [vmem:[%s2700 + $0x69] sm:$0xff]
      %v2743 = vld [vmem:[%s2700 + $0x79] sm:$0xff]
      %v2744 = vld [vmem:[%s2700 + $0x81] sm:$0xff]
      %v2745 = vld [vmem:[%s2700 + $0x91] sm:$0xff]
      %v2746 = vld [vmem:[%s2700 + $0x99] sm:$0xff]
      %v2747 = vld [vmem:[%s2700 + $0xa9] sm:$0xff]
      %v2748 = vld [vmem:[%s2700 + $0xb1] sm:$0xff]
      %v2749 = vld [vmem:[%s2700 + $0xc1] sm:$0xff]
      %v2750 = vld [vmem:[%s2700 + $0xc9] sm:$0xff]
      %v2751 = vld [vmem:[%s2700 + $0xd9] sm:$0xff]
      %v2752 = vld [vmem:[%s2700 + $0xe1] sm:$0xff]
      %v2753 = vld [vmem:[%s2700 + $0xf1] sm:$0xff]
      %v2754 = vld [vmem:[%s2700 + $0xf9] sm:$0xff]
      %v2755 = vld [vmem:[%s2700 + $0x109] sm:$0xff]
      %v2756 = vld [vmem:[%s2700 + $0x111] sm:$0xff]
      %v2757 = vld [vmem:[%s2700 + $0x121] sm:$0xff]
      %v2758 = vld [vmem:[%s2700 + $0x129] sm:$0xff]
      %v2759 = vld [vmem:[%s2700 + $0x139] sm:$0xff]
      %v2760 = vld [vmem:[%s2700 + $0x141] sm:$0xff]
      %v2761 = vld [vmem:[%s2700 + $0x151] sm:$0xff]
      %v2762 = vld [vmem:[%s2700 + $0x159] sm:$0xff]
      %v2763 = vld [vmem:[%s2700 + $0x169] sm:$0xff]
      %v2764 = vld [vmem:[%s2700 + $0x171] sm:$0xff]
      %v2765 = vld [vmem:[%s2700 + $0x2] sm:$0xff]
      %v2766 = vld [vmem:[%s2700 + $0xa] sm:$0xff]
      %v2767 = vld [vmem:[%s2700 + $0x1a] sm:$0xff]
      %v2768 = vld [vmem:[%s2700 + $0x22] sm:$0xff]
      %v2769 = vld [vmem:[%s2700 + $0x32] sm:$0xff]
      %v2770 = vld [vmem:[%s2700 + $0x3a] sm:$0xff]
      %v2771 = vld [vmem:[%s2700 + $0x4a] sm:$0xff]
      %v2772 = vld [vmem:[%s2700 + $0x52] sm:$0xff]
      %v2773 = vld [vmem:[%s2700 + $0x62] sm:$0xff]
      %v2774 = vld [vmem:[%s2700 + $0x6a] sm:$0xff]
      %v2775 = vld [vmem:[%s2700 + $0x7a] sm:$0xff]
      %v2776 = vld [vmem:[%s2700 + $0x82] sm:$0xff]
      %v2777 = vld [vmem:[%s2700 + $0x92] sm:$0xff]
      %v2778 = vld [vmem:[%s2700 + $0x9a] sm:$0xff]
      %v2779 = vld [vmem:[%s2700 + $0xaa] sm:$0xff]
      %v2780 = vld [vmem:[%s2700 + $0xb2] sm:$0xff]
      %v2781 = vld [vmem:[%s2700 + $0xc2] sm:$0xff]
      %v2782 = vld [vmem:[%s2700 + $0xca] sm:$0xff]
      %v2783 = vld [vmem:[%s2700 + $0xda] sm:$0xff]
      %v2784 = vld [vmem:[%s2700 + $0xe2] sm:$0xff]
      %v2785 = vld [vmem:[%s2700 + $0xf2] sm:$0xff]
      %v2786 = vld [vmem:[%s2700 + $0xfa] sm:$0xff]
      %v2787 = vld [vmem:[%s2700 + $0x10a] sm:$0xff]
      %v2788 = vld [vmem:[%s2700 + $0x112] sm:$0xff]
      %v2789 = vld [vmem:[%s2700 + $0x122] sm:$0xff]
      %v2790 = vld [vmem:[%s2700 + $0x12a] sm:$0xff]
      %v2791 = vld [vmem:[%s2700 + $0x13a] sm:$0xff]
      %v2792 = vld [vmem:[%s2700 + $0x142] sm:$0xff]
      %v2793 = vld [vmem:[%s2700 + $0x152] sm:$0xff]
      %v2794 = vld [vmem:[%s2700 + $0x15a] sm:$0xff]
      %v2795 = vld [vmem:[%s2700 + $0x16a] sm:$0xff]
      %v2796 = vld [vmem:[%s2700 + $0x172] sm:$0xff]
      %2829 = vrot.lane.b32.xlu0 %v2540, 10
      %v2830 = vpop.permute.xlu0 %2829
      %2831 = vrot.lane.b32.xlu0 %v2541, 10
      %v2832 = vpop.permute.xlu0 %2831
      %2833 = vrot.lane.b32.xlu0 %v2542, 10
      %v2834 = vpop.permute.xlu0 %2833
      %2835 = vrot.lane.b32.xlu0 %v2543, 10
      %v2836 = vpop.permute.xlu0 %2835
      %2837 = vrot.lane.b32.xlu0 %v2544, 10
      %v2838 = vpop.permute.xlu0 %2837
      %2839 = vrot.lane.b32.xlu0 %v2545, 10
      %v2840 = vpop.permute.xlu0 %2839
      %2841 = vrot.lane.b32.xlu0 %v2546, 10
      %v2842 = vpop.permute.xlu0 %2841
      %2843 = vrot.lane.b32.xlu0 %v2547, 10
      %v2844 = vpop.permute.xlu0 %2843
      %2845 = vrot.lane.b32.xlu0 %v2548, 10
      %v2846 = vpop.permute.xlu0 %2845
      %2847 = vrot.lane.b32.xlu0 %v2549, 10
      %v2848 = vpop.permute.xlu0 %2847
      %2849 = vrot.lane.b32.xlu0 %v2550, 10
      %v2850 = vpop.permute.xlu0 %2849
      %2851 = vrot.lane.b32.xlu0 %v2551, 10
      %v2852 = vpop.permute.xlu0 %2851
      %2853 = vrot.lane.b32.xlu0 %v2552, 10
      %v2854 = vpop.permute.xlu0 %2853
      %2855 = vrot.lane.b32.xlu0 %v2553, 10
      %v2856 = vpop.permute.xlu0 %2855
      %2857 = vrot.lane.b32.xlu0 %v2554, 10
      %v2858 = vpop.permute.xlu0 %2857
      %2859 = vrot.lane.b32.xlu0 %v2555, 10
      %v2860 = vpop.permute.xlu0 %2859
      %2861 = vrot.lane.b32.xlu0 %v2556, 10
      %v2862 = vpop.permute.xlu0 %2861
      %2863 = vrot.lane.b32.xlu0 %v2557, 10
      %v2864 = vpop.permute.xlu0 %2863
      %2865 = vrot.lane.b32.xlu0 %v2558, 10
      %v2866 = vpop.permute.xlu0 %2865
      %2867 = vrot.lane.b32.xlu0 %v2559, 10
      %v2868 = vpop.permute.xlu0 %2867
      %2869 = vrot.lane.b32.xlu0 %v2560, 10
      %v2870 = vpop.permute.xlu0 %2869
      %2871 = vrot.lane.b32.xlu0 %v2561, 10
      %v2872 = vpop.permute.xlu0 %2871
      %2873 = vrot.lane.b32.xlu0 %v2562, 10
      %v2874 = vpop.permute.xlu0 %2873
      %2875 = vrot.lane.b32.xlu0 %v2563, 10
      %v2876 = vpop.permute.xlu0 %2875
      %2877 = vrot.lane.b32.xlu0 %v2564, 10
      %v2878 = vpop.permute.xlu0 %2877
      %2879 = vrot.lane.b32.xlu0 %v2565, 10
      %v2880 = vpop.permute.xlu0 %2879
      %2881 = vrot.lane.b32.xlu0 %v2566, 10
      %v2882 = vpop.permute.xlu0 %2881
      %2883 = vrot.lane.b32.xlu0 %v2567, 10
      %v2884 = vpop.permute.xlu0 %2883
      %2885 = vrot.lane.b32.xlu0 %v2568, 10
      %v2886 = vpop.permute.xlu0 %2885
      %2887 = vrot.lane.b32.xlu0 %v2569, 10
      %v2888 = vpop.permute.xlu0 %2887
      %2889 = vrot.lane.b32.xlu0 %v2570, 10
      %v2890 = vpop.permute.xlu0 %2889
      %2891 = vrot.lane.b32.xlu0 %v2571, 10
      %v2892 = vpop.permute.xlu0 %2891
      %2957 = vrot.lane.b32.xlu0 %v2572, 20
      %v2958 = vpop.permute.xlu0 %2957
      %2959 = vrot.lane.b32.xlu0 %v2573, 20
      %v2960 = vpop.permute.xlu0 %2959
      %2961 = vrot.lane.b32.xlu0 %v2574, 20
      %v2962 = vpop.permute.xlu0 %2961
      %2963 = vrot.lane.b32.xlu0 %v2575, 20
      %v2964 = vpop.permute.xlu0 %2963
      %2965 = vrot.lane.b32.xlu0 %v2576, 20
      %v2966 = vpop.permute.xlu0 %2965
      %2967 = vrot.lane.b32.xlu0 %v2577, 20
      %v2968 = vpop.permute.xlu0 %2967
      %2969 = vrot.lane.b32.xlu0 %v2578, 20
      %v2970 = vpop.permute.xlu0 %2969
      %2971 = vrot.lane.b32.xlu0 %v2579, 20
      %v2972 = vpop.permute.xlu0 %2971
      %2973 = vrot.lane.b32.xlu0 %v2580, 20
      %v2974 = vpop.permute.xlu0 %2973
      %2975 = vrot.lane.b32.xlu0 %v2581, 20
      %v2976 = vpop.permute.xlu0 %2975
      %2977 = vrot.lane.b32.xlu0 %v2582, 20
      %v2978 = vpop.permute.xlu0 %2977
      %2979 = vrot.lane.b32.xlu0 %v2583, 20
      %v2980 = vpop.permute.xlu0 %2979
      %2981 = vrot.lane.b32.xlu0 %v2584, 20
      %v2982 = vpop.permute.xlu0 %2981
      %2983 = vrot.lane.b32.xlu0 %v2585, 20
      %v2984 = vpop.permute.xlu0 %2983
      %2985 = vrot.lane.b32.xlu0 %v2586, 20
      %v2986 = vpop.permute.xlu0 %2985
      %2987 = vrot.lane.b32.xlu0 %v2587, 20
      %v2988 = vpop.permute.xlu0 %2987
      %2989 = vrot.lane.b32.xlu0 %v2588, 20
      %v2990 = vpop.permute.xlu0 %2989
      %2991 = vrot.lane.b32.xlu0 %v2589, 20
      %v2992 = vpop.permute.xlu0 %2991
      %2993 = vrot.lane.b32.xlu0 %v2590, 20
      %v2994 = vpop.permute.xlu0 %2993
      %2995 = vrot.lane.b32.xlu0 %v2591, 20
      %v2996 = vpop.permute.xlu0 %2995
      %2997 = vrot.lane.b32.xlu0 %v2592, 20
      %v2998 = vpop.permute.xlu0 %2997
      %2999 = vrot.lane.b32.xlu0 %v2593, 20
      %v3000 = vpop.permute.xlu0 %2999
      %3001 = vrot.lane.b32.xlu0 %v2594, 20
      %v3002 = vpop.permute.xlu0 %3001
      %3003 = vrot.lane.b32.xlu0 %v2595, 20
      %v3004 = vpop.permute.xlu0 %3003
      %3005 = vrot.lane.b32.xlu0 %v2596, 20
      %v3006 = vpop.permute.xlu0 %3005
      %3007 = vrot.lane.b32.xlu0 %v2597, 20
      %v3008 = vpop.permute.xlu0 %3007
      %3009 = vrot.lane.b32.xlu0 %v2598, 20
      %v3010 = vpop.permute.xlu0 %3009
      %3011 = vrot.lane.b32.xlu0 %v2599, 20
      %v3012 = vpop.permute.xlu0 %3011
      %3013 = vrot.lane.b32.xlu0 %v2600, 20
      %v3014 = vpop.permute.xlu0 %3013
      %3015 = vrot.lane.b32.xlu0 %v2601, 20
      %v3016 = vpop.permute.xlu0 %3015
      %3017 = vrot.lane.b32.xlu0 %v2602, 20
      %v3018 = vpop.permute.xlu0 %3017
      %3019 = vrot.lane.b32.xlu0 %v2603, 20
      %v3020 = vpop.permute.xlu0 %3019
      %3085 = vrot.lane.b32.xlu0 %v2604, 30
      %v3086 = vpop.permute.xlu0 %3085
      %3087 = vrot.lane.b32.xlu0 %v2605, 30
      %v3088 = vpop.permute.xlu0 %3087
      %3089 = vrot.lane.b32.xlu0 %v2606, 30
      %v3090 = vpop.permute.xlu0 %3089
      %3091 = vrot.lane.b32.xlu0 %v2607, 30
      %v3092 = vpop.permute.xlu0 %3091
      %3093 = vrot.lane.b32.xlu0 %v2608, 30
      %v3094 = vpop.permute.xlu0 %3093
      %3095 = vrot.lane.b32.xlu0 %v2609, 30
      %v3096 = vpop.permute.xlu0 %3095
      %3097 = vrot.lane.b32.xlu0 %v2610, 30
      %v3098 = vpop.permute.xlu0 %3097
      %3099 = vrot.lane.b32.xlu0 %v2611, 30
      %v3100 = vpop.permute.xlu0 %3099
      %3101 = vrot.lane.b32.xlu0 %v2612, 30
      %v3102 = vpop.permute.xlu0 %3101
      %3103 = vrot.lane.b32.xlu0 %v2613, 30
      %v3104 = vpop.permute.xlu0 %3103
      %3105 = vrot.lane.b32.xlu0 %v2614, 30
      %v3106 = vpop.permute.xlu0 %3105
      %3107 = vrot.lane.b32.xlu0 %v2615, 30
      %v3108 = vpop.permute.xlu0 %3107
      %3109 = vrot.lane.b32.xlu0 %v2616, 30
      %v3110 = vpop.permute.xlu0 %3109
      %3111 = vrot.lane.b32.xlu0 %v2617, 30
      %v3112 = vpop.permute.xlu0 %3111
      %3113 = vrot.lane.b32.xlu0 %v2618, 30
      %v3114 = vpop.permute.xlu0 %3113
      %3115 = vrot.lane.b32.xlu0 %v2619, 30
      %v3116 = vpop.permute.xlu0 %3115
      %3117 = vrot.lane.b32.xlu0 %v2620, 30
      %v3118 = vpop.permute.xlu0 %3117
      %3119 = vrot.lane.b32.xlu0 %v2621, 30
      %v3120 = vpop.permute.xlu0 %3119
      %3121 = vrot.lane.b32.xlu0 %v2622, 30
      %v3122 = vpop.permute.xlu0 %3121
      %3123 = vrot.lane.b32.xlu0 %v2623, 30
      %v3124 = vpop.permute.xlu0 %3123
      %3125 = vrot.lane.b32.xlu0 %v2624, 30
      %v3126 = vpop.permute.xlu0 %3125
      %3127 = vrot.lane.b32.xlu0 %v2625, 30
      %v3128 = vpop.permute.xlu0 %3127
      %3129 = vrot.lane.b32.xlu0 %v2626, 30
      %v3130 = vpop.permute.xlu0 %3129
      %3131 = vrot.lane.b32.xlu0 %v2627, 30
      %v3132 = vpop.permute.xlu0 %3131
      %3133 = vrot.lane.b32.xlu0 %v2628, 30
      %v3134 = vpop.permute.xlu0 %3133
      %3135 = vrot.lane.b32.xlu0 %v2629, 30
      %v3136 = vpop.permute.xlu0 %3135
      %3137 = vrot.lane.b32.xlu0 %v2630, 30
      %v3138 = vpop.permute.xlu0 %3137
      %3139 = vrot.lane.b32.xlu0 %v2631, 30
      %v3140 = vpop.permute.xlu0 %3139
      %3141 = vrot.lane.b32.xlu0 %v2632, 30
      %v3142 = vpop.permute.xlu0 %3141
      %3143 = vrot.lane.b32.xlu0 %v2633, 30
      %v3144 = vpop.permute.xlu0 %3143
      %3145 = vrot.lane.b32.xlu0 %v2634, 30
      %v3146 = vpop.permute.xlu0 %3145
      %3147 = vrot.lane.b32.xlu0 %v2635, 30
      %v3148 = vpop.permute.xlu0 %3147
      %3213 = vrot.lane.b32.xlu0 %v2636, 40
      %v3214 = vpop.permute.xlu0 %3213
      %3215 = vrot.lane.b32.xlu0 %v2637, 40
      %v3216 = vpop.permute.xlu0 %3215
      %3217 = vrot.lane.b32.xlu0 %v2638, 40
      %v3218 = vpop.permute.xlu0 %3217
      %3219 = vrot.lane.b32.xlu0 %v2639, 40
      %v3220 = vpop.permute.xlu0 %3219
      %3221 = vrot.lane.b32.xlu0 %v2640, 40
      %v3222 = vpop.permute.xlu0 %3221
      %3223 = vrot.lane.b32.xlu0 %v2641, 40
      %v3224 = vpop.permute.xlu0 %3223
      %3225 = vrot.lane.b32.xlu0 %v2642, 40
      %v3226 = vpop.permute.xlu0 %3225
      %3227 = vrot.lane.b32.xlu0 %v2643, 40
      %v3228 = vpop.permute.xlu0 %3227
      %3229 = vrot.lane.b32.xlu0 %v2644, 40
      %v3230 = vpop.permute.xlu0 %3229
      %3231 = vrot.lane.b32.xlu0 %v2645, 40
      %v3232 = vpop.permute.xlu0 %3231
      %3233 = vrot.lane.b32.xlu0 %v2646, 40
      %v3234 = vpop.permute.xlu0 %3233
      %3235 = vrot.lane.b32.xlu0 %v2647, 40
      %v3236 = vpop.permute.xlu0 %3235
      %3237 = vrot.lane.b32.xlu0 %v2648, 40
      %v3238 = vpop.permute.xlu0 %3237
      %3239 = vrot.lane.b32.xlu0 %v2649, 40
      %v3240 = vpop.permute.xlu0 %3239
      %3241 = vrot.lane.b32.xlu0 %v2650, 40
      %v3242 = vpop.permute.xlu0 %3241
      %3243 = vrot.lane.b32.xlu0 %v2651, 40
      %v3244 = vpop.permute.xlu0 %3243
      %3245 = vrot.lane.b32.xlu0 %v2652, 40
      %v3246 = vpop.permute.xlu0 %3245
      %3247 = vrot.lane.b32.xlu0 %v2653, 40
      %v3248 = vpop.permute.xlu0 %3247
      %3249 = vrot.lane.b32.xlu0 %v2654, 40
      %v3250 = vpop.permute.xlu0 %3249
      %3251 = vrot.lane.b32.xlu0 %v2655, 40
      %v3252 = vpop.permute.xlu0 %3251
      %3253 = vrot.lane.b32.xlu0 %v2656, 40
      %v3254 = vpop.permute.xlu0 %3253
      %3255 = vrot.lane.b32.xlu0 %v2657, 40
      %v3256 = vpop.permute.xlu0 %3255
      %3257 = vrot.lane.b32.xlu0 %v2658, 40
      %v3258 = vpop.permute.xlu0 %3257
      %3259 = vrot.lane.b32.xlu0 %v2659, 40
      %v3260 = vpop.permute.xlu0 %3259
      %3261 = vrot.lane.b32.xlu0 %v2660, 40
      %v3262 = vpop.permute.xlu0 %3261
      %3263 = vrot.lane.b32.xlu0 %v2661, 40
      %v3264 = vpop.permute.xlu0 %3263
      %3265 = vrot.lane.b32.xlu0 %v2662, 40
      %v3266 = vpop.permute.xlu0 %3265
      %3267 = vrot.lane.b32.xlu0 %v2663, 40
      %v3268 = vpop.permute.xlu0 %3267
      %3269 = vrot.lane.b32.xlu0 %v2664, 40
      %v3270 = vpop.permute.xlu0 %3269
      %3271 = vrot.lane.b32.xlu0 %v2665, 40
      %v3272 = vpop.permute.xlu0 %3271
      %3273 = vrot.lane.b32.xlu0 %v2666, 40
      %v3274 = vpop.permute.xlu0 %3273
      %3275 = vrot.lane.b32.xlu0 %v2667, 40
      %v3276 = vpop.permute.xlu0 %3275
      %3341 = vrot.lane.b32.xlu0 %v2668, 50
      %v3342 = vpop.permute.xlu0 %3341
      %3343 = vrot.lane.b32.xlu0 %v2669, 50
      %v3344 = vpop.permute.xlu0 %3343
      %3345 = vrot.lane.b32.xlu0 %v2670, 50
      %v3346 = vpop.permute.xlu0 %3345
      %3347 = vrot.lane.b32.xlu0 %v2671, 50
      %v3348 = vpop.permute.xlu0 %3347
      %3349 = vrot.lane.b32.xlu0 %v2672, 50
      %v3350 = vpop.permute.xlu0 %3349
      %3351 = vrot.lane.b32.xlu0 %v2673, 50
      %v3352 = vpop.permute.xlu0 %3351
      %3353 = vrot.lane.b32.xlu0 %v2674, 50
      %v3354 = vpop.permute.xlu0 %3353
      %3355 = vrot.lane.b32.xlu0 %v2675, 50
      %v3356 = vpop.permute.xlu0 %3355
      %3357 = vrot.lane.b32.xlu0 %v2676, 50
      %v3358 = vpop.permute.xlu0 %3357
      %3359 = vrot.lane.b32.xlu0 %v2677, 50
      %v3360 = vpop.permute.xlu0 %3359
      %3361 = vrot.lane.b32.xlu0 %v2678, 50
      %v3362 = vpop.permute.xlu0 %3361
      %3363 = vrot.lane.b32.xlu0 %v2679, 50
      %v3364 = vpop.permute.xlu0 %3363
      %3365 = vrot.lane.b32.xlu0 %v2680, 50
      %v3366 = vpop.permute.xlu0 %3365
      %3367 = vrot.lane.b32.xlu0 %v2681, 50
      %v3368 = vpop.permute.xlu0 %3367
      %3369 = vrot.lane.b32.xlu0 %v2682, 50
      %v3370 = vpop.permute.xlu0 %3369
      %3371 = vrot.lane.b32.xlu0 %v2683, 50
      %v3372 = vpop.permute.xlu0 %3371
      %3373 = vrot.lane.b32.xlu0 %v2684, 50
      %v3374 = vpop.permute.xlu0 %3373
      %3375 = vrot.lane.b32.xlu0 %v2685, 50
      %v3376 = vpop.permute.xlu0 %3375
      %3377 = vrot.lane.b32.xlu0 %v2686, 50
      %v3378 = vpop.permute.xlu0 %3377
      %3379 = vrot.lane.b32.xlu0 %v2687, 50
      %v3380 = vpop.permute.xlu0 %3379
      %3381 = vrot.lane.b32.xlu0 %v2688, 50
      %v3382 = vpop.permute.xlu0 %3381
      %3383 = vrot.lane.b32.xlu0 %v2689, 50
      %v3384 = vpop.permute.xlu0 %3383
      %3385 = vrot.lane.b32.xlu0 %v2690, 50
      %v3386 = vpop.permute.xlu0 %3385
      %3387 = vrot.lane.b32.xlu0 %v2691, 50
      %v3388 = vpop.permute.xlu0 %3387
      %3389 = vrot.lane.b32.xlu0 %v2692, 50
      %v3390 = vpop.permute.xlu0 %3389
      %3391 = vrot.lane.b32.xlu0 %v2693, 50
      %v3392 = vpop.permute.xlu0 %3391
      %3393 = vrot.lane.b32.xlu0 %v2694, 50
      %v3394 = vpop.permute.xlu0 %3393
      %3395 = vrot.lane.b32.xlu0 %v2695, 50
      %v3396 = vpop.permute.xlu0 %3395
      %3397 = vrot.lane.b32.xlu0 %v2696, 50
      %v3398 = vpop.permute.xlu0 %3397
      %3399 = vrot.lane.b32.xlu0 %v2697, 50
      %v3400 = vpop.permute.xlu0 %3399
      %3401 = vrot.lane.b32.xlu0 %v2698, 50
      %v3402 = vpop.permute.xlu0 %3401
      %3403 = vrot.lane.b32.xlu0 %v2699, 50
      %v3404 = vpop.permute.xlu0 %3403
      %3469 = vrot.lane.b32.xlu0 %v2701, 60
      %v3470 = vpop.permute.xlu0 %3469
      %3471 = vrot.lane.b32.xlu0 %v2702, 60
      %v3472 = vpop.permute.xlu0 %3471
      %3473 = vrot.lane.b32.xlu0 %v2703, 60
      %v3474 = vpop.permute.xlu0 %3473
      %3475 = vrot.lane.b32.xlu0 %v2704, 60
      %v3476 = vpop.permute.xlu0 %3475
      %3477 = vrot.lane.b32.xlu0 %v2705, 60
      %v3478 = vpop.permute.xlu0 %3477
      %3479 = vrot.lane.b32.xlu0 %v2706, 60
      %v3480 = vpop.permute.xlu0 %3479
      %3481 = vrot.lane.b32.xlu0 %v2707, 60
      %v3482 = vpop.permute.xlu0 %3481
      %3483 = vrot.lane.b32.xlu0 %v2708, 60
      %v3484 = vpop.permute.xlu0 %3483
      %3485 = vrot.lane.b32.xlu0 %v2709, 60
      %v3486 = vpop.permute.xlu0 %3485
      %3487 = vrot.lane.b32.xlu0 %v2710, 60
      %v3488 = vpop.permute.xlu0 %3487
      %3489 = vrot.lane.b32.xlu0 %v2711, 60
      %v3490 = vpop.permute.xlu0 %3489
      %3491 = vrot.lane.b32.xlu0 %v2712, 60
      %v3492 = vpop.permute.xlu0 %3491
      %3493 = vrot.lane.b32.xlu0 %v2713, 60
      %v3494 = vpop.permute.xlu0 %3493
      %3495 = vrot.lane.b32.xlu0 %v2714, 60
      %v3496 = vpop.permute.xlu0 %3495
      %3497 = vrot.lane.b32.xlu0 %v2715, 60
      %v3498 = vpop.permute.xlu0 %3497
      %3499 = vrot.lane.b32.xlu0 %v2716, 60
      %v3500 = vpop.permute.xlu0 %3499
      %3501 = vrot.lane.b32.xlu0 %v2717, 60
      %v3502 = vpop.permute.xlu0 %3501
      %3503 = vrot.lane.b32.xlu0 %v2718, 60
      %v3504 = vpop.permute.xlu0 %3503
      %3505 = vrot.lane.b32.xlu0 %v2719, 60
      %v3506 = vpop.permute.xlu0 %3505
      %3507 = vrot.lane.b32.xlu0 %v2720, 60
      %v3508 = vpop.permute.xlu0 %3507
      %3509 = vrot.lane.b32.xlu0 %v2721, 60
      %v3510 = vpop.permute.xlu0 %3509
      %3511 = vrot.lane.b32.xlu0 %v2722, 60
      %v3512 = vpop.permute.xlu0 %3511
      %3513 = vrot.lane.b32.xlu0 %v2723, 60
      %v3514 = vpop.permute.xlu0 %3513
      %3515 = vrot.lane.b32.xlu0 %v2724, 60
      %v3516 = vpop.permute.xlu0 %3515
      %3517 = vrot.lane.b32.xlu0 %v2725, 60
      %v3518 = vpop.permute.xlu0 %3517
      %3519 = vrot.lane.b32.xlu0 %v2726, 60
      %v3520 = vpop.permute.xlu0 %3519
      %3521 = vrot.lane.b32.xlu0 %v2727, 60
      %v3522 = vpop.permute.xlu0 %3521
      %3523 = vrot.lane.b32.xlu0 %v2728, 60
      %v3524 = vpop.permute.xlu0 %3523
      %3525 = vrot.lane.b32.xlu0 %v2729, 60
      %v3526 = vpop.permute.xlu0 %3525
      %3527 = vrot.lane.b32.xlu0 %v2730, 60
      %v3528 = vpop.permute.xlu0 %3527
      %3529 = vrot.lane.b32.xlu0 %v2731, 60
      %v3530 = vpop.permute.xlu0 %3529
      %3531 = vrot.lane.b32.xlu0 %v2732, 60
      %v3532 = vpop.permute.xlu0 %3531
      %3597 = vrot.lane.b32.xlu0 %v2733, 70
      %v3598 = vpop.permute.xlu0 %3597
      %3599 = vrot.lane.b32.xlu0 %v2734, 70
      %v3600 = vpop.permute.xlu0 %3599
      %3601 = vrot.lane.b32.xlu0 %v2735, 70
      %v3602 = vpop.permute.xlu0 %3601
      %3603 = vrot.lane.b32.xlu0 %v2736, 70
      %v3604 = vpop.permute.xlu0 %3603
      %3605 = vrot.lane.b32.xlu0 %v2737, 70
      %v3606 = vpop.permute.xlu0 %3605
      %3607 = vrot.lane.b32.xlu0 %v2738, 70
      %v3608 = vpop.permute.xlu0 %3607
      %3609 = vrot.lane.b32.xlu0 %v2739, 70
      %v3610 = vpop.permute.xlu0 %3609
      %3611 = vrot.lane.b32.xlu0 %v2740, 70
      %v3612 = vpop.permute.xlu0 %3611
      %3613 = vrot.lane.b32.xlu0 %v2741, 70
      %v3614 = vpop.permute.xlu0 %3613
      %3615 = vrot.lane.b32.xlu0 %v2742, 70
      %v3616 = vpop.permute.xlu0 %3615
      %3617 = vrot.lane.b32.xlu0 %v2743, 70
      %v3618 = vpop.permute.xlu0 %3617
      %3619 = vrot.lane.b32.xlu0 %v2744, 70
      %v3620 = vpop.permute.xlu0 %3619
      %3621 = vrot.lane.b32.xlu0 %v2745, 70
      %v3622 = vpop.permute.xlu0 %3621
      %3623 = vrot.lane.b32.xlu0 %v2746, 70
      %v3624 = vpop.permute.xlu0 %3623
      %3625 = vrot.lane.b32.xlu0 %v2747, 70
      %v3626 = vpop.permute.xlu0 %3625
      %3627 = vrot.lane.b32.xlu0 %v2748, 70
      %v3628 = vpop.permute.xlu0 %3627
      %3629 = vrot.lane.b32.xlu0 %v2749, 70
      %v3630 = vpop.permute.xlu0 %3629
      %3631 = vrot.lane.b32.xlu0 %v2750, 70
      %v3632 = vpop.permute.xlu0 %3631
      %3633 = vrot.lane.b32.xlu0 %v2751, 70
      %v3634 = vpop.permute.xlu0 %3633
      %3635 = vrot.lane.b32.xlu0 %v2752, 70
      %v3636 = vpop.permute.xlu0 %3635
      %3637 = vrot.lane.b32.xlu0 %v2753, 70
      %v3638 = vpop.permute.xlu0 %3637
      %3639 = vrot.lane.b32.xlu0 %v2754, 70
      %v3640 = vpop.permute.xlu0 %3639
      %3641 = vrot.lane.b32.xlu0 %v2755, 70
      %v3642 = vpop.permute.xlu0 %3641
      %3643 = vrot.lane.b32.xlu0 %v2756, 70
      %v3644 = vpop.permute.xlu0 %3643
      %3645 = vrot.lane.b32.xlu0 %v2757, 70
      %v3646 = vpop.permute.xlu0 %3645
      %3647 = vrot.lane.b32.xlu0 %v2758, 70
      %v3648 = vpop.permute.xlu0 %3647
      %3649 = vrot.lane.b32.xlu0 %v2759, 70
      %v3650 = vpop.permute.xlu0 %3649
      %3651 = vrot.lane.b32.xlu0 %v2760, 70
      %v3652 = vpop.permute.xlu0 %3651
      %3653 = vrot.lane.b32.xlu0 %v2761, 70
      %v3654 = vpop.permute.xlu0 %3653
      %3655 = vrot.lane.b32.xlu0 %v2762, 70
      %v3656 = vpop.permute.xlu0 %3655
      %3657 = vrot.lane.b32.xlu0 %v2763, 70
      %v3658 = vpop.permute.xlu0 %3657
      %3659 = vrot.lane.b32.xlu0 %v2764, 70
      %v3660 = vpop.permute.xlu0 %3659
      %3725 = vrot.lane.b32.xlu0 %v2765, 80
      %v3726 = vpop.permute.xlu0 %3725
      %3727 = vrot.lane.b32.xlu0 %v2766, 80
      %v3728 = vpop.permute.xlu0 %3727
      %3729 = vrot.lane.b32.xlu0 %v2767, 80
      %v3730 = vpop.permute.xlu0 %3729
      %3731 = vrot.lane.b32.xlu0 %v2768, 80
      %v3732 = vpop.permute.xlu0 %3731
      %3733 = vrot.lane.b32.xlu0 %v2769, 80
      %v3734 = vpop.permute.xlu0 %3733
      %3735 = vrot.lane.b32.xlu0 %v2770, 80
      %v3736 = vpop.permute.xlu0 %3735
      %3737 = vrot.lane.b32.xlu0 %v2771, 80
      %v3738 = vpop.permute.xlu0 %3737
      %3739 = vrot.lane.b32.xlu0 %v2772, 80
      %v3740 = vpop.permute.xlu0 %3739
      %3741 = vrot.lane.b32.xlu0 %v2773, 80
      %v3742 = vpop.permute.xlu0 %3741
      %3743 = vrot.lane.b32.xlu0 %v2774, 80
      %v3744 = vpop.permute.xlu0 %3743
      %3745 = vrot.lane.b32.xlu0 %v2775, 80
      %v3746 = vpop.permute.xlu0 %3745
      %3747 = vrot.lane.b32.xlu0 %v2776, 80
      %v3748 = vpop.permute.xlu0 %3747
      %3749 = vrot.lane.b32.xlu0 %v2777, 80
      %v3750 = vpop.permute.xlu0 %3749
      %3751 = vrot.lane.b32.xlu0 %v2778, 80
      %v3752 = vpop.permute.xlu0 %3751
      %3753 = vrot.lane.b32.xlu0 %v2779, 80
      %v3754 = vpop.permute.xlu0 %3753
      %3755 = vrot.lane.b32.xlu0 %v2780, 80
      %v3756 = vpop.permute.xlu0 %3755
      %3757 = vrot.lane.b32.xlu0 %v2781, 80
      %v3758 = vpop.permute.xlu0 %3757
      %3759 = vrot.lane.b32.xlu0 %v2782, 80
      %v3760 = vpop.permute.xlu0 %3759
      %3761 = vrot.lane.b32.xlu0 %v2783, 80
      %v3762 = vpop.permute.xlu0 %3761
      %3763 = vrot.lane.b32.xlu0 %v2784, 80
      %v3764 = vpop.permute.xlu0 %3763
      %3765 = vrot.lane.b32.xlu0 %v2785, 80
      %v3766 = vpop.permute.xlu0 %3765
      %3767 = vrot.lane.b32.xlu0 %v2786, 80
      %v3768 = vpop.permute.xlu0 %3767
      %3769 = vrot.lane.b32.xlu0 %v2787, 80
      %v3770 = vpop.permute.xlu0 %3769
      %3771 = vrot.lane.b32.xlu0 %v2788, 80
      %v3772 = vpop.permute.xlu0 %3771
      %3773 = vrot.lane.b32.xlu0 %v2789, 80
      %v3774 = vpop.permute.xlu0 %3773
      %3775 = vrot.lane.b32.xlu0 %v2790, 80
      %v3776 = vpop.permute.xlu0 %3775
      %3777 = vrot.lane.b32.xlu0 %v2791, 80
      %v3778 = vpop.permute.xlu0 %3777
      %3779 = vrot.lane.b32.xlu0 %v2792, 80
      %v3780 = vpop.permute.xlu0 %3779
      %3781 = vrot.lane.b32.xlu0 %v2793, 80
      %v3782 = vpop.permute.xlu0 %3781
      %3783 = vrot.lane.b32.xlu0 %v2794, 80
      %v3784 = vpop.permute.xlu0 %3783
      %3785 = vrot.lane.b32.xlu0 %v2795, 80
      %v3786 = vpop.permute.xlu0 %3785
      %3787 = vrot.lane.b32.xlu0 %v2796, 80
      %v3788 = vpop.permute.xlu0 %3787
      %v3821 = vsel %vm442, %v2508, %v2830
      %v3822 = vsel %vm442, %v2509, %v2832
      %v3823 = vsel %vm442, %v2510, %v2834
      %v3824 = vsel %vm442, %v2511, %v2836
      %v3825 = vsel %vm442, %v2512, %v2838
      %v3826 = vsel %vm442, %v2513, %v2840
      %v3827 = vsel %vm442, %v2514, %v2842
      %v3828 = vsel %vm442, %v2515, %v2844
      %v3829 = vsel %vm442, %v2516, %v2846
      %v3830 = vsel %vm442, %v2517, %v2848
      %v3831 = vsel %vm442, %v2518, %v2850
      %v3832 = vsel %vm442, %v2519, %v2852
      %v3833 = vsel %vm442, %v2520, %v2854
      %v3834 = vsel %vm442, %v2521, %v2856
      %v3835 = vsel %vm442, %v2522, %v2858
      %v3836 = vsel %vm442, %v2523, %v2860
      %v3837 = vsel %vm442, %v2524, %v2862
      %v3838 = vsel %vm442, %v2525, %v2864
      %v3839 = vsel %vm442, %v2526, %v2866
      %v3840 = vsel %vm442, %v2527, %v2868
      %v3841 = vsel %vm442, %v2528, %v2870
      %v3842 = vsel %vm442, %v2529, %v2872
      %v3843 = vsel %vm442, %v2530, %v2874
      %v3844 = vsel %vm442, %v2531, %v2876
      %v3845 = vsel %vm442, %v2532, %v2878
      %v3846 = vsel %vm442, %v2533, %v2880
      %v3847 = vsel %vm442, %v2534, %v2882
      %v3848 = vsel %vm442, %v2535, %v2884
      %v3849 = vsel %vm442, %v2536, %v2886
      %v3850 = vsel %vm442, %v2537, %v2888
      %v3851 = vsel %vm442, %v2538, %v2890
      %v3852 = vsel %vm442, %v2539, %v2892
      %vm3853 = vcmask 162816
      %v3854 = vsel %vm3853, %v3821, %v2958
      %v3855 = vsel %vm3853, %v3822, %v2960
      %v3856 = vsel %vm3853, %v3823, %v2962
      %v3857 = vsel %vm3853, %v3824, %v2964
      %v3858 = vsel %vm3853, %v3825, %v2966
      %v3859 = vsel %vm3853, %v3826, %v2968
      %v3860 = vsel %vm3853, %v3827, %v2970
      %v3861 = vsel %vm3853, %v3828, %v2972
      %v3862 = vsel %vm3853, %v3829, %v2974
      %v3863 = vsel %vm3853, %v3830, %v2976
      %v3864 = vsel %vm3853, %v3831, %v2978
      %v3865 = vsel %vm3853, %v3832, %v2980
      %v3866 = vsel %vm3853, %v3833, %v2982
      %v3867 = vsel %vm3853, %v3834, %v2984
      %v3868 = vsel %vm3853, %v3835, %v2986
      %v3869 = vsel %vm3853, %v3836, %v2988
      %v3870 = vsel %vm3853, %v3837, %v2990
      %v3871 = vsel %vm3853, %v3838, %v2992
      %v3872 = vsel %vm3853, %v3839, %v2994
      %v3873 = vsel %vm3853, %v3840, %v2996
      %v3874 = vsel %vm3853, %v3841, %v2998
      %v3875 = vsel %vm3853, %v3842, %v3000
      %v3876 = vsel %vm3853, %v3843, %v3002
      %v3877 = vsel %vm3853, %v3844, %v3004
      %v3878 = vsel %vm3853, %v3845, %v3006
      %v3879 = vsel %vm3853, %v3846, %v3008
      %v3880 = vsel %vm3853, %v3847, %v3010
      %v3881 = vsel %vm3853, %v3848, %v3012
      %v3882 = vsel %vm3853, %v3849, %v3014
      %v3883 = vsel %vm3853, %v3850, %v3016
      %v3884 = vsel %vm3853, %v3851, %v3018
      %v3885 = vsel %vm3853, %v3852, %v3020
      %v3886 = vsel %vm2042, %v3854, %v3086
      %v3887 = vsel %vm2042, %v3855, %v3088
      %v3888 = vsel %vm2042, %v3856, %v3090
      %v3889 = vsel %vm2042, %v3857, %v3092
      %v3890 = vsel %vm2042, %v3858, %v3094
      %v3891 = vsel %vm2042, %v3859, %v3096
      %v3892 = vsel %vm2042, %v3860, %v3098
      %v3893 = vsel %vm2042, %v3861, %v3100
      %v3894 = vsel %vm2042, %v3862, %v3102
      %v3895 = vsel %vm2042, %v3863, %v3104
      %v3896 = vsel %vm2042, %v3864, %v3106
      %v3897 = vsel %vm2042, %v3865, %v3108
      %v3898 = vsel %vm2042, %v3866, %v3110
      %v3899 = vsel %vm2042, %v3867, %v3112
      %v3900 = vsel %vm2042, %v3868, %v3114
      %v3901 = vsel %vm2042, %v3869, %v3116
      %v3902 = vsel %vm2042, %v3870, %v3118
      %v3903 = vsel %vm2042, %v3871, %v3120
      %v3904 = vsel %vm2042, %v3872, %v3122
      %v3905 = vsel %vm2042, %v3873, %v3124
      %v3906 = vsel %vm2042, %v3874, %v3126
      %v3907 = vsel %vm2042, %v3875, %v3128
      %v3908 = vsel %vm2042, %v3876, %v3130
      %v3909 = vsel %vm2042, %v3877, %v3132
      %v3910 = vsel %vm2042, %v3878, %v3134
      %v3911 = vsel %vm2042, %v3879, %v3136
      %v3912 = vsel %vm2042, %v3880, %v3138
      %v3913 = vsel %vm2042, %v3881, %v3140
      %v3914 = vsel %vm2042, %v3882, %v3142
      %v3915 = vsel %vm2042, %v3883, %v3144
      %v3916 = vsel %vm2042, %v3884, %v3146
      %v3917 = vsel %vm2042, %v3885, %v3148
      %vm3918 = vcmask 326656
      %v3919 = vsel %vm3918, %v3886, %v3214
      %v3920 = vsel %vm3918, %v3887, %v3216
      %v3921 = vsel %vm3918, %v3888, %v3218
      %v3922 = vsel %vm3918, %v3889, %v3220
      %v3923 = vsel %vm3918, %v3890, %v3222
      %v3924 = vsel %vm3918, %v3891, %v3224
      %v3925 = vsel %vm3918, %v3892, %v3226
      %v3926 = vsel %vm3918, %v3893, %v3228
      %v3927 = vsel %vm3918, %v3894, %v3230
      %v3928 = vsel %vm3918, %v3895, %v3232
      %v3929 = vsel %vm3918, %v3896, %v3234
      %v3930 = vsel %vm3918, %v3897, %v3236
      %v3931 = vsel %vm3918, %v3898, %v3238
      %v3932 = vsel %vm3918, %v3899, %v3240
      %v3933 = vsel %vm3918, %v3900, %v3242
      %v3934 = vsel %vm3918, %v3901, %v3244
      %v3935 = vsel %vm3918, %v3902, %v3246
      %v3936 = vsel %vm3918, %v3903, %v3248
      %v3937 = vsel %vm3918, %v3904, %v3250
      %v3938 = vsel %vm3918, %v3905, %v3252
      %v3939 = vsel %vm3918, %v3906, %v3254
      %v3940 = vsel %vm3918, %v3907, %v3256
      %v3941 = vsel %vm3918, %v3908, %v3258
      %v3942 = vsel %vm3918, %v3909, %v3260
      %v3943 = vsel %vm3918, %v3910, %v3262
      %v3944 = vsel %vm3918, %v3911, %v3264
      %v3945 = vsel %vm3918, %v3912, %v3266
      %v3946 = vsel %vm3918, %v3913, %v3268
      %v3947 = vsel %vm3918, %v3914, %v3270
      %v3948 = vsel %vm3918, %v3915, %v3272
      %v3949 = vsel %vm3918, %v3916, %v3274
      %v3950 = vsel %vm3918, %v3917, %v3276
      %vm3951 = vcmask 408576
      %v3952 = vsel %vm3951, %v3919, %v3342
      %v3953 = vsel %vm3951, %v3920, %v3344
      %v3954 = vsel %vm3951, %v3921, %v3346
      %v3955 = vsel %vm3951, %v3922, %v3348
      %v3956 = vsel %vm3951, %v3923, %v3350
      %v3957 = vsel %vm3951, %v3924, %v3352
      %v3958 = vsel %vm3951, %v3925, %v3354
      %v3959 = vsel %vm3951, %v3926, %v3356
      %v3960 = vsel %vm3951, %v3927, %v3358
      %v3961 = vsel %vm3951, %v3928, %v3360
      %v3962 = vsel %vm3951, %v3929, %v3362
      %v3963 = vsel %vm3951, %v3930, %v3364
      %v3964 = vsel %vm3951, %v3931, %v3366
      %v3965 = vsel %vm3951, %v3932, %v3368
      %v3966 = vsel %vm3951, %v3933, %v3370
      %v3967 = vsel %vm3951, %v3934, %v3372
      %v3968 = vsel %vm3951, %v3935, %v3374
      %v3969 = vsel %vm3951, %v3936, %v3376
      %v3970 = vsel %vm3951, %v3937, %v3378
      %v3971 = vsel %vm3951, %v3938, %v3380
      %v3972 = vsel %vm3951, %v3939, %v3382
      %v3973 = vsel %vm3951, %v3940, %v3384
      %v3974 = vsel %vm3951, %v3941, %v3386
      %v3975 = vsel %vm3951, %v3942, %v3388
      %v3976 = vsel %vm3951, %v3943, %v3390
      %v3977 = vsel %vm3951, %v3944, %v3392
      %v3978 = vsel %vm3951, %v3945, %v3394
      %v3979 = vsel %vm3951, %v3946, %v3396
      %v3980 = vsel %vm3951, %v3947, %v3398
      %v3981 = vsel %vm3951, %v3948, %v3400
      %v3982 = vsel %vm3951, %v3949, %v3402
      %v3983 = vsel %vm3951, %v3950, %v3404
      %vm3984 = vcmask 490496
      %v3985 = vsel %vm3984, %v3952, %v3470
      %v3986 = vsel %vm3984, %v3953, %v3472
      %v3987 = vsel %vm3984, %v3954, %v3474
      %v3988 = vsel %vm3984, %v3955, %v3476
      %v3989 = vsel %vm3984, %v3956, %v3478
      %v3990 = vsel %vm3984, %v3957, %v3480
      %v3991 = vsel %vm3984, %v3958, %v3482
      %v3992 = vsel %vm3984, %v3959, %v3484
      %v3993 = vsel %vm3984, %v3960, %v3486
      %v3994 = vsel %vm3984, %v3961, %v3488
      %v3995 = vsel %vm3984, %v3962, %v3490
      %v3996 = vsel %vm3984, %v3963, %v3492
      %v3997 = vsel %vm3984, %v3964, %v3494
      %v3998 = vsel %vm3984, %v3965, %v3496
      %v3999 = vsel %vm3984, %v3966, %v3498
      %v4000 = vsel %vm3984, %v3967, %v3500
      %v4001 = vsel %vm3984, %v3968, %v3502
      %v4002 = vsel %vm3984, %v3969, %v3504
      %v4003 = vsel %vm3984, %v3970, %v3506
      %v4004 = vsel %vm3984, %v3971, %v3508
      %v4005 = vsel %vm3984, %v3972, %v3510
      %v4006 = vsel %vm3984, %v3973, %v3512
      %v4007 = vsel %vm3984, %v3974, %v3514
      %v4008 = vsel %vm3984, %v3975, %v3516
      %v4009 = vsel %vm3984, %v3976, %v3518
      %v4010 = vsel %vm3984, %v3977, %v3520
      %v4011 = vsel %vm3984, %v3978, %v3522
      %v4012 = vsel %vm3984, %v3979, %v3524
      %v4013 = vsel %vm3984, %v3980, %v3526
      %v4014 = vsel %vm3984, %v3981, %v3528
      %v4015 = vsel %vm3984, %v3982, %v3530
      %v4016 = vsel %vm3984, %v3983, %v3532
      %vm4017 = vcmask 572416
      %v4018 = vsel %vm4017, %v3985, %v3598
      %v4019 = vsel %vm4017, %v3986, %v3600
      %v4020 = vsel %vm4017, %v3987, %v3602
      %v4021 = vsel %vm4017, %v3988, %v3604
      %v4022 = vsel %vm4017, %v3989, %v3606
      %v4023 = vsel %vm4017, %v3990, %v3608
      %v4024 = vsel %vm4017, %v3991, %v3610
      %v4025 = vsel %vm4017, %v3992, %v3612
      %v4026 = vsel %vm4017, %v3993, %v3614
      %v4027 = vsel %vm4017, %v3994, %v3616
      %v4028 = vsel %vm4017, %v3995, %v3618
      %v4029 = vsel %vm4017, %v3996, %v3620
      %v4030 = vsel %vm4017, %v3997, %v3622
      %v4031 = vsel %vm4017, %v3998, %v3624
      %v4032 = vsel %vm4017, %v3999, %v3626
      %v4033 = vsel %vm4017, %v4000, %v3628
      %v4034 = vsel %vm4017, %v4001, %v3630
      %v4035 = vsel %vm4017, %v4002, %v3632
      %v4036 = vsel %vm4017, %v4003, %v3634
      %v4037 = vsel %vm4017, %v4004, %v3636
      %v4038 = vsel %vm4017, %v4005, %v3638
      %v4039 = vsel %vm4017, %v4006, %v3640
      %v4040 = vsel %vm4017, %v4007, %v3642
      %v4041 = vsel %vm4017, %v4008, %v3644
      %v4042 = vsel %vm4017, %v4009, %v3646
      %v4043 = vsel %vm4017, %v4010, %v3648
      %v4044 = vsel %vm4017, %v4011, %v3650
      %v4045 = vsel %vm4017, %v4012, %v3652
      %v4046 = vsel %vm4017, %v4013, %v3654
      %v4047 = vsel %vm4017, %v4014, %v3656
      %v4048 = vsel %vm4017, %v4015, %v3658
      %v4049 = vsel %vm4017, %v4016, %v3660
      %vm4050 = vcmask 654336
      %v4051 = vsel %vm4050, %v4018, %v3726
      %v4052 = vsel %vm4050, %v4019, %v3728
      %v4053 = vsel %vm4050, %v4020, %v3730
      %v4054 = vsel %vm4050, %v4021, %v3732
      %v4055 = vsel %vm4050, %v4022, %v3734
      %v4056 = vsel %vm4050, %v4023, %v3736
      %v4057 = vsel %vm4050, %v4024, %v3738
      %v4058 = vsel %vm4050, %v4025, %v3740
      %v4059 = vsel %vm4050, %v4026, %v3742
      %v4060 = vsel %vm4050, %v4027, %v3744
      %v4061 = vsel %vm4050, %v4028, %v3746
      %v4062 = vsel %vm4050, %v4029, %v3748
      %v4063 = vsel %vm4050, %v4030, %v3750
      %v4064 = vsel %vm4050, %v4031, %v3752
      %v4065 = vsel %vm4050, %v4032, %v3754
      %v4066 = vsel %vm4050, %v4033, %v3756
      %v4067 = vsel %vm4050, %v4034, %v3758
      %v4068 = vsel %vm4050, %v4035, %v3760
      %v4069 = vsel %vm4050, %v4036, %v3762
      %v4070 = vsel %vm4050, %v4037, %v3764
      %v4071 = vsel %vm4050, %v4038, %v3766
      %v4072 = vsel %vm4050, %v4039, %v3768
      %v4073 = vsel %vm4050, %v4040, %v3770
      %v4074 = vsel %vm4050, %v4041, %v3772
      %v4075 = vsel %vm4050, %v4042, %v3774
      %v4076 = vsel %vm4050, %v4043, %v3776
      %v4077 = vsel %vm4050, %v4044, %v3778
      %v4078 = vsel %vm4050, %v4045, %v3780
      %v4079 = vsel %vm4050, %v4046, %v3782
      %v4080 = vsel %vm4050, %v4047, %v3784
      %v4081 = vsel %vm4050, %v4048, %v3786
      %v4082 = vsel %vm4050, %v4049, %v3788
      %v4083 = vpack.c.bf16 %v4052, %v4051
      %v4084 = vpack.c.bf16 %v4054, %v4053
      %v4085 = vpack.c.bf16 %v4056, %v4055
      %v4086 = vpack.c.bf16 %v4058, %v4057
      %v4087 = vpack.c.bf16 %v4060, %v4059
      %v4088 = vpack.c.bf16 %v4062, %v4061
      %v4089 = vpack.c.bf16 %v4064, %v4063
      %v4090 = vpack.c.bf16 %v4066, %v4065
      %v4091 = vpack.c.bf16 %v4068, %v4067
      %v4092 = vpack.c.bf16 %v4070, %v4069
      %v4093 = vpack.c.bf16 %v4072, %v4071
      %v4094 = vpack.c.bf16 %v4074, %v4073
      %v4095 = vpack.c.bf16 %v4076, %v4075
      %v4096 = vpack.c.bf16 %v4078, %v4077
      %v4097 = vpack.c.bf16 %v4080, %v4079
      %v4098 = vpack.c.bf16 %v4082, %v4081
      %v4100 = vlaneseq
      %v4101 = vshrl.u32 %v4100, 7
      %v4102 = vsub.s32 0, %v4101
      %v4103 = vrot.slane %v2507, %v4102
      %v4117 = vunpack.c.l.b16 %v2495
      %v4118 = vunpack.c.l.b16 %v2496
      %v4119 = vunpack.c.l.b16 %v2497
      %v4120 = vunpack.c.l.b16 %v2498
      %v4121 = vunpack.c.l.b16 %v2499
      %v4122 = vunpack.c.l.b16 %v2500
      %v4123 = vunpack.c.l.b16 %v2501
      %v4124 = vunpack.c.l.b16 %v2502
      %v4125 = vunpack.c.l.b16 %v2503
      %v4126 = vunpack.c.l.b16 %v2504
      %v4127 = vunpack.c.l.b16 %v2505
      %v4128 = vunpack.c.l.b16 %v2506
      %v4129 = vpack.c.b16 %v4118, %v4117
      %v4130 = vpack.c.b16 %v4120, %v4119
      %v4131 = vpack.c.b16 %v4122, %v4121
      %v4132 = vpack.c.b16 %v4124, %v4123
      %v4133 = vpack.c.b16 %v4126, %v4125
      %v4134 = vpack.c.b16 %v4128, %v4127
      %vm4140 = vcmask 736256
      %v4142 = vsel %vm4140, %v4083, 0
      %v4145 = vsel %vm4140, %v4084, 0
      %v4148 = vsel %vm4140, %v4085, 0
      %v4151 = vsel %vm4140, %v4086, 0
      %v4154 = vsel %vm4140, %v4087, 0
      %v4157 = vsel %vm4140, %v4088, 0
      %v4160 = vsel %vm4140, %v4089, 0
      %v4163 = vsel %vm4140, %v4090, 0
      %v4166 = vsel %vm4140, %v4091, 0
      %v4169 = vsel %vm4140, %v4092, 0
      %v4172 = vsel %vm4140, %v4093, 0
      %v4175 = vsel %vm4140, %v4094, 0
      %v4178 = vsel %vm4140, %v4095, 0
      %v4181 = vsel %vm4140, %v4096, 0
      %v4184 = vsel %vm4140, %v4097, 0
      %v4187 = vsel %vm4140, %v4098, 0
      %vm4189 = vcmask 1044480
      %v4191 = vsel %vm4189, %v4134, 0
      %4193 = vmatprep.subr.bf16.mxu0 0
      %4194 = vmatpush1.bf16.msra.mxu0 %v4129
      %4195 = vmatprep.subr.bf16.mxu0 0
      %4196 = vmatpush1.bf16.msra.mxu0 %v4130
      %4197 = vmatprep.subr.bf16.mxu0 0
      %4198 = vmatpush1.bf16.msra.mxu0 %v4131
      %4199 = vmatprep.subr.bf16.mxu0 0
      %4200 = vmatpush1.bf16.msra.mxu0 %v4132
      %4201 = vmatprep.subr.bf16.mxu0 0
      %4202 = vmatpush1.bf16.msra.mxu0 %v4133
      %4203 = vmatprep.subr.bf16.mxu0 0
      %4204 = vmatpush1.bf16.msra.mxu0 %v4191
      %4205 = vmatprep.subr.bf16.mxu0 0
      %4206 = vmatpush1.bf16.msra.mxu0 0
      %4207 = vmatprep.subr.bf16.mxu0 0
      %4208 = vmatpush1.bf16.msra.mxu0 0
      %4209 = vmatprep.subr.bf16.mxu0 0
      %4210 = vmatpush1.bf16.msra.mxu0 0
      %4211 = vmatprep.subr.bf16.mxu0 0
      %4212 = vmatpush1.bf16.msra.mxu0 0
      %4213 = vmatprep.subr.bf16.mxu0 0
      %4214 = vmatpush1.bf16.msra.mxu0 0
      %4215 = vmatprep.subr.bf16.mxu0 0
      %4216 = vmatpush1.bf16.msra.mxu0 0
      %4217 = vmatprep.subr.bf16.mxu0 0
      %4218 = vmatpush1.bf16.msra.mxu0 0
      %4219 = vmatprep.subr.bf16.mxu0 0
      %4220 = vmatpush1.bf16.msra.mxu0 0
      %4221 = vmatprep.subr.bf16.mxu0 0
      %4222 = vmatpush1.bf16.msra.mxu0 0
      %4223 = vmatprep.subr.bf16.mxu0 0
      %4224 = vmatpush1.bf16.msra.mxu0 0
      %4225 = vmatprep.mubr.bf16.mxu0 0
      %4226 = vmatmul.mubr.bf16.gmra.mrb[0].mxu0 %v4142
      %v4227 = vpop.f32.mrb[0].mxu0
      %v4228 = vadd.f32 %v4103, %v4227
      %v4229 = vpop.f32.mrb[0].mxu0
      %v4230 = vpop.f32.mrb[0].mxu0
      %v4231 = vadd.f32 %v4103, %v4230
      %v4232 = vpop.f32.mrb[0].mxu0
      %4233 = vmatprep.mubr.bf16.mxu0 0
      %4234 = vmatmul.mubr.bf16.gmra.mrb[0].mxu0 %v4145
      %v4235 = vpop.f32.mrb[0].mxu0
      %v4236 = vadd.f32 %v4103, %v4235
      %v4237 = vpop.f32.mrb[0].mxu0
      %v4238 = vpop.f32.mrb[0].mxu0
      %v4239 = vadd.f32 %v4103, %v4238
      %v4240 = vpop.f32.mrb[0].mxu0
      %4241 = vmatprep.mubr.bf16.mxu0 0
      %4242 = vmatmul.mubr.bf16.gmra.mrb[0].mxu0 %v4148
      %v4243 = vpop.f32.mrb[0].mxu0
      %v4244 = vadd.f32 %v4103, %v4243
      %v4245 = vpop.f32.mrb[0].mxu0
      %v4246 = vpop.f32.mrb[0].mxu0
      %v4247 = vadd.f32 %v4103, %v4246
      %v4248 = vpop.f32.mrb[0].mxu0
      %4249 = vmatprep.mubr.bf16.mxu0 0
      %4250 = vmatmul.mubr.bf16.gmra.mrb[0].mxu0 %v4151
      %v4251 = vpop.f32.mrb[0].mxu0
      %v4252 = vadd.f32 %v4103, %v4251
      %v4253 = vpop.f32.mrb[0].mxu0
      %v4254 = vpop.f32.mrb[0].mxu0
      %v4255 = vadd.f32 %v4103, %v4254
      %v4256 = vpop.f32.mrb[0].mxu0
      %4257 = vmatprep.mubr.bf16.mxu0 0
      %4258 = vmatmul.mubr.bf16.gmra.mrb[0].mxu0 %v4154
      %v4259 = vpop.f32.mrb[0].mxu0
      %v4260 = vadd.f32 %v4103, %v4259
      %v4261 = vpop.f32.mrb[0].mxu0
      %v4262 = vpop.f32.mrb[0].mxu0
      %v4263 = vadd.f32 %v4103, %v4262
      %v4264 = vpop.f32.mrb[0].mxu0
      %4265 = vmatprep.mubr.bf16.mxu0 0
      %4266 = vmatmul.mubr.bf16.gmra.mrb[0].mxu0 %v4157
      %v4267 = vpop.f32.mrb[0].mxu0
      %v4268 = vadd.f32 %v4103, %v4267
      %v4269 = vpop.f32.mrb[0].mxu0
      %v4270 = vpop.f32.mrb[0].mxu0
      %v4271 = vadd.f32 %v4103, %v4270
      %v4272 = vpop.f32.mrb[0].mxu0
      %4273 = vmatprep.mubr.bf16.mxu0 0
      %4274 = vmatmul.mubr.bf16.gmra.mrb[0].mxu0 %v4160
      %v4275 = vpop.f32.mrb[0].mxu0
      %v4276 = vadd.f32 %v4103, %v4275
      %v4277 = vpop.f32.mrb[0].mxu0
      %v4278 = vpop.f32.mrb[0].mxu0
      %v4279 = vadd.f32 %v4103, %v4278
      %v4280 = vpop.f32.mrb[0].mxu0
      %4281 = vmatprep.mubr.bf16.mxu0 0
      %4282 = vmatmul.mubr.bf16.gmra.mrb[0].mxu0 %v4163
      %v4283 = vpop.f32.mrb[0].mxu0
      %v4284 = vadd.f32 %v4103, %v4283
      %v4285 = vpop.f32.mrb[0].mxu0
      %v4286 = vpop.f32.mrb[0].mxu0
      %v4287 = vadd.f32 %v4103, %v4286
      %v4288 = vpop.f32.mrb[0].mxu0
      %4289 = vmatprep.mubr.bf16.mxu0 0
      %4290 = vmatmul.mubr.bf16.gmra.mrb[0].mxu0 %v4166
      %v4291 = vpop.f32.mrb[0].mxu0
      %v4292 = vadd.f32 %v4103, %v4291
      %v4293 = vpop.f32.mrb[0].mxu0
      %v4294 = vpop.f32.mrb[0].mxu0
      %v4295 = vadd.f32 %v4103, %v4294
      %v4296 = vpop.f32.mrb[0].mxu0
      %4297 = vmatprep.mubr.bf16.mxu0 0
      %4298 = vmatmul.mubr.bf16.gmra.mrb[0].mxu0 %v4169
      %v4299 = vpop.f32.mrb[0].mxu0
      %v4300 = vadd.f32 %v4103, %v4299
      %v4301 = vpop.f32.mrb[0].mxu0
      %v4302 = vpop.f32.mrb[0].mxu0
      %v4303 = vadd.f32 %v4103, %v4302
      %v4304 = vpop.f32.mrb[0].mxu0
      %4305 = vmatprep.mubr.bf16.mxu0 0
      %4306 = vmatmul.mubr.bf16.gmra.mrb[0].mxu0 %v4172
      %v4307 = vpop.f32.mrb[0].mxu0
      %v4308 = vadd.f32 %v4103, %v4307
      %v4309 = vpop.f32.mrb[0].mxu0
      %v4310 = vpop.f32.mrb[0].mxu0
      %v4311 = vadd.f32 %v4103, %v4310
      %v4312 = vpop.f32.mrb[0].mxu0
      %4313 = vmatprep.mubr.bf16.mxu0 0
      %4314 = vmatmul.mubr.bf16.gmra.mrb[0].mxu0 %v4175
      %v4315 = vpop.f32.mrb[0].mxu0
      %v4316 = vadd.f32 %v4103, %v4315
      %v4317 = vpop.f32.mrb[0].mxu0
      %v4318 = vpop.f32.mrb[0].mxu0
      %v4319 = vadd.f32 %v4103, %v4318
      %v4320 = vpop.f32.mrb[0].mxu0
      %4321 = vmatprep.mubr.bf16.mxu0 0
      %4322 = vmatmul.mubr.bf16.gmra.mrb[0].mxu0 %v4178
      %v4323 = vpop.f32.mrb[0].mxu0
      %v4324 = vadd.f32 %v4103, %v4323
      %v4325 = vpop.f32.mrb[0].mxu0
      %v4326 = vpop.f32.mrb[0].mxu0
      %v4327 = vadd.f32 %v4103, %v4326
      %v4328 = vpop.f32.mrb[0].mxu0
      %4329 = vmatprep.mubr.bf16.mxu0 0
      %4330 = vmatmul.mubr.bf16.gmra.mrb[0].mxu0 %v4181
      %v4331 = vpop.f32.mrb[0].mxu0
      %v4332 = vadd.f32 %v4103, %v4331
      %v4333 = vpop.f32.mrb[0].mxu0
      %v4334 = vpop.f32.mrb[0].mxu0
      %v4335 = vadd.f32 %v4103, %v4334
      %v4336 = vpop.f32.mrb[0].mxu0
      %4337 = vmatprep.mubr.bf16.mxu0 0
      %4338 = vmatmul.mubr.bf16.gmra.mrb[0].mxu0 %v4184
      %v4339 = vpop.f32.mrb[0].mxu0
      %v4340 = vadd.f32 %v4103, %v4339
      %v4341 = vpop.f32.mrb[0].mxu0
      %v4342 = vpop.f32.mrb[0].mxu0
      %v4343 = vadd.f32 %v4103, %v4342
      %v4344 = vpop.f32.mrb[0].mxu0
      %4345 = vmatprep.mubr.bf16.mxu0 0
      %4346 = vmatmul.mubr.bf16.gmra.mrb[0].mxu0 %v4187
      %v4347 = vpop.f32.mrb[0].mxu0
      %v4348 = vadd.f32 %v4103, %v4347
      %v4349 = vpop.f32.mrb[0].mxu0
      %v4350 = vpop.f32.mrb[0].mxu0
      %v4351 = vadd.f32 %v4103, %v4350
      %v4352 = vpop.f32.mrb[0].mxu0
      %4353 = vdwg.mxu0
      %v4354 = vmax.f32 %v4228, 0.0
      %v4355 = vmax.f32 %v4231, 0.0
      %v4356 = vmax.f32 %v4236, 0.0
      %v4357 = vmax.f32 %v4239, 0.0
      %v4358 = vmax.f32 %v4244, 0.0
      %v4359 = vmax.f32 %v4247, 0.0
      %v4360 = vmax.f32 %v4252, 0.0
      %v4361 = vmax.f32 %v4255, 0.0
      %v4362 = vmax.f32 %v4260, 0.0
      %v4363 = vmax.f32 %v4263, 0.0
      %v4364 = vmax.f32 %v4268, 0.0
      %v4365 = vmax.f32 %v4271, 0.0
      %v4366 = vmax.f32 %v4276, 0.0
      %v4367 = vmax.f32 %v4279, 0.0
      %v4368 = vmax.f32 %v4284, 0.0
      %v4369 = vmax.f32 %v4287, 0.0
      %v4370 = vmax.f32 %v4292, 0.0
      %v4371 = vmax.f32 %v4295, 0.0
      %v4372 = vmax.f32 %v4300, 0.0
      %v4373 = vmax.f32 %v4303, 0.0
      %v4374 = vmax.f32 %v4308, 0.0
      %v4375 = vmax.f32 %v4311, 0.0
      %v4376 = vmax.f32 %v4316, 0.0
      %v4377 = vmax.f32 %v4319, 0.0
      %v4378 = vmax.f32 %v4324, 0.0
      %v4379 = vmax.f32 %v4327, 0.0
      %v4380 = vmax.f32 %v4332, 0.0
      %v4381 = vmax.f32 %v4335, 0.0
      %v4382 = vmax.f32 %v4340, 0.0
      %v4383 = vmax.f32 %v4343, 0.0
      %v4384 = vmax.f32 %v4348, 0.0
      %v4385 = vmax.f32 %v4351, 0.0
      %4386 = vst.msk [vmem:[%s451 + $0x1] sm:$0xff] %vm442, %v4354
      %4387 = vst.msk [vmem:[%s451 + $0x9] sm:$0xff] %vm442, %v4355
      %4388 = vst.msk [vmem:[%s451 + $0x19] sm:$0xff] %vm442, %v4356
      %4389 = vst.msk [vmem:[%s451 + $0x21] sm:$0xff] %vm442, %v4357
      %4390 = vst.msk [vmem:[%s451 + $0x31] sm:$0xff] %vm442, %v4358
      %4391 = vst.msk [vmem:[%s451 + $0x39] sm:$0xff] %vm442, %v4359
      %4392 = vst.msk [vmem:[%s451 + $0x49] sm:$0xff] %vm442, %v4360
      %4393 = vst.msk [vmem:[%s451 + $0x51] sm:$0xff] %vm442, %v4361
      %4394 = vst.msk [vmem:[%s451 + $0x61] sm:$0xff] %vm442, %v4362
      %4395 = vst.msk [vmem:[%s451 + $0x69] sm:$0xff] %vm442, %v4363
      %4396 = vst.msk [vmem:[%s451 + $0x79] sm:$0xff] %vm442, %v4364
      %4397 = vst.msk [vmem:[%s451 + $0x81] sm:$0xff] %vm442, %v4365
      %4398 = vst.msk [vmem:[%s451 + $0x91] sm:$0xff] %vm442, %v4366
      %4399 = vst.msk [vmem:[%s451 + $0x99] sm:$0xff] %vm442, %v4367
      %4400 = vst.msk [vmem:[%s451 + $0xa9] sm:$0xff] %vm442, %v4368
      %4401 = vst.msk [vmem:[%s451 + $0xb1] sm:$0xff] %vm442, %v4369
      %4402 = vst.msk [vmem:[%s451 + $0xc1] sm:$0xff] %vm442, %v4370
      %4403 = vst.msk [vmem:[%s451 + $0xc9] sm:$0xff] %vm442, %v4371
      %4404 = vst.msk [vmem:[%s451 + $0xd9] sm:$0xff] %vm442, %v4372
      %4405 = vst.msk [vmem:[%s451 + $0xe1] sm:$0xff] %vm442, %v4373
      %4406 = vst.msk [vmem:[%s451 + $0xf1] sm:$0xff] %vm442, %v4374
      %4407 = vst.msk [vmem:[%s451 + $0xf9] sm:$0xff] %vm442, %v4375
      %4408 = vst.msk [vmem:[%s451 + $0x109] sm:$0xff] %vm442, %v4376
      %4409 = vst.msk [vmem:[%s451 + $0x111] sm:$0xff] %vm442, %v4377
      %4410 = vst.msk [vmem:[%s451 + $0x121] sm:$0xff] %vm442, %v4378
      %4411 = vst.msk [vmem:[%s451 + $0x129] sm:$0xff] %vm442, %v4379
      %4412 = vst.msk [vmem:[%s451 + $0x139] sm:$0xff] %vm442, %v4380
      %4413 = vst.msk [vmem:[%s451 + $0x141] sm:$0xff] %vm442, %v4381
      %4414 = vst.msk [vmem:[%s451 + $0x151] sm:$0xff] %vm442, %v4382
      %4415 = vst.msk [vmem:[%s451 + $0x159] sm:$0xff] %vm442, %v4383
      %4416 = vst.msk [vmem:[%s451 + $0x169] sm:$0xff] %vm442, %v4384
      %4417 = vst.msk [vmem:[%s451 + $0x171] sm:$0xff] %vm442, %v4385
      %v4418 = vld [vmem:[%s5] sm:$0xf]
      %v4419 = vld [vmem:[%s5 + $0x4] sm:$0xf]
      %v4420 = vld [vmem:[%s5 + $0x8] sm:$0xf]
      %v4421 = vld [vmem:[%s5 + $0xc] sm:$0xf]
      %v4422 = vld [vmem:[%s5 + $0x10] sm:$0xf]
      %v4423 = vld [vmem:[%s5 + $0x14] sm:$0xf]
      %v4424 = vld [vmem:[%s5 + $0x18] sm:$0xf]
      %v4425 = vld [vmem:[%s5 + $0x1c] sm:$0xf]
      %v4426 = vld [vmem:[%s5 + $0x20] sm:$0xf]
      %v4427 = vld [vmem:[%s5 + $0x24] sm:$0xf]
      %v4428 = vld [vmem:[%s5 + $0x28] sm:$0xf]
      %v4429 = vld [vmem:[%s5 + $0x2c] sm:$0x1]
      %v4430 = vld [vmem:[%s6] sm:$0x1]
      %v4431 = vld [vmem:[#allocation2] sm:$0xff]
      %v4432 = vld [vmem:[#allocation2 + $0x8] sm:$0xff]
      %v4433 = vld [vmem:[#allocation2 + $0x18] sm:$0xff]
      %v4434 = vld [vmem:[#allocation2 + $0x20] sm:$0xff]
      %v4435 = vld [vmem:[#allocation2 + $0x30] sm:$0xff]
      %v4436 = vld [vmem:[#allocation2 + $0x38] sm:$0xff]
      %v4437 = vld [vmem:[#allocation2 + $0x48] sm:$0xff]
      %v4438 = vld [vmem:[#allocation2 + $0x50] sm:$0xff]
      %v4439 = vld [vmem:[#allocation2 + $0x60] sm:$0xff]
      %v4440 = vld [vmem:[#allocation2 + $0x68] sm:$0xff]
      %v4441 = vld [vmem:[#allocation2 + $0x78] sm:$0xff]
      %v4442 = vld [vmem:[#allocation2 + $0x80] sm:$0xff]
      %v4443 = vld [vmem:[#allocation2 + $0x90] sm:$0xff]
      %v4444 = vld [vmem:[#allocation2 + $0x98] sm:$0xff]
      %v4445 = vld [vmem:[#allocation2 + $0xa8] sm:$0xff]
      %v4446 = vld [vmem:[#allocation2 + $0xb0] sm:$0xff]
      %v4447 = vld [vmem:[#allocation2 + $0xc0] sm:$0xff]
      %v4448 = vld [vmem:[#allocation2 + $0xc8] sm:$0xff]
      %v4449 = vld [vmem:[#allocation2 + $0xd8] sm:$0xff]
      %v4450 = vld [vmem:[#allocation2 + $0xe0] sm:$0xff]
      %v4451 = vld [vmem:[#allocation2 + $0xf0] sm:$0xff]
      %v4452 = vld [vmem:[#allocation2 + $0xf8] sm:$0xff]
      %v4453 = vld [vmem:[#allocation2 + $0x108] sm:$0xff]
      %v4454 = vld [vmem:[#allocation2 + $0x110] sm:$0xff]
      %v4455 = vld [vmem:[#allocation2 + $0x120] sm:$0xff]
      %v4456 = vld [vmem:[#allocation2 + $0x128] sm:$0xff]
      %v4457 = vld [vmem:[#allocation2 + $0x138] sm:$0xff]
      %v4458 = vld [vmem:[#allocation2 + $0x140] sm:$0xff]
      %v4459 = vld [vmem:[#allocation2 + $0x150] sm:$0xff]
      %v4460 = vld [vmem:[#allocation2 + $0x158] sm:$0xff]
      %v4461 = vld [vmem:[#allocation2 + $0x168] sm:$0xff]
      %v4462 = vld [vmem:[#allocation2 + $0x170] sm:$0xff]
      %v4463 = vld [vmem:[#allocation2 + $0x1] sm:$0xff]
      %v4464 = vld [vmem:[#allocation2 + $0x9] sm:$0xff]
      %v4465 = vld [vmem:[#allocation2 + $0x19] sm:$0xff]
      %v4466 = vld [vmem:[#allocation2 + $0x21] sm:$0xff]
      %v4467 = vld [vmem:[#allocation2 + $0x31] sm:$0xff]
      %v4468 = vld [vmem:[#allocation2 + $0x39] sm:$0xff]
      %v4469 = vld [vmem:[#allocation2 + $0x49] sm:$0xff]
      %v4470 = vld [vmem:[#allocation2 + $0x51] sm:$0xff]
      %v4471 = vld [vmem:[#allocation2 + $0x61] sm:$0xff]
      %v4472 = vld [vmem:[#allocation2 + $0x69] sm:$0xff]
      %v4473 = vld [vmem:[#allocation2 + $0x79] sm:$0xff]
      %v4474 = vld [vmem:[#allocation2 + $0x81] sm:$0xff]
      %v4475 = vld [vmem:[#allocation2 + $0x91] sm:$0xff]
      %v4476 = vld [vmem:[#allocation2 + $0x99] sm:$0xff]
      %v4477 = vld [vmem:[#allocation2 + $0xa9] sm:$0xff]
      %v4478 = vld [vmem:[#allocation2 + $0xb1] sm:$0xff]
      %v4479 = vld [vmem:[#allocation2 + $0xc1] sm:$0xff]
      %v4480 = vld [vmem:[#allocation2 + $0xc9] sm:$0xff]
      %v4481 = vld [vmem:[#allocation2 + $0xd9] sm:$0xff]
      %v4482 = vld [vmem:[#allocation2 + $0xe1] sm:$0xff]
      %v4483 = vld [vmem:[#allocation2 + $0xf1] sm:$0xff]
      %v4484 = vld [vmem:[#allocation2 + $0xf9] sm:$0xff]
      %v4485 = vld [vmem:[#allocation2 + $0x109] sm:$0xff]
      %v4486 = vld [vmem:[#allocation2 + $0x111] sm:$0xff]
      %v4487 = vld [vmem:[#allocation2 + $0x121] sm:$0xff]
      %v4488 = vld [vmem:[#allocation2 + $0x129] sm:$0xff]
      %v4489 = vld [vmem:[#allocation2 + $0x139] sm:$0xff]
      %v4490 = vld [vmem:[#allocation2 + $0x141] sm:$0xff]
      %v4491 = vld [vmem:[#allocation2 + $0x151] sm:$0xff]
      %v4492 = vld [vmem:[#allocation2 + $0x159] sm:$0xff]
      %v4493 = vld [vmem:[#allocation2 + $0x169] sm:$0xff]
      %v4494 = vld [vmem:[#allocation2 + $0x171] sm:$0xff]
      %v4495 = vld [vmem:[#allocation2 + $0x2] sm:$0xff]
      %v4496 = vld [vmem:[#allocation2 + $0xa] sm:$0xff]
      %v4497 = vld [vmem:[#allocation2 + $0x1a] sm:$0xff]
      %v4498 = vld [vmem:[#allocation2 + $0x22] sm:$0xff]
      %v4499 = vld [vmem:[#allocation2 + $0x32] sm:$0xff]
      %v4500 = vld [vmem:[#allocation2 + $0x3a] sm:$0xff]
      %v4501 = vld [vmem:[#allocation2 + $0x4a] sm:$0xff]
      %v4502 = vld [vmem:[#allocation2 + $0x52] sm:$0xff]
      %v4503 = vld [vmem:[#allocation2 + $0x62] sm:$0xff]
      %v4504 = vld [vmem:[#allocation2 + $0x6a] sm:$0xff]
      %v4505 = vld [vmem:[#allocation2 + $0x7a] sm:$0xff]
      %v4506 = vld [vmem:[#allocation2 + $0x82] sm:$0xff]
      %v4507 = vld [vmem:[#allocation2 + $0x92] sm:$0xff]
      %v4508 = vld [vmem:[#allocation2 + $0x9a] sm:$0xff]
      %v4509 = vld [vmem:[#allocation2 + $0xaa] sm:$0xff]
      %v4510 = vld [vmem:[#allocation2 + $0xb2] sm:$0xff]
      %v4511 = vld [vmem:[#allocation2 + $0xc2] sm:$0xff]
      %v4512 = vld [vmem:[#allocation2 + $0xca] sm:$0xff]
      %v4513 = vld [vmem:[#allocation2 + $0xda] sm:$0xff]
      %v4514 = vld [vmem:[#allocation2 + $0xe2] sm:$0xff]
      %v4515 = vld [vmem:[#allocation2 + $0xf2] sm:$0xff]
      %v4516 = vld [vmem:[#allocation2 + $0xfa] sm:$0xff]
      %v4517 = vld [vmem:[#allocation2 + $0x10a] sm:$0xff]
      %v4518 = vld [vmem:[#allocation2 + $0x112] sm:$0xff]
      %v4519 = vld [vmem:[#allocation2 + $0x122] sm:$0xff]
      %v4520 = vld [vmem:[#allocation2 + $0x12a] sm:$0xff]
      %v4521 = vld [vmem:[#allocation2 + $0x13a] sm:$0xff]
      %v4522 = vld [vmem:[#allocation2 + $0x142] sm:$0xff]
      %v4523 = vld [vmem:[#allocation2 + $0x152] sm:$0xff]
      %v4524 = vld [vmem:[#allocation2 + $0x15a] sm:$0xff]
      %v4525 = vld [vmem:[#allocation2 + $0x16a] sm:$0xff]
      %v4526 = vld [vmem:[#allocation2 + $0x172] sm:$0xff]
      %v4527 = vld [vmem:[%s451] sm:$0xff]
      %v4528 = vld [vmem:[%s451 + $0x8] sm:$0xff]
      %v4529 = vld [vmem:[%s451 + $0x18] sm:$0xff]
      %v4530 = vld [vmem:[%s451 + $0x20] sm:$0xff]
      %v4531 = vld [vmem:[%s451 + $0x30] sm:$0xff]
      %v4532 = vld [vmem:[%s451 + $0x38] sm:$0xff]
      %v4533 = vld [vmem:[%s451 + $0x48] sm:$0xff]
      %v4534 = vld [vmem:[%s451 + $0x50] sm:$0xff]
      %v4535 = vld [vmem:[%s451 + $0x60] sm:$0xff]
      %v4536 = vld [vmem:[%s451 + $0x68] sm:$0xff]
      %v4537 = vld [vmem:[%s451 + $0x78] sm:$0xff]
      %v4538 = vld [vmem:[%s451 + $0x80] sm:$0xff]
      %v4539 = vld [vmem:[%s451 + $0x90] sm:$0xff]
      %v4540 = vld [vmem:[%s451 + $0x98] sm:$0xff]
      %v4541 = vld [vmem:[%s451 + $0xa8] sm:$0xff]
      %v4542 = vld [vmem:[%s451 + $0xb0] sm:$0xff]
      %v4543 = vld [vmem:[%s451 + $0xc0] sm:$0xff]
      %v4544 = vld [vmem:[%s451 + $0xc8] sm:$0xff]
      %v4545 = vld [vmem:[%s451 + $0xd8] sm:$0xff]
      %v4546 = vld [vmem:[%s451 + $0xe0] sm:$0xff]
      %v4547 = vld [vmem:[%s451 + $0xf0] sm:$0xff]
      %v4548 = vld [vmem:[%s451 + $0xf8] sm:$0xff]
      %v4549 = vld [vmem:[%s451 + $0x108] sm:$0xff]
      %v4550 = vld [vmem:[%s451 + $0x110] sm:$0xff]
      %v4551 = vld [vmem:[%s451 + $0x120] sm:$0xff]
      %v4552 = vld [vmem:[%s451 + $0x128] sm:$0xff]
      %v4553 = vld [vmem:[%s451 + $0x138] sm:$0xff]
      %v4554 = vld [vmem:[%s451 + $0x140] sm:$0xff]
      %v4555 = vld [vmem:[%s451 + $0x150] sm:$0xff]
      %v4556 = vld [vmem:[%s451 + $0x158] sm:$0xff]
      %v4557 = vld [vmem:[%s451 + $0x168] sm:$0xff]
      %v4558 = vld [vmem:[%s451 + $0x170] sm:$0xff]
      %v4559 = vld [vmem:[%s451 + $0x1] sm:$0xff]
      %v4560 = vld [vmem:[%s451 + $0x9] sm:$0xff]
      %v4561 = vld [vmem:[%s451 + $0x19] sm:$0xff]
      %v4562 = vld [vmem:[%s451 + $0x21] sm:$0xff]
      %v4563 = vld [vmem:[%s451 + $0x31] sm:$0xff]
      %v4564 = vld [vmem:[%s451 + $0x39] sm:$0xff]
      %v4565 = vld [vmem:[%s451 + $0x49] sm:$0xff]
      %v4566 = vld [vmem:[%s451 + $0x51] sm:$0xff]
      %v4567 = vld [vmem:[%s451 + $0x61] sm:$0xff]
      %v4568 = vld [vmem:[%s451 + $0x69] sm:$0xff]
      %v4569 = vld [vmem:[%s451 + $0x79] sm:$0xff]
      %v4570 = vld [vmem:[%s451 + $0x81] sm:$0xff]
      %v4571 = vld [vmem:[%s451 + $0x91] sm:$0xff]
      %v4572 = vld [vmem:[%s451 + $0x99] sm:$0xff]
      %v4573 = vld [vmem:[%s451 + $0xa9] sm:$0xff]
      %v4574 = vld [vmem:[%s451 + $0xb1] sm:$0xff]
      %v4575 = vld [vmem:[%s451 + $0xc1] sm:$0xff]
      %v4576 = vld [vmem:[%s451 + $0xc9] sm:$0xff]
      %v4577 = vld [vmem:[%s451 + $0xd9] sm:$0xff]
      %v4578 = vld [vmem:[%s451 + $0xe1] sm:$0xff]
      %v4579 = vld [vmem:[%s451 + $0xf1] sm:$0xff]
      %v4580 = vld [vmem:[%s451 + $0xf9] sm:$0xff]
      %v4581 = vld [vmem:[%s451 + $0x109] sm:$0xff]
      %v4582 = vld [vmem:[%s451 + $0x111] sm:$0xff]
      %v4583 = vld [vmem:[%s451 + $0x121] sm:$0xff]
      %v4584 = vld [vmem:[%s451 + $0x129] sm:$0xff]
      %v4585 = vld [vmem:[%s451 + $0x139] sm:$0xff]
      %v4586 = vld [vmem:[%s451 + $0x141] sm:$0xff]
      %v4587 = vld [vmem:[%s451 + $0x151] sm:$0xff]
      %v4588 = vld [vmem:[%s451 + $0x159] sm:$0xff]
      %v4589 = vld [vmem:[%s451 + $0x169] sm:$0xff]
      %v4590 = vld [vmem:[%s451 + $0x171] sm:$0xff]
      %v4591 = vld [vmem:[%s451 + $0x2] sm:$0xff]
      %v4592 = vld [vmem:[%s451 + $0xa] sm:$0xff]
      %v4593 = vld [vmem:[%s451 + $0x1a] sm:$0xff]
      %v4594 = vld [vmem:[%s451 + $0x22] sm:$0xff]
      %v4595 = vld [vmem:[%s451 + $0x32] sm:$0xff]
      %v4596 = vld [vmem:[%s451 + $0x3a] sm:$0xff]
      %v4597 = vld [vmem:[%s451 + $0x4a] sm:$0xff]
      %v4598 = vld [vmem:[%s451 + $0x52] sm:$0xff]
      %v4599 = vld [vmem:[%s451 + $0x62] sm:$0xff]
      %v4600 = vld [vmem:[%s451 + $0x6a] sm:$0xff]
      %v4601 = vld [vmem:[%s451 + $0x7a] sm:$0xff]
      %v4602 = vld [vmem:[%s451 + $0x82] sm:$0xff]
      %v4603 = vld [vmem:[%s451 + $0x92] sm:$0xff]
      %v4604 = vld [vmem:[%s451 + $0x9a] sm:$0xff]
      %v4605 = vld [vmem:[%s451 + $0xaa] sm:$0xff]
      %v4606 = vld [vmem:[%s451 + $0xb2] sm:$0xff]
      %v4607 = vld [vmem:[%s451 + $0xc2] sm:$0xff]
      %v4608 = vld [vmem:[%s451 + $0xca] sm:$0xff]
      %v4609 = vld [vmem:[%s451 + $0xda] sm:$0xff]
      %v4610 = vld [vmem:[%s451 + $0xe2] sm:$0xff]
      %v4611 = vld [vmem:[%s451 + $0xf2] sm:$0xff]
      %v4612 = vld [vmem:[%s451 + $0xfa] sm:$0xff]
      %v4613 = vld [vmem:[%s451 + $0x10a] sm:$0xff]
      %v4614 = vld [vmem:[%s451 + $0x112] sm:$0xff]
      %v4615 = vld [vmem:[%s451 + $0x122] sm:$0xff]
      %v4616 = vld [vmem:[%s451 + $0x12a] sm:$0xff]
      %v4617 = vld [vmem:[%s451 + $0x13a] sm:$0xff]
      %v4618 = vld [vmem:[%s451 + $0x142] sm:$0xff]
      %v4619 = vld [vmem:[%s451 + $0x152] sm:$0xff]
      %v4620 = vld [vmem:[%s451 + $0x15a] sm:$0xff]
      %v4621 = vld [vmem:[%s451 + $0x16a] sm:$0xff]
      %v4622 = vld [vmem:[%s451 + $0x172] sm:$0xff]
      %v4623 = vld [vmem:[%s790] sm:$0xff]
      %v4624 = vld [vmem:[%s790 + $0x8] sm:$0xff]
      %v4625 = vld [vmem:[%s790 + $0x18] sm:$0xff]
      %v4626 = vld [vmem:[%s790 + $0x20] sm:$0xff]
      %v4627 = vld [vmem:[%s790 + $0x30] sm:$0xff]
      %v4628 = vld [vmem:[%s790 + $0x38] sm:$0xff]
      %v4629 = vld [vmem:[%s790 + $0x48] sm:$0xff]
      %v4630 = vld [vmem:[%s790 + $0x50] sm:$0xff]
      %v4631 = vld [vmem:[%s790 + $0x60] sm:$0xff]
      %v4632 = vld [vmem:[%s790 + $0x68] sm:$0xff]
      %v4633 = vld [vmem:[%s790 + $0x78] sm:$0xff]
      %v4634 = vld [vmem:[%s790 + $0x80] sm:$0xff]
      %v4635 = vld [vmem:[%s790 + $0x90] sm:$0xff]
      %v4636 = vld [vmem:[%s790 + $0x98] sm:$0xff]
      %v4637 = vld [vmem:[%s790 + $0xa8] sm:$0xff]
      %v4638 = vld [vmem:[%s790 + $0xb0] sm:$0xff]
      %v4639 = vld [vmem:[%s790 + $0xc0] sm:$0xff]
      %v4640 = vld [vmem:[%s790 + $0xc8] sm:$0xff]
      %v4641 = vld [vmem:[%s790 + $0xd8] sm:$0xff]
      %v4642 = vld [vmem:[%s790 + $0xe0] sm:$0xff]
      %v4643 = vld [vmem:[%s790 + $0xf0] sm:$0xff]
      %v4644 = vld [vmem:[%s790 + $0xf8] sm:$0xff]
      %v4645 = vld [vmem:[%s790 + $0x108] sm:$0xff]
      %v4646 = vld [vmem:[%s790 + $0x110] sm:$0xff]
      %v4647 = vld [vmem:[%s790 + $0x120] sm:$0xff]
      %v4648 = vld [vmem:[%s790 + $0x128] sm:$0xff]
      %v4649 = vld [vmem:[%s790 + $0x138] sm:$0xff]
      %v4650 = vld [vmem:[%s790 + $0x140] sm:$0xff]
      %v4651 = vld [vmem:[%s790 + $0x150] sm:$0xff]
      %v4652 = vld [vmem:[%s790 + $0x158] sm:$0xff]
      %v4653 = vld [vmem:[%s790 + $0x168] sm:$0xff]
      %v4654 = vld [vmem:[%s790 + $0x170] sm:$0xff]
      %v4655 = vld [vmem:[%s790 + $0x1] sm:$0xff]
      %v4656 = vld [vmem:[%s790 + $0x9] sm:$0xff]
      %v4657 = vld [vmem:[%s790 + $0x19] sm:$0xff]
      %v4658 = vld [vmem:[%s790 + $0x21] sm:$0xff]
      %v4659 = vld [vmem:[%s790 + $0x31] sm:$0xff]
      %v4660 = vld [vmem:[%s790 + $0x39] sm:$0xff]
      %v4661 = vld [vmem:[%s790 + $0x49] sm:$0xff]
      %v4662 = vld [vmem:[%s790 + $0x51] sm:$0xff]
      %v4663 = vld [vmem:[%s790 + $0x61] sm:$0xff]
      %v4664 = vld [vmem:[%s790 + $0x69] sm:$0xff]
      %v4665 = vld [vmem:[%s790 + $0x79] sm:$0xff]
      %v4666 = vld [vmem:[%s790 + $0x81] sm:$0xff]
      %v4667 = vld [vmem:[%s790 + $0x91] sm:$0xff]
      %v4668 = vld [vmem:[%s790 + $0x99] sm:$0xff]
      %v4669 = vld [vmem:[%s790 + $0xa9] sm:$0xff]
      %v4670 = vld [vmem:[%s790 + $0xb1] sm:$0xff]
      %v4671 = vld [vmem:[%s790 + $0xc1] sm:$0xff]
      %v4672 = vld [vmem:[%s790 + $0xc9] sm:$0xff]
      %v4673 = vld [vmem:[%s790 + $0xd9] sm:$0xff]
      %v4674 = vld [vmem:[%s790 + $0xe1] sm:$0xff]
      %v4675 = vld [vmem:[%s790 + $0xf1] sm:$0xff]
      %v4676 = vld [vmem:[%s790 + $0xf9] sm:$0xff]
      %v4677 = vld [vmem:[%s790 + $0x109] sm:$0xff]
      %v4678 = vld [vmem:[%s790 + $0x111] sm:$0xff]
      %v4679 = vld [vmem:[%s790 + $0x121] sm:$0xff]
      %v4680 = vld [vmem:[%s790 + $0x129] sm:$0xff]
      %v4681 = vld [vmem:[%s790 + $0x139] sm:$0xff]
      %v4682 = vld [vmem:[%s790 + $0x141] sm:$0xff]
      %v4683 = vld [vmem:[%s790 + $0x151] sm:$0xff]
      %v4684 = vld [vmem:[%s790 + $0x159] sm:$0xff]
      %v4685 = vld [vmem:[%s790 + $0x169] sm:$0xff]
      %v4686 = vld [vmem:[%s790 + $0x171] sm:$0xff]
      %v4687 = vld [vmem:[%s790 + $0x2] sm:$0xff]
      %v4688 = vld [vmem:[%s790 + $0xa] sm:$0xff]
      %v4689 = vld [vmem:[%s790 + $0x1a] sm:$0xff]
      %v4690 = vld [vmem:[%s790 + $0x22] sm:$0xff]
      %v4691 = vld [vmem:[%s790 + $0x32] sm:$0xff]
      %v4692 = vld [vmem:[%s790 + $0x3a] sm:$0xff]
      %v4693 = vld [vmem:[%s790 + $0x4a] sm:$0xff]
      %v4694 = vld [vmem:[%s790 + $0x52] sm:$0xff]
      %v4695 = vld [vmem:[%s790 + $0x62] sm:$0xff]
      %v4696 = vld [vmem:[%s790 + $0x6a] sm:$0xff]
      %v4697 = vld [vmem:[%s790 + $0x7a] sm:$0xff]
      %v4698 = vld [vmem:[%s790 + $0x82] sm:$0xff]
      %v4699 = vld [vmem:[%s790 + $0x92] sm:$0xff]
      %v4700 = vld [vmem:[%s790 + $0x9a] sm:$0xff]
      %v4701 = vld [vmem:[%s790 + $0xaa] sm:$0xff]
      %v4702 = vld [vmem:[%s790 + $0xb2] sm:$0xff]
      %v4703 = vld [vmem:[%s790 + $0xc2] sm:$0xff]
      %v4704 = vld [vmem:[%s790 + $0xca] sm:$0xff]
      %v4705 = vld [vmem:[%s790 + $0xda] sm:$0xff]
      %v4706 = vld [vmem:[%s790 + $0xe2] sm:$0xff]
      %v4707 = vld [vmem:[%s790 + $0xf2] sm:$0xff]
      %v4708 = vld [vmem:[%s790 + $0xfa] sm:$0xff]
      %v4709 = vld [vmem:[%s790 + $0x10a] sm:$0xff]
      %v4710 = vld [vmem:[%s790 + $0x112] sm:$0xff]
      %v4711 = vld [vmem:[%s790 + $0x122] sm:$0xff]
      %v4712 = vld [vmem:[%s790 + $0x12a] sm:$0xff]
      %v4713 = vld [vmem:[%s790 + $0x13a] sm:$0xff]
      %v4714 = vld [vmem:[%s790 + $0x142] sm:$0xff]
      %v4715 = vld [vmem:[%s790 + $0x152] sm:$0xff]
      %v4716 = vld [vmem:[%s790 + $0x15a] sm:$0xff]
      %v4717 = vld [vmem:[%s790 + $0x16a] sm:$0xff]
      %v4718 = vld [vmem:[%s790 + $0x172] sm:$0xff]
      %4751 = vrot.lane.b32.xlu0 %v4463, 10
      %v4752 = vpop.permute.xlu0 %4751
      %4753 = vrot.lane.b32.xlu0 %v4464, 10
      %v4754 = vpop.permute.xlu0 %4753
      %4755 = vrot.lane.b32.xlu0 %v4465, 10
      %v4756 = vpop.permute.xlu0 %4755
      %4757 = vrot.lane.b32.xlu0 %v4466, 10
      %v4758 = vpop.permute.xlu0 %4757
      %4759 = vrot.lane.b32.xlu0 %v4467, 10
      %v4760 = vpop.permute.xlu0 %4759
      %4761 = vrot.lane.b32.xlu0 %v4468, 10
      %v4762 = vpop.permute.xlu0 %4761
      %4763 = vrot.lane.b32.xlu0 %v4469, 10
      %v4764 = vpop.permute.xlu0 %4763
      %4765 = vrot.lane.b32.xlu0 %v4470, 10
      %v4766 = vpop.permute.xlu0 %4765
      %4767 = vrot.lane.b32.xlu0 %v4471, 10
      %v4768 = vpop.permute.xlu0 %4767
      %4769 = vrot.lane.b32.xlu0 %v4472, 10
      %v4770 = vpop.permute.xlu0 %4769
      %4771 = vrot.lane.b32.xlu0 %v4473, 10
      %v4772 = vpop.permute.xlu0 %4771
      %4773 = vrot.lane.b32.xlu0 %v4474, 10
      %v4774 = vpop.permute.xlu0 %4773
      %4775 = vrot.lane.b32.xlu0 %v4475, 10
      %v4776 = vpop.permute.xlu0 %4775
      %4777 = vrot.lane.b32.xlu0 %v4476, 10
      %v4778 = vpop.permute.xlu0 %4777
      %4779 = vrot.lane.b32.xlu0 %v4477, 10
      %v4780 = vpop.permute.xlu0 %4779
      %4781 = vrot.lane.b32.xlu0 %v4478, 10
      %v4782 = vpop.permute.xlu0 %4781
      %4783 = vrot.lane.b32.xlu0 %v4479, 10
      %v4784 = vpop.permute.xlu0 %4783
      %4785 = vrot.lane.b32.xlu0 %v4480, 10
      %v4786 = vpop.permute.xlu0 %4785
      %4787 = vrot.lane.b32.xlu0 %v4481, 10
      %v4788 = vpop.permute.xlu0 %4787
      %4789 = vrot.lane.b32.xlu0 %v4482, 10
      %v4790 = vpop.permute.xlu0 %4789
      %4791 = vrot.lane.b32.xlu0 %v4483, 10
      %v4792 = vpop.permute.xlu0 %4791
      %4793 = vrot.lane.b32.xlu0 %v4484, 10
      %v4794 = vpop.permute.xlu0 %4793
      %4795 = vrot.lane.b32.xlu0 %v4485, 10
      %v4796 = vpop.permute.xlu0 %4795
      %4797 = vrot.lane.b32.xlu0 %v4486, 10
      %v4798 = vpop.permute.xlu0 %4797
      %4799 = vrot.lane.b32.xlu0 %v4487, 10
      %v4800 = vpop.permute.xlu0 %4799
      %4801 = vrot.lane.b32.xlu0 %v4488, 10
      %v4802 = vpop.permute.xlu0 %4801
      %4803 = vrot.lane.b32.xlu0 %v4489, 10
      %v4804 = vpop.permute.xlu0 %4803
      %4805 = vrot.lane.b32.xlu0 %v4490, 10
      %v4806 = vpop.permute.xlu0 %4805
      %4807 = vrot.lane.b32.xlu0 %v4491, 10
      %v4808 = vpop.permute.xlu0 %4807
      %4809 = vrot.lane.b32.xlu0 %v4492, 10
      %v4810 = vpop.permute.xlu0 %4809
      %4811 = vrot.lane.b32.xlu0 %v4493, 10
      %v4812 = vpop.permute.xlu0 %4811
      %4813 = vrot.lane.b32.xlu0 %v4494, 10
      %v4814 = vpop.permute.xlu0 %4813
      %4879 = vrot.lane.b32.xlu0 %v4495, 20
      %v4880 = vpop.permute.xlu0 %4879
      %4881 = vrot.lane.b32.xlu0 %v4496, 20
      %v4882 = vpop.permute.xlu0 %4881
      %4883 = vrot.lane.b32.xlu0 %v4497, 20
      %v4884 = vpop.permute.xlu0 %4883
      %4885 = vrot.lane.b32.xlu0 %v4498, 20
      %v4886 = vpop.permute.xlu0 %4885
      %4887 = vrot.lane.b32.xlu0 %v4499, 20
      %v4888 = vpop.permute.xlu0 %4887
      %4889 = vrot.lane.b32.xlu0 %v4500, 20
      %v4890 = vpop.permute.xlu0 %4889
      %4891 = vrot.lane.b32.xlu0 %v4501, 20
      %v4892 = vpop.permute.xlu0 %4891
      %4893 = vrot.lane.b32.xlu0 %v4502, 20
      %v4894 = vpop.permute.xlu0 %4893
      %4895 = vrot.lane.b32.xlu0 %v4503, 20
      %v4896 = vpop.permute.xlu0 %4895
      %4897 = vrot.lane.b32.xlu0 %v4504, 20
      %v4898 = vpop.permute.xlu0 %4897
      %4899 = vrot.lane.b32.xlu0 %v4505, 20
      %v4900 = vpop.permute.xlu0 %4899
      %4901 = vrot.lane.b32.xlu0 %v4506, 20
      %v4902 = vpop.permute.xlu0 %4901
      %4903 = vrot.lane.b32.xlu0 %v4507, 20
      %v4904 = vpop.permute.xlu0 %4903
      %4905 = vrot.lane.b32.xlu0 %v4508, 20
      %v4906 = vpop.permute.xlu0 %4905
      %4907 = vrot.lane.b32.xlu0 %v4509, 20
      %v4908 = vpop.permute.xlu0 %4907
      %4909 = vrot.lane.b32.xlu0 %v4510, 20
      %v4910 = vpop.permute.xlu0 %4909
      %4911 = vrot.lane.b32.xlu0 %v4511, 20
      %v4912 = vpop.permute.xlu0 %4911
      %4913 = vrot.lane.b32.xlu0 %v4512, 20
      %v4914 = vpop.permute.xlu0 %4913
      %4915 = vrot.lane.b32.xlu0 %v4513, 20
      %v4916 = vpop.permute.xlu0 %4915
      %4917 = vrot.lane.b32.xlu0 %v4514, 20
      %v4918 = vpop.permute.xlu0 %4917
      %4919 = vrot.lane.b32.xlu0 %v4515, 20
      %v4920 = vpop.permute.xlu0 %4919
      %4921 = vrot.lane.b32.xlu0 %v4516, 20
      %v4922 = vpop.permute.xlu0 %4921
      %4923 = vrot.lane.b32.xlu0 %v4517, 20
      %v4924 = vpop.permute.xlu0 %4923
      %4925 = vrot.lane.b32.xlu0 %v4518, 20
      %v4926 = vpop.permute.xlu0 %4925
      %4927 = vrot.lane.b32.xlu0 %v4519, 20
      %v4928 = vpop.permute.xlu0 %4927
      %4929 = vrot.lane.b32.xlu0 %v4520, 20
      %v4930 = vpop.permute.xlu0 %4929
      %4931 = vrot.lane.b32.xlu0 %v4521, 20
      %v4932 = vpop.permute.xlu0 %4931
      %4933 = vrot.lane.b32.xlu0 %v4522, 20
      %v4934 = vpop.permute.xlu0 %4933
      %4935 = vrot.lane.b32.xlu0 %v4523, 20
      %v4936 = vpop.permute.xlu0 %4935
      %4937 = vrot.lane.b32.xlu0 %v4524, 20
      %v4938 = vpop.permute.xlu0 %4937
      %4939 = vrot.lane.b32.xlu0 %v4525, 20
      %v4940 = vpop.permute.xlu0 %4939
      %4941 = vrot.lane.b32.xlu0 %v4526, 20
      %v4942 = vpop.permute.xlu0 %4941
      %5007 = vrot.lane.b32.xlu0 %v4527, 30
      %v5008 = vpop.permute.xlu0 %5007
      %5009 = vrot.lane.b32.xlu0 %v4528, 30
      %v5010 = vpop.permute.xlu0 %5009
      %5011 = vrot.lane.b32.xlu0 %v4529, 30
      %v5012 = vpop.permute.xlu0 %5011
      %5013 = vrot.lane.b32.xlu0 %v4530, 30
      %v5014 = vpop.permute.xlu0 %5013
      %5015 = vrot.lane.b32.xlu0 %v4531, 30
      %v5016 = vpop.permute.xlu0 %5015
      %5017 = vrot.lane.b32.xlu0 %v4532, 30
      %v5018 = vpop.permute.xlu0 %5017
      %5019 = vrot.lane.b32.xlu0 %v4533, 30
      %v5020 = vpop.permute.xlu0 %5019
      %5021 = vrot.lane.b32.xlu0 %v4534, 30
      %v5022 = vpop.permute.xlu0 %5021
      %5023 = vrot.lane.b32.xlu0 %v4535, 30
      %v5024 = vpop.permute.xlu0 %5023
      %5025 = vrot.lane.b32.xlu0 %v4536, 30
      %v5026 = vpop.permute.xlu0 %5025
      %5027 = vrot.lane.b32.xlu0 %v4537, 30
      %v5028 = vpop.permute.xlu0 %5027
      %5029 = vrot.lane.b32.xlu0 %v4538, 30
      %v5030 = vpop.permute.xlu0 %5029
      %5031 = vrot.lane.b32.xlu0 %v4539, 30
      %v5032 = vpop.permute.xlu0 %5031
      %5033 = vrot.lane.b32.xlu0 %v4540, 30
      %v5034 = vpop.permute.xlu0 %5033
      %5035 = vrot.lane.b32.xlu0 %v4541, 30
      %v5036 = vpop.permute.xlu0 %5035
      %5037 = vrot.lane.b32.xlu0 %v4542, 30
      %v5038 = vpop.permute.xlu0 %5037
      %5039 = vrot.lane.b32.xlu0 %v4543, 30
      %v5040 = vpop.permute.xlu0 %5039
      %5041 = vrot.lane.b32.xlu0 %v4544, 30
      %v5042 = vpop.permute.xlu0 %5041
      %5043 = vrot.lane.b32.xlu0 %v4545, 30
      %v5044 = vpop.permute.xlu0 %5043
      %5045 = vrot.lane.b32.xlu0 %v4546, 30
      %v5046 = vpop.permute.xlu0 %5045
      %5047 = vrot.lane.b32.xlu0 %v4547, 30
      %v5048 = vpop.permute.xlu0 %5047
      %5049 = vrot.lane.b32.xlu0 %v4548, 30
      %v5050 = vpop.permute.xlu0 %5049
      %5051 = vrot.lane.b32.xlu0 %v4549, 30
      %v5052 = vpop.permute.xlu0 %5051
      %5053 = vrot.lane.b32.xlu0 %v4550, 30
      %v5054 = vpop.permute.xlu0 %5053
      %5055 = vrot.lane.b32.xlu0 %v4551, 30
      %v5056 = vpop.permute.xlu0 %5055
      %5057 = vrot.lane.b32.xlu0 %v4552, 30
      %v5058 = vpop.permute.xlu0 %5057
      %5059 = vrot.lane.b32.xlu0 %v4553, 30
      %v5060 = vpop.permute.xlu0 %5059
      %5061 = vrot.lane.b32.xlu0 %v4554, 30
      %v5062 = vpop.permute.xlu0 %5061
      %5063 = vrot.lane.b32.xlu0 %v4555, 30
      %v5064 = vpop.permute.xlu0 %5063
      %5065 = vrot.lane.b32.xlu0 %v4556, 30
      %v5066 = vpop.permute.xlu0 %5065
      %5067 = vrot.lane.b32.xlu0 %v4557, 30
      %v5068 = vpop.permute.xlu0 %5067
      %5069 = vrot.lane.b32.xlu0 %v4558, 30
      %v5070 = vpop.permute.xlu0 %5069
      %5135 = vrot.lane.b32.xlu0 %v4559, 40
      %v5136 = vpop.permute.xlu0 %5135
      %5137 = vrot.lane.b32.xlu0 %v4560, 40
      %v5138 = vpop.permute.xlu0 %5137
      %5139 = vrot.lane.b32.xlu0 %v4561, 40
      %v5140 = vpop.permute.xlu0 %5139
      %5141 = vrot.lane.b32.xlu0 %v4562, 40
      %v5142 = vpop.permute.xlu0 %5141
      %5143 = vrot.lane.b32.xlu0 %v4563, 40
      %v5144 = vpop.permute.xlu0 %5143
      %5145 = vrot.lane.b32.xlu0 %v4564, 40
      %v5146 = vpop.permute.xlu0 %5145
      %5147 = vrot.lane.b32.xlu0 %v4565, 40
      %v5148 = vpop.permute.xlu0 %5147
      %5149 = vrot.lane.b32.xlu0 %v4566, 40
      %v5150 = vpop.permute.xlu0 %5149
      %5151 = vrot.lane.b32.xlu0 %v4567, 40
      %v5152 = vpop.permute.xlu0 %5151
      %5153 = vrot.lane.b32.xlu0 %v4568, 40
      %v5154 = vpop.permute.xlu0 %5153
      %5155 = vrot.lane.b32.xlu0 %v4569, 40
      %v5156 = vpop.permute.xlu0 %5155
      %5157 = vrot.lane.b32.xlu0 %v4570, 40
      %v5158 = vpop.permute.xlu0 %5157
      %5159 = vrot.lane.b32.xlu0 %v4571, 40
      %v5160 = vpop.permute.xlu0 %5159
      %5161 = vrot.lane.b32.xlu0 %v4572, 40
      %v5162 = vpop.permute.xlu0 %5161
      %5163 = vrot.lane.b32.xlu0 %v4573, 40
      %v5164 = vpop.permute.xlu0 %5163
      %5165 = vrot.lane.b32.xlu0 %v4574, 40
      %v5166 = vpop.permute.xlu0 %5165
      %5167 = vrot.lane.b32.xlu0 %v4575, 40
      %v5168 = vpop.permute.xlu0 %5167
      %5169 = vrot.lane.b32.xlu0 %v4576, 40
      %v5170 = vpop.permute.xlu0 %5169
      %5171 = vrot.lane.b32.xlu0 %v4577, 40
      %v5172 = vpop.permute.xlu0 %5171
      %5173 = vrot.lane.b32.xlu0 %v4578, 40
      %v5174 = vpop.permute.xlu0 %5173
      %5175 = vrot.lane.b32.xlu0 %v4579, 40
      %v5176 = vpop.permute.xlu0 %5175
      %5177 = vrot.lane.b32.xlu0 %v4580, 40
      %v5178 = vpop.permute.xlu0 %5177
      %5179 = vrot.lane.b32.xlu0 %v4581, 40
      %v5180 = vpop.permute.xlu0 %5179
      %5181 = vrot.lane.b32.xlu0 %v4582, 40
      %v5182 = vpop.permute.xlu0 %5181
      %5183 = vrot.lane.b32.xlu0 %v4583, 40
      %v5184 = vpop.permute.xlu0 %5183
      %5185 = vrot.lane.b32.xlu0 %v4584, 40
      %v5186 = vpop.permute.xlu0 %5185
      %5187 = vrot.lane.b32.xlu0 %v4585, 40
      %v5188 = vpop.permute.xlu0 %5187
      %5189 = vrot.lane.b32.xlu0 %v4586, 40
      %v5190 = vpop.permute.xlu0 %5189
      %5191 = vrot.lane.b32.xlu0 %v4587, 40
      %v5192 = vpop.permute.xlu0 %5191
      %5193 = vrot.lane.b32.xlu0 %v4588, 40
      %v5194 = vpop.permute.xlu0 %5193
      %5195 = vrot.lane.b32.xlu0 %v4589, 40
      %v5196 = vpop.permute.xlu0 %5195
      %5197 = vrot.lane.b32.xlu0 %v4590, 40
      %v5198 = vpop.permute.xlu0 %5197
      %5263 = vrot.lane.b32.xlu0 %v4591, 50
      %v5264 = vpop.permute.xlu0 %5263
      %5265 = vrot.lane.b32.xlu0 %v4592, 50
      %v5266 = vpop.permute.xlu0 %5265
      %5267 = vrot.lane.b32.xlu0 %v4593, 50
      %v5268 = vpop.permute.xlu0 %5267
      %5269 = vrot.lane.b32.xlu0 %v4594, 50
      %v5270 = vpop.permute.xlu0 %5269
      %5271 = vrot.lane.b32.xlu0 %v4595, 50
      %v5272 = vpop.permute.xlu0 %5271
      %5273 = vrot.lane.b32.xlu0 %v4596, 50
      %v5274 = vpop.permute.xlu0 %5273
      %5275 = vrot.lane.b32.xlu0 %v4597, 50
      %v5276 = vpop.permute.xlu0 %5275
      %5277 = vrot.lane.b32.xlu0 %v4598, 50
      %v5278 = vpop.permute.xlu0 %5277
      %5279 = vrot.lane.b32.xlu0 %v4599, 50
      %v5280 = vpop.permute.xlu0 %5279
      %5281 = vrot.lane.b32.xlu0 %v4600, 50
      %v5282 = vpop.permute.xlu0 %5281
      %5283 = vrot.lane.b32.xlu0 %v4601, 50
      %v5284 = vpop.permute.xlu0 %5283
      %5285 = vrot.lane.b32.xlu0 %v4602, 50
      %v5286 = vpop.permute.xlu0 %5285
      %5287 = vrot.lane.b32.xlu0 %v4603, 50
      %v5288 = vpop.permute.xlu0 %5287
      %5289 = vrot.lane.b32.xlu0 %v4604, 50
      %v5290 = vpop.permute.xlu0 %5289
      %5291 = vrot.lane.b32.xlu0 %v4605, 50
      %v5292 = vpop.permute.xlu0 %5291
      %5293 = vrot.lane.b32.xlu0 %v4606, 50
      %v5294 = vpop.permute.xlu0 %5293
      %5295 = vrot.lane.b32.xlu0 %v4607, 50
      %v5296 = vpop.permute.xlu0 %5295
      %5297 = vrot.lane.b32.xlu0 %v4608, 50
      %v5298 = vpop.permute.xlu0 %5297
      %5299 = vrot.lane.b32.xlu0 %v4609, 50
      %v5300 = vpop.permute.xlu0 %5299
      %5301 = vrot.lane.b32.xlu0 %v4610, 50
      %v5302 = vpop.permute.xlu0 %5301
      %5303 = vrot.lane.b32.xlu0 %v4611, 50
      %v5304 = vpop.permute.xlu0 %5303
      %5305 = vrot.lane.b32.xlu0 %v4612, 50
      %v5306 = vpop.permute.xlu0 %5305
      %5307 = vrot.lane.b32.xlu0 %v4613, 50
      %v5308 = vpop.permute.xlu0 %5307
      %5309 = vrot.lane.b32.xlu0 %v4614, 50
      %v5310 = vpop.permute.xlu0 %5309
      %5311 = vrot.lane.b32.xlu0 %v4615, 50
      %v5312 = vpop.permute.xlu0 %5311
      %5313 = vrot.lane.b32.xlu0 %v4616, 50
      %v5314 = vpop.permute.xlu0 %5313
      %5315 = vrot.lane.b32.xlu0 %v4617, 50
      %v5316 = vpop.permute.xlu0 %5315
      %5317 = vrot.lane.b32.xlu0 %v4618, 50
      %v5318 = vpop.permute.xlu0 %5317
      %5319 = vrot.lane.b32.xlu0 %v4619, 50
      %v5320 = vpop.permute.xlu0 %5319
      %5321 = vrot.lane.b32.xlu0 %v4620, 50
      %v5322 = vpop.permute.xlu0 %5321
      %5323 = vrot.lane.b32.xlu0 %v4621, 50
      %v5324 = vpop.permute.xlu0 %5323
      %5325 = vrot.lane.b32.xlu0 %v4622, 50
      %v5326 = vpop.permute.xlu0 %5325
      %5391 = vrot.lane.b32.xlu0 %v4623, 60
      %v5392 = vpop.permute.xlu0 %5391
      %5393 = vrot.lane.b32.xlu0 %v4624, 60
      %v5394 = vpop.permute.xlu0 %5393
      %5395 = vrot.lane.b32.xlu0 %v4625, 60
      %v5396 = vpop.permute.xlu0 %5395
      %5397 = vrot.lane.b32.xlu0 %v4626, 60
      %v5398 = vpop.permute.xlu0 %5397
      %5399 = vrot.lane.b32.xlu0 %v4627, 60
      %v5400 = vpop.permute.xlu0 %5399
      %5401 = vrot.lane.b32.xlu0 %v4628, 60
      %v5402 = vpop.permute.xlu0 %5401
      %5403 = vrot.lane.b32.xlu0 %v4629, 60
      %v5404 = vpop.permute.xlu0 %5403
      %5405 = vrot.lane.b32.xlu0 %v4630, 60
      %v5406 = vpop.permute.xlu0 %5405
      %5407 = vrot.lane.b32.xlu0 %v4631, 60
      %v5408 = vpop.permute.xlu0 %5407
      %5409 = vrot.lane.b32.xlu0 %v4632, 60
      %v5410 = vpop.permute.xlu0 %5409
      %5411 = vrot.lane.b32.xlu0 %v4633, 60
      %v5412 = vpop.permute.xlu0 %5411
      %5413 = vrot.lane.b32.xlu0 %v4634, 60
      %v5414 = vpop.permute.xlu0 %5413
      %5415 = vrot.lane.b32.xlu0 %v4635, 60
      %v5416 = vpop.permute.xlu0 %5415
      %5417 = vrot.lane.b32.xlu0 %v4636, 60
      %v5418 = vpop.permute.xlu0 %5417
      %5419 = vrot.lane.b32.xlu0 %v4637, 60
      %v5420 = vpop.permute.xlu0 %5419
      %5421 = vrot.lane.b32.xlu0 %v4638, 60
      %v5422 = vpop.permute.xlu0 %5421
      %5423 = vrot.lane.b32.xlu0 %v4639, 60
      %v5424 = vpop.permute.xlu0 %5423
      %5425 = vrot.lane.b32.xlu0 %v4640, 60
      %v5426 = vpop.permute.xlu0 %5425
      %5427 = vrot.lane.b32.xlu0 %v4641, 60
      %v5428 = vpop.permute.xlu0 %5427
      %5429 = vrot.lane.b32.xlu0 %v4642, 60
      %v5430 = vpop.permute.xlu0 %5429
      %5431 = vrot.lane.b32.xlu0 %v4643, 60
      %v5432 = vpop.permute.xlu0 %5431
      %5433 = vrot.lane.b32.xlu0 %v4644, 60
      %v5434 = vpop.permute.xlu0 %5433
      %5435 = vrot.lane.b32.xlu0 %v4645, 60
      %v5436 = vpop.permute.xlu0 %5435
      %5437 = vrot.lane.b32.xlu0 %v4646, 60
      %v5438 = vpop.permute.xlu0 %5437
      %5439 = vrot.lane.b32.xlu0 %v4647, 60
      %v5440 = vpop.permute.xlu0 %5439
      %5441 = vrot.lane.b32.xlu0 %v4648, 60
      %v5442 = vpop.permute.xlu0 %5441
      %5443 = vrot.lane.b32.xlu0 %v4649, 60
      %v5444 = vpop.permute.xlu0 %5443
      %5445 = vrot.lane.b32.xlu0 %v4650, 60
      %v5446 = vpop.permute.xlu0 %5445
      %5447 = vrot.lane.b32.xlu0 %v4651, 60
      %v5448 = vpop.permute.xlu0 %5447
      %5449 = vrot.lane.b32.xlu0 %v4652, 60
      %v5450 = vpop.permute.xlu0 %5449
      %5451 = vrot.lane.b32.xlu0 %v4653, 60
      %v5452 = vpop.permute.xlu0 %5451
      %5453 = vrot.lane.b32.xlu0 %v4654, 60
      %v5454 = vpop.permute.xlu0 %5453
      %5519 = vrot.lane.b32.xlu0 %v4655, 70
      %v5520 = vpop.permute.xlu0 %5519
      %5521 = vrot.lane.b32.xlu0 %v4656, 70
      %v5522 = vpop.permute.xlu0 %5521
      %5523 = vrot.lane.b32.xlu0 %v4657, 70
      %v5524 = vpop.permute.xlu0 %5523
      %5525 = vrot.lane.b32.xlu0 %v4658, 70
      %v5526 = vpop.permute.xlu0 %5525
      %5527 = vrot.lane.b32.xlu0 %v4659, 70
      %v5528 = vpop.permute.xlu0 %5527
      %5529 = vrot.lane.b32.xlu0 %v4660, 70
      %v5530 = vpop.permute.xlu0 %5529
      %5531 = vrot.lane.b32.xlu0 %v4661, 70
      %v5532 = vpop.permute.xlu0 %5531
      %5533 = vrot.lane.b32.xlu0 %v4662, 70
      %v5534 = vpop.permute.xlu0 %5533
      %5535 = vrot.lane.b32.xlu0 %v4663, 70
      %v5536 = vpop.permute.xlu0 %5535
      %5537 = vrot.lane.b32.xlu0 %v4664, 70
      %v5538 = vpop.permute.xlu0 %5537
      %5539 = vrot.lane.b32.xlu0 %v4665, 70
      %v5540 = vpop.permute.xlu0 %5539
      %5541 = vrot.lane.b32.xlu0 %v4666, 70
      %v5542 = vpop.permute.xlu0 %5541
      %5543 = vrot.lane.b32.xlu0 %v4667, 70
      %v5544 = vpop.permute.xlu0 %5543
      %5545 = vrot.lane.b32.xlu0 %v4668, 70
      %v5546 = vpop.permute.xlu0 %5545
      %5547 = vrot.lane.b32.xlu0 %v4669, 70
      %v5548 = vpop.permute.xlu0 %5547
      %5549 = vrot.lane.b32.xlu0 %v4670, 70
      %v5550 = vpop.permute.xlu0 %5549
      %5551 = vrot.lane.b32.xlu0 %v4671, 70
      %v5552 = vpop.permute.xlu0 %5551
      %5553 = vrot.lane.b32.xlu0 %v4672, 70
      %v5554 = vpop.permute.xlu0 %5553
      %5555 = vrot.lane.b32.xlu0 %v4673, 70
      %v5556 = vpop.permute.xlu0 %5555
      %5557 = vrot.lane.b32.xlu0 %v4674, 70
      %v5558 = vpop.permute.xlu0 %5557
      %5559 = vrot.lane.b32.xlu0 %v4675, 70
      %v5560 = vpop.permute.xlu0 %5559
      %5561 = vrot.lane.b32.xlu0 %v4676, 70
      %v5562 = vpop.permute.xlu0 %5561
      %5563 = vrot.lane.b32.xlu0 %v4677, 70
      %v5564 = vpop.permute.xlu0 %5563
      %5565 = vrot.lane.b32.xlu0 %v4678, 70
      %v5566 = vpop.permute.xlu0 %5565
      %5567 = vrot.lane.b32.xlu0 %v4679, 70
      %v5568 = vpop.permute.xlu0 %5567
      %5569 = vrot.lane.b32.xlu0 %v4680, 70
      %v5570 = vpop.permute.xlu0 %5569
      %5571 = vrot.lane.b32.xlu0 %v4681, 70
      %v5572 = vpop.permute.xlu0 %5571
      %5573 = vrot.lane.b32.xlu0 %v4682, 70
      %v5574 = vpop.permute.xlu0 %5573
      %5575 = vrot.lane.b32.xlu0 %v4683, 70
      %v5576 = vpop.permute.xlu0 %5575
      %5577 = vrot.lane.b32.xlu0 %v4684, 70
      %v5578 = vpop.permute.xlu0 %5577
      %5579 = vrot.lane.b32.xlu0 %v4685, 70
      %v5580 = vpop.permute.xlu0 %5579
      %5581 = vrot.lane.b32.xlu0 %v4686, 70
      %v5582 = vpop.permute.xlu0 %5581
      %5647 = vrot.lane.b32.xlu0 %v4687, 80
      %v5648 = vpop.permute.xlu0 %5647
      %5649 = vrot.lane.b32.xlu0 %v4688, 80
      %v5650 = vpop.permute.xlu0 %5649
      %5651 = vrot.lane.b32.xlu0 %v4689, 80
      %v5652 = vpop.permute.xlu0 %5651
      %5653 = vrot.lane.b32.xlu0 %v4690, 80
      %v5654 = vpop.permute.xlu0 %5653
      %5655 = vrot.lane.b32.xlu0 %v4691, 80
      %v5656 = vpop.permute.xlu0 %5655
      %5657 = vrot.lane.b32.xlu0 %v4692, 80
      %v5658 = vpop.permute.xlu0 %5657
      %5659 = vrot.lane.b32.xlu0 %v4693, 80
      %v5660 = vpop.permute.xlu0 %5659
      %5661 = vrot.lane.b32.xlu0 %v4694, 80
      %v5662 = vpop.permute.xlu0 %5661
      %5663 = vrot.lane.b32.xlu0 %v4695, 80
      %v5664 = vpop.permute.xlu0 %5663
      %5665 = vrot.lane.b32.xlu0 %v4696, 80
      %v5666 = vpop.permute.xlu0 %5665
      %5667 = vrot.lane.b32.xlu0 %v4697, 80
      %v5668 = vpop.permute.xlu0 %5667
      %5669 = vrot.lane.b32.xlu0 %v4698, 80
      %v5670 = vpop.permute.xlu0 %5669
      %5671 = vrot.lane.b32.xlu0 %v4699, 80
      %v5672 = vpop.permute.xlu0 %5671
      %5673 = vrot.lane.b32.xlu0 %v4700, 80
      %v5674 = vpop.permute.xlu0 %5673
      %5675 = vrot.lane.b32.xlu0 %v4701, 80
      %v5676 = vpop.permute.xlu0 %5675
      %5677 = vrot.lane.b32.xlu0 %v4702, 80
      %v5678 = vpop.permute.xlu0 %5677
      %5679 = vrot.lane.b32.xlu0 %v4703, 80
      %v5680 = vpop.permute.xlu0 %5679
      %5681 = vrot.lane.b32.xlu0 %v4704, 80
      %v5682 = vpop.permute.xlu0 %5681
      %5683 = vrot.lane.b32.xlu0 %v4705, 80
      %v5684 = vpop.permute.xlu0 %5683
      %5685 = vrot.lane.b32.xlu0 %v4706, 80
      %v5686 = vpop.permute.xlu0 %5685
      %5687 = vrot.lane.b32.xlu0 %v4707, 80
      %v5688 = vpop.permute.xlu0 %5687
      %5689 = vrot.lane.b32.xlu0 %v4708, 80
      %v5690 = vpop.permute.xlu0 %5689
      %5691 = vrot.lane.b32.xlu0 %v4709, 80
      %v5692 = vpop.permute.xlu0 %5691
      %5693 = vrot.lane.b32.xlu0 %v4710, 80
      %v5694 = vpop.permute.xlu0 %5693
      %5695 = vrot.lane.b32.xlu0 %v4711, 80
      %v5696 = vpop.permute.xlu0 %5695
      %5697 = vrot.lane.b32.xlu0 %v4712, 80
      %v5698 = vpop.permute.xlu0 %5697
      %5699 = vrot.lane.b32.xlu0 %v4713, 80
      %v5700 = vpop.permute.xlu0 %5699
      %5701 = vrot.lane.b32.xlu0 %v4714, 80
      %v5702 = vpop.permute.xlu0 %5701
      %5703 = vrot.lane.b32.xlu0 %v4715, 80
      %v5704 = vpop.permute.xlu0 %5703
      %5705 = vrot.lane.b32.xlu0 %v4716, 80
      %v5706 = vpop.permute.xlu0 %5705
      %5707 = vrot.lane.b32.xlu0 %v4717, 80
      %v5708 = vpop.permute.xlu0 %5707
      %5709 = vrot.lane.b32.xlu0 %v4718, 80
      %v5710 = vpop.permute.xlu0 %5709
      %v5743 = vsel %vm442, %v4431, %v4752
      %v5744 = vsel %vm442, %v4432, %v4754
      %v5745 = vsel %vm442, %v4433, %v4756
      %v5746 = vsel %vm442, %v4434, %v4758
      %v5747 = vsel %vm442, %v4435, %v4760
      %v5748 = vsel %vm442, %v4436, %v4762
      %v5749 = vsel %vm442, %v4437, %v4764
      %v5750 = vsel %vm442, %v4438, %v4766
      %v5751 = vsel %vm442, %v4439, %v4768
      %v5752 = vsel %vm442, %v4440, %v4770
      %v5753 = vsel %vm442, %v4441, %v4772
      %v5754 = vsel %vm442, %v4442, %v4774
      %v5755 = vsel %vm442, %v4443, %v4776
      %v5756 = vsel %vm442, %v4444, %v4778
      %v5757 = vsel %vm442, %v4445, %v4780
      %v5758 = vsel %vm442, %v4446, %v4782
      %v5759 = vsel %vm442, %v4447, %v4784
      %v5760 = vsel %vm442, %v4448, %v4786
      %v5761 = vsel %vm442, %v4449, %v4788
      %v5762 = vsel %vm442, %v4450, %v4790
      %v5763 = vsel %vm442, %v4451, %v4792
      %v5764 = vsel %vm442, %v4452, %v4794
      %v5765 = vsel %vm442, %v4453, %v4796
      %v5766 = vsel %vm442, %v4454, %v4798
      %v5767 = vsel %vm442, %v4455, %v4800
      %v5768 = vsel %vm442, %v4456, %v4802
      %v5769 = vsel %vm442, %v4457, %v4804
      %v5770 = vsel %vm442, %v4458, %v4806
      %v5771 = vsel %vm442, %v4459, %v4808
      %v5772 = vsel %vm442, %v4460, %v4810
      %v5773 = vsel %vm442, %v4461, %v4812
      %v5774 = vsel %vm442, %v4462, %v4814
      %v5775 = vsel %vm3853, %v5743, %v4880
      %v5776 = vsel %vm3853, %v5744, %v4882
      %v5777 = vsel %vm3853, %v5745, %v4884
      %v5778 = vsel %vm3853, %v5746, %v4886
      %v5779 = vsel %vm3853, %v5747, %v4888
      %v5780 = vsel %vm3853, %v5748, %v4890
      %v5781 = vsel %vm3853, %v5749, %v4892
      %v5782 = vsel %vm3853, %v5750, %v4894
      %v5783 = vsel %vm3853, %v5751, %v4896
      %v5784 = vsel %vm3853, %v5752, %v4898
      %v5785 = vsel %vm3853, %v5753, %v4900
      %v5786 = vsel %vm3853, %v5754, %v4902
      %v5787 = vsel %vm3853, %v5755, %v4904
      %v5788 = vsel %vm3853, %v5756, %v4906
      %v5789 = vsel %vm3853, %v5757, %v4908
      %v5790 = vsel %vm3853, %v5758, %v4910
      %v5791 = vsel %vm3853, %v5759, %v4912
      %v5792 = vsel %vm3853, %v5760, %v4914
      %v5793 = vsel %vm3853, %v5761, %v4916
      %v5794 = vsel %vm3853, %v5762, %v4918
      %v5795 = vsel %vm3853, %v5763, %v4920
      %v5796 = vsel %vm3853, %v5764, %v4922
      %v5797 = vsel %vm3853, %v5765, %v4924
      %v5798 = vsel %vm3853, %v5766, %v4926
      %v5799 = vsel %vm3853, %v5767, %v4928
      %v5800 = vsel %vm3853, %v5768, %v4930
      %v5801 = vsel %vm3853, %v5769, %v4932
      %v5802 = vsel %vm3853, %v5770, %v4934
      %v5803 = vsel %vm3853, %v5771, %v4936
      %v5804 = vsel %vm3853, %v5772, %v4938
      %v5805 = vsel %vm3853, %v5773, %v4940
      %v5806 = vsel %vm3853, %v5774, %v4942
      %v5807 = vsel %vm2042, %v5775, %v5008
      %v5808 = vsel %vm2042, %v5776, %v5010
      %v5809 = vsel %vm2042, %v5777, %v5012
      %v5810 = vsel %vm2042, %v5778, %v5014
      %v5811 = vsel %vm2042, %v5779, %v5016
      %v5812 = vsel %vm2042, %v5780, %v5018
      %v5813 = vsel %vm2042, %v5781, %v5020
      %v5814 = vsel %vm2042, %v5782, %v5022
      %v5815 = vsel %vm2042, %v5783, %v5024
      %v5816 = vsel %vm2042, %v5784, %v5026
      %v5817 = vsel %vm2042, %v5785, %v5028
      %v5818 = vsel %vm2042, %v5786, %v5030
      %v5819 = vsel %vm2042, %v5787, %v5032
      %v5820 = vsel %vm2042, %v5788, %v5034
      %v5821 = vsel %vm2042, %v5789, %v5036
      %v5822 = vsel %vm2042, %v5790, %v5038
      %v5823 = vsel %vm2042, %v5791, %v5040
      %v5824 = vsel %vm2042, %v5792, %v5042
      %v5825 = vsel %vm2042, %v5793, %v5044
      %v5826 = vsel %vm2042, %v5794, %v5046
      %v5827 = vsel %vm2042, %v5795, %v5048
      %v5828 = vsel %vm2042, %v5796, %v5050
      %v5829 = vsel %vm2042, %v5797, %v5052
      %v5830 = vsel %vm2042, %v5798, %v5054
      %v5831 = vsel %vm2042, %v5799, %v5056
      %v5832 = vsel %vm2042, %v5800, %v5058
      %v5833 = vsel %vm2042, %v5801, %v5060
      %v5834 = vsel %vm2042, %v5802, %v5062
      %v5835 = vsel %vm2042, %v5803, %v5064
      %v5836 = vsel %vm2042, %v5804, %v5066
      %v5837 = vsel %vm2042, %v5805, %v5068
      %v5838 = vsel %vm2042, %v5806, %v5070
      %v5839 = vsel %vm3918, %v5807, %v5136
      %v5840 = vsel %vm3918, %v5808, %v5138
      %v5841 = vsel %vm3918, %v5809, %v5140
      %v5842 = vsel %vm3918, %v5810, %v5142
      %v5843 = vsel %vm3918, %v5811, %v5144
      %v5844 = vsel %vm3918, %v5812, %v5146
      %v5845 = vsel %vm3918, %v5813, %v5148
      %v5846 = vsel %vm3918, %v5814, %v5150
      %v5847 = vsel %vm3918, %v5815, %v5152
      %v5848 = vsel %vm3918, %v5816, %v5154
      %v5849 = vsel %vm3918, %v5817, %v5156
      %v5850 = vsel %vm3918, %v5818, %v5158
      %v5851 = vsel %vm3918, %v5819, %v5160
      %v5852 = vsel %vm3918, %v5820, %v5162
      %v5853 = vsel %vm3918, %v5821, %v5164
      %v5854 = vsel %vm3918, %v5822, %v5166
      %v5855 = vsel %vm3918, %v5823, %v5168
      %v5856 = vsel %vm3918, %v5824, %v5170
      %v5857 = vsel %vm3918, %v5825, %v5172
      %v5858 = vsel %vm3918, %v5826, %v5174
      %v5859 = vsel %vm3918, %v5827, %v5176
      %v5860 = vsel %vm3918, %v5828, %v5178
      %v5861 = vsel %vm3918, %v5829, %v5180
      %v5862 = vsel %vm3918, %v5830, %v5182
      %v5863 = vsel %vm3918, %v5831, %v5184
      %v5864 = vsel %vm3918, %v5832, %v5186
      %v5865 = vsel %vm3918, %v5833, %v5188
      %v5866 = vsel %vm3918, %v5834, %v5190
      %v5867 = vsel %vm3918, %v5835, %v5192
      %v5868 = vsel %vm3918, %v5836, %v5194
      %v5869 = vsel %vm3918, %v5837, %v5196
      %v5870 = vsel %vm3918, %v5838, %v5198
      %v5871 = vsel %vm3951, %v5839, %v5264
      %v5872 = vsel %vm3951, %v5840, %v5266
      %v5873 = vsel %vm3951, %v5841, %v5268
      %v5874 = vsel %vm3951, %v5842, %v5270
      %v5875 = vsel %vm3951, %v5843, %v5272
      %v5876 = vsel %vm3951, %v5844, %v5274
      %v5877 = vsel %vm3951, %v5845, %v5276
      %v5878 = vsel %vm3951, %v5846, %v5278
      %v5879 = vsel %vm3951, %v5847, %v5280
      %v5880 = vsel %vm3951, %v5848, %v5282
      %v5881 = vsel %vm3951, %v5849, %v5284
      %v5882 = vsel %vm3951, %v5850, %v5286
      %v5883 = vsel %vm3951, %v5851, %v5288
      %v5884 = vsel %vm3951, %v5852, %v5290
      %v5885 = vsel %vm3951, %v5853, %v5292
      %v5886 = vsel %vm3951, %v5854, %v5294
      %v5887 = vsel %vm3951, %v5855, %v5296
      %v5888 = vsel %vm3951, %v5856, %v5298
      %v5889 = vsel %vm3951, %v5857, %v5300
      %v5890 = vsel %vm3951, %v5858, %v5302
      %v5891 = vsel %vm3951, %v5859, %v5304
      %v5892 = vsel %vm3951, %v5860, %v5306
      %v5893 = vsel %vm3951, %v5861, %v5308
      %v5894 = vsel %vm3951, %v5862, %v5310
      %v5895 = vsel %vm3951, %v5863, %v5312
      %v5896 = vsel %vm3951, %v5864, %v5314
      %v5897 = vsel %vm3951, %v5865, %v5316
      %v5898 = vsel %vm3951, %v5866, %v5318
      %v5899 = vsel %vm3951, %v5867, %v5320
      %v5900 = vsel %vm3951, %v5868, %v5322
      %v5901 = vsel %vm3951, %v5869, %v5324
      %v5902 = vsel %vm3951, %v5870, %v5326
      %v5903 = vsel %vm3984, %v5871, %v5392
      %v5904 = vsel %vm3984, %v5872, %v5394
      %v5905 = vsel %vm3984, %v5873, %v5396
      %v5906 = vsel %vm3984, %v5874, %v5398
      %v5907 = vsel %vm3984, %v5875, %v5400
      %v5908 = vsel %vm3984, %v5876, %v5402
      %v5909 = vsel %vm3984, %v5877, %v5404
      %v5910 = vsel %vm3984, %v5878, %v5406
      %v5911 = vsel %vm3984, %v5879, %v5408
      %v5912 = vsel %vm3984, %v5880, %v5410
      %v5913 = vsel %vm3984, %v5881, %v5412
      %v5914 = vsel %vm3984, %v5882, %v5414
      %v5915 = vsel %vm3984, %v5883, %v5416
      %v5916 = vsel %vm3984, %v5884, %v5418
      %v5917 = vsel %vm3984, %v5885, %v5420
      %v5918 = vsel %vm3984, %v5886, %v5422
      %v5919 = vsel %vm3984, %v5887, %v5424
      %v5920 = vsel %vm3984, %v5888, %v5426
      %v5921 = vsel %vm3984, %v5889, %v5428
      %v5922 = vsel %vm3984, %v5890, %v5430
      %v5923 = vsel %vm3984, %v5891, %v5432
      %v5924 = vsel %vm3984, %v5892, %v5434
      %v5925 = vsel %vm3984, %v5893, %v5436
      %v5926 = vsel %vm3984, %v5894, %v5438
      %v5927 = vsel %vm3984, %v5895, %v5440
      %v5928 = vsel %vm3984, %v5896, %v5442
      %v5929 = vsel %vm3984, %v5897, %v5444
      %v5930 = vsel %vm3984, %v5898, %v5446
      %v5931 = vsel %vm3984, %v5899, %v5448
      %v5932 = vsel %vm3984, %v5900, %v5450
      %v5933 = vsel %vm3984, %v5901, %v5452
      %v5934 = vsel %vm3984, %v5902, %v5454
      %v5935 = vsel %vm4017, %v5903, %v5520
      %v5936 = vsel %vm4017, %v5904, %v5522
      %v5937 = vsel %vm4017, %v5905, %v5524
      %v5938 = vsel %vm4017, %v5906, %v5526
      %v5939 = vsel %vm4017, %v5907, %v5528
      %v5940 = vsel %vm4017, %v5908, %v5530
      %v5941 = vsel %vm4017, %v5909, %v5532
      %v5942 = vsel %vm4017, %v5910, %v5534
      %v5943 = vsel %vm4017, %v5911, %v5536
      %v5944 = vsel %vm4017, %v5912, %v5538
      %v5945 = vsel %vm4017, %v5913, %v5540
      %v5946 = vsel %vm4017, %v5914, %v5542
      %v5947 = vsel %vm4017, %v5915, %v5544
      %v5948 = vsel %vm4017, %v5916, %v5546
      %v5949 = vsel %vm4017, %v5917, %v5548
      %v5950 = vsel %vm4017, %v5918, %v5550
      %v5951 = vsel %vm4017, %v5919, %v5552
      %v5952 = vsel %vm4017, %v5920, %v5554
      %v5953 = vsel %vm4017, %v5921, %v5556
      %v5954 = vsel %vm4017, %v5922, %v5558
      %v5955 = vsel %vm4017, %v5923, %v5560
      %v5956 = vsel %vm4017, %v5924, %v5562
      %v5957 = vsel %vm4017, %v5925, %v5564
      %v5958 = vsel %vm4017, %v5926, %v5566
      %v5959 = vsel %vm4017, %v5927, %v5568
      %v5960 = vsel %vm4017, %v5928, %v5570
      %v5961 = vsel %vm4017, %v5929, %v5572
      %v5962 = vsel %vm4017, %v5930, %v5574
      %v5963 = vsel %vm4017, %v5931, %v5576
      %v5964 = vsel %vm4017, %v5932, %v5578
      %v5965 = vsel %vm4017, %v5933, %v5580
      %v5966 = vsel %vm4017, %v5934, %v5582
      %v5967 = vsel %vm4050, %v5935, %v5648
      %v5968 = vsel %vm4050, %v5936, %v5650
      %v5969 = vsel %vm4050, %v5937, %v5652
      %v5970 = vsel %vm4050, %v5938, %v5654
      %v5971 = vsel %vm4050, %v5939, %v5656
      %v5972 = vsel %vm4050, %v5940, %v5658
      %v5973 = vsel %vm4050, %v5941, %v5660
      %v5974 = vsel %vm4050, %v5942, %v5662
      %v5975 = vsel %vm4050, %v5943, %v5664
      %v5976 = vsel %vm4050, %v5944, %v5666
      %v5977 = vsel %vm4050, %v5945, %v5668
      %v5978 = vsel %vm4050, %v5946, %v5670
      %v5979 = vsel %vm4050, %v5947, %v5672
      %v5980 = vsel %vm4050, %v5948, %v5674
      %v5981 = vsel %vm4050, %v5949, %v5676
      %v5982 = vsel %vm4050, %v5950, %v5678
      %v5983 = vsel %vm4050, %v5951, %v5680
      %v5984 = vsel %vm4050, %v5952, %v5682
      %v5985 = vsel %vm4050, %v5953, %v5684
      %v5986 = vsel %vm4050, %v5954, %v5686
      %v5987 = vsel %vm4050, %v5955, %v5688
      %v5988 = vsel %vm4050, %v5956, %v5690
      %v5989 = vsel %vm4050, %v5957, %v5692
      %v5990 = vsel %vm4050, %v5958, %v5694
      %v5991 = vsel %vm4050, %v5959, %v5696
      %v5992 = vsel %vm4050, %v5960, %v5698
      %v5993 = vsel %vm4050, %v5961, %v5700
      %v5994 = vsel %vm4050, %v5962, %v5702
      %v5995 = vsel %vm4050, %v5963, %v5704
      %v5996 = vsel %vm4050, %v5964, %v5706
      %v5997 = vsel %vm4050, %v5965, %v5708
      %v5998 = vsel %vm4050, %v5966, %v5710
      %v5999 = vpack.c.bf16 %v5968, %v5967
      %v6000 = vpack.c.bf16 %v5970, %v5969
      %v6001 = vpack.c.bf16 %v5972, %v5971
      %v6002 = vpack.c.bf16 %v5974, %v5973
      %v6003 = vpack.c.bf16 %v5976, %v5975
      %v6004 = vpack.c.bf16 %v5978, %v5977
      %v6005 = vpack.c.bf16 %v5980, %v5979
      %v6006 = vpack.c.bf16 %v5982, %v5981
      %v6007 = vpack.c.bf16 %v5984, %v5983
      %v6008 = vpack.c.bf16 %v5986, %v5985
      %v6009 = vpack.c.bf16 %v5988, %v5987
      %v6010 = vpack.c.bf16 %v5990, %v5989
      %v6011 = vpack.c.bf16 %v5992, %v5991
      %v6012 = vpack.c.bf16 %v5994, %v5993
      %v6013 = vpack.c.bf16 %v5996, %v5995
      %v6014 = vpack.c.bf16 %v5998, %v5997
      %v6016 = vlaneseq
      %v6017 = vshrl.u32 %v6016, 7
      %v6018 = vsub.s32 0, %v6017
      %v6019 = vrot.slane %v4430, %v6018
      %v6033 = vunpack.c.l.b16 %v4418
      %v6034 = vunpack.c.l.b16 %v4419
      %v6035 = vunpack.c.l.b16 %v4420
      %v6036 = vunpack.c.l.b16 %v4421
      %v6037 = vunpack.c.l.b16 %v4422
      %v6038 = vunpack.c.l.b16 %v4423
      %v6039 = vunpack.c.l.b16 %v4424
      %v6040 = vunpack.c.l.b16 %v4425
      %v6041 = vunpack.c.l.b16 %v4426
      %v6042 = vunpack.c.l.b16 %v4427
      %v6043 = vunpack.c.l.b16 %v4428
      %v6044 = vunpack.c.l.b16 %v4429
      %v6045 = vpack.c.b16 %v6034, %v6033
      %v6046 = vpack.c.b16 %v6036, %v6035
      %v6047 = vpack.c.b16 %v6038, %v6037
      %v6048 = vpack.c.b16 %v6040, %v6039
      %v6049 = vpack.c.b16 %v6042, %v6041
      %v6050 = vpack.c.b16 %v6044, %v6043
      %v6057 = vsel %vm4140, %v5999, 0
      %v6060 = vsel %vm4140, %v6000, 0
      %v6063 = vsel %vm4140, %v6001, 0
      %v6066 = vsel %vm4140, %v6002, 0
      %v6069 = vsel %vm4140, %v6003, 0
      %v6072 = vsel %vm4140, %v6004, 0
      %v6075 = vsel %vm4140, %v6005, 0
      %v6078 = vsel %vm4140, %v6006, 0
      %v6081 = vsel %vm4140, %v6007, 0
      %v6084 = vsel %vm4140, %v6008, 0
      %v6087 = vsel %vm4140, %v6009, 0
      %v6090 = vsel %vm4140, %v6010, 0
      %v6093 = vsel %vm4140, %v6011, 0
      %v6096 = vsel %vm4140, %v6012, 0
      %v6099 = vsel %vm4140, %v6013, 0
      %v6102 = vsel %vm4140, %v6014, 0
      %v6105 = vsel %vm4189, %v6050, 0
      %6107 = vmatprep.subr.bf16.mxu0 0
      %6108 = vmatpush1.bf16.msra.mxu0 %v6045
      %6109 = vmatprep.subr.bf16.mxu0 0
      %6110 = vmatpush1.bf16.msra.mxu0 %v6046
      %6111 = vmatprep.subr.bf16.mxu0 0
      %6112 = vmatpush1.bf16.msra.mxu0 %v6047
      %6113 = vmatprep.subr.bf16.mxu0 0
      %6114 = vmatpush1.bf16.msra.mxu0 %v6048
      %6115 = vmatprep.subr.bf16.mxu0 0
      %6116 = vmatpush1.bf16.msra.mxu0 %v6049
      %6117 = vmatprep.subr.bf16.mxu0 0
      %6118 = vmatpush1.bf16.msra.mxu0 %v6105
      %6119 = vmatprep.subr.bf16.mxu0 0
      %6120 = vmatpush1.bf16.msra.mxu0 0
      %6121 = vmatprep.subr.bf16.mxu0 0
      %6122 = vmatpush1.bf16.msra.mxu0 0
      %6123 = vmatprep.subr.bf16.mxu0 0
      %6124 = vmatpush1.bf16.msra.mxu0 0
      %6125 = vmatprep.subr.bf16.mxu0 0
      %6126 = vmatpush1.bf16.msra.mxu0 0
      %6127 = vmatprep.subr.bf16.mxu0 0
      %6128 = vmatpush1.bf16.msra.mxu0 0
      %6129 = vmatprep.subr.bf16.mxu0 0
      %6130 = vmatpush1.bf16.msra.mxu0 0
      %6131 = vmatprep.subr.bf16.mxu0 0
      %6132 = vmatpush1.bf16.msra.mxu0 0
      %6133 = vmatprep.subr.bf16.mxu0 0
      %6134 = vmatpush1.bf16.msra.mxu0 0
      %6135 = vmatprep.subr.bf16.mxu0 0
      %6136 = vmatpush1.bf16.msra.mxu0 0
      %6137 = vmatprep.subr.bf16.mxu0 0
      %6138 = vmatpush1.bf16.msra.mxu0 0
      %6139 = vmatprep.mubr.bf16.mxu0 0
      %6140 = vmatmul.mubr.bf16.gmra.mrb[0].mxu0 %v6057
      %v6141 = vpop.f32.mrb[0].mxu0
      %v6142 = vadd.f32 %v6019, %v6141
      %v6143 = vpop.f32.mrb[0].mxu0
      %v6144 = vpop.f32.mrb[0].mxu0
      %v6145 = vadd.f32 %v6019, %v6144
      %v6146 = vpop.f32.mrb[0].mxu0
      %6147 = vmatprep.mubr.bf16.mxu0 0
      %6148 = vmatmul.mubr.bf16.gmra.mrb[0].mxu0 %v6060
      %v6149 = vpop.f32.mrb[0].mxu0
      %v6150 = vadd.f32 %v6019, %v6149
      %v6151 = vpop.f32.mrb[0].mxu0
      %v6152 = vpop.f32.mrb[0].mxu0
      %v6153 = vadd.f32 %v6019, %v6152
      %v6154 = vpop.f32.mrb[0].mxu0
      %6155 = vmatprep.mubr.bf16.mxu0 0
      %6156 = vmatmul.mubr.bf16.gmra.mrb[0].mxu0 %v6063
      %v6157 = vpop.f32.mrb[0].mxu0
      %v6158 = vadd.f32 %v6019, %v6157
      %v6159 = vpop.f32.mrb[0].mxu0
      %v6160 = vpop.f32.mrb[0].mxu0
      %v6161 = vadd.f32 %v6019, %v6160
      %v6162 = vpop.f32.mrb[0].mxu0
      %6163 = vmatprep.mubr.bf16.mxu0 0
      %6164 = vmatmul.mubr.bf16.gmra.mrb[0].mxu0 %v6066
      %v6165 = vpop.f32.mrb[0].mxu0
      %v6166 = vadd.f32 %v6019, %v6165
      %v6167 = vpop.f32.mrb[0].mxu0
      %v6168 = vpop.f32.mrb[0].mxu0
      %v6169 = vadd.f32 %v6019, %v6168
      %v6170 = vpop.f32.mrb[0].mxu0
      %6171 = vmatprep.mubr.bf16.mxu0 0
      %6172 = vmatmul.mubr.bf16.gmra.mrb[0].mxu0 %v6069
      %v6173 = vpop.f32.mrb[0].mxu0
      %v6174 = vadd.f32 %v6019, %v6173
      %v6175 = vpop.f32.mrb[0].mxu0
      %v6176 = vpop.f32.mrb[0].mxu0
      %v6177 = vadd.f32 %v6019, %v6176
      %v6178 = vpop.f32.mrb[0].mxu0
      %6179 = vmatprep.mubr.bf16.mxu0 0
      %6180 = vmatmul.mubr.bf16.gmra.mrb[0].mxu0 %v6072
      %v6181 = vpop.f32.mrb[0].mxu0
      %v6182 = vadd.f32 %v6019, %v6181
      %v6183 = vpop.f32.mrb[0].mxu0
      %v6184 = vpop.f32.mrb[0].mxu0
      %v6185 = vadd.f32 %v6019, %v6184
      %v6186 = vpop.f32.mrb[0].mxu0
      %6187 = vmatprep.mubr.bf16.mxu0 0
      %6188 = vmatmul.mubr.bf16.gmra.mrb[0].mxu0 %v6075
      %v6189 = vpop.f32.mrb[0].mxu0
      %v6190 = vadd.f32 %v6019, %v6189
      %v6191 = vpop.f32.mrb[0].mxu0
      %v6192 = vpop.f32.mrb[0].mxu0
      %v6193 = vadd.f32 %v6019, %v6192
      %v6194 = vpop.f32.mrb[0].mxu0
      %6195 = vmatprep.mubr.bf16.mxu0 0
      %6196 = vmatmul.mubr.bf16.gmra.mrb[0].mxu0 %v6078
      %v6197 = vpop.f32.mrb[0].mxu0
      %v6198 = vadd.f32 %v6019, %v6197
      %v6199 = vpop.f32.mrb[0].mxu0
      %v6200 = vpop.f32.mrb[0].mxu0
      %v6201 = vadd.f32 %v6019, %v6200
      %v6202 = vpop.f32.mrb[0].mxu0
      %6203 = vmatprep.mubr.bf16.mxu0 0
      %6204 = vmatmul.mubr.bf16.gmra.mrb[0].mxu0 %v6081
      %v6205 = vpop.f32.mrb[0].mxu0
      %v6206 = vadd.f32 %v6019, %v6205
      %v6207 = vpop.f32.mrb[0].mxu0
      %v6208 = vpop.f32.mrb[0].mxu0
      %v6209 = vadd.f32 %v6019, %v6208
      %v6210 = vpop.f32.mrb[0].mxu0
      %6211 = vmatprep.mubr.bf16.mxu0 0
      %6212 = vmatmul.mubr.bf16.gmra.mrb[0].mxu0 %v6084
      %v6213 = vpop.f32.mrb[0].mxu0
      %v6214 = vadd.f32 %v6019, %v6213
      %v6215 = vpop.f32.mrb[0].mxu0
      %v6216 = vpop.f32.mrb[0].mxu0
      %v6217 = vadd.f32 %v6019, %v6216
      %v6218 = vpop.f32.mrb[0].mxu0
      %6219 = vmatprep.mubr.bf16.mxu0 0
      %6220 = vmatmul.mubr.bf16.gmra.mrb[0].mxu0 %v6087
      %v6221 = vpop.f32.mrb[0].mxu0
      %v6222 = vadd.f32 %v6019, %v6221
      %v6223 = vpop.f32.mrb[0].mxu0
      %v6224 = vpop.f32.mrb[0].mxu0
      %v6225 = vadd.f32 %v6019, %v6224
      %v6226 = vpop.f32.mrb[0].mxu0
      %6227 = vmatprep.mubr.bf16.mxu0 0
      %6228 = vmatmul.mubr.bf16.gmra.mrb[0].mxu0 %v6090
      %v6229 = vpop.f32.mrb[0].mxu0
      %v6230 = vadd.f32 %v6019, %v6229
      %v6231 = vpop.f32.mrb[0].mxu0
      %v6232 = vpop.f32.mrb[0].mxu0
      %v6233 = vadd.f32 %v6019, %v6232
      %v6234 = vpop.f32.mrb[0].mxu0
      %6235 = vmatprep.mubr.bf16.mxu0 0
      %6236 = vmatmul.mubr.bf16.gmra.mrb[0].mxu0 %v6093
      %v6237 = vpop.f32.mrb[0].mxu0
      %v6238 = vadd.f32 %v6019, %v6237
      %v6239 = vpop.f32.mrb[0].mxu0
      %v6240 = vpop.f32.mrb[0].mxu0
      %v6241 = vadd.f32 %v6019, %v6240
      %v6242 = vpop.f32.mrb[0].mxu0
      %6243 = vmatprep.mubr.bf16.mxu0 0
      %6244 = vmatmul.mubr.bf16.gmra.mrb[0].mxu0 %v6096
      %v6245 = vpop.f32.mrb[0].mxu0
      %v6246 = vadd.f32 %v6019, %v6245
      %v6247 = vpop.f32.mrb[0].mxu0
      %v6248 = vpop.f32.mrb[0].mxu0
      %v6249 = vadd.f32 %v6019, %v6248
      %v6250 = vpop.f32.mrb[0].mxu0
      %6251 = vmatprep.mubr.bf16.mxu0 0
      %6252 = vmatmul.mubr.bf16.gmra.mrb[0].mxu0 %v6099
      %v6253 = vpop.f32.mrb[0].mxu0
      %v6254 = vadd.f32 %v6019, %v6253
      %v6255 = vpop.f32.mrb[0].mxu0
      %v6256 = vpop.f32.mrb[0].mxu0
      %v6257 = vadd.f32 %v6019, %v6256
      %v6258 = vpop.f32.mrb[0].mxu0
      %6259 = vmatprep.mubr.bf16.mxu0 0
      %6260 = vmatmul.mubr.bf16.gmra.mrb[0].mxu0 %v6102
      %v6261 = vpop.f32.mrb[0].mxu0
      %v6262 = vadd.f32 %v6019, %v6261
      %v6263 = vpop.f32.mrb[0].mxu0
      %v6264 = vpop.f32.mrb[0].mxu0
      %v6265 = vadd.f32 %v6019, %v6264
      %v6266 = vpop.f32.mrb[0].mxu0
      %6267 = vdwg.mxu0
      %vm6268 = vcmask 56320
      %6269 = vst.msk [vmem:[%s492 + $0x1] sm:$0xff] %vm6268, %v6142
      %6270 = vst.msk [vmem:[%s492 + $0x9] sm:$0xff] %vm6268, %v6145
      %6271 = vst.msk [vmem:[%s492 + $0x19] sm:$0xff] %vm6268, %v6150
      %6272 = vst.msk [vmem:[%s492 + $0x21] sm:$0xff] %vm6268, %v6153
      %6273 = vst.msk [vmem:[%s492 + $0x31] sm:$0xff] %vm6268, %v6158
      %6274 = vst.msk [vmem:[%s492 + $0x39] sm:$0xff] %vm6268, %v6161
      %6275 = vst.msk [vmem:[%s492 + $0x49] sm:$0xff] %vm6268, %v6166
      %6276 = vst.msk [vmem:[%s492 + $0x51] sm:$0xff] %vm6268, %v6169
      %6277 = vst.msk [vmem:[%s492 + $0x61] sm:$0xff] %vm6268, %v6174
      %6278 = vst.msk [vmem:[%s492 + $0x69] sm:$0xff] %vm6268, %v6177
      %6279 = vst.msk [vmem:[%s492 + $0x79] sm:$0xff] %vm6268, %v6182
      %6280 = vst.msk [vmem:[%s492 + $0x81] sm:$0xff] %vm6268, %v6185
      %6281 = vst.msk [vmem:[%s492 + $0x91] sm:$0xff] %vm6268, %v6190
      %6282 = vst.msk [vmem:[%s492 + $0x99] sm:$0xff] %vm6268, %v6193
      %6283 = vst.msk [vmem:[%s492 + $0xa9] sm:$0xff] %vm6268, %v6198
      %6284 = vst.msk [vmem:[%s492 + $0xb1] sm:$0xff] %vm6268, %v6201
      %6285 = vst.msk [vmem:[%s492 + $0xc1] sm:$0xff] %vm6268, %v6206
      %6286 = vst.msk [vmem:[%s492 + $0xc9] sm:$0xff] %vm6268, %v6209
      %6287 = vst.msk [vmem:[%s492 + $0xd9] sm:$0xff] %vm6268, %v6214
      %6288 = vst.msk [vmem:[%s492 + $0xe1] sm:$0xff] %vm6268, %v6217
      %6289 = vst.msk [vmem:[%s492 + $0xf1] sm:$0xff] %vm6268, %v6222
      %6290 = vst.msk [vmem:[%s492 + $0xf9] sm:$0xff] %vm6268, %v6225
      %6291 = vst.msk [vmem:[%s492 + $0x109] sm:$0xff] %vm6268, %v6230
      %6292 = vst.msk [vmem:[%s492 + $0x111] sm:$0xff] %vm6268, %v6233
      %6293 = vst.msk [vmem:[%s492 + $0x121] sm:$0xff] %vm6268, %v6238
      %6294 = vst.msk [vmem:[%s492 + $0x129] sm:$0xff] %vm6268, %v6241
      %6295 = vst.msk [vmem:[%s492 + $0x139] sm:$0xff] %vm6268, %v6246
      %6296 = vst.msk [vmem:[%s492 + $0x141] sm:$0xff] %vm6268, %v6249
      %6297 = vst.msk [vmem:[%s492 + $0x151] sm:$0xff] %vm6268, %v6254
      %6298 = vst.msk [vmem:[%s492 + $0x159] sm:$0xff] %vm6268, %v6257
      %6299 = vst.msk [vmem:[%s492 + $0x169] sm:$0xff] %vm6268, %v6262
      %6300 = vst.msk [vmem:[%s492 + $0x171] sm:$0xff] %vm6268, %v6265
      %v6301 = vld [vmem:[%s7] sm:$0xf]
      %v6302 = vld [vmem:[%s7 + $0x4] sm:$0xf]
      %v6303 = vld [vmem:[%s7 + $0x8] sm:$0xf]
      %v6304 = vld [vmem:[%s7 + $0xc] sm:$0xf]
      %v6305 = vld [vmem:[%s7 + $0x10] sm:$0xf]
      %v6306 = vld [vmem:[%s7 + $0x14] sm:$0xf]
      %v6307 = vld [vmem:[%s7 + $0x18] sm:$0xf]
      %v6308 = vld [vmem:[%s7 + $0x1c] sm:$0xf]
      %v6309 = vld [vmem:[%s8] sm:$0x1]
      %v6310 = vld [vmem:[#allocation3] sm:$0xff]
      %v6311 = vld [vmem:[#allocation3 + $0x8] sm:$0xff]
      %v6312 = vld [vmem:[#allocation3 + $0x18] sm:$0xff]
      %v6313 = vld [vmem:[#allocation3 + $0x20] sm:$0xff]
      %v6314 = vld [vmem:[#allocation3 + $0x30] sm:$0xff]
      %v6315 = vld [vmem:[#allocation3 + $0x38] sm:$0xff]
      %v6316 = vld [vmem:[#allocation3 + $0x48] sm:$0xff]
      %v6317 = vld [vmem:[#allocation3 + $0x50] sm:$0xff]
      %v6318 = vld [vmem:[#allocation3 + $0x60] sm:$0xff]
      %v6319 = vld [vmem:[#allocation3 + $0x68] sm:$0xff]
      %v6320 = vld [vmem:[#allocation3 + $0x78] sm:$0xff]
      %v6321 = vld [vmem:[#allocation3 + $0x80] sm:$0xff]
      %v6322 = vld [vmem:[#allocation3 + $0x90] sm:$0xff]
      %v6323 = vld [vmem:[#allocation3 + $0x98] sm:$0xff]
      %v6324 = vld [vmem:[#allocation3 + $0xa8] sm:$0xff]
      %v6325 = vld [vmem:[#allocation3 + $0xb0] sm:$0xff]
      %v6326 = vld [vmem:[#allocation3 + $0xc0] sm:$0xff]
      %v6327 = vld [vmem:[#allocation3 + $0xc8] sm:$0xff]
      %v6328 = vld [vmem:[#allocation3 + $0xd8] sm:$0xff]
      %v6329 = vld [vmem:[#allocation3 + $0xe0] sm:$0xff]
      %v6330 = vld [vmem:[#allocation3 + $0xf0] sm:$0xff]
      %v6331 = vld [vmem:[#allocation3 + $0xf8] sm:$0xff]
      %v6332 = vld [vmem:[#allocation3 + $0x108] sm:$0xff]
      %v6333 = vld [vmem:[#allocation3 + $0x110] sm:$0xff]
      %v6334 = vld [vmem:[#allocation3 + $0x120] sm:$0xff]
      %v6335 = vld [vmem:[#allocation3 + $0x128] sm:$0xff]
      %v6336 = vld [vmem:[#allocation3 + $0x138] sm:$0xff]
      %v6337 = vld [vmem:[#allocation3 + $0x140] sm:$0xff]
      %v6338 = vld [vmem:[#allocation3 + $0x150] sm:$0xff]
      %v6339 = vld [vmem:[#allocation3 + $0x158] sm:$0xff]
      %v6340 = vld [vmem:[#allocation3 + $0x168] sm:$0xff]
      %v6341 = vld [vmem:[#allocation3 + $0x170] sm:$0xff]
      %v6342 = vld [vmem:[#allocation3 + $0x1] sm:$0xff]
      %v6343 = vld [vmem:[#allocation3 + $0x9] sm:$0xff]
      %v6344 = vld [vmem:[#allocation3 + $0x19] sm:$0xff]
      %v6345 = vld [vmem:[#allocation3 + $0x21] sm:$0xff]
      %v6346 = vld [vmem:[#allocation3 + $0x31] sm:$0xff]
      %v6347 = vld [vmem:[#allocation3 + $0x39] sm:$0xff]
      %v6348 = vld [vmem:[#allocation3 + $0x49] sm:$0xff]
      %v6349 = vld [vmem:[#allocation3 + $0x51] sm:$0xff]
      %v6350 = vld [vmem:[#allocation3 + $0x61] sm:$0xff]
      %v6351 = vld [vmem:[#allocation3 + $0x69] sm:$0xff]
      %v6352 = vld [vmem:[#allocation3 + $0x79] sm:$0xff]
      %v6353 = vld [vmem:[#allocation3 + $0x81] sm:$0xff]
      %v6354 = vld [vmem:[#allocation3 + $0x91] sm:$0xff]
      %v6355 = vld [vmem:[#allocation3 + $0x99] sm:$0xff]
      %v6356 = vld [vmem:[#allocation3 + $0xa9] sm:$0xff]
      %v6357 = vld [vmem:[#allocation3 + $0xb1] sm:$0xff]
      %v6358 = vld [vmem:[#allocation3 + $0xc1] sm:$0xff]
      %v6359 = vld [vmem:[#allocation3 + $0xc9] sm:$0xff]
      %v6360 = vld [vmem:[#allocation3 + $0xd9] sm:$0xff]
      %v6361 = vld [vmem:[#allocation3 + $0xe1] sm:$0xff]
      %v6362 = vld [vmem:[#allocation3 + $0xf1] sm:$0xff]
      %v6363 = vld [vmem:[#allocation3 + $0xf9] sm:$0xff]
      %v6364 = vld [vmem:[#allocation3 + $0x109] sm:$0xff]
      %v6365 = vld [vmem:[#allocation3 + $0x111] sm:$0xff]
      %v6366 = vld [vmem:[#allocation3 + $0x121] sm:$0xff]
      %v6367 = vld [vmem:[#allocation3 + $0x129] sm:$0xff]
      %v6368 = vld [vmem:[#allocation3 + $0x139] sm:$0xff]
      %v6369 = vld [vmem:[#allocation3 + $0x141] sm:$0xff]
      %v6370 = vld [vmem:[#allocation3 + $0x151] sm:$0xff]
      %v6371 = vld [vmem:[#allocation3 + $0x159] sm:$0xff]
      %v6372 = vld [vmem:[#allocation3 + $0x169] sm:$0xff]
      %v6373 = vld [vmem:[#allocation3 + $0x171] sm:$0xff]
      %v6374 = vld [vmem:[#allocation3 + $0x2] sm:$0xff]
      %v6375 = vld [vmem:[#allocation3 + $0xa] sm:$0xff]
      %v6376 = vld [vmem:[#allocation3 + $0x1a] sm:$0xff]
      %v6377 = vld [vmem:[#allocation3 + $0x22] sm:$0xff]
      %v6378 = vld [vmem:[#allocation3 + $0x32] sm:$0xff]
      %v6379 = vld [vmem:[#allocation3 + $0x3a] sm:$0xff]
      %v6380 = vld [vmem:[#allocation3 + $0x4a] sm:$0xff]
      %v6381 = vld [vmem:[#allocation3 + $0x52] sm:$0xff]
      %v6382 = vld [vmem:[#allocation3 + $0x62] sm:$0xff]
      %v6383 = vld [vmem:[#allocation3 + $0x6a] sm:$0xff]
      %v6384 = vld [vmem:[#allocation3 + $0x7a] sm:$0xff]
      %v6385 = vld [vmem:[#allocation3 + $0x82] sm:$0xff]
      %v6386 = vld [vmem:[#allocation3 + $0x92] sm:$0xff]
      %v6387 = vld [vmem:[#allocation3 + $0x9a] sm:$0xff]
      %v6388 = vld [vmem:[#allocation3 + $0xaa] sm:$0xff]
      %v6389 = vld [vmem:[#allocation3 + $0xb2] sm:$0xff]
      %v6390 = vld [vmem:[#allocation3 + $0xc2] sm:$0xff]
      %v6391 = vld [vmem:[#allocation3 + $0xca] sm:$0xff]
      %v6392 = vld [vmem:[#allocation3 + $0xda] sm:$0xff]
      %v6393 = vld [vmem:[#allocation3 + $0xe2] sm:$0xff]
      %v6394 = vld [vmem:[#allocation3 + $0xf2] sm:$0xff]
      %v6395 = vld [vmem:[#allocation3 + $0xfa] sm:$0xff]
      %v6396 = vld [vmem:[#allocation3 + $0x10a] sm:$0xff]
      %v6397 = vld [vmem:[#allocation3 + $0x112] sm:$0xff]
      %v6398 = vld [vmem:[#allocation3 + $0x122] sm:$0xff]
      %v6399 = vld [vmem:[#allocation3 + $0x12a] sm:$0xff]
      %v6400 = vld [vmem:[#allocation3 + $0x13a] sm:$0xff]
      %v6401 = vld [vmem:[#allocation3 + $0x142] sm:$0xff]
      %v6402 = vld [vmem:[#allocation3 + $0x152] sm:$0xff]
      %v6403 = vld [vmem:[#allocation3 + $0x15a] sm:$0xff]
      %v6404 = vld [vmem:[#allocation3 + $0x16a] sm:$0xff]
      %v6405 = vld [vmem:[#allocation3 + $0x172] sm:$0xff]
      %v6406 = vld [vmem:[%s492] sm:$0xff]
      %v6407 = vld [vmem:[%s492 + $0x8] sm:$0xff]
      %v6408 = vld [vmem:[%s492 + $0x18] sm:$0xff]
      %v6409 = vld [vmem:[%s492 + $0x20] sm:$0xff]
      %v6410 = vld [vmem:[%s492 + $0x30] sm:$0xff]
      %v6411 = vld [vmem:[%s492 + $0x38] sm:$0xff]
      %v6412 = vld [vmem:[%s492 + $0x48] sm:$0xff]
      %v6413 = vld [vmem:[%s492 + $0x50] sm:$0xff]
      %v6414 = vld [vmem:[%s492 + $0x60] sm:$0xff]
      %v6415 = vld [vmem:[%s492 + $0x68] sm:$0xff]
      %v6416 = vld [vmem:[%s492 + $0x78] sm:$0xff]
      %v6417 = vld [vmem:[%s492 + $0x80] sm:$0xff]
      %v6418 = vld [vmem:[%s492 + $0x90] sm:$0xff]
      %v6419 = vld [vmem:[%s492 + $0x98] sm:$0xff]
      %v6420 = vld [vmem:[%s492 + $0xa8] sm:$0xff]
      %v6421 = vld [vmem:[%s492 + $0xb0] sm:$0xff]
      %v6422 = vld [vmem:[%s492 + $0xc0] sm:$0xff]
      %v6423 = vld [vmem:[%s492 + $0xc8] sm:$0xff]
      %v6424 = vld [vmem:[%s492 + $0xd8] sm:$0xff]
      %v6425 = vld [vmem:[%s492 + $0xe0] sm:$0xff]
      %v6426 = vld [vmem:[%s492 + $0xf0] sm:$0xff]
      %v6427 = vld [vmem:[%s492 + $0xf8] sm:$0xff]
      %v6428 = vld [vmem:[%s492 + $0x108] sm:$0xff]
      %v6429 = vld [vmem:[%s492 + $0x110] sm:$0xff]
      %v6430 = vld [vmem:[%s492 + $0x120] sm:$0xff]
      %v6431 = vld [vmem:[%s492 + $0x128] sm:$0xff]
      %v6432 = vld [vmem:[%s492 + $0x138] sm:$0xff]
      %v6433 = vld [vmem:[%s492 + $0x140] sm:$0xff]
      %v6434 = vld [vmem:[%s492 + $0x150] sm:$0xff]
      %v6435 = vld [vmem:[%s492 + $0x158] sm:$0xff]
      %v6436 = vld [vmem:[%s492 + $0x168] sm:$0xff]
      %v6437 = vld [vmem:[%s492 + $0x170] sm:$0xff]
      %v6438 = vld [vmem:[%s492 + $0x1] sm:$0xff]
      %v6439 = vld [vmem:[%s492 + $0x9] sm:$0xff]
      %v6440 = vld [vmem:[%s492 + $0x19] sm:$0xff]
      %v6441 = vld [vmem:[%s492 + $0x21] sm:$0xff]
      %v6442 = vld [vmem:[%s492 + $0x31] sm:$0xff]
      %v6443 = vld [vmem:[%s492 + $0x39] sm:$0xff]
      %v6444 = vld [vmem:[%s492 + $0x49] sm:$0xff]
      %v6445 = vld [vmem:[%s492 + $0x51] sm:$0xff]
      %v6446 = vld [vmem:[%s492 + $0x61] sm:$0xff]
      %v6447 = vld [vmem:[%s492 + $0x69] sm:$0xff]
      %v6448 = vld [vmem:[%s492 + $0x79] sm:$0xff]
      %v6449 = vld [vmem:[%s492 + $0x81] sm:$0xff]
      %v6450 = vld [vmem:[%s492 + $0x91] sm:$0xff]
      %v6451 = vld [vmem:[%s492 + $0x99] sm:$0xff]
      %v6452 = vld [vmem:[%s492 + $0xa9] sm:$0xff]
      %v6453 = vld [vmem:[%s492 + $0xb1] sm:$0xff]
      %v6454 = vld [vmem:[%s492 + $0xc1] sm:$0xff]
      %v6455 = vld [vmem:[%s492 + $0xc9] sm:$0xff]
      %v6456 = vld [vmem:[%s492 + $0xd9] sm:$0xff]
      %v6457 = vld [vmem:[%s492 + $0xe1] sm:$0xff]
      %v6458 = vld [vmem:[%s492 + $0xf1] sm:$0xff]
      %v6459 = vld [vmem:[%s492 + $0xf9] sm:$0xff]
      %v6460 = vld [vmem:[%s492 + $0x109] sm:$0xff]
      %v6461 = vld [vmem:[%s492 + $0x111] sm:$0xff]
      %v6462 = vld [vmem:[%s492 + $0x121] sm:$0xff]
      %v6463 = vld [vmem:[%s492 + $0x129] sm:$0xff]
      %v6464 = vld [vmem:[%s492 + $0x139] sm:$0xff]
      %v6465 = vld [vmem:[%s492 + $0x141] sm:$0xff]
      %v6466 = vld [vmem:[%s492 + $0x151] sm:$0xff]
      %v6467 = vld [vmem:[%s492 + $0x159] sm:$0xff]
      %v6468 = vld [vmem:[%s492 + $0x169] sm:$0xff]
      %v6469 = vld [vmem:[%s492 + $0x171] sm:$0xff]
      %v6470 = vld [vmem:[%s492 + $0x2] sm:$0xff]
      %v6471 = vld [vmem:[%s492 + $0xa] sm:$0xff]
      %v6472 = vld [vmem:[%s492 + $0x1a] sm:$0xff]
      %v6473 = vld [vmem:[%s492 + $0x22] sm:$0xff]
      %v6474 = vld [vmem:[%s492 + $0x32] sm:$0xff]
      %v6475 = vld [vmem:[%s492 + $0x3a] sm:$0xff]
      %v6476 = vld [vmem:[%s492 + $0x4a] sm:$0xff]
      %v6477 = vld [vmem:[%s492 + $0x52] sm:$0xff]
      %v6478 = vld [vmem:[%s492 + $0x62] sm:$0xff]
      %v6479 = vld [vmem:[%s492 + $0x6a] sm:$0xff]
      %v6480 = vld [vmem:[%s492 + $0x7a] sm:$0xff]
      %v6481 = vld [vmem:[%s492 + $0x82] sm:$0xff]
      %v6482 = vld [vmem:[%s492 + $0x92] sm:$0xff]
      %v6483 = vld [vmem:[%s492 + $0x9a] sm:$0xff]
      %v6484 = vld [vmem:[%s492 + $0xaa] sm:$0xff]
      %v6485 = vld [vmem:[%s492 + $0xb2] sm:$0xff]
      %v6486 = vld [vmem:[%s492 + $0xc2] sm:$0xff]
      %v6487 = vld [vmem:[%s492 + $0xca] sm:$0xff]
      %v6488 = vld [vmem:[%s492 + $0xda] sm:$0xff]
      %v6489 = vld [vmem:[%s492 + $0xe2] sm:$0xff]
      %v6490 = vld [vmem:[%s492 + $0xf2] sm:$0xff]
      %v6491 = vld [vmem:[%s492 + $0xfa] sm:$0xff]
      %v6492 = vld [vmem:[%s492 + $0x10a] sm:$0xff]
      %v6493 = vld [vmem:[%s492 + $0x112] sm:$0xff]
      %v6494 = vld [vmem:[%s492 + $0x122] sm:$0xff]
      %v6495 = vld [vmem:[%s492 + $0x12a] sm:$0xff]
      %v6496 = vld [vmem:[%s492 + $0x13a] sm:$0xff]
      %v6497 = vld [vmem:[%s492 + $0x142] sm:$0xff]
      %v6498 = vld [vmem:[%s492 + $0x152] sm:$0xff]
      %v6499 = vld [vmem:[%s492 + $0x15a] sm:$0xff]
      %v6500 = vld [vmem:[%s492 + $0x16a] sm:$0xff]
      %v6501 = vld [vmem:[%s492 + $0x172] sm:$0xff]
      %v6502 = vld [vmem:[%s2700] sm:$0xff]
      %v6503 = vld [vmem:[%s2700 + $0x8] sm:$0xff]
      %v6504 = vld [vmem:[%s2700 + $0x18] sm:$0xff]
      %v6505 = vld [vmem:[%s2700 + $0x20] sm:$0xff]
      %v6506 = vld [vmem:[%s2700 + $0x30] sm:$0xff]
      %v6507 = vld [vmem:[%s2700 + $0x38] sm:$0xff]
      %v6508 = vld [vmem:[%s2700 + $0x48] sm:$0xff]
      %v6509 = vld [vmem:[%s2700 + $0x50] sm:$0xff]
      %v6510 = vld [vmem:[%s2700 + $0x60] sm:$0xff]
      %v6511 = vld [vmem:[%s2700 + $0x68] sm:$0xff]
      %v6512 = vld [vmem:[%s2700 + $0x78] sm:$0xff]
      %v6513 = vld [vmem:[%s2700 + $0x80] sm:$0xff]
      %v6514 = vld [vmem:[%s2700 + $0x90] sm:$0xff]
      %v6515 = vld [vmem:[%s2700 + $0x98] sm:$0xff]
      %v6516 = vld [vmem:[%s2700 + $0xa8] sm:$0xff]
      %v6517 = vld [vmem:[%s2700 + $0xb0] sm:$0xff]
      %v6518 = vld [vmem:[%s2700 + $0xc0] sm:$0xff]
      %v6519 = vld [vmem:[%s2700 + $0xc8] sm:$0xff]
      %v6520 = vld [vmem:[%s2700 + $0xd8] sm:$0xff]
      %v6521 = vld [vmem:[%s2700 + $0xe0] sm:$0xff]
      %v6522 = vld [vmem:[%s2700 + $0xf0] sm:$0xff]
      %v6523 = vld [vmem:[%s2700 + $0xf8] sm:$0xff]
      %v6524 = vld [vmem:[%s2700 + $0x108] sm:$0xff]
      %v6525 = vld [vmem:[%s2700 + $0x110] sm:$0xff]
      %v6526 = vld [vmem:[%s2700 + $0x120] sm:$0xff]
      %v6527 = vld [vmem:[%s2700 + $0x128] sm:$0xff]
      %v6528 = vld [vmem:[%s2700 + $0x138] sm:$0xff]
      %v6529 = vld [vmem:[%s2700 + $0x140] sm:$0xff]
      %v6530 = vld [vmem:[%s2700 + $0x150] sm:$0xff]
      %v6531 = vld [vmem:[%s2700 + $0x158] sm:$0xff]
      %v6532 = vld [vmem:[%s2700 + $0x168] sm:$0xff]
      %v6533 = vld [vmem:[%s2700 + $0x170] sm:$0xff]
      %v6534 = vld [vmem:[%s2700 + $0x1] sm:$0xff]
      %v6535 = vld [vmem:[%s2700 + $0x9] sm:$0xff]
      %v6536 = vld [vmem:[%s2700 + $0x19] sm:$0xff]
      %v6537 = vld [vmem:[%s2700 + $0x21] sm:$0xff]
      %v6538 = vld [vmem:[%s2700 + $0x31] sm:$0xff]
      %v6539 = vld [vmem:[%s2700 + $0x39] sm:$0xff]
      %v6540 = vld [vmem:[%s2700 + $0x49] sm:$0xff]
      %v6541 = vld [vmem:[%s2700 + $0x51] sm:$0xff]
      %v6542 = vld [vmem:[%s2700 + $0x61] sm:$0xff]
      %v6543 = vld [vmem:[%s2700 + $0x69] sm:$0xff]
      %v6544 = vld [vmem:[%s2700 + $0x79] sm:$0xff]
      %v6545 = vld [vmem:[%s2700 + $0x81] sm:$0xff]
      %v6546 = vld [vmem:[%s2700 + $0x91] sm:$0xff]
      %v6547 = vld [vmem:[%s2700 + $0x99] sm:$0xff]
      %v6548 = vld [vmem:[%s2700 + $0xa9] sm:$0xff]
      %v6549 = vld [vmem:[%s2700 + $0xb1] sm:$0xff]
      %v6550 = vld [vmem:[%s2700 + $0xc1] sm:$0xff]
      %v6551 = vld [vmem:[%s2700 + $0xc9] sm:$0xff]
      %v6552 = vld [vmem:[%s2700 + $0xd9] sm:$0xff]
      %v6553 = vld [vmem:[%s2700 + $0xe1] sm:$0xff]
      %v6554 = vld [vmem:[%s2700 + $0xf1] sm:$0xff]
      %v6555 = vld [vmem:[%s2700 + $0xf9] sm:$0xff]
      %v6556 = vld [vmem:[%s2700 + $0x109] sm:$0xff]
      %v6557 = vld [vmem:[%s2700 + $0x111] sm:$0xff]
      %v6558 = vld [vmem:[%s2700 + $0x121] sm:$0xff]
      %v6559 = vld [vmem:[%s2700 + $0x129] sm:$0xff]
      %v6560 = vld [vmem:[%s2700 + $0x139] sm:$0xff]
      %v6561 = vld [vmem:[%s2700 + $0x141] sm:$0xff]
      %v6562 = vld [vmem:[%s2700 + $0x151] sm:$0xff]
      %v6563 = vld [vmem:[%s2700 + $0x159] sm:$0xff]
      %v6564 = vld [vmem:[%s2700 + $0x169] sm:$0xff]
      %v6565 = vld [vmem:[%s2700 + $0x171] sm:$0xff]
      %v6566 = vld [vmem:[%s2700 + $0x2] sm:$0xff]
      %v6567 = vld [vmem:[%s2700 + $0xa] sm:$0xff]
      %v6568 = vld [vmem:[%s2700 + $0x1a] sm:$0xff]
      %v6569 = vld [vmem:[%s2700 + $0x22] sm:$0xff]
      %v6570 = vld [vmem:[%s2700 + $0x32] sm:$0xff]
      %v6571 = vld [vmem:[%s2700 + $0x3a] sm:$0xff]
      %v6572 = vld [vmem:[%s2700 + $0x4a] sm:$0xff]
      %v6573 = vld [vmem:[%s2700 + $0x52] sm:$0xff]
      %v6574 = vld [vmem:[%s2700 + $0x62] sm:$0xff]
      %v6575 = vld [vmem:[%s2700 + $0x6a] sm:$0xff]
      %v6576 = vld [vmem:[%s2700 + $0x7a] sm:$0xff]
      %v6577 = vld [vmem:[%s2700 + $0x82] sm:$0xff]
      %v6578 = vld [vmem:[%s2700 + $0x92] sm:$0xff]
      %v6579 = vld [vmem:[%s2700 + $0x9a] sm:$0xff]
      %v6580 = vld [vmem:[%s2700 + $0xaa] sm:$0xff]
      %v6581 = vld [vmem:[%s2700 + $0xb2] sm:$0xff]
      %v6582 = vld [vmem:[%s2700 + $0xc2] sm:$0xff]
      %v6583 = vld [vmem:[%s2700 + $0xca] sm:$0xff]
      %v6584 = vld [vmem:[%s2700 + $0xda] sm:$0xff]
      %v6585 = vld [vmem:[%s2700 + $0xe2] sm:$0xff]
      %v6586 = vld [vmem:[%s2700 + $0xf2] sm:$0xff]
      %v6587 = vld [vmem:[%s2700 + $0xfa] sm:$0xff]
      %v6588 = vld [vmem:[%s2700 + $0x10a] sm:$0xff]
      %v6589 = vld [vmem:[%s2700 + $0x112] sm:$0xff]
      %v6590 = vld [vmem:[%s2700 + $0x122] sm:$0xff]
      %v6591 = vld [vmem:[%s2700 + $0x12a] sm:$0xff]
      %v6592 = vld [vmem:[%s2700 + $0x13a] sm:$0xff]
      %v6593 = vld [vmem:[%s2700 + $0x142] sm:$0xff]
      %v6594 = vld [vmem:[%s2700 + $0x152] sm:$0xff]
      %v6595 = vld [vmem:[%s2700 + $0x15a] sm:$0xff]
      %v6596 = vld [vmem:[%s2700 + $0x16a] sm:$0xff]
      %v6597 = vld [vmem:[%s2700 + $0x172] sm:$0xff]
      %6630 = vrot.lane.b32.xlu0 %v6342, 7
      %v6631 = vpop.permute.xlu0 %6630
      %6632 = vrot.lane.b32.xlu0 %v6343, 7
      %v6633 = vpop.permute.xlu0 %6632
      %6634 = vrot.lane.b32.xlu0 %v6344, 7
      %v6635 = vpop.permute.xlu0 %6634
      %6636 = vrot.lane.b32.xlu0 %v6345, 7
      %v6637 = vpop.permute.xlu0 %6636
      %6638 = vrot.lane.b32.xlu0 %v6346, 7
      %v6639 = vpop.permute.xlu0 %6638
      %6640 = vrot.lane.b32.xlu0 %v6347, 7
      %v6641 = vpop.permute.xlu0 %6640
      %6642 = vrot.lane.b32.xlu0 %v6348, 7
      %v6643 = vpop.permute.xlu0 %6642
      %6644 = vrot.lane.b32.xlu0 %v6349, 7
      %v6645 = vpop.permute.xlu0 %6644
      %6646 = vrot.lane.b32.xlu0 %v6350, 7
      %v6647 = vpop.permute.xlu0 %6646
      %6648 = vrot.lane.b32.xlu0 %v6351, 7
      %v6649 = vpop.permute.xlu0 %6648
      %6650 = vrot.lane.b32.xlu0 %v6352, 7
      %v6651 = vpop.permute.xlu0 %6650
      %6652 = vrot.lane.b32.xlu0 %v6353, 7
      %v6653 = vpop.permute.xlu0 %6652
      %6654 = vrot.lane.b32.xlu0 %v6354, 7
      %v6655 = vpop.permute.xlu0 %6654
      %6656 = vrot.lane.b32.xlu0 %v6355, 7
      %v6657 = vpop.permute.xlu0 %6656
      %6658 = vrot.lane.b32.xlu0 %v6356, 7
      %v6659 = vpop.permute.xlu0 %6658
      %6660 = vrot.lane.b32.xlu0 %v6357, 7
      %v6661 = vpop.permute.xlu0 %6660
      %6662 = vrot.lane.b32.xlu0 %v6358, 7
      %v6663 = vpop.permute.xlu0 %6662
      %6664 = vrot.lane.b32.xlu0 %v6359, 7
      %v6665 = vpop.permute.xlu0 %6664
      %6666 = vrot.lane.b32.xlu0 %v6360, 7
      %v6667 = vpop.permute.xlu0 %6666
      %6668 = vrot.lane.b32.xlu0 %v6361, 7
      %v6669 = vpop.permute.xlu0 %6668
      %6670 = vrot.lane.b32.xlu0 %v6362, 7
      %v6671 = vpop.permute.xlu0 %6670
      %6672 = vrot.lane.b32.xlu0 %v6363, 7
      %v6673 = vpop.permute.xlu0 %6672
      %6674 = vrot.lane.b32.xlu0 %v6364, 7
      %v6675 = vpop.permute.xlu0 %6674
      %6676 = vrot.lane.b32.xlu0 %v6365, 7
      %v6677 = vpop.permute.xlu0 %6676
      %6678 = vrot.lane.b32.xlu0 %v6366, 7
      %v6679 = vpop.permute.xlu0 %6678
      %6680 = vrot.lane.b32.xlu0 %v6367, 7
      %v6681 = vpop.permute.xlu0 %6680
      %6682 = vrot.lane.b32.xlu0 %v6368, 7
      %v6683 = vpop.permute.xlu0 %6682
      %6684 = vrot.lane.b32.xlu0 %v6369, 7
      %v6685 = vpop.permute.xlu0 %6684
      %6686 = vrot.lane.b32.xlu0 %v6370, 7
      %v6687 = vpop.permute.xlu0 %6686
      %6688 = vrot.lane.b32.xlu0 %v6371, 7
      %v6689 = vpop.permute.xlu0 %6688
      %6690 = vrot.lane.b32.xlu0 %v6372, 7
      %v6691 = vpop.permute.xlu0 %6690
      %6692 = vrot.lane.b32.xlu0 %v6373, 7
      %v6693 = vpop.permute.xlu0 %6692
      %6758 = vrot.lane.b32.xlu0 %v6374, 14
      %v6759 = vpop.permute.xlu0 %6758
      %6760 = vrot.lane.b32.xlu0 %v6375, 14
      %v6761 = vpop.permute.xlu0 %6760
      %6762 = vrot.lane.b32.xlu0 %v6376, 14
      %v6763 = vpop.permute.xlu0 %6762
      %6764 = vrot.lane.b32.xlu0 %v6377, 14
      %v6765 = vpop.permute.xlu0 %6764
      %6766 = vrot.lane.b32.xlu0 %v6378, 14
      %v6767 = vpop.permute.xlu0 %6766
      %6768 = vrot.lane.b32.xlu0 %v6379, 14
      %v6769 = vpop.permute.xlu0 %6768
      %6770 = vrot.lane.b32.xlu0 %v6380, 14
      %v6771 = vpop.permute.xlu0 %6770
      %6772 = vrot.lane.b32.xlu0 %v6381, 14
      %v6773 = vpop.permute.xlu0 %6772
      %6774 = vrot.lane.b32.xlu0 %v6382, 14
      %v6775 = vpop.permute.xlu0 %6774
      %6776 = vrot.lane.b32.xlu0 %v6383, 14
      %v6777 = vpop.permute.xlu0 %6776
      %6778 = vrot.lane.b32.xlu0 %v6384, 14
      %v6779 = vpop.permute.xlu0 %6778
      %6780 = vrot.lane.b32.xlu0 %v6385, 14
      %v6781 = vpop.permute.xlu0 %6780
      %6782 = vrot.lane.b32.xlu0 %v6386, 14
      %v6783 = vpop.permute.xlu0 %6782
      %6784 = vrot.lane.b32.xlu0 %v6387, 14
      %v6785 = vpop.permute.xlu0 %6784
      %6786 = vrot.lane.b32.xlu0 %v6388, 14
      %v6787 = vpop.permute.xlu0 %6786
      %6788 = vrot.lane.b32.xlu0 %v6389, 14
      %v6789 = vpop.permute.xlu0 %6788
      %6790 = vrot.lane.b32.xlu0 %v6390, 14
      %v6791 = vpop.permute.xlu0 %6790
      %6792 = vrot.lane.b32.xlu0 %v6391, 14
      %v6793 = vpop.permute.xlu0 %6792
      %6794 = vrot.lane.b32.xlu0 %v6392, 14
      %v6795 = vpop.permute.xlu0 %6794
      %6796 = vrot.lane.b32.xlu0 %v6393, 14
      %v6797 = vpop.permute.xlu0 %6796
      %6798 = vrot.lane.b32.xlu0 %v6394, 14
      %v6799 = vpop.permute.xlu0 %6798
      %6800 = vrot.lane.b32.xlu0 %v6395, 14
      %v6801 = vpop.permute.xlu0 %6800
      %6802 = vrot.lane.b32.xlu0 %v6396, 14
      %v6803 = vpop.permute.xlu0 %6802
      %6804 = vrot.lane.b32.xlu0 %v6397, 14
      %v6805 = vpop.permute.xlu0 %6804
      %6806 = vrot.lane.b32.xlu0 %v6398, 14
      %v6807 = vpop.permute.xlu0 %6806
      %6808 = vrot.lane.b32.xlu0 %v6399, 14
      %v6809 = vpop.permute.xlu0 %6808
      %6810 = vrot.lane.b32.xlu0 %v6400, 14
      %v6811 = vpop.permute.xlu0 %6810
      %6812 = vrot.lane.b32.xlu0 %v6401, 14
      %v6813 = vpop.permute.xlu0 %6812
      %6814 = vrot.lane.b32.xlu0 %v6402, 14
      %v6815 = vpop.permute.xlu0 %6814
      %6816 = vrot.lane.b32.xlu0 %v6403, 14
      %v6817 = vpop.permute.xlu0 %6816
      %6818 = vrot.lane.b32.xlu0 %v6404, 14
      %v6819 = vpop.permute.xlu0 %6818
      %6820 = vrot.lane.b32.xlu0 %v6405, 14
      %v6821 = vpop.permute.xlu0 %6820
      %6886 = vrot.lane.b32.xlu0 %v6406, 21
      %v6887 = vpop.permute.xlu0 %6886
      %6888 = vrot.lane.b32.xlu0 %v6407, 21
      %v6889 = vpop.permute.xlu0 %6888
      %6890 = vrot.lane.b32.xlu0 %v6408, 21
      %v6891 = vpop.permute.xlu0 %6890
      %6892 = vrot.lane.b32.xlu0 %v6409, 21
      %v6893 = vpop.permute.xlu0 %6892
      %6894 = vrot.lane.b32.xlu0 %v6410, 21
      %v6895 = vpop.permute.xlu0 %6894
      %6896 = vrot.lane.b32.xlu0 %v6411, 21
      %v6897 = vpop.permute.xlu0 %6896
      %6898 = vrot.lane.b32.xlu0 %v6412, 21
      %v6899 = vpop.permute.xlu0 %6898
      %6900 = vrot.lane.b32.xlu0 %v6413, 21
      %v6901 = vpop.permute.xlu0 %6900
      %6902 = vrot.lane.b32.xlu0 %v6414, 21
      %v6903 = vpop.permute.xlu0 %6902
      %6904 = vrot.lane.b32.xlu0 %v6415, 21
      %v6905 = vpop.permute.xlu0 %6904
      %6906 = vrot.lane.b32.xlu0 %v6416, 21
      %v6907 = vpop.permute.xlu0 %6906
      %6908 = vrot.lane.b32.xlu0 %v6417, 21
      %v6909 = vpop.permute.xlu0 %6908
      %6910 = vrot.lane.b32.xlu0 %v6418, 21
      %v6911 = vpop.permute.xlu0 %6910
      %6912 = vrot.lane.b32.xlu0 %v6419, 21
      %v6913 = vpop.permute.xlu0 %6912
      %6914 = vrot.lane.b32.xlu0 %v6420, 21
      %v6915 = vpop.permute.xlu0 %6914
      %6916 = vrot.lane.b32.xlu0 %v6421, 21
      %v6917 = vpop.permute.xlu0 %6916
      %6918 = vrot.lane.b32.xlu0 %v6422, 21
      %v6919 = vpop.permute.xlu0 %6918
      %6920 = vrot.lane.b32.xlu0 %v6423, 21
      %v6921 = vpop.permute.xlu0 %6920
      %6922 = vrot.lane.b32.xlu0 %v6424, 21
      %v6923 = vpop.permute.xlu0 %6922
      %6924 = vrot.lane.b32.xlu0 %v6425, 21
      %v6925 = vpop.permute.xlu0 %6924
      %6926 = vrot.lane.b32.xlu0 %v6426, 21
      %v6927 = vpop.permute.xlu0 %6926
      %6928 = vrot.lane.b32.xlu0 %v6427, 21
      %v6929 = vpop.permute.xlu0 %6928
      %6930 = vrot.lane.b32.xlu0 %v6428, 21
      %v6931 = vpop.permute.xlu0 %6930
      %6932 = vrot.lane.b32.xlu0 %v6429, 21
      %v6933 = vpop.permute.xlu0 %6932
      %6934 = vrot.lane.b32.xlu0 %v6430, 21
      %v6935 = vpop.permute.xlu0 %6934
      %6936 = vrot.lane.b32.xlu0 %v6431, 21
      %v6937 = vpop.permute.xlu0 %6936
      %6938 = vrot.lane.b32.xlu0 %v6432, 21
      %v6939 = vpop.permute.xlu0 %6938
      %6940 = vrot.lane.b32.xlu0 %v6433, 21
      %v6941 = vpop.permute.xlu0 %6940
      %6942 = vrot.lane.b32.xlu0 %v6434, 21
      %v6943 = vpop.permute.xlu0 %6942
      %6944 = vrot.lane.b32.xlu0 %v6435, 21
      %v6945 = vpop.permute.xlu0 %6944
      %6946 = vrot.lane.b32.xlu0 %v6436, 21
      %v6947 = vpop.permute.xlu0 %6946
      %6948 = vrot.lane.b32.xlu0 %v6437, 21
      %v6949 = vpop.permute.xlu0 %6948
      %7014 = vrot.lane.b32.xlu0 %v6438, 28
      %v7015 = vpop.permute.xlu0 %7014
      %7016 = vrot.lane.b32.xlu0 %v6439, 28
      %v7017 = vpop.permute.xlu0 %7016
      %7018 = vrot.lane.b32.xlu0 %v6440, 28
      %v7019 = vpop.permute.xlu0 %7018
      %7020 = vrot.lane.b32.xlu0 %v6441, 28
      %v7021 = vpop.permute.xlu0 %7020
      %7022 = vrot.lane.b32.xlu0 %v6442, 28
      %v7023 = vpop.permute.xlu0 %7022
      %7024 = vrot.lane.b32.xlu0 %v6443, 28
      %v7025 = vpop.permute.xlu0 %7024
      %7026 = vrot.lane.b32.xlu0 %v6444, 28
      %v7027 = vpop.permute.xlu0 %7026
      %7028 = vrot.lane.b32.xlu0 %v6445, 28
      %v7029 = vpop.permute.xlu0 %7028
      %7030 = vrot.lane.b32.xlu0 %v6446, 28
      %v7031 = vpop.permute.xlu0 %7030
      %7032 = vrot.lane.b32.xlu0 %v6447, 28
      %v7033 = vpop.permute.xlu0 %7032
      %7034 = vrot.lane.b32.xlu0 %v6448, 28
      %v7035 = vpop.permute.xlu0 %7034
      %7036 = vrot.lane.b32.xlu0 %v6449, 28
      %v7037 = vpop.permute.xlu0 %7036
      %7038 = vrot.lane.b32.xlu0 %v6450, 28
      %v7039 = vpop.permute.xlu0 %7038
      %7040 = vrot.lane.b32.xlu0 %v6451, 28
      %v7041 = vpop.permute.xlu0 %7040
      %7042 = vrot.lane.b32.xlu0 %v6452, 28
      %v7043 = vpop.permute.xlu0 %7042
      %7044 = vrot.lane.b32.xlu0 %v6453, 28
      %v7045 = vpop.permute.xlu0 %7044
      %7046 = vrot.lane.b32.xlu0 %v6454, 28
      %v7047 = vpop.permute.xlu0 %7046
      %7048 = vrot.lane.b32.xlu0 %v6455, 28
      %v7049 = vpop.permute.xlu0 %7048
      %7050 = vrot.lane.b32.xlu0 %v6456, 28
      %v7051 = vpop.permute.xlu0 %7050
      %7052 = vrot.lane.b32.xlu0 %v6457, 28
      %v7053 = vpop.permute.xlu0 %7052
      %7054 = vrot.lane.b32.xlu0 %v6458, 28
      %v7055 = vpop.permute.xlu0 %7054
      %7056 = vrot.lane.b32.xlu0 %v6459, 28
      %v7057 = vpop.permute.xlu0 %7056
      %7058 = vrot.lane.b32.xlu0 %v6460, 28
      %v7059 = vpop.permute.xlu0 %7058
      %7060 = vrot.lane.b32.xlu0 %v6461, 28
      %v7061 = vpop.permute.xlu0 %7060
      %7062 = vrot.lane.b32.xlu0 %v6462, 28
      %v7063 = vpop.permute.xlu0 %7062
      %7064 = vrot.lane.b32.xlu0 %v6463, 28
      %v7065 = vpop.permute.xlu0 %7064
      %7066 = vrot.lane.b32.xlu0 %v6464, 28
      %v7067 = vpop.permute.xlu0 %7066
      %7068 = vrot.lane.b32.xlu0 %v6465, 28
      %v7069 = vpop.permute.xlu0 %7068
      %7070 = vrot.lane.b32.xlu0 %v6466, 28
      %v7071 = vpop.permute.xlu0 %7070
      %7072 = vrot.lane.b32.xlu0 %v6467, 28
      %v7073 = vpop.permute.xlu0 %7072
      %7074 = vrot.lane.b32.xlu0 %v6468, 28
      %v7075 = vpop.permute.xlu0 %7074
      %7076 = vrot.lane.b32.xlu0 %v6469, 28
      %v7077 = vpop.permute.xlu0 %7076
      %7142 = vrot.lane.b32.xlu0 %v6470, 35
      %v7143 = vpop.permute.xlu0 %7142
      %7144 = vrot.lane.b32.xlu0 %v6471, 35
      %v7145 = vpop.permute.xlu0 %7144
      %7146 = vrot.lane.b32.xlu0 %v6472, 35
      %v7147 = vpop.permute.xlu0 %7146
      %7148 = vrot.lane.b32.xlu0 %v6473, 35
      %v7149 = vpop.permute.xlu0 %7148
      %7150 = vrot.lane.b32.xlu0 %v6474, 35
      %v7151 = vpop.permute.xlu0 %7150
      %7152 = vrot.lane.b32.xlu0 %v6475, 35
      %v7153 = vpop.permute.xlu0 %7152
      %7154 = vrot.lane.b32.xlu0 %v6476, 35
      %v7155 = vpop.permute.xlu0 %7154
      %7156 = vrot.lane.b32.xlu0 %v6477, 35
      %v7157 = vpop.permute.xlu0 %7156
      %7158 = vrot.lane.b32.xlu0 %v6478, 35
      %v7159 = vpop.permute.xlu0 %7158
      %7160 = vrot.lane.b32.xlu0 %v6479, 35
      %v7161 = vpop.permute.xlu0 %7160
      %7162 = vrot.lane.b32.xlu0 %v6480, 35
      %v7163 = vpop.permute.xlu0 %7162
      %7164 = vrot.lane.b32.xlu0 %v6481, 35
      %v7165 = vpop.permute.xlu0 %7164
      %7166 = vrot.lane.b32.xlu0 %v6482, 35
      %v7167 = vpop.permute.xlu0 %7166
      %7168 = vrot.lane.b32.xlu0 %v6483, 35
      %v7169 = vpop.permute.xlu0 %7168
      %7170 = vrot.lane.b32.xlu0 %v6484, 35
      %v7171 = vpop.permute.xlu0 %7170
      %7172 = vrot.lane.b32.xlu0 %v6485, 35
      %v7173 = vpop.permute.xlu0 %7172
      %7174 = vrot.lane.b32.xlu0 %v6486, 35
      %v7175 = vpop.permute.xlu0 %7174
      %7176 = vrot.lane.b32.xlu0 %v6487, 35
      %v7177 = vpop.permute.xlu0 %7176
      %7178 = vrot.lane.b32.xlu0 %v6488, 35
      %v7179 = vpop.permute.xlu0 %7178
      %7180 = vrot.lane.b32.xlu0 %v6489, 35
      %v7181 = vpop.permute.xlu0 %7180
      %7182 = vrot.lane.b32.xlu0 %v6490, 35
      %v7183 = vpop.permute.xlu0 %7182
      %7184 = vrot.lane.b32.xlu0 %v6491, 35
      %v7185 = vpop.permute.xlu0 %7184
      %7186 = vrot.lane.b32.xlu0 %v6492, 35
      %v7187 = vpop.permute.xlu0 %7186
      %7188 = vrot.lane.b32.xlu0 %v6493, 35
      %v7189 = vpop.permute.xlu0 %7188
      %7190 = vrot.lane.b32.xlu0 %v6494, 35
      %v7191 = vpop.permute.xlu0 %7190
      %7192 = vrot.lane.b32.xlu0 %v6495, 35
      %v7193 = vpop.permute.xlu0 %7192
      %7194 = vrot.lane.b32.xlu0 %v6496, 35
      %v7195 = vpop.permute.xlu0 %7194
      %7196 = vrot.lane.b32.xlu0 %v6497, 35
      %v7197 = vpop.permute.xlu0 %7196
      %7198 = vrot.lane.b32.xlu0 %v6498, 35
      %v7199 = vpop.permute.xlu0 %7198
      %7200 = vrot.lane.b32.xlu0 %v6499, 35
      %v7201 = vpop.permute.xlu0 %7200
      %7202 = vrot.lane.b32.xlu0 %v6500, 35
      %v7203 = vpop.permute.xlu0 %7202
      %7204 = vrot.lane.b32.xlu0 %v6501, 35
      %v7205 = vpop.permute.xlu0 %7204
      %7270 = vrot.lane.b32.xlu0 %v6502, 42
      %v7271 = vpop.permute.xlu0 %7270
      %7272 = vrot.lane.b32.xlu0 %v6503, 42
      %v7273 = vpop.permute.xlu0 %7272
      %7274 = vrot.lane.b32.xlu0 %v6504, 42
      %v7275 = vpop.permute.xlu0 %7274
      %7276 = vrot.lane.b32.xlu0 %v6505, 42
      %v7277 = vpop.permute.xlu0 %7276
      %7278 = vrot.lane.b32.xlu0 %v6506, 42
      %v7279 = vpop.permute.xlu0 %7278
      %7280 = vrot.lane.b32.xlu0 %v6507, 42
      %v7281 = vpop.permute.xlu0 %7280
      %7282 = vrot.lane.b32.xlu0 %v6508, 42
      %v7283 = vpop.permute.xlu0 %7282
      %7284 = vrot.lane.b32.xlu0 %v6509, 42
      %v7285 = vpop.permute.xlu0 %7284
      %7286 = vrot.lane.b32.xlu0 %v6510, 42
      %v7287 = vpop.permute.xlu0 %7286
      %7288 = vrot.lane.b32.xlu0 %v6511, 42
      %v7289 = vpop.permute.xlu0 %7288
      %7290 = vrot.lane.b32.xlu0 %v6512, 42
      %v7291 = vpop.permute.xlu0 %7290
      %7292 = vrot.lane.b32.xlu0 %v6513, 42
      %v7293 = vpop.permute.xlu0 %7292
      %7294 = vrot.lane.b32.xlu0 %v6514, 42
      %v7295 = vpop.permute.xlu0 %7294
      %7296 = vrot.lane.b32.xlu0 %v6515, 42
      %v7297 = vpop.permute.xlu0 %7296
      %7298 = vrot.lane.b32.xlu0 %v6516, 42
      %v7299 = vpop.permute.xlu0 %7298
      %7300 = vrot.lane.b32.xlu0 %v6517, 42
      %v7301 = vpop.permute.xlu0 %7300
      %7302 = vrot.lane.b32.xlu0 %v6518, 42
      %v7303 = vpop.permute.xlu0 %7302
      %7304 = vrot.lane.b32.xlu0 %v6519, 42
      %v7305 = vpop.permute.xlu0 %7304
      %7306 = vrot.lane.b32.xlu0 %v6520, 42
      %v7307 = vpop.permute.xlu0 %7306
      %7308 = vrot.lane.b32.xlu0 %v6521, 42
      %v7309 = vpop.permute.xlu0 %7308
      %7310 = vrot.lane.b32.xlu0 %v6522, 42
      %v7311 = vpop.permute.xlu0 %7310
      %7312 = vrot.lane.b32.xlu0 %v6523, 42
      %v7313 = vpop.permute.xlu0 %7312
      %7314 = vrot.lane.b32.xlu0 %v6524, 42
      %v7315 = vpop.permute.xlu0 %7314
      %7316 = vrot.lane.b32.xlu0 %v6525, 42
      %v7317 = vpop.permute.xlu0 %7316
      %7318 = vrot.lane.b32.xlu0 %v6526, 42
      %v7319 = vpop.permute.xlu0 %7318
      %7320 = vrot.lane.b32.xlu0 %v6527, 42
      %v7321 = vpop.permute.xlu0 %7320
      %7322 = vrot.lane.b32.xlu0 %v6528, 42
      %v7323 = vpop.permute.xlu0 %7322
      %7324 = vrot.lane.b32.xlu0 %v6529, 42
      %v7325 = vpop.permute.xlu0 %7324
      %7326 = vrot.lane.b32.xlu0 %v6530, 42
      %v7327 = vpop.permute.xlu0 %7326
      %7328 = vrot.lane.b32.xlu0 %v6531, 42
      %v7329 = vpop.permute.xlu0 %7328
      %7330 = vrot.lane.b32.xlu0 %v6532, 42
      %v7331 = vpop.permute.xlu0 %7330
      %7332 = vrot.lane.b32.xlu0 %v6533, 42
      %v7333 = vpop.permute.xlu0 %7332
      %7398 = vrot.lane.b32.xlu0 %v6534, 49
      %v7399 = vpop.permute.xlu0 %7398
      %7400 = vrot.lane.b32.xlu0 %v6535, 49
      %v7401 = vpop.permute.xlu0 %7400
      %7402 = vrot.lane.b32.xlu0 %v6536, 49
      %v7403 = vpop.permute.xlu0 %7402
      %7404 = vrot.lane.b32.xlu0 %v6537, 49
      %v7405 = vpop.permute.xlu0 %7404
      %7406 = vrot.lane.b32.xlu0 %v6538, 49
      %v7407 = vpop.permute.xlu0 %7406
      %7408 = vrot.lane.b32.xlu0 %v6539, 49
      %v7409 = vpop.permute.xlu0 %7408
      %7410 = vrot.lane.b32.xlu0 %v6540, 49
      %v7411 = vpop.permute.xlu0 %7410
      %7412 = vrot.lane.b32.xlu0 %v6541, 49
      %v7413 = vpop.permute.xlu0 %7412
      %7414 = vrot.lane.b32.xlu0 %v6542, 49
      %v7415 = vpop.permute.xlu0 %7414
      %7416 = vrot.lane.b32.xlu0 %v6543, 49
      %v7417 = vpop.permute.xlu0 %7416
      %7418 = vrot.lane.b32.xlu0 %v6544, 49
      %v7419 = vpop.permute.xlu0 %7418
      %7420 = vrot.lane.b32.xlu0 %v6545, 49
      %v7421 = vpop.permute.xlu0 %7420
      %7422 = vrot.lane.b32.xlu0 %v6546, 49
      %v7423 = vpop.permute.xlu0 %7422
      %7424 = vrot.lane.b32.xlu0 %v6547, 49
      %v7425 = vpop.permute.xlu0 %7424
      %7426 = vrot.lane.b32.xlu0 %v6548, 49
      %v7427 = vpop.permute.xlu0 %7426
      %7428 = vrot.lane.b32.xlu0 %v6549, 49
      %v7429 = vpop.permute.xlu0 %7428
      %7430 = vrot.lane.b32.xlu0 %v6550, 49
      %v7431 = vpop.permute.xlu0 %7430
      %7432 = vrot.lane.b32.xlu0 %v6551, 49
      %v7433 = vpop.permute.xlu0 %7432
      %7434 = vrot.lane.b32.xlu0 %v6552, 49
      %v7435 = vpop.permute.xlu0 %7434
      %7436 = vrot.lane.b32.xlu0 %v6553, 49
      %v7437 = vpop.permute.xlu0 %7436
      %7438 = vrot.lane.b32.xlu0 %v6554, 49
      %v7439 = vpop.permute.xlu0 %7438
      %7440 = vrot.lane.b32.xlu0 %v6555, 49
      %v7441 = vpop.permute.xlu0 %7440
      %7442 = vrot.lane.b32.xlu0 %v6556, 49
      %v7443 = vpop.permute.xlu0 %7442
      %7444 = vrot.lane.b32.xlu0 %v6557, 49
      %v7445 = vpop.permute.xlu0 %7444
      %7446 = vrot.lane.b32.xlu0 %v6558, 49
      %v7447 = vpop.permute.xlu0 %7446
      %7448 = vrot.lane.b32.xlu0 %v6559, 49
      %v7449 = vpop.permute.xlu0 %7448
      %7450 = vrot.lane.b32.xlu0 %v6560, 49
      %v7451 = vpop.permute.xlu0 %7450
      %7452 = vrot.lane.b32.xlu0 %v6561, 49
      %v7453 = vpop.permute.xlu0 %7452
      %7454 = vrot.lane.b32.xlu0 %v6562, 49
      %v7455 = vpop.permute.xlu0 %7454
      %7456 = vrot.lane.b32.xlu0 %v6563, 49
      %v7457 = vpop.permute.xlu0 %7456
      %7458 = vrot.lane.b32.xlu0 %v6564, 49
      %v7459 = vpop.permute.xlu0 %7458
      %7460 = vrot.lane.b32.xlu0 %v6565, 49
      %v7461 = vpop.permute.xlu0 %7460
      %7526 = vrot.lane.b32.xlu0 %v6566, 56
      %v7527 = vpop.permute.xlu0 %7526
      %7528 = vrot.lane.b32.xlu0 %v6567, 56
      %v7529 = vpop.permute.xlu0 %7528
      %7530 = vrot.lane.b32.xlu0 %v6568, 56
      %v7531 = vpop.permute.xlu0 %7530
      %7532 = vrot.lane.b32.xlu0 %v6569, 56
      %v7533 = vpop.permute.xlu0 %7532
      %7534 = vrot.lane.b32.xlu0 %v6570, 56
      %v7535 = vpop.permute.xlu0 %7534
      %7536 = vrot.lane.b32.xlu0 %v6571, 56
      %v7537 = vpop.permute.xlu0 %7536
      %7538 = vrot.lane.b32.xlu0 %v6572, 56
      %v7539 = vpop.permute.xlu0 %7538
      %7540 = vrot.lane.b32.xlu0 %v6573, 56
      %v7541 = vpop.permute.xlu0 %7540
      %7542 = vrot.lane.b32.xlu0 %v6574, 56
      %v7543 = vpop.permute.xlu0 %7542
      %7544 = vrot.lane.b32.xlu0 %v6575, 56
      %v7545 = vpop.permute.xlu0 %7544
      %7546 = vrot.lane.b32.xlu0 %v6576, 56
      %v7547 = vpop.permute.xlu0 %7546
      %7548 = vrot.lane.b32.xlu0 %v6577, 56
      %v7549 = vpop.permute.xlu0 %7548
      %7550 = vrot.lane.b32.xlu0 %v6578, 56
      %v7551 = vpop.permute.xlu0 %7550
      %7552 = vrot.lane.b32.xlu0 %v6579, 56
      %v7553 = vpop.permute.xlu0 %7552
      %7554 = vrot.lane.b32.xlu0 %v6580, 56
      %v7555 = vpop.permute.xlu0 %7554
      %7556 = vrot.lane.b32.xlu0 %v6581, 56
      %v7557 = vpop.permute.xlu0 %7556
      %7558 = vrot.lane.b32.xlu0 %v6582, 56
      %v7559 = vpop.permute.xlu0 %7558
      %7560 = vrot.lane.b32.xlu0 %v6583, 56
      %v7561 = vpop.permute.xlu0 %7560
      %7562 = vrot.lane.b32.xlu0 %v6584, 56
      %v7563 = vpop.permute.xlu0 %7562
      %7564 = vrot.lane.b32.xlu0 %v6585, 56
      %v7565 = vpop.permute.xlu0 %7564
      %7566 = vrot.lane.b32.xlu0 %v6586, 56
      %v7567 = vpop.permute.xlu0 %7566
      %7568 = vrot.lane.b32.xlu0 %v6587, 56
      %v7569 = vpop.permute.xlu0 %7568
      %7570 = vrot.lane.b32.xlu0 %v6588, 56
      %v7571 = vpop.permute.xlu0 %7570
      %7572 = vrot.lane.b32.xlu0 %v6589, 56
      %v7573 = vpop.permute.xlu0 %7572
      %7574 = vrot.lane.b32.xlu0 %v6590, 56
      %v7575 = vpop.permute.xlu0 %7574
      %7576 = vrot.lane.b32.xlu0 %v6591, 56
      %v7577 = vpop.permute.xlu0 %7576
      %7578 = vrot.lane.b32.xlu0 %v6592, 56
      %v7579 = vpop.permute.xlu0 %7578
      %7580 = vrot.lane.b32.xlu0 %v6593, 56
      %v7581 = vpop.permute.xlu0 %7580
      %7582 = vrot.lane.b32.xlu0 %v6594, 56
      %v7583 = vpop.permute.xlu0 %7582
      %7584 = vrot.lane.b32.xlu0 %v6595, 56
      %v7585 = vpop.permute.xlu0 %7584
      %7586 = vrot.lane.b32.xlu0 %v6596, 56
      %v7587 = vpop.permute.xlu0 %7586
      %7588 = vrot.lane.b32.xlu0 %v6597, 56
      %v7589 = vpop.permute.xlu0 %7588
      %v7622 = vsel %vm6268, %v6310, %v6631
      %v7623 = vsel %vm6268, %v6311, %v6633
      %v7624 = vsel %vm6268, %v6312, %v6635
      %v7625 = vsel %vm6268, %v6313, %v6637
      %v7626 = vsel %vm6268, %v6314, %v6639
      %v7627 = vsel %vm6268, %v6315, %v6641
      %v7628 = vsel %vm6268, %v6316, %v6643
      %v7629 = vsel %vm6268, %v6317, %v6645
      %v7630 = vsel %vm6268, %v6318, %v6647
      %v7631 = vsel %vm6268, %v6319, %v6649
      %v7632 = vsel %vm6268, %v6320, %v6651
      %v7633 = vsel %vm6268, %v6321, %v6653
      %v7634 = vsel %vm6268, %v6322, %v6655
      %v7635 = vsel %vm6268, %v6323, %v6657
      %v7636 = vsel %vm6268, %v6324, %v6659
      %v7637 = vsel %vm6268, %v6325, %v6661
      %v7638 = vsel %vm6268, %v6326, %v6663
      %v7639 = vsel %vm6268, %v6327, %v6665
      %v7640 = vsel %vm6268, %v6328, %v6667
      %v7641 = vsel %vm6268, %v6329, %v6669
      %v7642 = vsel %vm6268, %v6330, %v6671
      %v7643 = vsel %vm6268, %v6331, %v6673
      %v7644 = vsel %vm6268, %v6332, %v6675
      %v7645 = vsel %vm6268, %v6333, %v6677
      %v7646 = vsel %vm6268, %v6334, %v6679
      %v7647 = vsel %vm6268, %v6335, %v6681
      %v7648 = vsel %vm6268, %v6336, %v6683
      %v7649 = vsel %vm6268, %v6337, %v6685
      %v7650 = vsel %vm6268, %v6338, %v6687
      %v7651 = vsel %vm6268, %v6339, %v6689
      %v7652 = vsel %vm6268, %v6340, %v6691
      %v7653 = vsel %vm6268, %v6341, %v6693
      %vm7654 = vcmask 113664
      %v7655 = vsel %vm7654, %v7622, %v6759
      %v7656 = vsel %vm7654, %v7623, %v6761
      %v7657 = vsel %vm7654, %v7624, %v6763
      %v7658 = vsel %vm7654, %v7625, %v6765
      %v7659 = vsel %vm7654, %v7626, %v6767
      %v7660 = vsel %vm7654, %v7627, %v6769
      %v7661 = vsel %vm7654, %v7628, %v6771
      %v7662 = vsel %vm7654, %v7629, %v6773
      %v7663 = vsel %vm7654, %v7630, %v6775
      %v7664 = vsel %vm7654, %v7631, %v6777
      %v7665 = vsel %vm7654, %v7632, %v6779
      %v7666 = vsel %vm7654, %v7633, %v6781
      %v7667 = vsel %vm7654, %v7634, %v6783
      %v7668 = vsel %vm7654, %v7635, %v6785
      %v7669 = vsel %vm7654, %v7636, %v6787
      %v7670 = vsel %vm7654, %v7637, %v6789
      %v7671 = vsel %vm7654, %v7638, %v6791
      %v7672 = vsel %vm7654, %v7639, %v6793
      %v7673 = vsel %vm7654, %v7640, %v6795
      %v7674 = vsel %vm7654, %v7641, %v6797
      %v7675 = vsel %vm7654, %v7642, %v6799
      %v7676 = vsel %vm7654, %v7643, %v6801
      %v7677 = vsel %vm7654, %v7644, %v6803
      %v7678 = vsel %vm7654, %v7645, %v6805
      %v7679 = vsel %vm7654, %v7646, %v6807
      %v7680 = vsel %vm7654, %v7647, %v6809
      %v7681 = vsel %vm7654, %v7648, %v6811
      %v7682 = vsel %vm7654, %v7649, %v6813
      %v7683 = vsel %vm7654, %v7650, %v6815
      %v7684 = vsel %vm7654, %v7651, %v6817
      %v7685 = vsel %vm7654, %v7652, %v6819
      %v7686 = vsel %vm7654, %v7653, %v6821
      %vm7687 = vcmask 171008
      %v7688 = vsel %vm7687, %v7655, %v6887
      %v7689 = vsel %vm7687, %v7656, %v6889
      %v7690 = vsel %vm7687, %v7657, %v6891
      %v7691 = vsel %vm7687, %v7658, %v6893
      %v7692 = vsel %vm7687, %v7659, %v6895
      %v7693 = vsel %vm7687, %v7660, %v6897
      %v7694 = vsel %vm7687, %v7661, %v6899
      %v7695 = vsel %vm7687, %v7662, %v6901
      %v7696 = vsel %vm7687, %v7663, %v6903
      %v7697 = vsel %vm7687, %v7664, %v6905
      %v7698 = vsel %vm7687, %v7665, %v6907
      %v7699 = vsel %vm7687, %v7666, %v6909
      %v7700 = vsel %vm7687, %v7667, %v6911
      %v7701 = vsel %vm7687, %v7668, %v6913
      %v7702 = vsel %vm7687, %v7669, %v6915
      %v7703 = vsel %vm7687, %v7670, %v6917
      %v7704 = vsel %vm7687, %v7671, %v6919
      %v7705 = vsel %vm7687, %v7672, %v6921
      %v7706 = vsel %vm7687, %v7673, %v6923
      %v7707 = vsel %vm7687, %v7674, %v6925
      %v7708 = vsel %vm7687, %v7675, %v6927
      %v7709 = vsel %vm7687, %v7676, %v6929
      %v7710 = vsel %vm7687, %v7677, %v6931
      %v7711 = vsel %vm7687, %v7678, %v6933
      %v7712 = vsel %vm7687, %v7679, %v6935
      %v7713 = vsel %vm7687, %v7680, %v6937
      %v7714 = vsel %vm7687, %v7681, %v6939
      %v7715 = vsel %vm7687, %v7682, %v6941
      %v7716 = vsel %vm7687, %v7683, %v6943
      %v7717 = vsel %vm7687, %v7684, %v6945
      %v7718 = vsel %vm7687, %v7685, %v6947
      %v7719 = vsel %vm7687, %v7686, %v6949
      %vm7720 = vcmask 228352
      %v7721 = vsel %vm7720, %v7688, %v7015
      %v7722 = vsel %vm7720, %v7689, %v7017
      %v7723 = vsel %vm7720, %v7690, %v7019
      %v7724 = vsel %vm7720, %v7691, %v7021
      %v7725 = vsel %vm7720, %v7692, %v7023
      %v7726 = vsel %vm7720, %v7693, %v7025
      %v7727 = vsel %vm7720, %v7694, %v7027
      %v7728 = vsel %vm7720, %v7695, %v7029
      %v7729 = vsel %vm7720, %v7696, %v7031
      %v7730 = vsel %vm7720, %v7697, %v7033
      %v7731 = vsel %vm7720, %v7698, %v7035
      %v7732 = vsel %vm7720, %v7699, %v7037
      %v7733 = vsel %vm7720, %v7700, %v7039
      %v7734 = vsel %vm7720, %v7701, %v7041
      %v7735 = vsel %vm7720, %v7702, %v7043
      %v7736 = vsel %vm7720, %v7703, %v7045
      %v7737 = vsel %vm7720, %v7704, %v7047
      %v7738 = vsel %vm7720, %v7705, %v7049
      %v7739 = vsel %vm7720, %v7706, %v7051
      %v7740 = vsel %vm7720, %v7707, %v7053
      %v7741 = vsel %vm7720, %v7708, %v7055
      %v7742 = vsel %vm7720, %v7709, %v7057
      %v7743 = vsel %vm7720, %v7710, %v7059
      %v7744 = vsel %vm7720, %v7711, %v7061
      %v7745 = vsel %vm7720, %v7712, %v7063
      %v7746 = vsel %vm7720, %v7713, %v7065
      %v7747 = vsel %vm7720, %v7714, %v7067
      %v7748 = vsel %vm7720, %v7715, %v7069
      %v7749 = vsel %vm7720, %v7716, %v7071
      %v7750 = vsel %vm7720, %v7717, %v7073
      %v7751 = vsel %vm7720, %v7718, %v7075
      %v7752 = vsel %vm7720, %v7719, %v7077
      %vm7753 = vcmask 285696
      %v7754 = vsel %vm7753, %v7721, %v7143
      %v7755 = vsel %vm7753, %v7722, %v7145
      %v7756 = vsel %vm7753, %v7723, %v7147
      %v7757 = vsel %vm7753, %v7724, %v7149
      %v7758 = vsel %vm7753, %v7725, %v7151
      %v7759 = vsel %vm7753, %v7726, %v7153
      %v7760 = vsel %vm7753, %v7727, %v7155
      %v7761 = vsel %vm7753, %v7728, %v7157
      %v7762 = vsel %vm7753, %v7729, %v7159
      %v7763 = vsel %vm7753, %v7730, %v7161
      %v7764 = vsel %vm7753, %v7731, %v7163
      %v7765 = vsel %vm7753, %v7732, %v7165
      %v7766 = vsel %vm7753, %v7733, %v7167
      %v7767 = vsel %vm7753, %v7734, %v7169
      %v7768 = vsel %vm7753, %v7735, %v7171
      %v7769 = vsel %vm7753, %v7736, %v7173
      %v7770 = vsel %vm7753, %v7737, %v7175
      %v7771 = vsel %vm7753, %v7738, %v7177
      %v7772 = vsel %vm7753, %v7739, %v7179
      %v7773 = vsel %vm7753, %v7740, %v7181
      %v7774 = vsel %vm7753, %v7741, %v7183
      %v7775 = vsel %vm7753, %v7742, %v7185
      %v7776 = vsel %vm7753, %v7743, %v7187
      %v7777 = vsel %vm7753, %v7744, %v7189
      %v7778 = vsel %vm7753, %v7745, %v7191
      %v7779 = vsel %vm7753, %v7746, %v7193
      %v7780 = vsel %vm7753, %v7747, %v7195
      %v7781 = vsel %vm7753, %v7748, %v7197
      %v7782 = vsel %vm7753, %v7749, %v7199
      %v7783 = vsel %vm7753, %v7750, %v7201
      %v7784 = vsel %vm7753, %v7751, %v7203
      %v7785 = vsel %vm7753, %v7752, %v7205
      %v7786 = vsel %vm2108, %v7754, %v7271
      %v7787 = vsel %vm2108, %v7755, %v7273
      %v7788 = vsel %vm2108, %v7756, %v7275
      %v7789 = vsel %vm2108, %v7757, %v7277
      %v7790 = vsel %vm2108, %v7758, %v7279
      %v7791 = vsel %vm2108, %v7759, %v7281
      %v7792 = vsel %vm2108, %v7760, %v7283
      %v7793 = vsel %vm2108, %v7761, %v7285
      %v7794 = vsel %vm2108, %v7762, %v7287
      %v7795 = vsel %vm2108, %v7763, %v7289
      %v7796 = vsel %vm2108, %v7764, %v7291
      %v7797 = vsel %vm2108, %v7765, %v7293
      %v7798 = vsel %vm2108, %v7766, %v7295
      %v7799 = vsel %vm2108, %v7767, %v7297
      %v7800 = vsel %vm2108, %v7768, %v7299
      %v7801 = vsel %vm2108, %v7769, %v7301
      %v7802 = vsel %vm2108, %v7770, %v7303
      %v7803 = vsel %vm2108, %v7771, %v7305
      %v7804 = vsel %vm2108, %v7772, %v7307
      %v7805 = vsel %vm2108, %v7773, %v7309
      %v7806 = vsel %vm2108, %v7774, %v7311
      %v7807 = vsel %vm2108, %v7775, %v7313
      %v7808 = vsel %vm2108, %v7776, %v7315
      %v7809 = vsel %vm2108, %v7777, %v7317
      %v7810 = vsel %vm2108, %v7778, %v7319
      %v7811 = vsel %vm2108, %v7779, %v7321
      %v7812 = vsel %vm2108, %v7780, %v7323
      %v7813 = vsel %vm2108, %v7781, %v7325
      %v7814 = vsel %vm2108, %v7782, %v7327
      %v7815 = vsel %vm2108, %v7783, %v7329
      %v7816 = vsel %vm2108, %v7784, %v7331
      %v7817 = vsel %vm2108, %v7785, %v7333
      %vm7818 = vcmask 400384
      %v7819 = vsel %vm7818, %v7786, %v7399
      %v7820 = vsel %vm7818, %v7787, %v7401
      %v7821 = vsel %vm7818, %v7788, %v7403
      %v7822 = vsel %vm7818, %v7789, %v7405
      %v7823 = vsel %vm7818, %v7790, %v7407
      %v7824 = vsel %vm7818, %v7791, %v7409
      %v7825 = vsel %vm7818, %v7792, %v7411
      %v7826 = vsel %vm7818, %v7793, %v7413
      %v7827 = vsel %vm7818, %v7794, %v7415
      %v7828 = vsel %vm7818, %v7795, %v7417
      %v7829 = vsel %vm7818, %v7796, %v7419
      %v7830 = vsel %vm7818, %v7797, %v7421
      %v7831 = vsel %vm7818, %v7798, %v7423
      %v7832 = vsel %vm7818, %v7799, %v7425
      %v7833 = vsel %vm7818, %v7800, %v7427
      %v7834 = vsel %vm7818, %v7801, %v7429
      %v7835 = vsel %vm7818, %v7802, %v7431
      %v7836 = vsel %vm7818, %v7803, %v7433
      %v7837 = vsel %vm7818, %v7804, %v7435
      %v7838 = vsel %vm7818, %v7805, %v7437
      %v7839 = vsel %vm7818, %v7806, %v7439
      %v7840 = vsel %vm7818, %v7807, %v7441
      %v7841 = vsel %vm7818, %v7808, %v7443
      %v7842 = vsel %vm7818, %v7809, %v7445
      %v7843 = vsel %vm7818, %v7810, %v7447
      %v7844 = vsel %vm7818, %v7811, %v7449
      %v7845 = vsel %vm7818, %v7812, %v7451
      %v7846 = vsel %vm7818, %v7813, %v7453
      %v7847 = vsel %vm7818, %v7814, %v7455
      %v7848 = vsel %vm7818, %v7815, %v7457
      %v7849 = vsel %vm7818, %v7816, %v7459
      %v7850 = vsel %vm7818, %v7817, %v7461
      %vm7851 = vcmask 457728
      %v7852 = vsel %vm7851, %v7819, %v7527
      %v7853 = vsel %vm7851, %v7820, %v7529
      %v7854 = vsel %vm7851, %v7821, %v7531
      %v7855 = vsel %vm7851, %v7822, %v7533
      %v7856 = vsel %vm7851, %v7823, %v7535
      %v7857 = vsel %vm7851, %v7824, %v7537
      %v7858 = vsel %vm7851, %v7825, %v7539
      %v7859 = vsel %vm7851, %v7826, %v7541
      %v7860 = vsel %vm7851, %v7827, %v7543
      %v7861 = vsel %vm7851, %v7828, %v7545
      %v7862 = vsel %vm7851, %v7829, %v7547
      %v7863 = vsel %vm7851, %v7830, %v7549
      %v7864 = vsel %vm7851, %v7831, %v7551
      %v7865 = vsel %vm7851, %v7832, %v7553
      %v7866 = vsel %vm7851, %v7833, %v7555
      %v7867 = vsel %vm7851, %v7834, %v7557
      %v7868 = vsel %vm7851, %v7835, %v7559
      %v7869 = vsel %vm7851, %v7836, %v7561
      %v7870 = vsel %vm7851, %v7837, %v7563
      %v7871 = vsel %vm7851, %v7838, %v7565
      %v7872 = vsel %vm7851, %v7839, %v7567
      %v7873 = vsel %vm7851, %v7840, %v7569
      %v7874 = vsel %vm7851, %v7841, %v7571
      %v7875 = vsel %vm7851, %v7842, %v7573
      %v7876 = vsel %vm7851, %v7843, %v7575
      %v7877 = vsel %vm7851, %v7844, %v7577
      %v7878 = vsel %vm7851, %v7845, %v7579
      %v7879 = vsel %vm7851, %v7846, %v7581
      %v7880 = vsel %vm7851, %v7847, %v7583
      %v7881 = vsel %vm7851, %v7848, %v7585
      %v7882 = vsel %vm7851, %v7849, %v7587
      %v7883 = vsel %vm7851, %v7850, %v7589
      %v7884 = vpack.c.bf16 %v7853, %v7852
      %v7885 = vpack.c.bf16 %v7855, %v7854
      %v7886 = vpack.c.bf16 %v7857, %v7856
      %v7887 = vpack.c.bf16 %v7859, %v7858
      %v7888 = vpack.c.bf16 %v7861, %v7860
      %v7889 = vpack.c.bf16 %v7863, %v7862
      %v7890 = vpack.c.bf16 %v7865, %v7864
      %v7891 = vpack.c.bf16 %v7867, %v7866
      %v7892 = vpack.c.bf16 %v7869, %v7868
      %v7893 = vpack.c.bf16 %v7871, %v7870
      %v7894 = vpack.c.bf16 %v7873, %v7872
      %v7895 = vpack.c.bf16 %v7875, %v7874
      %v7896 = vpack.c.bf16 %v7877, %v7876
      %v7897 = vpack.c.bf16 %v7879, %v7878
      %v7898 = vpack.c.bf16 %v7881, %v7880
      %v7899 = vpack.c.bf16 %v7883, %v7882
      %v7901 = vlaneseq
      %v7902 = vshrl.u32 %v7901, 7
      %v7903 = vsub.s32 0, %v7902
      %v7904 = vrot.slane %v6309, %v7903
      %v7914 = vunpack.c.l.b16 %v6301
      %v7915 = vunpack.c.l.b16 %v6302
      %v7916 = vunpack.c.l.b16 %v6303
      %v7917 = vunpack.c.l.b16 %v6304
      %v7918 = vunpack.c.l.b16 %v6305
      %v7919 = vunpack.c.l.b16 %v6306
      %v7920 = vunpack.c.l.b16 %v6307
      %v7921 = vunpack.c.l.b16 %v6308
      %v7922 = vpack.c.b16 %v7915, %v7914
      %v7923 = vpack.c.b16 %v7917, %v7916
      %v7924 = vpack.c.b16 %v7919, %v7918
      %v7925 = vpack.c.b16 %v7921, %v7920
      %vm7929 = vcmask 515072
      %v7931 = vsel %vm7929, %v7884, 0
      %v7934 = vsel %vm7929, %v7885, 0
      %v7937 = vsel %vm7929, %v7886, 0
      %v7940 = vsel %vm7929, %v7887, 0
      %v7943 = vsel %vm7929, %v7888, 0
      %v7946 = vsel %vm7929, %v7889, 0
      %v7949 = vsel %vm7929, %v7890, 0
      %v7952 = vsel %vm7929, %v7891, 0
      %v7955 = vsel %vm7929, %v7892, 0
      %v7958 = vsel %vm7929, %v7893, 0
      %v7961 = vsel %vm7929, %v7894, 0
      %v7964 = vsel %vm7929, %v7895, 0
      %v7967 = vsel %vm7929, %v7896, 0
      %v7970 = vsel %vm7929, %v7897, 0
      %v7973 = vsel %vm7929, %v7898, 0
      %v7976 = vsel %vm7929, %v7899, 0
      %vm7978 = vcmask 1046528
      %vm7979 = vcmask 1047552
      %v7980 = vsel %vm7978, 4294967295, 65535
      %v7981 = vsel %vm7979, %v7980, 0
      %v7983 = vand.u32 %v7925, %v7981
      %7985 = vmatprep.subr.bf16.mxu0 0
      %7986 = vmatpush1.bf16.msra.mxu0 %v7922
      %7987 = vmatprep.subr.bf16.mxu0 0
      %7988 = vmatpush1.bf16.msra.mxu0 %v7923
      %7989 = vmatprep.subr.bf16.mxu0 0
      %7990 = vmatpush1.bf16.msra.mxu0 %v7924
      %7991 = vmatprep.subr.bf16.mxu0 0
      %7992 = vmatpush1.bf16.msra.mxu0 %v7983
      %7993 = vmatprep.subr.bf16.mxu0 0
      %7994 = vmatpush1.bf16.msra.mxu0 0
      %7995 = vmatprep.subr.bf16.mxu0 0
      %7996 = vmatpush1.bf16.msra.mxu0 0
      %7997 = vmatprep.subr.bf16.mxu0 0
      %7998 = vmatpush1.bf16.msra.mxu0 0
      %7999 = vmatprep.subr.bf16.mxu0 0
      %8000 = vmatpush1.bf16.msra.mxu0 0
      %8001 = vmatprep.subr.bf16.mxu0 0
      %8002 = vmatpush1.bf16.msra.mxu0 0
      %8003 = vmatprep.subr.bf16.mxu0 0
      %8004 = vmatpush1.bf16.msra.mxu0 0
      %8005 = vmatprep.subr.bf16.mxu0 0
      %8006 = vmatpush1.bf16.msra.mxu0 0
      %8007 = vmatprep.subr.bf16.mxu0 0
      %8008 = vmatpush1.bf16.msra.mxu0 0
      %8009 = vmatprep.subr.bf16.mxu0 0
      %8010 = vmatpush1.bf16.msra.mxu0 0
      %8011 = vmatprep.subr.bf16.mxu0 0
      %8012 = vmatpush1.bf16.msra.mxu0 0
      %8013 = vmatprep.subr.bf16.mxu0 0
      %8014 = vmatpush1.bf16.msra.mxu0 0
      %8015 = vmatprep.subr.bf16.mxu0 0
      %8016 = vmatpush1.bf16.msra.mxu0 0
      %8017 = vmatprep.mubr.bf16.mxu0 0
      %8018 = vmatmul.mubr.bf16.gmra.mrb[0].mxu0 %v7931
      %v8019 = vpop.f32.mrb[0].mxu0
      %v8020 = vadd.f32 %v7904, %v8019
      %v8021 = vpop.f32.mrb[0].mxu0
      %v8022 = vpop.f32.mrb[0].mxu0
      %v8023 = vadd.f32 %v7904, %v8022
      %v8024 = vpop.f32.mrb[0].mxu0
      %8025 = vmatprep.mubr.bf16.mxu0 0
      %8026 = vmatmul.mubr.bf16.gmra.mrb[0].mxu0 %v7934
      %v8027 = vpop.f32.mrb[0].mxu0
      %v8028 = vadd.f32 %v7904, %v8027
      %v8029 = vpop.f32.mrb[0].mxu0
      %v8030 = vpop.f32.mrb[0].mxu0
      %v8031 = vadd.f32 %v7904, %v8030
      %v8032 = vpop.f32.mrb[0].mxu0
      %8033 = vmatprep.mubr.bf16.mxu0 0
      %8034 = vmatmul.mubr.bf16.gmra.mrb[0].mxu0 %v7937
      %v8035 = vpop.f32.mrb[0].mxu0
      %v8036 = vadd.f32 %v7904, %v8035
      %v8037 = vpop.f32.mrb[0].mxu0
      %v8038 = vpop.f32.mrb[0].mxu0
      %v8039 = vadd.f32 %v7904, %v8038
      %v8040 = vpop.f32.mrb[0].mxu0
      %8041 = vmatprep.mubr.bf16.mxu0 0
      %8042 = vmatmul.mubr.bf16.gmra.mrb[0].mxu0 %v7940
      %v8043 = vpop.f32.mrb[0].mxu0
      %v8044 = vadd.f32 %v7904, %v8043
      %v8045 = vpop.f32.mrb[0].mxu0
      %v8046 = vpop.f32.mrb[0].mxu0
      %v8047 = vadd.f32 %v7904, %v8046
      %v8048 = vpop.f32.mrb[0].mxu0
      %8049 = vmatprep.mubr.bf16.mxu0 0
      %8050 = vmatmul.mubr.bf16.gmra.mrb[0].mxu0 %v7943
      %v8051 = vpop.f32.mrb[0].mxu0
      %v8052 = vadd.f32 %v7904, %v8051
      %v8053 = vpop.f32.mrb[0].mxu0
      %v8054 = vpop.f32.mrb[0].mxu0
      %v8055 = vadd.f32 %v7904, %v8054
      %v8056 = vpop.f32.mrb[0].mxu0
      %8057 = vmatprep.mubr.bf16.mxu0 0
      %8058 = vmatmul.mubr.bf16.gmra.mrb[0].mxu0 %v7946
      %v8059 = vpop.f32.mrb[0].mxu0
      %v8060 = vadd.f32 %v7904, %v8059
      %v8061 = vpop.f32.mrb[0].mxu0
      %v8062 = vpop.f32.mrb[0].mxu0
      %v8063 = vadd.f32 %v7904, %v8062
      %v8064 = vpop.f32.mrb[0].mxu0
      %8065 = vmatprep.mubr.bf16.mxu0 0
      %8066 = vmatmul.mubr.bf16.gmra.mrb[0].mxu0 %v7949
      %v8067 = vpop.f32.mrb[0].mxu0
      %v8068 = vadd.f32 %v7904, %v8067
      %v8069 = vpop.f32.mrb[0].mxu0
      %v8070 = vpop.f32.mrb[0].mxu0
      %v8071 = vadd.f32 %v7904, %v8070
      %v8072 = vpop.f32.mrb[0].mxu0
      %8073 = vmatprep.mubr.bf16.mxu0 0
      %8074 = vmatmul.mubr.bf16.gmra.mrb[0].mxu0 %v7952
      %v8075 = vpop.f32.mrb[0].mxu0
      %v8076 = vadd.f32 %v7904, %v8075
      %v8077 = vpop.f32.mrb[0].mxu0
      %v8078 = vpop.f32.mrb[0].mxu0
      %v8079 = vadd.f32 %v7904, %v8078
      %v8080 = vpop.f32.mrb[0].mxu0
      %8081 = vmatprep.mubr.bf16.mxu0 0
      %8082 = vmatmul.mubr.bf16.gmra.mrb[0].mxu0 %v7955
      %v8083 = vpop.f32.mrb[0].mxu0
      %v8084 = vadd.f32 %v7904, %v8083
      %v8085 = vpop.f32.mrb[0].mxu0
      %v8086 = vpop.f32.mrb[0].mxu0
      %v8087 = vadd.f32 %v7904, %v8086
      %v8088 = vpop.f32.mrb[0].mxu0
      %8089 = vmatprep.mubr.bf16.mxu0 0
      %8090 = vmatmul.mubr.bf16.gmra.mrb[0].mxu0 %v7958
      %v8091 = vpop.f32.mrb[0].mxu0
      %v8092 = vadd.f32 %v7904, %v8091
      %v8093 = vpop.f32.mrb[0].mxu0
      %v8094 = vpop.f32.mrb[0].mxu0
      %v8095 = vadd.f32 %v7904, %v8094
      %v8096 = vpop.f32.mrb[0].mxu0
      %8097 = vmatprep.mubr.bf16.mxu0 0
      %8098 = vmatmul.mubr.bf16.gmra.mrb[0].mxu0 %v7961
      %v8099 = vpop.f32.mrb[0].mxu0
      %v8100 = vadd.f32 %v7904, %v8099
      %v8101 = vpop.f32.mrb[0].mxu0
      %v8102 = vpop.f32.mrb[0].mxu0
      %v8103 = vadd.f32 %v7904, %v8102
      %v8104 = vpop.f32.mrb[0].mxu0
      %8105 = vmatprep.mubr.bf16.mxu0 0
      %8106 = vmatmul.mubr.bf16.gmra.mrb[0].mxu0 %v7964
      %v8107 = vpop.f32.mrb[0].mxu0
      %v8108 = vadd.f32 %v7904, %v8107
      %v8109 = vpop.f32.mrb[0].mxu0
      %v8110 = vpop.f32.mrb[0].mxu0
      %v8111 = vadd.f32 %v7904, %v8110
      %v8112 = vpop.f32.mrb[0].mxu0
      %8113 = vmatprep.mubr.bf16.mxu0 0
      %8114 = vmatmul.mubr.bf16.gmra.mrb[0].mxu0 %v7967
      %v8115 = vpop.f32.mrb[0].mxu0
      %v8116 = vadd.f32 %v7904, %v8115
      %v8117 = vpop.f32.mrb[0].mxu0
      %v8118 = vpop.f32.mrb[0].mxu0
      %v8119 = vadd.f32 %v7904, %v8118
      %v8120 = vpop.f32.mrb[0].mxu0
      %8121 = vmatprep.mubr.bf16.mxu0 0
      %8122 = vmatmul.mubr.bf16.gmra.mrb[0].mxu0 %v7970
      %v8123 = vpop.f32.mrb[0].mxu0
      %v8124 = vadd.f32 %v7904, %v8123
      %v8125 = vpop.f32.mrb[0].mxu0
      %v8126 = vpop.f32.mrb[0].mxu0
      %v8127 = vadd.f32 %v7904, %v8126
      %v8128 = vpop.f32.mrb[0].mxu0
      %8129 = vmatprep.mubr.bf16.mxu0 0
      %8130 = vmatmul.mubr.bf16.gmra.mrb[0].mxu0 %v7973
      %v8131 = vpop.f32.mrb[0].mxu0
      %v8132 = vadd.f32 %v7904, %v8131
      %v8133 = vpop.f32.mrb[0].mxu0
      %v8134 = vpop.f32.mrb[0].mxu0
      %v8135 = vadd.f32 %v7904, %v8134
      %v8136 = vpop.f32.mrb[0].mxu0
      %8137 = vmatprep.mubr.bf16.mxu0 0
      %8138 = vmatmul.mubr.bf16.gmra.mrb[0].mxu0 %v7976
      %v8139 = vpop.f32.mrb[0].mxu0
      %v8140 = vadd.f32 %v7904, %v8139
      %v8141 = vpop.f32.mrb[0].mxu0
      %v8142 = vpop.f32.mrb[0].mxu0
      %v8143 = vadd.f32 %v7904, %v8142
      %v8144 = vpop.f32.mrb[0].mxu0
      %8145 = vdwg.mxu0
      %v8146 = vmax.f32 %v8020, 0.0
      %v8147 = vmax.f32 %v8023, 0.0
      %v8148 = vmax.f32 %v8028, 0.0
      %v8149 = vmax.f32 %v8031, 0.0
      %v8150 = vmax.f32 %v8036, 0.0
      %v8151 = vmax.f32 %v8039, 0.0
      %v8152 = vmax.f32 %v8044, 0.0
      %v8153 = vmax.f32 %v8047, 0.0
      %v8154 = vmax.f32 %v8052, 0.0
      %v8155 = vmax.f32 %v8055, 0.0
      %v8156 = vmax.f32 %v8060, 0.0
      %v8157 = vmax.f32 %v8063, 0.0
      %v8158 = vmax.f32 %v8068, 0.0
      %v8159 = vmax.f32 %v8071, 0.0
      %v8160 = vmax.f32 %v8076, 0.0
      %v8161 = vmax.f32 %v8079, 0.0
      %v8162 = vmax.f32 %v8084, 0.0
      %v8163 = vmax.f32 %v8087, 0.0
      %v8164 = vmax.f32 %v8092, 0.0
      %v8165 = vmax.f32 %v8095, 0.0
      %v8166 = vmax.f32 %v8100, 0.0
      %v8167 = vmax.f32 %v8103, 0.0
      %v8168 = vmax.f32 %v8108, 0.0
      %v8169 = vmax.f32 %v8111, 0.0
      %v8170 = vmax.f32 %v8116, 0.0
      %v8171 = vmax.f32 %v8119, 0.0
      %v8172 = vmax.f32 %v8124, 0.0
      %v8173 = vmax.f32 %v8127, 0.0
      %v8174 = vmax.f32 %v8132, 0.0
      %v8175 = vmax.f32 %v8135, 0.0
      %v8176 = vmax.f32 %v8140, 0.0
      %v8177 = vmax.f32 %v8143, 0.0
      %8178 = vst.msk [vmem:[%s451 + $0x1] sm:$0xff] %vm442, %v8146
      %8179 = vst.msk [vmem:[%s451 + $0x9] sm:$0xff] %vm442, %v8147
      %8180 = vst.msk [vmem:[%s451 + $0x19] sm:$0xff] %vm442, %v8148
      %8181 = vst.msk [vmem:[%s451 + $0x21] sm:$0xff] %vm442, %v8149
      %8182 = vst.msk [vmem:[%s451 + $0x31] sm:$0xff] %vm442, %v8150
      %8183 = vst.msk [vmem:[%s451 + $0x39] sm:$0xff] %vm442, %v8151
      %8184 = vst.msk [vmem:[%s451 + $0x49] sm:$0xff] %vm442, %v8152
      %8185 = vst.msk [vmem:[%s451 + $0x51] sm:$0xff] %vm442, %v8153
      %8186 = vst.msk [vmem:[%s451 + $0x61] sm:$0xff] %vm442, %v8154
      %8187 = vst.msk [vmem:[%s451 + $0x69] sm:$0xff] %vm442, %v8155
      %8188 = vst.msk [vmem:[%s451 + $0x79] sm:$0xff] %vm442, %v8156
      %8189 = vst.msk [vmem:[%s451 + $0x81] sm:$0xff] %vm442, %v8157
      %8190 = vst.msk [vmem:[%s451 + $0x91] sm:$0xff] %vm442, %v8158
      %8191 = vst.msk [vmem:[%s451 + $0x99] sm:$0xff] %vm442, %v8159
      %8192 = vst.msk [vmem:[%s451 + $0xa9] sm:$0xff] %vm442, %v8160
      %8193 = vst.msk [vmem:[%s451 + $0xb1] sm:$0xff] %vm442, %v8161
      %8194 = vst.msk [vmem:[%s451 + $0xc1] sm:$0xff] %vm442, %v8162
      %8195 = vst.msk [vmem:[%s451 + $0xc9] sm:$0xff] %vm442, %v8163
      %8196 = vst.msk [vmem:[%s451 + $0xd9] sm:$0xff] %vm442, %v8164
      %8197 = vst.msk [vmem:[%s451 + $0xe1] sm:$0xff] %vm442, %v8165
      %8198 = vst.msk [vmem:[%s451 + $0xf1] sm:$0xff] %vm442, %v8166
      %8199 = vst.msk [vmem:[%s451 + $0xf9] sm:$0xff] %vm442, %v8167
      %8200 = vst.msk [vmem:[%s451 + $0x109] sm:$0xff] %vm442, %v8168
      %8201 = vst.msk [vmem:[%s451 + $0x111] sm:$0xff] %vm442, %v8169
      %8202 = vst.msk [vmem:[%s451 + $0x121] sm:$0xff] %vm442, %v8170
      %8203 = vst.msk [vmem:[%s451 + $0x129] sm:$0xff] %vm442, %v8171
      %8204 = vst.msk [vmem:[%s451 + $0x139] sm:$0xff] %vm442, %v8172
      %8205 = vst.msk [vmem:[%s451 + $0x141] sm:$0xff] %vm442, %v8173
      %8206 = vst.msk [vmem:[%s451 + $0x151] sm:$0xff] %vm442, %v8174
      %8207 = vst.msk [vmem:[%s451 + $0x159] sm:$0xff] %vm442, %v8175
      %8208 = vst.msk [vmem:[%s451 + $0x169] sm:$0xff] %vm442, %v8176
      %8209 = vst.msk [vmem:[%s451 + $0x171] sm:$0xff] %vm442, %v8177
      %v8210 = vld [vmem:[%s9] sm:$0xf]
      %v8211 = vld [vmem:[%s9 + $0x4] sm:$0xf]
      %v8212 = vld [vmem:[%s9 + $0x8] sm:$0xf]
      %v8213 = vld [vmem:[%s9 + $0xc] sm:$0xf]
      %v8214 = vld [vmem:[%s9 + $0x10] sm:$0xf]
      %v8215 = vld [vmem:[%s9 + $0x14] sm:$0xf]
      %v8216 = vld [vmem:[%s9 + $0x18] sm:$0xf]
      %v8217 = vld [vmem:[%s9 + $0x1c] sm:$0xf]
      %v8218 = vld [vmem:[%s9 + $0x20] sm:$0xf]
      %v8219 = vld [vmem:[%s9 + $0x24] sm:$0xf]
      %v8220 = vld [vmem:[%s9 + $0x28] sm:$0xf]
      %v8221 = vld [vmem:[%s9 + $0x2c] sm:$0x1]
      %v8222 = vld [vmem:[%s10] sm:$0x1]
      %v8223 = vld [vmem:[#allocation2] sm:$0xff]
      %v8224 = vld [vmem:[#allocation2 + $0x8] sm:$0xff]
      %v8225 = vld [vmem:[#allocation2 + $0x18] sm:$0xff]
      %v8226 = vld [vmem:[#allocation2 + $0x20] sm:$0xff]
      %v8227 = vld [vmem:[#allocation2 + $0x30] sm:$0xff]
      %v8228 = vld [vmem:[#allocation2 + $0x38] sm:$0xff]
      %v8229 = vld [vmem:[#allocation2 + $0x48] sm:$0xff]
      %v8230 = vld [vmem:[#allocation2 + $0x50] sm:$0xff]
      %v8231 = vld [vmem:[#allocation2 + $0x60] sm:$0xff]
      %v8232 = vld [vmem:[#allocation2 + $0x68] sm:$0xff]
      %v8233 = vld [vmem:[#allocation2 + $0x78] sm:$0xff]
      %v8234 = vld [vmem:[#allocation2 + $0x80] sm:$0xff]
      %v8235 = vld [vmem:[#allocation2 + $0x90] sm:$0xff]
      %v8236 = vld [vmem:[#allocation2 + $0x98] sm:$0xff]
      %v8237 = vld [vmem:[#allocation2 + $0xa8] sm:$0xff]
      %v8238 = vld [vmem:[#allocation2 + $0xb0] sm:$0xff]
      %v8239 = vld [vmem:[#allocation2 + $0xc0] sm:$0xff]
      %v8240 = vld [vmem:[#allocation2 + $0xc8] sm:$0xff]
      %v8241 = vld [vmem:[#allocation2 + $0xd8] sm:$0xff]
      %v8242 = vld [vmem:[#allocation2 + $0xe0] sm:$0xff]
      %v8243 = vld [vmem:[#allocation2 + $0xf0] sm:$0xff]
      %v8244 = vld [vmem:[#allocation2 + $0xf8] sm:$0xff]
      %v8245 = vld [vmem:[#allocation2 + $0x108] sm:$0xff]
      %v8246 = vld [vmem:[#allocation2 + $0x110] sm:$0xff]
      %v8247 = vld [vmem:[#allocation2 + $0x120] sm:$0xff]
      %v8248 = vld [vmem:[#allocation2 + $0x128] sm:$0xff]
      %v8249 = vld [vmem:[#allocation2 + $0x138] sm:$0xff]
      %v8250 = vld [vmem:[#allocation2 + $0x140] sm:$0xff]
      %v8251 = vld [vmem:[#allocation2 + $0x150] sm:$0xff]
      %v8252 = vld [vmem:[#allocation2 + $0x158] sm:$0xff]
      %v8253 = vld [vmem:[#allocation2 + $0x168] sm:$0xff]
      %v8254 = vld [vmem:[#allocation2 + $0x170] sm:$0xff]
      %v8255 = vld [vmem:[#allocation2 + $0x1] sm:$0xff]
      %v8256 = vld [vmem:[#allocation2 + $0x9] sm:$0xff]
      %v8257 = vld [vmem:[#allocation2 + $0x19] sm:$0xff]
      %v8258 = vld [vmem:[#allocation2 + $0x21] sm:$0xff]
      %v8259 = vld [vmem:[#allocation2 + $0x31] sm:$0xff]
      %v8260 = vld [vmem:[#allocation2 + $0x39] sm:$0xff]
      %v8261 = vld [vmem:[#allocation2 + $0x49] sm:$0xff]
      %v8262 = vld [vmem:[#allocation2 + $0x51] sm:$0xff]
      %v8263 = vld [vmem:[#allocation2 + $0x61] sm:$0xff]
      %v8264 = vld [vmem:[#allocation2 + $0x69] sm:$0xff]
      %v8265 = vld [vmem:[#allocation2 + $0x79] sm:$0xff]
      %v8266 = vld [vmem:[#allocation2 + $0x81] sm:$0xff]
      %v8267 = vld [vmem:[#allocation2 + $0x91] sm:$0xff]
      %v8268 = vld [vmem:[#allocation2 + $0x99] sm:$0xff]
      %v8269 = vld [vmem:[#allocation2 + $0xa9] sm:$0xff]
      %v8270 = vld [vmem:[#allocation2 + $0xb1] sm:$0xff]
      %v8271 = vld [vmem:[#allocation2 + $0xc1] sm:$0xff]
      %v8272 = vld [vmem:[#allocation2 + $0xc9] sm:$0xff]
      %v8273 = vld [vmem:[#allocation2 + $0xd9] sm:$0xff]
      %v8274 = vld [vmem:[#allocation2 + $0xe1] sm:$0xff]
      %v8275 = vld [vmem:[#allocation2 + $0xf1] sm:$0xff]
      %v8276 = vld [vmem:[#allocation2 + $0xf9] sm:$0xff]
      %v8277 = vld [vmem:[#allocation2 + $0x109] sm:$0xff]
      %v8278 = vld [vmem:[#allocation2 + $0x111] sm:$0xff]
      %v8279 = vld [vmem:[#allocation2 + $0x121] sm:$0xff]
      %v8280 = vld [vmem:[#allocation2 + $0x129] sm:$0xff]
      %v8281 = vld [vmem:[#allocation2 + $0x139] sm:$0xff]
      %v8282 = vld [vmem:[#allocation2 + $0x141] sm:$0xff]
      %v8283 = vld [vmem:[#allocation2 + $0x151] sm:$0xff]
      %v8284 = vld [vmem:[#allocation2 + $0x159] sm:$0xff]
      %v8285 = vld [vmem:[#allocation2 + $0x169] sm:$0xff]
      %v8286 = vld [vmem:[#allocation2 + $0x171] sm:$0xff]
      %v8287 = vld [vmem:[#allocation2 + $0x2] sm:$0xff]
      %v8288 = vld [vmem:[#allocation2 + $0xa] sm:$0xff]
      %v8289 = vld [vmem:[#allocation2 + $0x1a] sm:$0xff]
      %v8290 = vld [vmem:[#allocation2 + $0x22] sm:$0xff]
      %v8291 = vld [vmem:[#allocation2 + $0x32] sm:$0xff]
      %v8292 = vld [vmem:[#allocation2 + $0x3a] sm:$0xff]
      %v8293 = vld [vmem:[#allocation2 + $0x4a] sm:$0xff]
      %v8294 = vld [vmem:[#allocation2 + $0x52] sm:$0xff]
      %v8295 = vld [vmem:[#allocation2 + $0x62] sm:$0xff]
      %v8296 = vld [vmem:[#allocation2 + $0x6a] sm:$0xff]
      %v8297 = vld [vmem:[#allocation2 + $0x7a] sm:$0xff]
      %v8298 = vld [vmem:[#allocation2 + $0x82] sm:$0xff]
      %v8299 = vld [vmem:[#allocation2 + $0x92] sm:$0xff]
      %v8300 = vld [vmem:[#allocation2 + $0x9a] sm:$0xff]
      %v8301 = vld [vmem:[#allocation2 + $0xaa] sm:$0xff]
      %v8302 = vld [vmem:[#allocation2 + $0xb2] sm:$0xff]
      %v8303 = vld [vmem:[#allocation2 + $0xc2] sm:$0xff]
      %v8304 = vld [vmem:[#allocation2 + $0xca] sm:$0xff]
      %v8305 = vld [vmem:[#allocation2 + $0xda] sm:$0xff]
      %v8306 = vld [vmem:[#allocation2 + $0xe2] sm:$0xff]
      %v8307 = vld [vmem:[#allocation2 + $0xf2] sm:$0xff]
      %v8308 = vld [vmem:[#allocation2 + $0xfa] sm:$0xff]
      %v8309 = vld [vmem:[#allocation2 + $0x10a] sm:$0xff]
      %v8310 = vld [vmem:[#allocation2 + $0x112] sm:$0xff]
      %v8311 = vld [vmem:[#allocation2 + $0x122] sm:$0xff]
      %v8312 = vld [vmem:[#allocation2 + $0x12a] sm:$0xff]
      %v8313 = vld [vmem:[#allocation2 + $0x13a] sm:$0xff]
      %v8314 = vld [vmem:[#allocation2 + $0x142] sm:$0xff]
      %v8315 = vld [vmem:[#allocation2 + $0x152] sm:$0xff]
      %v8316 = vld [vmem:[#allocation2 + $0x15a] sm:$0xff]
      %v8317 = vld [vmem:[#allocation2 + $0x16a] sm:$0xff]
      %v8318 = vld [vmem:[#allocation2 + $0x172] sm:$0xff]
      %v8319 = vld [vmem:[%s451] sm:$0xff]
      %v8320 = vld [vmem:[%s451 + $0x8] sm:$0xff]
      %v8321 = vld [vmem:[%s451 + $0x18] sm:$0xff]
      %v8322 = vld [vmem:[%s451 + $0x20] sm:$0xff]
      %v8323 = vld [vmem:[%s451 + $0x30] sm:$0xff]
      %v8324 = vld [vmem:[%s451 + $0x38] sm:$0xff]
      %v8325 = vld [vmem:[%s451 + $0x48] sm:$0xff]
      %v8326 = vld [vmem:[%s451 + $0x50] sm:$0xff]
      %v8327 = vld [vmem:[%s451 + $0x60] sm:$0xff]
      %v8328 = vld [vmem:[%s451 + $0x68] sm:$0xff]
      %v8329 = vld [vmem:[%s451 + $0x78] sm:$0xff]
      %v8330 = vld [vmem:[%s451 + $0x80] sm:$0xff]
      %v8331 = vld [vmem:[%s451 + $0x90] sm:$0xff]
      %v8332 = vld [vmem:[%s451 + $0x98] sm:$0xff]
      %v8333 = vld [vmem:[%s451 + $0xa8] sm:$0xff]
      %v8334 = vld [vmem:[%s451 + $0xb0] sm:$0xff]
      %v8335 = vld [vmem:[%s451 + $0xc0] sm:$0xff]
      %v8336 = vld [vmem:[%s451 + $0xc8] sm:$0xff]
      %v8337 = vld [vmem:[%s451 + $0xd8] sm:$0xff]
      %v8338 = vld [vmem:[%s451 + $0xe0] sm:$0xff]
      %v8339 = vld [vmem:[%s451 + $0xf0] sm:$0xff]
      %v8340 = vld [vmem:[%s451 + $0xf8] sm:$0xff]
      %v8341 = vld [vmem:[%s451 + $0x108] sm:$0xff]
      %v8342 = vld [vmem:[%s451 + $0x110] sm:$0xff]
      %v8343 = vld [vmem:[%s451 + $0x120] sm:$0xff]
      %v8344 = vld [vmem:[%s451 + $0x128] sm:$0xff]
      %v8345 = vld [vmem:[%s451 + $0x138] sm:$0xff]
      %v8346 = vld [vmem:[%s451 + $0x140] sm:$0xff]
      %v8347 = vld [vmem:[%s451 + $0x150] sm:$0xff]
      %v8348 = vld [vmem:[%s451 + $0x158] sm:$0xff]
      %v8349 = vld [vmem:[%s451 + $0x168] sm:$0xff]
      %v8350 = vld [vmem:[%s451 + $0x170] sm:$0xff]
      %v8351 = vld [vmem:[%s451 + $0x1] sm:$0xff]
      %v8352 = vld [vmem:[%s451 + $0x9] sm:$0xff]
      %v8353 = vld [vmem:[%s451 + $0x19] sm:$0xff]
      %v8354 = vld [vmem:[%s451 + $0x21] sm:$0xff]
      %v8355 = vld [vmem:[%s451 + $0x31] sm:$0xff]
      %v8356 = vld [vmem:[%s451 + $0x39] sm:$0xff]
      %v8357 = vld [vmem:[%s451 + $0x49] sm:$0xff]
      %v8358 = vld [vmem:[%s451 + $0x51] sm:$0xff]
      %v8359 = vld [vmem:[%s451 + $0x61] sm:$0xff]
      %v8360 = vld [vmem:[%s451 + $0x69] sm:$0xff]
      %v8361 = vld [vmem:[%s451 + $0x79] sm:$0xff]
      %v8362 = vld [vmem:[%s451 + $0x81] sm:$0xff]
      %v8363 = vld [vmem:[%s451 + $0x91] sm:$0xff]
      %v8364 = vld [vmem:[%s451 + $0x99] sm:$0xff]
      %v8365 = vld [vmem:[%s451 + $0xa9] sm:$0xff]
      %v8366 = vld [vmem:[%s451 + $0xb1] sm:$0xff]
      %v8367 = vld [vmem:[%s451 + $0xc1] sm:$0xff]
      %v8368 = vld [vmem:[%s451 + $0xc9] sm:$0xff]
      %v8369 = vld [vmem:[%s451 + $0xd9] sm:$0xff]
      %v8370 = vld [vmem:[%s451 + $0xe1] sm:$0xff]
      %v8371 = vld [vmem:[%s451 + $0xf1] sm:$0xff]
      %v8372 = vld [vmem:[%s451 + $0xf9] sm:$0xff]
      %v8373 = vld [vmem:[%s451 + $0x109] sm:$0xff]
      %v8374 = vld [vmem:[%s451 + $0x111] sm:$0xff]
      %v8375 = vld [vmem:[%s451 + $0x121] sm:$0xff]
      %v8376 = vld [vmem:[%s451 + $0x129] sm:$0xff]
      %v8377 = vld [vmem:[%s451 + $0x139] sm:$0xff]
      %v8378 = vld [vmem:[%s451 + $0x141] sm:$0xff]
      %v8379 = vld [vmem:[%s451 + $0x151] sm:$0xff]
      %v8380 = vld [vmem:[%s451 + $0x159] sm:$0xff]
      %v8381 = vld [vmem:[%s451 + $0x169] sm:$0xff]
      %v8382 = vld [vmem:[%s451 + $0x171] sm:$0xff]
      %v8383 = vld [vmem:[%s451 + $0x2] sm:$0xff]
      %v8384 = vld [vmem:[%s451 + $0xa] sm:$0xff]
      %v8385 = vld [vmem:[%s451 + $0x1a] sm:$0xff]
      %v8386 = vld [vmem:[%s451 + $0x22] sm:$0xff]
      %v8387 = vld [vmem:[%s451 + $0x32] sm:$0xff]
      %v8388 = vld [vmem:[%s451 + $0x3a] sm:$0xff]
      %v8389 = vld [vmem:[%s451 + $0x4a] sm:$0xff]
      %v8390 = vld [vmem:[%s451 + $0x52] sm:$0xff]
      %v8391 = vld [vmem:[%s451 + $0x62] sm:$0xff]
      %v8392 = vld [vmem:[%s451 + $0x6a] sm:$0xff]
      %v8393 = vld [vmem:[%s451 + $0x7a] sm:$0xff]
      %v8394 = vld [vmem:[%s451 + $0x82] sm:$0xff]
      %v8395 = vld [vmem:[%s451 + $0x92] sm:$0xff]
      %v8396 = vld [vmem:[%s451 + $0x9a] sm:$0xff]
      %v8397 = vld [vmem:[%s451 + $0xaa] sm:$0xff]
      %v8398 = vld [vmem:[%s451 + $0xb2] sm:$0xff]
      %v8399 = vld [vmem:[%s451 + $0xc2] sm:$0xff]
      %v8400 = vld [vmem:[%s451 + $0xca] sm:$0xff]
      %v8401 = vld [vmem:[%s451 + $0xda] sm:$0xff]
      %v8402 = vld [vmem:[%s451 + $0xe2] sm:$0xff]
      %v8403 = vld [vmem:[%s451 + $0xf2] sm:$0xff]
      %v8404 = vld [vmem:[%s451 + $0xfa] sm:$0xff]
      %v8405 = vld [vmem:[%s451 + $0x10a] sm:$0xff]
      %v8406 = vld [vmem:[%s451 + $0x112] sm:$0xff]
      %v8407 = vld [vmem:[%s451 + $0x122] sm:$0xff]
      %v8408 = vld [vmem:[%s451 + $0x12a] sm:$0xff]
      %v8409 = vld [vmem:[%s451 + $0x13a] sm:$0xff]
      %v8410 = vld [vmem:[%s451 + $0x142] sm:$0xff]
      %v8411 = vld [vmem:[%s451 + $0x152] sm:$0xff]
      %v8412 = vld [vmem:[%s451 + $0x15a] sm:$0xff]
      %v8413 = vld [vmem:[%s451 + $0x16a] sm:$0xff]
      %v8414 = vld [vmem:[%s451 + $0x172] sm:$0xff]
      %v8415 = vld [vmem:[%s790] sm:$0xff]
      %v8416 = vld [vmem:[%s790 + $0x8] sm:$0xff]
      %v8417 = vld [vmem:[%s790 + $0x18] sm:$0xff]
      %v8418 = vld [vmem:[%s790 + $0x20] sm:$0xff]
      %v8419 = vld [vmem:[%s790 + $0x30] sm:$0xff]
      %v8420 = vld [vmem:[%s790 + $0x38] sm:$0xff]
      %v8421 = vld [vmem:[%s790 + $0x48] sm:$0xff]
      %v8422 = vld [vmem:[%s790 + $0x50] sm:$0xff]
      %v8423 = vld [vmem:[%s790 + $0x60] sm:$0xff]
      %v8424 = vld [vmem:[%s790 + $0x68] sm:$0xff]
      %v8425 = vld [vmem:[%s790 + $0x78] sm:$0xff]
      %v8426 = vld [vmem:[%s790 + $0x80] sm:$0xff]
      %v8427 = vld [vmem:[%s790 + $0x90] sm:$0xff]
      %v8428 = vld [vmem:[%s790 + $0x98] sm:$0xff]
      %v8429 = vld [vmem:[%s790 + $0xa8] sm:$0xff]
      %v8430 = vld [vmem:[%s790 + $0xb0] sm:$0xff]
      %v8431 = vld [vmem:[%s790 + $0xc0] sm:$0xff]
      %v8432 = vld [vmem:[%s790 + $0xc8] sm:$0xff]
      %v8433 = vld [vmem:[%s790 + $0xd8] sm:$0xff]
      %v8434 = vld [vmem:[%s790 + $0xe0] sm:$0xff]
      %v8435 = vld [vmem:[%s790 + $0xf0] sm:$0xff]
      %v8436 = vld [vmem:[%s790 + $0xf8] sm:$0xff]
      %v8437 = vld [vmem:[%s790 + $0x108] sm:$0xff]
      %v8438 = vld [vmem:[%s790 + $0x110] sm:$0xff]
      %v8439 = vld [vmem:[%s790 + $0x120] sm:$0xff]
      %v8440 = vld [vmem:[%s790 + $0x128] sm:$0xff]
      %v8441 = vld [vmem:[%s790 + $0x138] sm:$0xff]
      %v8442 = vld [vmem:[%s790 + $0x140] sm:$0xff]
      %v8443 = vld [vmem:[%s790 + $0x150] sm:$0xff]
      %v8444 = vld [vmem:[%s790 + $0x158] sm:$0xff]
      %v8445 = vld [vmem:[%s790 + $0x168] sm:$0xff]
      %v8446 = vld [vmem:[%s790 + $0x170] sm:$0xff]
      %v8447 = vld [vmem:[%s790 + $0x1] sm:$0xff]
      %v8448 = vld [vmem:[%s790 + $0x9] sm:$0xff]
      %v8449 = vld [vmem:[%s790 + $0x19] sm:$0xff]
      %v8450 = vld [vmem:[%s790 + $0x21] sm:$0xff]
      %v8451 = vld [vmem:[%s790 + $0x31] sm:$0xff]
      %v8452 = vld [vmem:[%s790 + $0x39] sm:$0xff]
      %v8453 = vld [vmem:[%s790 + $0x49] sm:$0xff]
      %v8454 = vld [vmem:[%s790 + $0x51] sm:$0xff]
      %v8455 = vld [vmem:[%s790 + $0x61] sm:$0xff]
      %v8456 = vld [vmem:[%s790 + $0x69] sm:$0xff]
      %v8457 = vld [vmem:[%s790 + $0x79] sm:$0xff]
      %v8458 = vld [vmem:[%s790 + $0x81] sm:$0xff]
      %v8459 = vld [vmem:[%s790 + $0x91] sm:$0xff]
      %v8460 = vld [vmem:[%s790 + $0x99] sm:$0xff]
      %v8461 = vld [vmem:[%s790 + $0xa9] sm:$0xff]
      %v8462 = vld [vmem:[%s790 + $0xb1] sm:$0xff]
      %v8463 = vld [vmem:[%s790 + $0xc1] sm:$0xff]
      %v8464 = vld [vmem:[%s790 + $0xc9] sm:$0xff]
      %v8465 = vld [vmem:[%s790 + $0xd9] sm:$0xff]
      %v8466 = vld [vmem:[%s790 + $0xe1] sm:$0xff]
      %v8467 = vld [vmem:[%s790 + $0xf1] sm:$0xff]
      %v8468 = vld [vmem:[%s790 + $0xf9] sm:$0xff]
      %v8469 = vld [vmem:[%s790 + $0x109] sm:$0xff]
      %v8470 = vld [vmem:[%s790 + $0x111] sm:$0xff]
      %v8471 = vld [vmem:[%s790 + $0x121] sm:$0xff]
      %v8472 = vld [vmem:[%s790 + $0x129] sm:$0xff]
      %v8473 = vld [vmem:[%s790 + $0x139] sm:$0xff]
      %v8474 = vld [vmem:[%s790 + $0x141] sm:$0xff]
      %v8475 = vld [vmem:[%s790 + $0x151] sm:$0xff]
      %v8476 = vld [vmem:[%s790 + $0x159] sm:$0xff]
      %v8477 = vld [vmem:[%s790 + $0x169] sm:$0xff]
      %v8478 = vld [vmem:[%s790 + $0x171] sm:$0xff]
      %v8479 = vld [vmem:[%s790 + $0x2] sm:$0xff]
      %v8480 = vld [vmem:[%s790 + $0xa] sm:$0xff]
      %v8481 = vld [vmem:[%s790 + $0x1a] sm:$0xff]
      %v8482 = vld [vmem:[%s790 + $0x22] sm:$0xff]
      %v8483 = vld [vmem:[%s790 + $0x32] sm:$0xff]
      %v8484 = vld [vmem:[%s790 + $0x3a] sm:$0xff]
      %v8485 = vld [vmem:[%s790 + $0x4a] sm:$0xff]
      %v8486 = vld [vmem:[%s790 + $0x52] sm:$0xff]
      %v8487 = vld [vmem:[%s790 + $0x62] sm:$0xff]
      %v8488 = vld [vmem:[%s790 + $0x6a] sm:$0xff]
      %v8489 = vld [vmem:[%s790 + $0x7a] sm:$0xff]
      %v8490 = vld [vmem:[%s790 + $0x82] sm:$0xff]
      %v8491 = vld [vmem:[%s790 + $0x92] sm:$0xff]
      %v8492 = vld [vmem:[%s790 + $0x9a] sm:$0xff]
      %v8493 = vld [vmem:[%s790 + $0xaa] sm:$0xff]
      %v8494 = vld [vmem:[%s790 + $0xb2] sm:$0xff]
      %v8495 = vld [vmem:[%s790 + $0xc2] sm:$0xff]
      %v8496 = vld [vmem:[%s790 + $0xca] sm:$0xff]
      %v8497 = vld [vmem:[%s790 + $0xda] sm:$0xff]
      %v8498 = vld [vmem:[%s790 + $0xe2] sm:$0xff]
      %v8499 = vld [vmem:[%s790 + $0xf2] sm:$0xff]
      %v8500 = vld [vmem:[%s790 + $0xfa] sm:$0xff]
      %v8501 = vld [vmem:[%s790 + $0x10a] sm:$0xff]
      %v8502 = vld [vmem:[%s790 + $0x112] sm:$0xff]
      %v8503 = vld [vmem:[%s790 + $0x122] sm:$0xff]
      %v8504 = vld [vmem:[%s790 + $0x12a] sm:$0xff]
      %v8505 = vld [vmem:[%s790 + $0x13a] sm:$0xff]
      %v8506 = vld [vmem:[%s790 + $0x142] sm:$0xff]
      %v8507 = vld [vmem:[%s790 + $0x152] sm:$0xff]
      %v8508 = vld [vmem:[%s790 + $0x15a] sm:$0xff]
      %v8509 = vld [vmem:[%s790 + $0x16a] sm:$0xff]
      %v8510 = vld [vmem:[%s790 + $0x172] sm:$0xff]
      %8543 = vrot.lane.b32.xlu0 %v8255, 10
      %v8544 = vpop.permute.xlu0 %8543
      %8545 = vrot.lane.b32.xlu0 %v8256, 10
      %v8546 = vpop.permute.xlu0 %8545
      %8547 = vrot.lane.b32.xlu0 %v8257, 10
      %v8548 = vpop.permute.xlu0 %8547
      %8549 = vrot.lane.b32.xlu0 %v8258, 10
      %v8550 = vpop.permute.xlu0 %8549
      %8551 = vrot.lane.b32.xlu0 %v8259, 10
      %v8552 = vpop.permute.xlu0 %8551
      %8553 = vrot.lane.b32.xlu0 %v8260, 10
      %v8554 = vpop.permute.xlu0 %8553
      %8555 = vrot.lane.b32.xlu0 %v8261, 10
      %v8556 = vpop.permute.xlu0 %8555
      %8557 = vrot.lane.b32.xlu0 %v8262, 10
      %v8558 = vpop.permute.xlu0 %8557
      %8559 = vrot.lane.b32.xlu0 %v8263, 10
      %v8560 = vpop.permute.xlu0 %8559
      %8561 = vrot.lane.b32.xlu0 %v8264, 10
      %v8562 = vpop.permute.xlu0 %8561
      %8563 = vrot.lane.b32.xlu0 %v8265, 10
      %v8564 = vpop.permute.xlu0 %8563
      %8565 = vrot.lane.b32.xlu0 %v8266, 10
      %v8566 = vpop.permute.xlu0 %8565
      %8567 = vrot.lane.b32.xlu0 %v8267, 10
      %v8568 = vpop.permute.xlu0 %8567
      %8569 = vrot.lane.b32.xlu0 %v8268, 10
      %v8570 = vpop.permute.xlu0 %8569
      %8571 = vrot.lane.b32.xlu0 %v8269, 10
      %v8572 = vpop.permute.xlu0 %8571
      %8573 = vrot.lane.b32.xlu0 %v8270, 10
      %v8574 = vpop.permute.xlu0 %8573
      %8575 = vrot.lane.b32.xlu0 %v8271, 10
      %v8576 = vpop.permute.xlu0 %8575
      %8577 = vrot.lane.b32.xlu0 %v8272, 10
      %v8578 = vpop.permute.xlu0 %8577
      %8579 = vrot.lane.b32.xlu0 %v8273, 10
      %v8580 = vpop.permute.xlu0 %8579
      %8581 = vrot.lane.b32.xlu0 %v8274, 10
      %v8582 = vpop.permute.xlu0 %8581
      %8583 = vrot.lane.b32.xlu0 %v8275, 10
      %v8584 = vpop.permute.xlu0 %8583
      %8585 = vrot.lane.b32.xlu0 %v8276, 10
      %v8586 = vpop.permute.xlu0 %8585
      %8587 = vrot.lane.b32.xlu0 %v8277, 10
      %v8588 = vpop.permute.xlu0 %8587
      %8589 = vrot.lane.b32.xlu0 %v8278, 10
      %v8590 = vpop.permute.xlu0 %8589
      %8591 = vrot.lane.b32.xlu0 %v8279, 10
      %v8592 = vpop.permute.xlu0 %8591
      %8593 = vrot.lane.b32.xlu0 %v8280, 10
      %v8594 = vpop.permute.xlu0 %8593
      %8595 = vrot.lane.b32.xlu0 %v8281, 10
      %v8596 = vpop.permute.xlu0 %8595
      %8597 = vrot.lane.b32.xlu0 %v8282, 10
      %v8598 = vpop.permute.xlu0 %8597
      %8599 = vrot.lane.b32.xlu0 %v8283, 10
      %v8600 = vpop.permute.xlu0 %8599
      %8601 = vrot.lane.b32.xlu0 %v8284, 10
      %v8602 = vpop.permute.xlu0 %8601
      %8603 = vrot.lane.b32.xlu0 %v8285, 10
      %v8604 = vpop.permute.xlu0 %8603
      %8605 = vrot.lane.b32.xlu0 %v8286, 10
      %v8606 = vpop.permute.xlu0 %8605
      %8671 = vrot.lane.b32.xlu0 %v8287, 20
      %v8672 = vpop.permute.xlu0 %8671
      %8673 = vrot.lane.b32.xlu0 %v8288, 20
      %v8674 = vpop.permute.xlu0 %8673
      %8675 = vrot.lane.b32.xlu0 %v8289, 20
      %v8676 = vpop.permute.xlu0 %8675
      %8677 = vrot.lane.b32.xlu0 %v8290, 20
      %v8678 = vpop.permute.xlu0 %8677
      %8679 = vrot.lane.b32.xlu0 %v8291, 20
      %v8680 = vpop.permute.xlu0 %8679
      %8681 = vrot.lane.b32.xlu0 %v8292, 20
      %v8682 = vpop.permute.xlu0 %8681
      %8683 = vrot.lane.b32.xlu0 %v8293, 20
      %v8684 = vpop.permute.xlu0 %8683
      %8685 = vrot.lane.b32.xlu0 %v8294, 20
      %v8686 = vpop.permute.xlu0 %8685
      %8687 = vrot.lane.b32.xlu0 %v8295, 20
      %v8688 = vpop.permute.xlu0 %8687
      %8689 = vrot.lane.b32.xlu0 %v8296, 20
      %v8690 = vpop.permute.xlu0 %8689
      %8691 = vrot.lane.b32.xlu0 %v8297, 20
      %v8692 = vpop.permute.xlu0 %8691
      %8693 = vrot.lane.b32.xlu0 %v8298, 20
      %v8694 = vpop.permute.xlu0 %8693
      %8695 = vrot.lane.b32.xlu0 %v8299, 20
      %v8696 = vpop.permute.xlu0 %8695
      %8697 = vrot.lane.b32.xlu0 %v8300, 20
      %v8698 = vpop.permute.xlu0 %8697
      %8699 = vrot.lane.b32.xlu0 %v8301, 20
      %v8700 = vpop.permute.xlu0 %8699
      %8701 = vrot.lane.b32.xlu0 %v8302, 20
      %v8702 = vpop.permute.xlu0 %8701
      %8703 = vrot.lane.b32.xlu0 %v8303, 20
      %v8704 = vpop.permute.xlu0 %8703
      %8705 = vrot.lane.b32.xlu0 %v8304, 20
      %v8706 = vpop.permute.xlu0 %8705
      %8707 = vrot.lane.b32.xlu0 %v8305, 20
      %v8708 = vpop.permute.xlu0 %8707
      %8709 = vrot.lane.b32.xlu0 %v8306, 20
      %v8710 = vpop.permute.xlu0 %8709
      %8711 = vrot.lane.b32.xlu0 %v8307, 20
      %v8712 = vpop.permute.xlu0 %8711
      %8713 = vrot.lane.b32.xlu0 %v8308, 20
      %v8714 = vpop.permute.xlu0 %8713
      %8715 = vrot.lane.b32.xlu0 %v8309, 20
      %v8716 = vpop.permute.xlu0 %8715
      %8717 = vrot.lane.b32.xlu0 %v8310, 20
      %v8718 = vpop.permute.xlu0 %8717
      %8719 = vrot.lane.b32.xlu0 %v8311, 20
      %v8720 = vpop.permute.xlu0 %8719
      %8721 = vrot.lane.b32.xlu0 %v8312, 20
      %v8722 = vpop.permute.xlu0 %8721
      %8723 = vrot.lane.b32.xlu0 %v8313, 20
      %v8724 = vpop.permute.xlu0 %8723
      %8725 = vrot.lane.b32.xlu0 %v8314, 20
      %v8726 = vpop.permute.xlu0 %8725
      %8727 = vrot.lane.b32.xlu0 %v8315, 20
      %v8728 = vpop.permute.xlu0 %8727
      %8729 = vrot.lane.b32.xlu0 %v8316, 20
      %v8730 = vpop.permute.xlu0 %8729
      %8731 = vrot.lane.b32.xlu0 %v8317, 20
      %v8732 = vpop.permute.xlu0 %8731
      %8733 = vrot.lane.b32.xlu0 %v8318, 20
      %v8734 = vpop.permute.xlu0 %8733
      %8799 = vrot.lane.b32.xlu0 %v8319, 30
      %v8800 = vpop.permute.xlu0 %8799
      %8801 = vrot.lane.b32.xlu0 %v8320, 30
      %v8802 = vpop.permute.xlu0 %8801
      %8803 = vrot.lane.b32.xlu0 %v8321, 30
      %v8804 = vpop.permute.xlu0 %8803
      %8805 = vrot.lane.b32.xlu0 %v8322, 30
      %v8806 = vpop.permute.xlu0 %8805
      %8807 = vrot.lane.b32.xlu0 %v8323, 30
      %v8808 = vpop.permute.xlu0 %8807
      %8809 = vrot.lane.b32.xlu0 %v8324, 30
      %v8810 = vpop.permute.xlu0 %8809
      %8811 = vrot.lane.b32.xlu0 %v8325, 30
      %v8812 = vpop.permute.xlu0 %8811
      %8813 = vrot.lane.b32.xlu0 %v8326, 30
      %v8814 = vpop.permute.xlu0 %8813
      %8815 = vrot.lane.b32.xlu0 %v8327, 30
      %v8816 = vpop.permute.xlu0 %8815
      %8817 = vrot.lane.b32.xlu0 %v8328, 30
      %v8818 = vpop.permute.xlu0 %8817
      %8819 = vrot.lane.b32.xlu0 %v8329, 30
      %v8820 = vpop.permute.xlu0 %8819
      %8821 = vrot.lane.b32.xlu0 %v8330, 30
      %v8822 = vpop.permute.xlu0 %8821
      %8823 = vrot.lane.b32.xlu0 %v8331, 30
      %v8824 = vpop.permute.xlu0 %8823
      %8825 = vrot.lane.b32.xlu0 %v8332, 30
      %v8826 = vpop.permute.xlu0 %8825
      %8827 = vrot.lane.b32.xlu0 %v8333, 30
      %v8828 = vpop.permute.xlu0 %8827
      %8829 = vrot.lane.b32.xlu0 %v8334, 30
      %v8830 = vpop.permute.xlu0 %8829
      %8831 = vrot.lane.b32.xlu0 %v8335, 30
      %v8832 = vpop.permute.xlu0 %8831
      %8833 = vrot.lane.b32.xlu0 %v8336, 30
      %v8834 = vpop.permute.xlu0 %8833
      %8835 = vrot.lane.b32.xlu0 %v8337, 30
      %v8836 = vpop.permute.xlu0 %8835
      %8837 = vrot.lane.b32.xlu0 %v8338, 30
      %v8838 = vpop.permute.xlu0 %8837
      %8839 = vrot.lane.b32.xlu0 %v8339, 30
      %v8840 = vpop.permute.xlu0 %8839
      %8841 = vrot.lane.b32.xlu0 %v8340, 30
      %v8842 = vpop.permute.xlu0 %8841
      %8843 = vrot.lane.b32.xlu0 %v8341, 30
      %v8844 = vpop.permute.xlu0 %8843
      %8845 = vrot.lane.b32.xlu0 %v8342, 30
      %v8846 = vpop.permute.xlu0 %8845
      %8847 = vrot.lane.b32.xlu0 %v8343, 30
      %v8848 = vpop.permute.xlu0 %8847
      %8849 = vrot.lane.b32.xlu0 %v8344, 30
      %v8850 = vpop.permute.xlu0 %8849
      %8851 = vrot.lane.b32.xlu0 %v8345, 30
      %v8852 = vpop.permute.xlu0 %8851
      %8853 = vrot.lane.b32.xlu0 %v8346, 30
      %v8854 = vpop.permute.xlu0 %8853
      %8855 = vrot.lane.b32.xlu0 %v8347, 30
      %v8856 = vpop.permute.xlu0 %8855
      %8857 = vrot.lane.b32.xlu0 %v8348, 30
      %v8858 = vpop.permute.xlu0 %8857
      %8859 = vrot.lane.b32.xlu0 %v8349, 30
      %v8860 = vpop.permute.xlu0 %8859
      %8861 = vrot.lane.b32.xlu0 %v8350, 30
      %v8862 = vpop.permute.xlu0 %8861
      %8927 = vrot.lane.b32.xlu0 %v8351, 40
      %v8928 = vpop.permute.xlu0 %8927
      %8929 = vrot.lane.b32.xlu0 %v8352, 40
      %v8930 = vpop.permute.xlu0 %8929
      %8931 = vrot.lane.b32.xlu0 %v8353, 40
      %v8932 = vpop.permute.xlu0 %8931
      %8933 = vrot.lane.b32.xlu0 %v8354, 40
      %v8934 = vpop.permute.xlu0 %8933
      %8935 = vrot.lane.b32.xlu0 %v8355, 40
      %v8936 = vpop.permute.xlu0 %8935
      %8937 = vrot.lane.b32.xlu0 %v8356, 40
      %v8938 = vpop.permute.xlu0 %8937
      %8939 = vrot.lane.b32.xlu0 %v8357, 40
      %v8940 = vpop.permute.xlu0 %8939
      %8941 = vrot.lane.b32.xlu0 %v8358, 40
      %v8942 = vpop.permute.xlu0 %8941
      %8943 = vrot.lane.b32.xlu0 %v8359, 40
      %v8944 = vpop.permute.xlu0 %8943
      %8945 = vrot.lane.b32.xlu0 %v8360, 40
      %v8946 = vpop.permute.xlu0 %8945
      %8947 = vrot.lane.b32.xlu0 %v8361, 40
      %v8948 = vpop.permute.xlu0 %8947
      %8949 = vrot.lane.b32.xlu0 %v8362, 40
      %v8950 = vpop.permute.xlu0 %8949
      %8951 = vrot.lane.b32.xlu0 %v8363, 40
      %v8952 = vpop.permute.xlu0 %8951
      %8953 = vrot.lane.b32.xlu0 %v8364, 40
      %v8954 = vpop.permute.xlu0 %8953
      %8955 = vrot.lane.b32.xlu0 %v8365, 40
      %v8956 = vpop.permute.xlu0 %8955
      %8957 = vrot.lane.b32.xlu0 %v8366, 40
      %v8958 = vpop.permute.xlu0 %8957
      %8959 = vrot.lane.b32.xlu0 %v8367, 40
      %v8960 = vpop.permute.xlu0 %8959
      %8961 = vrot.lane.b32.xlu0 %v8368, 40
      %v8962 = vpop.permute.xlu0 %8961
      %8963 = vrot.lane.b32.xlu0 %v8369, 40
      %v8964 = vpop.permute.xlu0 %8963
      %8965 = vrot.lane.b32.xlu0 %v8370, 40
      %v8966 = vpop.permute.xlu0 %8965
      %8967 = vrot.lane.b32.xlu0 %v8371, 40
      %v8968 = vpop.permute.xlu0 %8967
      %8969 = vrot.lane.b32.xlu0 %v8372, 40
      %v8970 = vpop.permute.xlu0 %8969
      %8971 = vrot.lane.b32.xlu0 %v8373, 40
      %v8972 = vpop.permute.xlu0 %8971
      %8973 = vrot.lane.b32.xlu0 %v8374, 40
      %v8974 = vpop.permute.xlu0 %8973
      %8975 = vrot.lane.b32.xlu0 %v8375, 40
      %v8976 = vpop.permute.xlu0 %8975
      %8977 = vrot.lane.b32.xlu0 %v8376, 40
      %v8978 = vpop.permute.xlu0 %8977
      %8979 = vrot.lane.b32.xlu0 %v8377, 40
      %v8980 = vpop.permute.xlu0 %8979
      %8981 = vrot.lane.b32.xlu0 %v8378, 40
      %v8982 = vpop.permute.xlu0 %8981
      %8983 = vrot.lane.b32.xlu0 %v8379, 40
      %v8984 = vpop.permute.xlu0 %8983
      %8985 = vrot.lane.b32.xlu0 %v8380, 40
      %v8986 = vpop.permute.xlu0 %8985
      %8987 = vrot.lane.b32.xlu0 %v8381, 40
      %v8988 = vpop.permute.xlu0 %8987
      %8989 = vrot.lane.b32.xlu0 %v8382, 40
      %v8990 = vpop.permute.xlu0 %8989
      %9055 = vrot.lane.b32.xlu0 %v8383, 50
      %v9056 = vpop.permute.xlu0 %9055
      %9057 = vrot.lane.b32.xlu0 %v8384, 50
      %v9058 = vpop.permute.xlu0 %9057
      %9059 = vrot.lane.b32.xlu0 %v8385, 50
      %v9060 = vpop.permute.xlu0 %9059
      %9061 = vrot.lane.b32.xlu0 %v8386, 50
      %v9062 = vpop.permute.xlu0 %9061
      %9063 = vrot.lane.b32.xlu0 %v8387, 50
      %v9064 = vpop.permute.xlu0 %9063
      %9065 = vrot.lane.b32.xlu0 %v8388, 50
      %v9066 = vpop.permute.xlu0 %9065
      %9067 = vrot.lane.b32.xlu0 %v8389, 50
      %v9068 = vpop.permute.xlu0 %9067
      %9069 = vrot.lane.b32.xlu0 %v8390, 50
      %v9070 = vpop.permute.xlu0 %9069
      %9071 = vrot.lane.b32.xlu0 %v8391, 50
      %v9072 = vpop.permute.xlu0 %9071
      %9073 = vrot.lane.b32.xlu0 %v8392, 50
      %v9074 = vpop.permute.xlu0 %9073
      %9075 = vrot.lane.b32.xlu0 %v8393, 50
      %v9076 = vpop.permute.xlu0 %9075
      %9077 = vrot.lane.b32.xlu0 %v8394, 50
      %v9078 = vpop.permute.xlu0 %9077
      %9079 = vrot.lane.b32.xlu0 %v8395, 50
      %v9080 = vpop.permute.xlu0 %9079
      %9081 = vrot.lane.b32.xlu0 %v8396, 50
      %v9082 = vpop.permute.xlu0 %9081
      %9083 = vrot.lane.b32.xlu0 %v8397, 50
      %v9084 = vpop.permute.xlu0 %9083
      %9085 = vrot.lane.b32.xlu0 %v8398, 50
      %v9086 = vpop.permute.xlu0 %9085
      %9087 = vrot.lane.b32.xlu0 %v8399, 50
      %v9088 = vpop.permute.xlu0 %9087
      %9089 = vrot.lane.b32.xlu0 %v8400, 50
      %v9090 = vpop.permute.xlu0 %9089
      %9091 = vrot.lane.b32.xlu0 %v8401, 50
      %v9092 = vpop.permute.xlu0 %9091
      %9093 = vrot.lane.b32.xlu0 %v8402, 50
      %v9094 = vpop.permute.xlu0 %9093
      %9095 = vrot.lane.b32.xlu0 %v8403, 50
      %v9096 = vpop.permute.xlu0 %9095
      %9097 = vrot.lane.b32.xlu0 %v8404, 50
      %v9098 = vpop.permute.xlu0 %9097
      %9099 = vrot.lane.b32.xlu0 %v8405, 50
      %v9100 = vpop.permute.xlu0 %9099
      %9101 = vrot.lane.b32.xlu0 %v8406, 50
      %v9102 = vpop.permute.xlu0 %9101
      %9103 = vrot.lane.b32.xlu0 %v8407, 50
      %v9104 = vpop.permute.xlu0 %9103
      %9105 = vrot.lane.b32.xlu0 %v8408, 50
      %v9106 = vpop.permute.xlu0 %9105
      %9107 = vrot.lane.b32.xlu0 %v8409, 50
      %v9108 = vpop.permute.xlu0 %9107
      %9109 = vrot.lane.b32.xlu0 %v8410, 50
      %v9110 = vpop.permute.xlu0 %9109
      %9111 = vrot.lane.b32.xlu0 %v8411, 50
      %v9112 = vpop.permute.xlu0 %9111
      %9113 = vrot.lane.b32.xlu0 %v8412, 50
      %v9114 = vpop.permute.xlu0 %9113
      %9115 = vrot.lane.b32.xlu0 %v8413, 50
      %v9116 = vpop.permute.xlu0 %9115
      %9117 = vrot.lane.b32.xlu0 %v8414, 50
      %v9118 = vpop.permute.xlu0 %9117
      %9183 = vrot.lane.b32.xlu0 %v8415, 60
      %v9184 = vpop.permute.xlu0 %9183
      %9185 = vrot.lane.b32.xlu0 %v8416, 60
      %v9186 = vpop.permute.xlu0 %9185
      %9187 = vrot.lane.b32.xlu0 %v8417, 60
      %v9188 = vpop.permute.xlu0 %9187
      %9189 = vrot.lane.b32.xlu0 %v8418, 60
      %v9190 = vpop.permute.xlu0 %9189
      %9191 = vrot.lane.b32.xlu0 %v8419, 60
      %v9192 = vpop.permute.xlu0 %9191
      %9193 = vrot.lane.b32.xlu0 %v8420, 60
      %v9194 = vpop.permute.xlu0 %9193
      %9195 = vrot.lane.b32.xlu0 %v8421, 60
      %v9196 = vpop.permute.xlu0 %9195
      %9197 = vrot.lane.b32.xlu0 %v8422, 60
      %v9198 = vpop.permute.xlu0 %9197
      %9199 = vrot.lane.b32.xlu0 %v8423, 60
      %v9200 = vpop.permute.xlu0 %9199
      %9201 = vrot.lane.b32.xlu0 %v8424, 60
      %v9202 = vpop.permute.xlu0 %9201
      %9203 = vrot.lane.b32.xlu0 %v8425, 60
      %v9204 = vpop.permute.xlu0 %9203
      %9205 = vrot.lane.b32.xlu0 %v8426, 60
      %v9206 = vpop.permute.xlu0 %9205
      %9207 = vrot.lane.b32.xlu0 %v8427, 60
      %v9208 = vpop.permute.xlu0 %9207
      %9209 = vrot.lane.b32.xlu0 %v8428, 60
      %v9210 = vpop.permute.xlu0 %9209
      %9211 = vrot.lane.b32.xlu0 %v8429, 60
      %v9212 = vpop.permute.xlu0 %9211
      %9213 = vrot.lane.b32.xlu0 %v8430, 60
      %v9214 = vpop.permute.xlu0 %9213
      %9215 = vrot.lane.b32.xlu0 %v8431, 60
      %v9216 = vpop.permute.xlu0 %9215
      %9217 = vrot.lane.b32.xlu0 %v8432, 60
      %v9218 = vpop.permute.xlu0 %9217
      %9219 = vrot.lane.b32.xlu0 %v8433, 60
      %v9220 = vpop.permute.xlu0 %9219
      %9221 = vrot.lane.b32.xlu0 %v8434, 60
      %v9222 = vpop.permute.xlu0 %9221
      %9223 = vrot.lane.b32.xlu0 %v8435, 60
      %v9224 = vpop.permute.xlu0 %9223
      %9225 = vrot.lane.b32.xlu0 %v8436, 60
      %v9226 = vpop.permute.xlu0 %9225
      %9227 = vrot.lane.b32.xlu0 %v8437, 60
      %v9228 = vpop.permute.xlu0 %9227
      %9229 = vrot.lane.b32.xlu0 %v8438, 60
      %v9230 = vpop.permute.xlu0 %9229
      %9231 = vrot.lane.b32.xlu0 %v8439, 60
      %v9232 = vpop.permute.xlu0 %9231
      %9233 = vrot.lane.b32.xlu0 %v8440, 60
      %v9234 = vpop.permute.xlu0 %9233
      %9235 = vrot.lane.b32.xlu0 %v8441, 60
      %v9236 = vpop.permute.xlu0 %9235
      %9237 = vrot.lane.b32.xlu0 %v8442, 60
      %v9238 = vpop.permute.xlu0 %9237
      %9239 = vrot.lane.b32.xlu0 %v8443, 60
      %v9240 = vpop.permute.xlu0 %9239
      %9241 = vrot.lane.b32.xlu0 %v8444, 60
      %v9242 = vpop.permute.xlu0 %9241
      %9243 = vrot.lane.b32.xlu0 %v8445, 60
      %v9244 = vpop.permute.xlu0 %9243
      %9245 = vrot.lane.b32.xlu0 %v8446, 60
      %v9246 = vpop.permute.xlu0 %9245
      %9311 = vrot.lane.b32.xlu0 %v8447, 70
      %v9312 = vpop.permute.xlu0 %9311
      %9313 = vrot.lane.b32.xlu0 %v8448, 70
      %v9314 = vpop.permute.xlu0 %9313
      %9315 = vrot.lane.b32.xlu0 %v8449, 70
      %v9316 = vpop.permute.xlu0 %9315
      %9317 = vrot.lane.b32.xlu0 %v8450, 70
      %v9318 = vpop.permute.xlu0 %9317
      %9319 = vrot.lane.b32.xlu0 %v8451, 70
      %v9320 = vpop.permute.xlu0 %9319
      %9321 = vrot.lane.b32.xlu0 %v8452, 70
      %v9322 = vpop.permute.xlu0 %9321
      %9323 = vrot.lane.b32.xlu0 %v8453, 70
      %v9324 = vpop.permute.xlu0 %9323
      %9325 = vrot.lane.b32.xlu0 %v8454, 70
      %v9326 = vpop.permute.xlu0 %9325
      %9327 = vrot.lane.b32.xlu0 %v8455, 70
      %v9328 = vpop.permute.xlu0 %9327
      %9329 = vrot.lane.b32.xlu0 %v8456, 70
      %v9330 = vpop.permute.xlu0 %9329
      %9331 = vrot.lane.b32.xlu0 %v8457, 70
      %v9332 = vpop.permute.xlu0 %9331
      %9333 = vrot.lane.b32.xlu0 %v8458, 70
      %v9334 = vpop.permute.xlu0 %9333
      %9335 = vrot.lane.b32.xlu0 %v8459, 70
      %v9336 = vpop.permute.xlu0 %9335
      %9337 = vrot.lane.b32.xlu0 %v8460, 70
      %v9338 = vpop.permute.xlu0 %9337
      %9339 = vrot.lane.b32.xlu0 %v8461, 70
      %v9340 = vpop.permute.xlu0 %9339
      %9341 = vrot.lane.b32.xlu0 %v8462, 70
      %v9342 = vpop.permute.xlu0 %9341
      %9343 = vrot.lane.b32.xlu0 %v8463, 70
      %v9344 = vpop.permute.xlu0 %9343
      %9345 = vrot.lane.b32.xlu0 %v8464, 70
      %v9346 = vpop.permute.xlu0 %9345
      %9347 = vrot.lane.b32.xlu0 %v8465, 70
      %v9348 = vpop.permute.xlu0 %9347
      %9349 = vrot.lane.b32.xlu0 %v8466, 70
      %v9350 = vpop.permute.xlu0 %9349
      %9351 = vrot.lane.b32.xlu0 %v8467, 70
      %v9352 = vpop.permute.xlu0 %9351
      %9353 = vrot.lane.b32.xlu0 %v8468, 70
      %v9354 = vpop.permute.xlu0 %9353
      %9355 = vrot.lane.b32.xlu0 %v8469, 70
      %v9356 = vpop.permute.xlu0 %9355
      %9357 = vrot.lane.b32.xlu0 %v8470, 70
      %v9358 = vpop.permute.xlu0 %9357
      %9359 = vrot.lane.b32.xlu0 %v8471, 70
      %v9360 = vpop.permute.xlu0 %9359
      %9361 = vrot.lane.b32.xlu0 %v8472, 70
      %v9362 = vpop.permute.xlu0 %9361
      %9363 = vrot.lane.b32.xlu0 %v8473, 70
      %v9364 = vpop.permute.xlu0 %9363
      %9365 = vrot.lane.b32.xlu0 %v8474, 70
      %v9366 = vpop.permute.xlu0 %9365
      %9367 = vrot.lane.b32.xlu0 %v8475, 70
      %v9368 = vpop.permute.xlu0 %9367
      %9369 = vrot.lane.b32.xlu0 %v8476, 70
      %v9370 = vpop.permute.xlu0 %9369
      %9371 = vrot.lane.b32.xlu0 %v8477, 70
      %v9372 = vpop.permute.xlu0 %9371
      %9373 = vrot.lane.b32.xlu0 %v8478, 70
      %v9374 = vpop.permute.xlu0 %9373
      %9439 = vrot.lane.b32.xlu0 %v8479, 80
      %v9440 = vpop.permute.xlu0 %9439
      %9441 = vrot.lane.b32.xlu0 %v8480, 80
      %v9442 = vpop.permute.xlu0 %9441
      %9443 = vrot.lane.b32.xlu0 %v8481, 80
      %v9444 = vpop.permute.xlu0 %9443
      %9445 = vrot.lane.b32.xlu0 %v8482, 80
      %v9446 = vpop.permute.xlu0 %9445
      %9447 = vrot.lane.b32.xlu0 %v8483, 80
      %v9448 = vpop.permute.xlu0 %9447
      %9449 = vrot.lane.b32.xlu0 %v8484, 80
      %v9450 = vpop.permute.xlu0 %9449
      %9451 = vrot.lane.b32.xlu0 %v8485, 80
      %v9452 = vpop.permute.xlu0 %9451
      %9453 = vrot.lane.b32.xlu0 %v8486, 80
      %v9454 = vpop.permute.xlu0 %9453
      %9455 = vrot.lane.b32.xlu0 %v8487, 80
      %v9456 = vpop.permute.xlu0 %9455
      %9457 = vrot.lane.b32.xlu0 %v8488, 80
      %v9458 = vpop.permute.xlu0 %9457
      %9459 = vrot.lane.b32.xlu0 %v8489, 80
      %v9460 = vpop.permute.xlu0 %9459
      %9461 = vrot.lane.b32.xlu0 %v8490, 80
      %v9462 = vpop.permute.xlu0 %9461
      %9463 = vrot.lane.b32.xlu0 %v8491, 80
      %v9464 = vpop.permute.xlu0 %9463
      %9465 = vrot.lane.b32.xlu0 %v8492, 80
      %v9466 = vpop.permute.xlu0 %9465
      %9467 = vrot.lane.b32.xlu0 %v8493, 80
      %v9468 = vpop.permute.xlu0 %9467
      %9469 = vrot.lane.b32.xlu0 %v8494, 80
      %v9470 = vpop.permute.xlu0 %9469
      %9471 = vrot.lane.b32.xlu0 %v8495, 80
      %v9472 = vpop.permute.xlu0 %9471
      %9473 = vrot.lane.b32.xlu0 %v8496, 80
      %v9474 = vpop.permute.xlu0 %9473
      %9475 = vrot.lane.b32.xlu0 %v8497, 80
      %v9476 = vpop.permute.xlu0 %9475
      %9477 = vrot.lane.b32.xlu0 %v8498, 80
      %v9478 = vpop.permute.xlu0 %9477
      %9479 = vrot.lane.b32.xlu0 %v8499, 80
      %v9480 = vpop.permute.xlu0 %9479
      %9481 = vrot.lane.b32.xlu0 %v8500, 80
      %v9482 = vpop.permute.xlu0 %9481
      %9483 = vrot.lane.b32.xlu0 %v8501, 80
      %v9484 = vpop.permute.xlu0 %9483
      %9485 = vrot.lane.b32.xlu0 %v8502, 80
      %v9486 = vpop.permute.xlu0 %9485
      %9487 = vrot.lane.b32.xlu0 %v8503, 80
      %v9488 = vpop.permute.xlu0 %9487
      %9489 = vrot.lane.b32.xlu0 %v8504, 80
      %v9490 = vpop.permute.xlu0 %9489
      %9491 = vrot.lane.b32.xlu0 %v8505, 80
      %v9492 = vpop.permute.xlu0 %9491
      %9493 = vrot.lane.b32.xlu0 %v8506, 80
      %v9494 = vpop.permute.xlu0 %9493
      %9495 = vrot.lane.b32.xlu0 %v8507, 80
      %v9496 = vpop.permute.xlu0 %9495
      %9497 = vrot.lane.b32.xlu0 %v8508, 80
      %v9498 = vpop.permute.xlu0 %9497
      %9499 = vrot.lane.b32.xlu0 %v8509, 80
      %v9500 = vpop.permute.xlu0 %9499
      %9501 = vrot.lane.b32.xlu0 %v8510, 80
      %v9502 = vpop.permute.xlu0 %9501
      %v9535 = vsel %vm442, %v8223, %v8544
      %v9536 = vsel %vm442, %v8224, %v8546
      %v9537 = vsel %vm442, %v8225, %v8548
      %v9538 = vsel %vm442, %v8226, %v8550
      %v9539 = vsel %vm442, %v8227, %v8552
      %v9540 = vsel %vm442, %v8228, %v8554
      %v9541 = vsel %vm442, %v8229, %v8556
      %v9542 = vsel %vm442, %v8230, %v8558
      %v9543 = vsel %vm442, %v8231, %v8560
      %v9544 = vsel %vm442, %v8232, %v8562
      %v9545 = vsel %vm442, %v8233, %v8564
      %v9546 = vsel %vm442, %v8234, %v8566
      %v9547 = vsel %vm442, %v8235, %v8568
      %v9548 = vsel %vm442, %v8236, %v8570
      %v9549 = vsel %vm442, %v8237, %v8572
      %v9550 = vsel %vm442, %v8238, %v8574
      %v9551 = vsel %vm442, %v8239, %v8576
      %v9552 = vsel %vm442, %v8240, %v8578
      %v9553 = vsel %vm442, %v8241, %v8580
      %v9554 = vsel %vm442, %v8242, %v8582
      %v9555 = vsel %vm442, %v8243, %v8584
      %v9556 = vsel %vm442, %v8244, %v8586
      %v9557 = vsel %vm442, %v8245, %v8588
      %v9558 = vsel %vm442, %v8246, %v8590
      %v9559 = vsel %vm442, %v8247, %v8592
      %v9560 = vsel %vm442, %v8248, %v8594
      %v9561 = vsel %vm442, %v8249, %v8596
      %v9562 = vsel %vm442, %v8250, %v8598
      %v9563 = vsel %vm442, %v8251, %v8600
      %v9564 = vsel %vm442, %v8252, %v8602
      %v9565 = vsel %vm442, %v8253, %v8604
      %v9566 = vsel %vm442, %v8254, %v8606
      %v9567 = vsel %vm3853, %v9535, %v8672
      %v9568 = vsel %vm3853, %v9536, %v8674
      %v9569 = vsel %vm3853, %v9537, %v8676
      %v9570 = vsel %vm3853, %v9538, %v8678
      %v9571 = vsel %vm3853, %v9539, %v8680
      %v9572 = vsel %vm3853, %v9540, %v8682
      %v9573 = vsel %vm3853, %v9541, %v8684
      %v9574 = vsel %vm3853, %v9542, %v8686
      %v9575 = vsel %vm3853, %v9543, %v8688
      %v9576 = vsel %vm3853, %v9544, %v8690
      %v9577 = vsel %vm3853, %v9545, %v8692
      %v9578 = vsel %vm3853, %v9546, %v8694
      %v9579 = vsel %vm3853, %v9547, %v8696
      %v9580 = vsel %vm3853, %v9548, %v8698
      %v9581 = vsel %vm3853, %v9549, %v8700
      %v9582 = vsel %vm3853, %v9550, %v8702
      %v9583 = vsel %vm3853, %v9551, %v8704
      %v9584 = vsel %vm3853, %v9552, %v8706
      %v9585 = vsel %vm3853, %v9553, %v8708
      %v9586 = vsel %vm3853, %v9554, %v8710
      %v9587 = vsel %vm3853, %v9555, %v8712
      %v9588 = vsel %vm3853, %v9556, %v8714
      %v9589 = vsel %vm3853, %v9557, %v8716
      %v9590 = vsel %vm3853, %v9558, %v8718
      %v9591 = vsel %vm3853, %v9559, %v8720
      %v9592 = vsel %vm3853, %v9560, %v8722
      %v9593 = vsel %vm3853, %v9561, %v8724
      %v9594 = vsel %vm3853, %v9562, %v8726
      %v9595 = vsel %vm3853, %v9563, %v8728
      %v9596 = vsel %vm3853, %v9564, %v8730
      %v9597 = vsel %vm3853, %v9565, %v8732
      %v9598 = vsel %vm3853, %v9566, %v8734
      %v9599 = vsel %vm2042, %v9567, %v8800
      %v9600 = vsel %vm2042, %v9568, %v8802
      %v9601 = vsel %vm2042, %v9569, %v8804
      %v9602 = vsel %vm2042, %v9570, %v8806
      %v9603 = vsel %vm2042, %v9571, %v8808
      %v9604 = vsel %vm2042, %v9572, %v8810
      %v9605 = vsel %vm2042, %v9573, %v8812
      %v9606 = vsel %vm2042, %v9574, %v8814
      %v9607 = vsel %vm2042, %v9575, %v8816
      %v9608 = vsel %vm2042, %v9576, %v8818
      %v9609 = vsel %vm2042, %v9577, %v8820
      %v9610 = vsel %vm2042, %v9578, %v8822
      %v9611 = vsel %vm2042, %v9579, %v8824
      %v9612 = vsel %vm2042, %v9580, %v8826
      %v9613 = vsel %vm2042, %v9581, %v8828
      %v9614 = vsel %vm2042, %v9582, %v8830
      %v9615 = vsel %vm2042, %v9583, %v8832
      %v9616 = vsel %vm2042, %v9584, %v8834
      %v9617 = vsel %vm2042, %v9585, %v8836
      %v9618 = vsel %vm2042, %v9586, %v8838
      %v9619 = vsel %vm2042, %v9587, %v8840
      %v9620 = vsel %vm2042, %v9588, %v8842
      %v9621 = vsel %vm2042, %v9589, %v8844
      %v9622 = vsel %vm2042, %v9590, %v8846
      %v9623 = vsel %vm2042, %v9591, %v8848
      %v9624 = vsel %vm2042, %v9592, %v8850
      %v9625 = vsel %vm2042, %v9593, %v8852
      %v9626 = vsel %vm2042, %v9594, %v8854
      %v9627 = vsel %vm2042, %v9595, %v8856
      %v9628 = vsel %vm2042, %v9596, %v8858
      %v9629 = vsel %vm2042, %v9597, %v8860
      %v9630 = vsel %vm2042, %v9598, %v8862
      %v9631 = vsel %vm3918, %v9599, %v8928
      %v9632 = vsel %vm3918, %v9600, %v8930
      %v9633 = vsel %vm3918, %v9601, %v8932
      %v9634 = vsel %vm3918, %v9602, %v8934
      %v9635 = vsel %vm3918, %v9603, %v8936
      %v9636 = vsel %vm3918, %v9604, %v8938
      %v9637 = vsel %vm3918, %v9605, %v8940
      %v9638 = vsel %vm3918, %v9606, %v8942
      %v9639 = vsel %vm3918, %v9607, %v8944
      %v9640 = vsel %vm3918, %v9608, %v8946
      %v9641 = vsel %vm3918, %v9609, %v8948
      %v9642 = vsel %vm3918, %v9610, %v8950
      %v9643 = vsel %vm3918, %v9611, %v8952
      %v9644 = vsel %vm3918, %v9612, %v8954
      %v9645 = vsel %vm3918, %v9613, %v8956
      %v9646 = vsel %vm3918, %v9614, %v8958
      %v9647 = vsel %vm3918, %v9615, %v8960
      %v9648 = vsel %vm3918, %v9616, %v8962
      %v9649 = vsel %vm3918, %v9617, %v8964
      %v9650 = vsel %vm3918, %v9618, %v8966
      %v9651 = vsel %vm3918, %v9619, %v8968
      %v9652 = vsel %vm3918, %v9620, %v8970
      %v9653 = vsel %vm3918, %v9621, %v8972
      %v9654 = vsel %vm3918, %v9622, %v8974
      %v9655 = vsel %vm3918, %v9623, %v8976
      %v9656 = vsel %vm3918, %v9624, %v8978
      %v9657 = vsel %vm3918, %v9625, %v8980
      %v9658 = vsel %vm3918, %v9626, %v8982
      %v9659 = vsel %vm3918, %v9627, %v8984
      %v9660 = vsel %vm3918, %v9628, %v8986
      %v9661 = vsel %vm3918, %v9629, %v8988
      %v9662 = vsel %vm3918, %v9630, %v8990
      %v9663 = vsel %vm3951, %v9631, %v9056
      %v9664 = vsel %vm3951, %v9632, %v9058
      %v9665 = vsel %vm3951, %v9633, %v9060
      %v9666 = vsel %vm3951, %v9634, %v9062
      %v9667 = vsel %vm3951, %v9635, %v9064
      %v9668 = vsel %vm3951, %v9636, %v9066
      %v9669 = vsel %vm3951, %v9637, %v9068
      %v9670 = vsel %vm3951, %v9638, %v9070
      %v9671 = vsel %vm3951, %v9639, %v9072
      %v9672 = vsel %vm3951, %v9640, %v9074
      %v9673 = vsel %vm3951, %v9641, %v9076
      %v9674 = vsel %vm3951, %v9642, %v9078
      %v9675 = vsel %vm3951, %v9643, %v9080
      %v9676 = vsel %vm3951, %v9644, %v9082
      %v9677 = vsel %vm3951, %v9645, %v9084
      %v9678 = vsel %vm3951, %v9646, %v9086
      %v9679 = vsel %vm3951, %v9647, %v9088
      %v9680 = vsel %vm3951, %v9648, %v9090
      %v9681 = vsel %vm3951, %v9649, %v9092
      %v9682 = vsel %vm3951, %v9650, %v9094
      %v9683 = vsel %vm3951, %v9651, %v9096
      %v9684 = vsel %vm3951, %v9652, %v9098
      %v9685 = vsel %vm3951, %v9653, %v9100
      %v9686 = vsel %vm3951, %v9654, %v9102
      %v9687 = vsel %vm3951, %v9655, %v9104
      %v9688 = vsel %vm3951, %v9656, %v9106
      %v9689 = vsel %vm3951, %v9657, %v9108
      %v9690 = vsel %vm3951, %v9658, %v9110
      %v9691 = vsel %vm3951, %v9659, %v9112
      %v9692 = vsel %vm3951, %v9660, %v9114
      %v9693 = vsel %vm3951, %v9661, %v9116
      %v9694 = vsel %vm3951, %v9662, %v9118
      %v9695 = vsel %vm3984, %v9663, %v9184
      %v9696 = vsel %vm3984, %v9664, %v9186
      %v9697 = vsel %vm3984, %v9665, %v9188
      %v9698 = vsel %vm3984, %v9666, %v9190
      %v9699 = vsel %vm3984, %v9667, %v9192
      %v9700 = vsel %vm3984, %v9668, %v9194
      %v9701 = vsel %vm3984, %v9669, %v9196
      %v9702 = vsel %vm3984, %v9670, %v9198
      %v9703 = vsel %vm3984, %v9671, %v9200
      %v9704 = vsel %vm3984, %v9672, %v9202
      %v9705 = vsel %vm3984, %v9673, %v9204
      %v9706 = vsel %vm3984, %v9674, %v9206
      %v9707 = vsel %vm3984, %v9675, %v9208
      %v9708 = vsel %vm3984, %v9676, %v9210
      %v9709 = vsel %vm3984, %v9677, %v9212
      %v9710 = vsel %vm3984, %v9678, %v9214
      %v9711 = vsel %vm3984, %v9679, %v9216
      %v9712 = vsel %vm3984, %v9680, %v9218
      %v9713 = vsel %vm3984, %v9681, %v9220
      %v9714 = vsel %vm3984, %v9682, %v9222
      %v9715 = vsel %vm3984, %v9683, %v9224
      %v9716 = vsel %vm3984, %v9684, %v9226
      %v9717 = vsel %vm3984, %v9685, %v9228
      %v9718 = vsel %vm3984, %v9686, %v9230
      %v9719 = vsel %vm3984, %v9687, %v9232
      %v9720 = vsel %vm3984, %v9688, %v9234
      %v9721 = vsel %vm3984, %v9689, %v9236
      %v9722 = vsel %vm3984, %v9690, %v9238
      %v9723 = vsel %vm3984, %v9691, %v9240
      %v9724 = vsel %vm3984, %v9692, %v9242
      %v9725 = vsel %vm3984, %v9693, %v9244
      %v9726 = vsel %vm3984, %v9694, %v9246
      %v9727 = vsel %vm4017, %v9695, %v9312
      %v9728 = vsel %vm4017, %v9696, %v9314
      %v9729 = vsel %vm4017, %v9697, %v9316
      %v9730 = vsel %vm4017, %v9698, %v9318
      %v9731 = vsel %vm4017, %v9699, %v9320
      %v9732 = vsel %vm4017, %v9700, %v9322
      %v9733 = vsel %vm4017, %v9701, %v9324
      %v9734 = vsel %vm4017, %v9702, %v9326
      %v9735 = vsel %vm4017, %v9703, %v9328
      %v9736 = vsel %vm4017, %v9704, %v9330
      %v9737 = vsel %vm4017, %v9705, %v9332
      %v9738 = vsel %vm4017, %v9706, %v9334
      %v9739 = vsel %vm4017, %v9707, %v9336
      %v9740 = vsel %vm4017, %v9708, %v9338
      %v9741 = vsel %vm4017, %v9709, %v9340
      %v9742 = vsel %vm4017, %v9710, %v9342
      %v9743 = vsel %vm4017, %v9711, %v9344
      %v9744 = vsel %vm4017, %v9712, %v9346
      %v9745 = vsel %vm4017, %v9713, %v9348
      %v9746 = vsel %vm4017, %v9714, %v9350
      %v9747 = vsel %vm4017, %v9715, %v9352
      %v9748 = vsel %vm4017, %v9716, %v9354
      %v9749 = vsel %vm4017, %v9717, %v9356
      %v9750 = vsel %vm4017, %v9718, %v9358
      %v9751 = vsel %vm4017, %v9719, %v9360
      %v9752 = vsel %vm4017, %v9720, %v9362
      %v9753 = vsel %vm4017, %v9721, %v9364
      %v9754 = vsel %vm4017, %v9722, %v9366
      %v9755 = vsel %vm4017, %v9723, %v9368
      %v9756 = vsel %vm4017, %v9724, %v9370
      %v9757 = vsel %vm4017, %v9725, %v9372
      %v9758 = vsel %vm4017, %v9726, %v9374
      %v9759 = vsel %vm4050, %v9727, %v9440
      %v9760 = vsel %vm4050, %v9728, %v9442
      %v9761 = vsel %vm4050, %v9729, %v9444
      %v9762 = vsel %vm4050, %v9730, %v9446
      %v9763 = vsel %vm4050, %v9731, %v9448
      %v9764 = vsel %vm4050, %v9732, %v9450
      %v9765 = vsel %vm4050, %v9733, %v9452
      %v9766 = vsel %vm4050, %v9734, %v9454
      %v9767 = vsel %vm4050, %v9735, %v9456
      %v9768 = vsel %vm4050, %v9736, %v9458
      %v9769 = vsel %vm4050, %v9737, %v9460
      %v9770 = vsel %vm4050, %v9738, %v9462
      %v9771 = vsel %vm4050, %v9739, %v9464
      %v9772 = vsel %vm4050, %v9740, %v9466
      %v9773 = vsel %vm4050, %v9741, %v9468
      %v9774 = vsel %vm4050, %v9742, %v9470
      %v9775 = vsel %vm4050, %v9743, %v9472
      %v9776 = vsel %vm4050, %v9744, %v9474
      %v9777 = vsel %vm4050, %v9745, %v9476
      %v9778 = vsel %vm4050, %v9746, %v9478
      %v9779 = vsel %vm4050, %v9747, %v9480
      %v9780 = vsel %vm4050, %v9748, %v9482
      %v9781 = vsel %vm4050, %v9749, %v9484
      %v9782 = vsel %vm4050, %v9750, %v9486
      %v9783 = vsel %vm4050, %v9751, %v9488
      %v9784 = vsel %vm4050, %v9752, %v9490
      %v9785 = vsel %vm4050, %v9753, %v9492
      %v9786 = vsel %vm4050, %v9754, %v9494
      %v9787 = vsel %vm4050, %v9755, %v9496
      %v9788 = vsel %vm4050, %v9756, %v9498
      %v9789 = vsel %vm4050, %v9757, %v9500
      %v9790 = vsel %vm4050, %v9758, %v9502
      %v9791 = vpack.c.bf16 %v9760, %v9759
      %v9792 = vpack.c.bf16 %v9762, %v9761
      %v9793 = vpack.c.bf16 %v9764, %v9763
      %v9794 = vpack.c.bf16 %v9766, %v9765
      %v9795 = vpack.c.bf16 %v9768, %v9767
      %v9796 = vpack.c.bf16 %v9770, %v9769
      %v9797 = vpack.c.bf16 %v9772, %v9771
      %v9798 = vpack.c.bf16 %v9774, %v9773
      %v9799 = vpack.c.bf16 %v9776, %v9775
      %v9800 = vpack.c.bf16 %v9778, %v9777
      %v9801 = vpack.c.bf16 %v9780, %v9779
      %v9802 = vpack.c.bf16 %v9782, %v9781
      %v9803 = vpack.c.bf16 %v9784, %v9783
      %v9804 = vpack.c.bf16 %v9786, %v9785
      %v9805 = vpack.c.bf16 %v9788, %v9787
      %v9806 = vpack.c.bf16 %v9790, %v9789
      %v9808 = vlaneseq
      %v9809 = vshrl.u32 %v9808, 7
      %v9810 = vsub.s32 0, %v9809
      %v9811 = vrot.slane %v8222, %v9810
      %v9825 = vunpack.c.l.b16 %v8210
      %v9826 = vunpack.c.l.b16 %v8211
      %v9827 = vunpack.c.l.b16 %v8212
      %v9828 = vunpack.c.l.b16 %v8213
      %v9829 = vunpack.c.l.b16 %v8214
      %v9830 = vunpack.c.l.b16 %v8215
      %v9831 = vunpack.c.l.b16 %v8216
      %v9832 = vunpack.c.l.b16 %v8217
      %v9833 = vunpack.c.l.b16 %v8218
      %v9834 = vunpack.c.l.b16 %v8219
      %v9835 = vunpack.c.l.b16 %v8220
      %v9836 = vunpack.c.l.b16 %v8221
      %v9837 = vpack.c.b16 %v9826, %v9825
      %v9838 = vpack.c.b16 %v9828, %v9827
      %v9839 = vpack.c.b16 %v9830, %v9829
      %v9840 = vpack.c.b16 %v9832, %v9831
      %v9841 = vpack.c.b16 %v9834, %v9833
      %v9842 = vpack.c.b16 %v9836, %v9835
      %v9849 = vsel %vm4140, %v9791, 0
      %v9852 = vsel %vm4140, %v9792, 0
      %v9855 = vsel %vm4140, %v9793, 0
      %v9858 = vsel %vm4140, %v9794, 0
      %v9861 = vsel %vm4140, %v9795, 0
      %v9864 = vsel %vm4140, %v9796, 0
      %v9867 = vsel %vm4140, %v9797, 0
      %v9870 = vsel %vm4140, %v9798, 0
      %v9873 = vsel %vm4140, %v9799, 0
      %v9876 = vsel %vm4140, %v9800, 0
      %v9879 = vsel %vm4140, %v9801, 0
      %v9882 = vsel %vm4140, %v9802, 0
      %v9885 = vsel %vm4140, %v9803, 0
      %v9888 = vsel %vm4140, %v9804, 0
      %v9891 = vsel %vm4140, %v9805, 0
      %v9894 = vsel %vm4140, %v9806, 0
      %v9897 = vsel %vm4189, %v9842, 0
      %9899 = vmatprep.subr.bf16.mxu0 0
      %9900 = vmatpush1.bf16.msra.mxu0 %v9837
      %9901 = vmatprep.subr.bf16.mxu0 0
      %9902 = vmatpush1.bf16.msra.mxu0 %v9838
      %9903 = vmatprep.subr.bf16.mxu0 0
      %9904 = vmatpush1.bf16.msra.mxu0 %v9839
      %9905 = vmatprep.subr.bf16.mxu0 0
      %9906 = vmatpush1.bf16.msra.mxu0 %v9840
      %9907 = vmatprep.subr.bf16.mxu0 0
      %9908 = vmatpush1.bf16.msra.mxu0 %v9841
      %9909 = vmatprep.subr.bf16.mxu0 0
      %9910 = vmatpush1.bf16.msra.mxu0 %v9897
      %9911 = vmatprep.subr.bf16.mxu0 0
      %9912 = vmatpush1.bf16.msra.mxu0 0
      %9913 = vmatprep.subr.bf16.mxu0 0
      %9914 = vmatpush1.bf16.msra.mxu0 0
      %9915 = vmatprep.subr.bf16.mxu0 0
      %9916 = vmatpush1.bf16.msra.mxu0 0
      %9917 = vmatprep.subr.bf16.mxu0 0
      %9918 = vmatpush1.bf16.msra.mxu0 0
      %9919 = vmatprep.subr.bf16.mxu0 0
      %9920 = vmatpush1.bf16.msra.mxu0 0
      %9921 = vmatprep.subr.bf16.mxu0 0
      %9922 = vmatpush1.bf16.msra.mxu0 0
      %9923 = vmatprep.subr.bf16.mxu0 0
      %9924 = vmatpush1.bf16.msra.mxu0 0
      %9925 = vmatprep.subr.bf16.mxu0 0
      %9926 = vmatpush1.bf16.msra.mxu0 0
      %9927 = vmatprep.subr.bf16.mxu0 0
      %9928 = vmatpush1.bf16.msra.mxu0 0
      %9929 = vmatprep.subr.bf16.mxu0 0
      %9930 = vmatpush1.bf16.msra.mxu0 0
      %9931 = vmatprep.mubr.bf16.mxu0 0
      %9932 = vmatmul.mubr.bf16.gmra.mrb[0].mxu0 %v9849
      %v9933 = vpop.f32.mrb[0].mxu0
      %v9934 = vadd.f32 %v9811, %v9933
      %v9935 = vpop.f32.mrb[0].mxu0
      %v9936 = vpop.f32.mrb[0].mxu0
      %v9937 = vadd.f32 %v9811, %v9936
      %v9938 = vpop.f32.mrb[0].mxu0
      %9939 = vmatprep.mubr.bf16.mxu0 0
      %9940 = vmatmul.mubr.bf16.gmra.mrb[0].mxu0 %v9852
      %v9941 = vpop.f32.mrb[0].mxu0
      %v9942 = vadd.f32 %v9811, %v9941
      %v9943 = vpop.f32.mrb[0].mxu0
      %v9944 = vpop.f32.mrb[0].mxu0
      %v9945 = vadd.f32 %v9811, %v9944
      %v9946 = vpop.f32.mrb[0].mxu0
      %9947 = vmatprep.mubr.bf16.mxu0 0
      %9948 = vmatmul.mubr.bf16.gmra.mrb[0].mxu0 %v9855
      %v9949 = vpop.f32.mrb[0].mxu0
      %v9950 = vadd.f32 %v9811, %v9949
      %v9951 = vpop.f32.mrb[0].mxu0
      %v9952 = vpop.f32.mrb[0].mxu0
      %v9953 = vadd.f32 %v9811, %v9952
      %v9954 = vpop.f32.mrb[0].mxu0
      %9955 = vmatprep.mubr.bf16.mxu0 0
      %9956 = vmatmul.mubr.bf16.gmra.mrb[0].mxu0 %v9858
      %v9957 = vpop.f32.mrb[0].mxu0
      %v9958 = vadd.f32 %v9811, %v9957
      %v9959 = vpop.f32.mrb[0].mxu0
      %v9960 = vpop.f32.mrb[0].mxu0
      %v9961 = vadd.f32 %v9811, %v9960
      %v9962 = vpop.f32.mrb[0].mxu0
      %9963 = vmatprep.mubr.bf16.mxu0 0
      %9964 = vmatmul.mubr.bf16.gmra.mrb[0].mxu0 %v9861
      %v9965 = vpop.f32.mrb[0].mxu0
      %v9966 = vadd.f32 %v9811, %v9965
      %v9967 = vpop.f32.mrb[0].mxu0
      %v9968 = vpop.f32.mrb[0].mxu0
      %v9969 = vadd.f32 %v9811, %v9968
      %v9970 = vpop.f32.mrb[0].mxu0
      %9971 = vmatprep.mubr.bf16.mxu0 0
      %9972 = vmatmul.mubr.bf16.gmra.mrb[0].mxu0 %v9864
      %v9973 = vpop.f32.mrb[0].mxu0
      %v9974 = vadd.f32 %v9811, %v9973
      %v9975 = vpop.f32.mrb[0].mxu0
      %v9976 = vpop.f32.mrb[0].mxu0
      %v9977 = vadd.f32 %v9811, %v9976
      %v9978 = vpop.f32.mrb[0].mxu0
      %9979 = vmatprep.mubr.bf16.mxu0 0
      %9980 = vmatmul.mubr.bf16.gmra.mrb[0].mxu0 %v9867
      %v9981 = vpop.f32.mrb[0].mxu0
      %v9982 = vadd.f32 %v9811, %v9981
      %v9983 = vpop.f32.mrb[0].mxu0
      %v9984 = vpop.f32.mrb[0].mxu0
      %v9985 = vadd.f32 %v9811, %v9984
      %v9986 = vpop.f32.mrb[0].mxu0
      %9987 = vmatprep.mubr.bf16.mxu0 0
      %9988 = vmatmul.mubr.bf16.gmra.mrb[0].mxu0 %v9870
      %v9989 = vpop.f32.mrb[0].mxu0
      %v9990 = vadd.f32 %v9811, %v9989
      %v9991 = vpop.f32.mrb[0].mxu0
      %v9992 = vpop.f32.mrb[0].mxu0
      %v9993 = vadd.f32 %v9811, %v9992
      %v9994 = vpop.f32.mrb[0].mxu0
      %9995 = vmatprep.mubr.bf16.mxu0 0
      %9996 = vmatmul.mubr.bf16.gmra.mrb[0].mxu0 %v9873
      %v9997 = vpop.f32.mrb[0].mxu0
      %v9998 = vadd.f32 %v9811, %v9997
      %v9999 = vpop.f32.mrb[0].mxu0
      %v10000 = vpop.f32.mrb[0].mxu0
      %v10001 = vadd.f32 %v9811, %v10000
      %v10002 = vpop.f32.mrb[0].mxu0
      %10003 = vmatprep.mubr.bf16.mxu0 0
      %10004 = vmatmul.mubr.bf16.gmra.mrb[0].mxu0 %v9876
      %v10005 = vpop.f32.mrb[0].mxu0
      %v10006 = vadd.f32 %v9811, %v10005
      %v10007 = vpop.f32.mrb[0].mxu0
      %v10008 = vpop.f32.mrb[0].mxu0
      %v10009 = vadd.f32 %v9811, %v10008
      %v10010 = vpop.f32.mrb[0].mxu0
      %10011 = vmatprep.mubr.bf16.mxu0 0
      %10012 = vmatmul.mubr.bf16.gmra.mrb[0].mxu0 %v9879
      %v10013 = vpop.f32.mrb[0].mxu0
      %v10014 = vadd.f32 %v9811, %v10013
      %v10015 = vpop.f32.mrb[0].mxu0
      %v10016 = vpop.f32.mrb[0].mxu0
      %v10017 = vadd.f32 %v9811, %v10016
      %v10018 = vpop.f32.mrb[0].mxu0
      %10019 = vmatprep.mubr.bf16.mxu0 0
      %10020 = vmatmul.mubr.bf16.gmra.mrb[0].mxu0 %v9882
      %v10021 = vpop.f32.mrb[0].mxu0
      %v10022 = vadd.f32 %v9811, %v10021
      %v10023 = vpop.f32.mrb[0].mxu0
      %v10024 = vpop.f32.mrb[0].mxu0
      %v10025 = vadd.f32 %v9811, %v10024
      %v10026 = vpop.f32.mrb[0].mxu0
      %10027 = vmatprep.mubr.bf16.mxu0 0
      %10028 = vmatmul.mubr.bf16.gmra.mrb[0].mxu0 %v9885
      %v10029 = vpop.f32.mrb[0].mxu0
      %v10030 = vadd.f32 %v9811, %v10029
      %v10031 = vpop.f32.mrb[0].mxu0
      %v10032 = vpop.f32.mrb[0].mxu0
      %v10033 = vadd.f32 %v9811, %v10032
      %v10034 = vpop.f32.mrb[0].mxu0
      %10035 = vmatprep.mubr.bf16.mxu0 0
      %10036 = vmatmul.mubr.bf16.gmra.mrb[0].mxu0 %v9888
      %v10037 = vpop.f32.mrb[0].mxu0
      %v10038 = vadd.f32 %v9811, %v10037
      %v10039 = vpop.f32.mrb[0].mxu0
      %v10040 = vpop.f32.mrb[0].mxu0
      %v10041 = vadd.f32 %v9811, %v10040
      %v10042 = vpop.f32.mrb[0].mxu0
      %10043 = vmatprep.mubr.bf16.mxu0 0
      %10044 = vmatmul.mubr.bf16.gmra.mrb[0].mxu0 %v9891
      %v10045 = vpop.f32.mrb[0].mxu0
      %v10046 = vadd.f32 %v9811, %v10045
      %v10047 = vpop.f32.mrb[0].mxu0
      %v10048 = vpop.f32.mrb[0].mxu0
      %v10049 = vadd.f32 %v9811, %v10048
      %v10050 = vpop.f32.mrb[0].mxu0
      %10051 = vmatprep.mubr.bf16.mxu0 0
      %10052 = vmatmul.mubr.bf16.gmra.mrb[0].mxu0 %v9894
      %v10053 = vpop.f32.mrb[0].mxu0
      %v10054 = vadd.f32 %v9811, %v10053
      %v10055 = vpop.f32.mrb[0].mxu0
      %v10056 = vpop.f32.mrb[0].mxu0
      %v10057 = vadd.f32 %v9811, %v10056
      %v10058 = vpop.f32.mrb[0].mxu0
      %10059 = vdwg.mxu0
      %v10060 = vmax.f32 %v9934, 0.0
      %v10061 = vmax.f32 %v9937, 0.0
      %v10062 = vmax.f32 %v9942, 0.0
      %v10063 = vmax.f32 %v9945, 0.0
      %v10064 = vmax.f32 %v9950, 0.0
      %v10065 = vmax.f32 %v9953, 0.0
      %v10066 = vmax.f32 %v9958, 0.0
      %v10067 = vmax.f32 %v9961, 0.0
      %v10068 = vmax.f32 %v9966, 0.0
      %v10069 = vmax.f32 %v9969, 0.0
      %v10070 = vmax.f32 %v9974, 0.0
      %v10071 = vmax.f32 %v9977, 0.0
      %v10072 = vmax.f32 %v9982, 0.0
      %v10073 = vmax.f32 %v9985, 0.0
      %v10074 = vmax.f32 %v9990, 0.0
      %v10075 = vmax.f32 %v9993, 0.0
      %v10076 = vmax.f32 %v9998, 0.0
      %v10077 = vmax.f32 %v10001, 0.0
      %v10078 = vmax.f32 %v10006, 0.0
      %v10079 = vmax.f32 %v10009, 0.0
      %v10080 = vmax.f32 %v10014, 0.0
      %v10081 = vmax.f32 %v10017, 0.0
      %v10082 = vmax.f32 %v10022, 0.0
      %v10083 = vmax.f32 %v10025, 0.0
      %v10084 = vmax.f32 %v10030, 0.0
      %v10085 = vmax.f32 %v10033, 0.0
      %v10086 = vmax.f32 %v10038, 0.0
      %v10087 = vmax.f32 %v10041, 0.0
      %v10088 = vmax.f32 %v10046, 0.0
      %v10089 = vmax.f32 %v10049, 0.0
      %v10090 = vmax.f32 %v10054, 0.0
      %v10091 = vmax.f32 %v10057, 0.0
      %10092 = vst.msk [vmem:[%s492 + $0x1] sm:$0xff] %vm442, %v10060
      %10093 = vst.msk [vmem:[%s492 + $0x9] sm:$0xff] %vm442, %v10061
      %10094 = vst.msk [vmem:[%s492 + $0x19] sm:$0xff] %vm442, %v10062
      %10095 = vst.msk [vmem:[%s492 + $0x21] sm:$0xff] %vm442, %v10063
      %10096 = vst.msk [vmem:[%s492 + $0x31] sm:$0xff] %vm442, %v10064
      %10097 = vst.msk [vmem:[%s492 + $0x39] sm:$0xff] %vm442, %v10065
      %10098 = vst.msk [vmem:[%s492 + $0x49] sm:$0xff] %vm442, %v10066
      %10099 = vst.msk [vmem:[%s492 + $0x51] sm:$0xff] %vm442, %v10067
      %10100 = vst.msk [vmem:[%s492 + $0x61] sm:$0xff] %vm442, %v10068
      %10101 = vst.msk [vmem:[%s492 + $0x69] sm:$0xff] %vm442, %v10069
      %10102 = vst.msk [vmem:[%s492 + $0x79] sm:$0xff] %vm442, %v10070
      %10103 = vst.msk [vmem:[%s492 + $0x81] sm:$0xff] %vm442, %v10071
      %10104 = vst.msk [vmem:[%s492 + $0x91] sm:$0xff] %vm442, %v10072
      %10105 = vst.msk [vmem:[%s492 + $0x99] sm:$0xff] %vm442, %v10073
      %10106 = vst.msk [vmem:[%s492 + $0xa9] sm:$0xff] %vm442, %v10074
      %10107 = vst.msk [vmem:[%s492 + $0xb1] sm:$0xff] %vm442, %v10075
      %10108 = vst.msk [vmem:[%s492 + $0xc1] sm:$0xff] %vm442, %v10076
      %10109 = vst.msk [vmem:[%s492 + $0xc9] sm:$0xff] %vm442, %v10077
      %10110 = vst.msk [vmem:[%s492 + $0xd9] sm:$0xff] %vm442, %v10078
      %10111 = vst.msk [vmem:[%s492 + $0xe1] sm:$0xff] %vm442, %v10079
      %10112 = vst.msk [vmem:[%s492 + $0xf1] sm:$0xff] %vm442, %v10080
      %10113 = vst.msk [vmem:[%s492 + $0xf9] sm:$0xff] %vm442, %v10081
      %10114 = vst.msk [vmem:[%s492 + $0x109] sm:$0xff] %vm442, %v10082
      %10115 = vst.msk [vmem:[%s492 + $0x111] sm:$0xff] %vm442, %v10083
      %10116 = vst.msk [vmem:[%s492 + $0x121] sm:$0xff] %vm442, %v10084
      %10117 = vst.msk [vmem:[%s492 + $0x129] sm:$0xff] %vm442, %v10085
      %10118 = vst.msk [vmem:[%s492 + $0x139] sm:$0xff] %vm442, %v10086
      %10119 = vst.msk [vmem:[%s492 + $0x141] sm:$0xff] %vm442, %v10087
      %10120 = vst.msk [vmem:[%s492 + $0x151] sm:$0xff] %vm442, %v10088
      %10121 = vst.msk [vmem:[%s492 + $0x159] sm:$0xff] %vm442, %v10089
      %10122 = vst.msk [vmem:[%s492 + $0x169] sm:$0xff] %vm442, %v10090
      %10123 = vst.msk [vmem:[%s492 + $0x171] sm:$0xff] %vm442, %v10091
      %v10124 = vld [vmem:[%s11] sm:$0xf]
      %v10125 = vld [vmem:[%s11 + $0x4] sm:$0xf]
      %v10126 = vld [vmem:[%s11 + $0x8] sm:$0xf]
      %v10127 = vld [vmem:[%s11 + $0xc] sm:$0xf]
      %v10128 = vld [vmem:[%s11 + $0x10] sm:$0xf]
      %v10129 = vld [vmem:[%s11 + $0x14] sm:$0xf]
      %v10130 = vld [vmem:[%s11 + $0x18] sm:$0xf]
      %v10131 = vld [vmem:[%s11 + $0x1c] sm:$0xf]
      %v10132 = vld [vmem:[%s11 + $0x20] sm:$0xf]
      %v10133 = vld [vmem:[%s11 + $0x24] sm:$0xf]
      %v10134 = vld [vmem:[%s11 + $0x28] sm:$0xf]
      %v10135 = vld [vmem:[%s11 + $0x2c] sm:$0x1]
      %v10136 = vld [vmem:[%s12] sm:$0x1]
      %v10137 = vld [vmem:[#allocation3] sm:$0xff]
      %v10138 = vld [vmem:[#allocation3 + $0x8] sm:$0xff]
      %v10139 = vld [vmem:[#allocation3 + $0x18] sm:$0xff]
      %v10140 = vld [vmem:[#allocation3 + $0x20] sm:$0xff]
      %v10141 = vld [vmem:[#allocation3 + $0x30] sm:$0xff]
      %v10142 = vld [vmem:[#allocation3 + $0x38] sm:$0xff]
      %v10143 = vld [vmem:[#allocation3 + $0x48] sm:$0xff]
      %v10144 = vld [vmem:[#allocation3 + $0x50] sm:$0xff]
      %v10145 = vld [vmem:[#allocation3 + $0x60] sm:$0xff]
      %v10146 = vld [vmem:[#allocation3 + $0x68] sm:$0xff]
      %v10147 = vld [vmem:[#allocation3 + $0x78] sm:$0xff]
      %v10148 = vld [vmem:[#allocation3 + $0x80] sm:$0xff]
      %v10149 = vld [vmem:[#allocation3 + $0x90] sm:$0xff]
      %v10150 = vld [vmem:[#allocation3 + $0x98] sm:$0xff]
      %v10151 = vld [vmem:[#allocation3 + $0xa8] sm:$0xff]
      %v10152 = vld [vmem:[#allocation3 + $0xb0] sm:$0xff]
      %v10153 = vld [vmem:[#allocation3 + $0xc0] sm:$0xff]
      %v10154 = vld [vmem:[#allocation3 + $0xc8] sm:$0xff]
      %v10155 = vld [vmem:[#allocation3 + $0xd8] sm:$0xff]
      %v10156 = vld [vmem:[#allocation3 + $0xe0] sm:$0xff]
      %v10157 = vld [vmem:[#allocation3 + $0xf0] sm:$0xff]
      %v10158 = vld [vmem:[#allocation3 + $0xf8] sm:$0xff]
      %v10159 = vld [vmem:[#allocation3 + $0x108] sm:$0xff]
      %v10160 = vld [vmem:[#allocation3 + $0x110] sm:$0xff]
      %v10161 = vld [vmem:[#allocation3 + $0x120] sm:$0xff]
      %v10162 = vld [vmem:[#allocation3 + $0x128] sm:$0xff]
      %v10163 = vld [vmem:[#allocation3 + $0x138] sm:$0xff]
      %v10164 = vld [vmem:[#allocation3 + $0x140] sm:$0xff]
      %v10165 = vld [vmem:[#allocation3 + $0x150] sm:$0xff]
      %v10166 = vld [vmem:[#allocation3 + $0x158] sm:$0xff]
      %v10167 = vld [vmem:[#allocation3 + $0x168] sm:$0xff]
      %v10168 = vld [vmem:[#allocation3 + $0x170] sm:$0xff]
      %v10169 = vld [vmem:[#allocation3 + $0x1] sm:$0xff]
      %v10170 = vld [vmem:[#allocation3 + $0x9] sm:$0xff]
      %v10171 = vld [vmem:[#allocation3 + $0x19] sm:$0xff]
      %v10172 = vld [vmem:[#allocation3 + $0x21] sm:$0xff]
      %v10173 = vld [vmem:[#allocation3 + $0x31] sm:$0xff]
      %v10174 = vld [vmem:[#allocation3 + $0x39] sm:$0xff]
      %v10175 = vld [vmem:[#allocation3 + $0x49] sm:$0xff]
      %v10176 = vld [vmem:[#allocation3 + $0x51] sm:$0xff]
      %v10177 = vld [vmem:[#allocation3 + $0x61] sm:$0xff]
      %v10178 = vld [vmem:[#allocation3 + $0x69] sm:$0xff]
      %v10179 = vld [vmem:[#allocation3 + $0x79] sm:$0xff]
      %v10180 = vld [vmem:[#allocation3 + $0x81] sm:$0xff]
      %v10181 = vld [vmem:[#allocation3 + $0x91] sm:$0xff]
      %v10182 = vld [vmem:[#allocation3 + $0x99] sm:$0xff]
      %v10183 = vld [vmem:[#allocation3 + $0xa9] sm:$0xff]
      %v10184 = vld [vmem:[#allocation3 + $0xb1] sm:$0xff]
      %v10185 = vld [vmem:[#allocation3 + $0xc1] sm:$0xff]
      %v10186 = vld [vmem:[#allocation3 + $0xc9] sm:$0xff]
      %v10187 = vld [vmem:[#allocation3 + $0xd9] sm:$0xff]
      %v10188 = vld [vmem:[#allocation3 + $0xe1] sm:$0xff]
      %v10189 = vld [vmem:[#allocation3 + $0xf1] sm:$0xff]
      %v10190 = vld [vmem:[#allocation3 + $0xf9] sm:$0xff]
      %v10191 = vld [vmem:[#allocation3 + $0x109] sm:$0xff]
      %v10192 = vld [vmem:[#allocation3 + $0x111] sm:$0xff]
      %v10193 = vld [vmem:[#allocation3 + $0x121] sm:$0xff]
      %v10194 = vld [vmem:[#allocation3 + $0x129] sm:$0xff]
      %v10195 = vld [vmem:[#allocation3 + $0x139] sm:$0xff]
      %v10196 = vld [vmem:[#allocation3 + $0x141] sm:$0xff]
      %v10197 = vld [vmem:[#allocation3 + $0x151] sm:$0xff]
      %v10198 = vld [vmem:[#allocation3 + $0x159] sm:$0xff]
      %v10199 = vld [vmem:[#allocation3 + $0x169] sm:$0xff]
      %v10200 = vld [vmem:[#allocation3 + $0x171] sm:$0xff]
      %v10201 = vld [vmem:[#allocation3 + $0x2] sm:$0xff]
      %v10202 = vld [vmem:[#allocation3 + $0xa] sm:$0xff]
      %v10203 = vld [vmem:[#allocation3 + $0x1a] sm:$0xff]
      %v10204 = vld [vmem:[#allocation3 + $0x22] sm:$0xff]
      %v10205 = vld [vmem:[#allocation3 + $0x32] sm:$0xff]
      %v10206 = vld [vmem:[#allocation3 + $0x3a] sm:$0xff]
      %v10207 = vld [vmem:[#allocation3 + $0x4a] sm:$0xff]
      %v10208 = vld [vmem:[#allocation3 + $0x52] sm:$0xff]
      %v10209 = vld [vmem:[#allocation3 + $0x62] sm:$0xff]
      %v10210 = vld [vmem:[#allocation3 + $0x6a] sm:$0xff]
      %v10211 = vld [vmem:[#allocation3 + $0x7a] sm:$0xff]
      %v10212 = vld [vmem:[#allocation3 + $0x82] sm:$0xff]
      %v10213 = vld [vmem:[#allocation3 + $0x92] sm:$0xff]
      %v10214 = vld [vmem:[#allocation3 + $0x9a] sm:$0xff]
      %v10215 = vld [vmem:[#allocation3 + $0xaa] sm:$0xff]
      %v10216 = vld [vmem:[#allocation3 + $0xb2] sm:$0xff]
      %v10217 = vld [vmem:[#allocation3 + $0xc2] sm:$0xff]
      %v10218 = vld [vmem:[#allocation3 + $0xca] sm:$0xff]
      %v10219 = vld [vmem:[#allocation3 + $0xda] sm:$0xff]
      %v10220 = vld [vmem:[#allocation3 + $0xe2] sm:$0xff]
      %v10221 = vld [vmem:[#allocation3 + $0xf2] sm:$0xff]
      %v10222 = vld [vmem:[#allocation3 + $0xfa] sm:$0xff]
      %v10223 = vld [vmem:[#allocation3 + $0x10a] sm:$0xff]
      %v10224 = vld [vmem:[#allocation3 + $0x112] sm:$0xff]
      %v10225 = vld [vmem:[#allocation3 + $0x122] sm:$0xff]
      %v10226 = vld [vmem:[#allocation3 + $0x12a] sm:$0xff]
      %v10227 = vld [vmem:[#allocation3 + $0x13a] sm:$0xff]
      %v10228 = vld [vmem:[#allocation3 + $0x142] sm:$0xff]
      %v10229 = vld [vmem:[#allocation3 + $0x152] sm:$0xff]
      %v10230 = vld [vmem:[#allocation3 + $0x15a] sm:$0xff]
      %v10231 = vld [vmem:[#allocation3 + $0x16a] sm:$0xff]
      %v10232 = vld [vmem:[#allocation3 + $0x172] sm:$0xff]
      %v10233 = vld [vmem:[%s492] sm:$0xff]
      %v10234 = vld [vmem:[%s492 + $0x8] sm:$0xff]
      %v10235 = vld [vmem:[%s492 + $0x18] sm:$0xff]
      %v10236 = vld [vmem:[%s492 + $0x20] sm:$0xff]
      %v10237 = vld [vmem:[%s492 + $0x30] sm:$0xff]
      %v10238 = vld [vmem:[%s492 + $0x38] sm:$0xff]
      %v10239 = vld [vmem:[%s492 + $0x48] sm:$0xff]
      %v10240 = vld [vmem:[%s492 + $0x50] sm:$0xff]
      %v10241 = vld [vmem:[%s492 + $0x60] sm:$0xff]
      %v10242 = vld [vmem:[%s492 + $0x68] sm:$0xff]
      %v10243 = vld [vmem:[%s492 + $0x78] sm:$0xff]
      %v10244 = vld [vmem:[%s492 + $0x80] sm:$0xff]
      %v10245 = vld [vmem:[%s492 + $0x90] sm:$0xff]
      %v10246 = vld [vmem:[%s492 + $0x98] sm:$0xff]
      %v10247 = vld [vmem:[%s492 + $0xa8] sm:$0xff]
      %v10248 = vld [vmem:[%s492 + $0xb0] sm:$0xff]
      %v10249 = vld [vmem:[%s492 + $0xc0] sm:$0xff]
      %v10250 = vld [vmem:[%s492 + $0xc8] sm:$0xff]
      %v10251 = vld [vmem:[%s492 + $0xd8] sm:$0xff]
      %v10252 = vld [vmem:[%s492 + $0xe0] sm:$0xff]
      %v10253 = vld [vmem:[%s492 + $0xf0] sm:$0xff]
      %v10254 = vld [vmem:[%s492 + $0xf8] sm:$0xff]
      %v10255 = vld [vmem:[%s492 + $0x108] sm:$0xff]
      %v10256 = vld [vmem:[%s492 + $0x110] sm:$0xff]
      %v10257 = vld [vmem:[%s492 + $0x120] sm:$0xff]
      %v10258 = vld [vmem:[%s492 + $0x128] sm:$0xff]
      %v10259 = vld [vmem:[%s492 + $0x138] sm:$0xff]
      %v10260 = vld [vmem:[%s492 + $0x140] sm:$0xff]
      %v10261 = vld [vmem:[%s492 + $0x150] sm:$0xff]
      %v10262 = vld [vmem:[%s492 + $0x158] sm:$0xff]
      %v10263 = vld [vmem:[%s492 + $0x168] sm:$0xff]
      %v10264 = vld [vmem:[%s492 + $0x170] sm:$0xff]
      %v10265 = vld [vmem:[%s492 + $0x1] sm:$0xff]
      %v10266 = vld [vmem:[%s492 + $0x9] sm:$0xff]
      %v10267 = vld [vmem:[%s492 + $0x19] sm:$0xff]
      %v10268 = vld [vmem:[%s492 + $0x21] sm:$0xff]
      %v10269 = vld [vmem:[%s492 + $0x31] sm:$0xff]
      %v10270 = vld [vmem:[%s492 + $0x39] sm:$0xff]
      %v10271 = vld [vmem:[%s492 + $0x49] sm:$0xff]
      %v10272 = vld [vmem:[%s492 + $0x51] sm:$0xff]
      %v10273 = vld [vmem:[%s492 + $0x61] sm:$0xff]
      %v10274 = vld [vmem:[%s492 + $0x69] sm:$0xff]
      %v10275 = vld [vmem:[%s492 + $0x79] sm:$0xff]
      %v10276 = vld [vmem:[%s492 + $0x81] sm:$0xff]
      %v10277 = vld [vmem:[%s492 + $0x91] sm:$0xff]
      %v10278 = vld [vmem:[%s492 + $0x99] sm:$0xff]
      %v10279 = vld [vmem:[%s492 + $0xa9] sm:$0xff]
      %v10280 = vld [vmem:[%s492 + $0xb1] sm:$0xff]
      %v10281 = vld [vmem:[%s492 + $0xc1] sm:$0xff]
      %v10282 = vld [vmem:[%s492 + $0xc9] sm:$0xff]
      %v10283 = vld [vmem:[%s492 + $0xd9] sm:$0xff]
      %v10284 = vld [vmem:[%s492 + $0xe1] sm:$0xff]
      %v10285 = vld [vmem:[%s492 + $0xf1] sm:$0xff]
      %v10286 = vld [vmem:[%s492 + $0xf9] sm:$0xff]
      %v10287 = vld [vmem:[%s492 + $0x109] sm:$0xff]
      %v10288 = vld [vmem:[%s492 + $0x111] sm:$0xff]
      %v10289 = vld [vmem:[%s492 + $0x121] sm:$0xff]
      %v10290 = vld [vmem:[%s492 + $0x129] sm:$0xff]
      %v10291 = vld [vmem:[%s492 + $0x139] sm:$0xff]
      %v10292 = vld [vmem:[%s492 + $0x141] sm:$0xff]
      %v10293 = vld [vmem:[%s492 + $0x151] sm:$0xff]
      %v10294 = vld [vmem:[%s492 + $0x159] sm:$0xff]
      %v10295 = vld [vmem:[%s492 + $0x169] sm:$0xff]
      %v10296 = vld [vmem:[%s492 + $0x171] sm:$0xff]
      %v10297 = vld [vmem:[%s492 + $0x2] sm:$0xff]
      %v10298 = vld [vmem:[%s492 + $0xa] sm:$0xff]
      %v10299 = vld [vmem:[%s492 + $0x1a] sm:$0xff]
      %v10300 = vld [vmem:[%s492 + $0x22] sm:$0xff]
      %v10301 = vld [vmem:[%s492 + $0x32] sm:$0xff]
      %v10302 = vld [vmem:[%s492 + $0x3a] sm:$0xff]
      %v10303 = vld [vmem:[%s492 + $0x4a] sm:$0xff]
      %v10304 = vld [vmem:[%s492 + $0x52] sm:$0xff]
      %v10305 = vld [vmem:[%s492 + $0x62] sm:$0xff]
      %v10306 = vld [vmem:[%s492 + $0x6a] sm:$0xff]
      %v10307 = vld [vmem:[%s492 + $0x7a] sm:$0xff]
      %v10308 = vld [vmem:[%s492 + $0x82] sm:$0xff]
      %v10309 = vld [vmem:[%s492 + $0x92] sm:$0xff]
      %v10310 = vld [vmem:[%s492 + $0x9a] sm:$0xff]
      %v10311 = vld [vmem:[%s492 + $0xaa] sm:$0xff]
      %v10312 = vld [vmem:[%s492 + $0xb2] sm:$0xff]
      %v10313 = vld [vmem:[%s492 + $0xc2] sm:$0xff]
      %v10314 = vld [vmem:[%s492 + $0xca] sm:$0xff]
      %v10315 = vld [vmem:[%s492 + $0xda] sm:$0xff]
      %v10316 = vld [vmem:[%s492 + $0xe2] sm:$0xff]
      %v10317 = vld [vmem:[%s492 + $0xf2] sm:$0xff]
      %v10318 = vld [vmem:[%s492 + $0xfa] sm:$0xff]
      %v10319 = vld [vmem:[%s492 + $0x10a] sm:$0xff]
      %v10320 = vld [vmem:[%s492 + $0x112] sm:$0xff]
      %v10321 = vld [vmem:[%s492 + $0x122] sm:$0xff]
      %v10322 = vld [vmem:[%s492 + $0x12a] sm:$0xff]
      %v10323 = vld [vmem:[%s492 + $0x13a] sm:$0xff]
      %v10324 = vld [vmem:[%s492 + $0x142] sm:$0xff]
      %v10325 = vld [vmem:[%s492 + $0x152] sm:$0xff]
      %v10326 = vld [vmem:[%s492 + $0x15a] sm:$0xff]
      %v10327 = vld [vmem:[%s492 + $0x16a] sm:$0xff]
      %v10328 = vld [vmem:[%s492 + $0x172] sm:$0xff]
      %v10329 = vld [vmem:[%s2700] sm:$0xff]
      %v10330 = vld [vmem:[%s2700 + $0x8] sm:$0xff]
      %v10331 = vld [vmem:[%s2700 + $0x18] sm:$0xff]
      %v10332 = vld [vmem:[%s2700 + $0x20] sm:$0xff]
      %v10333 = vld [vmem:[%s2700 + $0x30] sm:$0xff]
      %v10334 = vld [vmem:[%s2700 + $0x38] sm:$0xff]
      %v10335 = vld [vmem:[%s2700 + $0x48] sm:$0xff]
      %v10336 = vld [vmem:[%s2700 + $0x50] sm:$0xff]
      %v10337 = vld [vmem:[%s2700 + $0x60] sm:$0xff]
      %v10338 = vld [vmem:[%s2700 + $0x68] sm:$0xff]
      %v10339 = vld [vmem:[%s2700 + $0x78] sm:$0xff]
      %v10340 = vld [vmem:[%s2700 + $0x80] sm:$0xff]
      %v10341 = vld [vmem:[%s2700 + $0x90] sm:$0xff]
      %v10342 = vld [vmem:[%s2700 + $0x98] sm:$0xff]
      %v10343 = vld [vmem:[%s2700 + $0xa8] sm:$0xff]
      %v10344 = vld [vmem:[%s2700 + $0xb0] sm:$0xff]
      %v10345 = vld [vmem:[%s2700 + $0xc0] sm:$0xff]
      %v10346 = vld [vmem:[%s2700 + $0xc8] sm:$0xff]
      %v10347 = vld [vmem:[%s2700 + $0xd8] sm:$0xff]
      %v10348 = vld [vmem:[%s2700 + $0xe0] sm:$0xff]
      %v10349 = vld [vmem:[%s2700 + $0xf0] sm:$0xff]
      %v10350 = vld [vmem:[%s2700 + $0xf8] sm:$0xff]
      %v10351 = vld [vmem:[%s2700 + $0x108] sm:$0xff]
      %v10352 = vld [vmem:[%s2700 + $0x110] sm:$0xff]
      %v10353 = vld [vmem:[%s2700 + $0x120] sm:$0xff]
      %v10354 = vld [vmem:[%s2700 + $0x128] sm:$0xff]
      %v10355 = vld [vmem:[%s2700 + $0x138] sm:$0xff]
      %v10356 = vld [vmem:[%s2700 + $0x140] sm:$0xff]
      %v10357 = vld [vmem:[%s2700 + $0x150] sm:$0xff]
      %v10358 = vld [vmem:[%s2700 + $0x158] sm:$0xff]
      %v10359 = vld [vmem:[%s2700 + $0x168] sm:$0xff]
      %v10360 = vld [vmem:[%s2700 + $0x170] sm:$0xff]
      %v10361 = vld [vmem:[%s2700 + $0x1] sm:$0xff]
      %v10362 = vld [vmem:[%s2700 + $0x9] sm:$0xff]
      %v10363 = vld [vmem:[%s2700 + $0x19] sm:$0xff]
      %v10364 = vld [vmem:[%s2700 + $0x21] sm:$0xff]
      %v10365 = vld [vmem:[%s2700 + $0x31] sm:$0xff]
      %v10366 = vld [vmem:[%s2700 + $0x39] sm:$0xff]
      %v10367 = vld [vmem:[%s2700 + $0x49] sm:$0xff]
      %v10368 = vld [vmem:[%s2700 + $0x51] sm:$0xff]
      %v10369 = vld [vmem:[%s2700 + $0x61] sm:$0xff]
      %v10370 = vld [vmem:[%s2700 + $0x69] sm:$0xff]
      %v10371 = vld [vmem:[%s2700 + $0x79] sm:$0xff]
      %v10372 = vld [vmem:[%s2700 + $0x81] sm:$0xff]
      %v10373 = vld [vmem:[%s2700 + $0x91] sm:$0xff]
      %v10374 = vld [vmem:[%s2700 + $0x99] sm:$0xff]
      %v10375 = vld [vmem:[%s2700 + $0xa9] sm:$0xff]
      %v10376 = vld [vmem:[%s2700 + $0xb1] sm:$0xff]
      %v10377 = vld [vmem:[%s2700 + $0xc1] sm:$0xff]
      %v10378 = vld [vmem:[%s2700 + $0xc9] sm:$0xff]
      %v10379 = vld [vmem:[%s2700 + $0xd9] sm:$0xff]
      %v10380 = vld [vmem:[%s2700 + $0xe1] sm:$0xff]
      %v10381 = vld [vmem:[%s2700 + $0xf1] sm:$0xff]
      %v10382 = vld [vmem:[%s2700 + $0xf9] sm:$0xff]
      %v10383 = vld [vmem:[%s2700 + $0x109] sm:$0xff]
      %v10384 = vld [vmem:[%s2700 + $0x111] sm:$0xff]
      %v10385 = vld [vmem:[%s2700 + $0x121] sm:$0xff]
      %v10386 = vld [vmem:[%s2700 + $0x129] sm:$0xff]
      %v10387 = vld [vmem:[%s2700 + $0x139] sm:$0xff]
      %v10388 = vld [vmem:[%s2700 + $0x141] sm:$0xff]
      %v10389 = vld [vmem:[%s2700 + $0x151] sm:$0xff]
      %v10390 = vld [vmem:[%s2700 + $0x159] sm:$0xff]
      %v10391 = vld [vmem:[%s2700 + $0x169] sm:$0xff]
      %v10392 = vld [vmem:[%s2700 + $0x171] sm:$0xff]
      %v10393 = vld [vmem:[%s2700 + $0x2] sm:$0xff]
      %v10394 = vld [vmem:[%s2700 + $0xa] sm:$0xff]
      %v10395 = vld [vmem:[%s2700 + $0x1a] sm:$0xff]
      %v10396 = vld [vmem:[%s2700 + $0x22] sm:$0xff]
      %v10397 = vld [vmem:[%s2700 + $0x32] sm:$0xff]
      %v10398 = vld [vmem:[%s2700 + $0x3a] sm:$0xff]
      %v10399 = vld [vmem:[%s2700 + $0x4a] sm:$0xff]
      %v10400 = vld [vmem:[%s2700 + $0x52] sm:$0xff]
      %v10401 = vld [vmem:[%s2700 + $0x62] sm:$0xff]
      %v10402 = vld [vmem:[%s2700 + $0x6a] sm:$0xff]
      %v10403 = vld [vmem:[%s2700 + $0x7a] sm:$0xff]
      %v10404 = vld [vmem:[%s2700 + $0x82] sm:$0xff]
      %v10405 = vld [vmem:[%s2700 + $0x92] sm:$0xff]
      %v10406 = vld [vmem:[%s2700 + $0x9a] sm:$0xff]
      %v10407 = vld [vmem:[%s2700 + $0xaa] sm:$0xff]
      %v10408 = vld [vmem:[%s2700 + $0xb2] sm:$0xff]
      %v10409 = vld [vmem:[%s2700 + $0xc2] sm:$0xff]
      %v10410 = vld [vmem:[%s2700 + $0xca] sm:$0xff]
      %v10411 = vld [vmem:[%s2700 + $0xda] sm:$0xff]
      %v10412 = vld [vmem:[%s2700 + $0xe2] sm:$0xff]
      %v10413 = vld [vmem:[%s2700 + $0xf2] sm:$0xff]
      %v10414 = vld [vmem:[%s2700 + $0xfa] sm:$0xff]
      %v10415 = vld [vmem:[%s2700 + $0x10a] sm:$0xff]
      %v10416 = vld [vmem:[%s2700 + $0x112] sm:$0xff]
      %v10417 = vld [vmem:[%s2700 + $0x122] sm:$0xff]
      %v10418 = vld [vmem:[%s2700 + $0x12a] sm:$0xff]
      %v10419 = vld [vmem:[%s2700 + $0x13a] sm:$0xff]
      %v10420 = vld [vmem:[%s2700 + $0x142] sm:$0xff]
      %v10421 = vld [vmem:[%s2700 + $0x152] sm:$0xff]
      %v10422 = vld [vmem:[%s2700 + $0x15a] sm:$0xff]
      %v10423 = vld [vmem:[%s2700 + $0x16a] sm:$0xff]
      %v10424 = vld [vmem:[%s2700 + $0x172] sm:$0xff]
      %10457 = vrot.lane.b32.xlu0 %v10169, 10
      %v10458 = vpop.permute.xlu0 %10457
      %10459 = vrot.lane.b32.xlu0 %v10170, 10
      %v10460 = vpop.permute.xlu0 %10459
      %10461 = vrot.lane.b32.xlu0 %v10171, 10
      %v10462 = vpop.permute.xlu0 %10461
      %10463 = vrot.lane.b32.xlu0 %v10172, 10
      %v10464 = vpop.permute.xlu0 %10463
      %10465 = vrot.lane.b32.xlu0 %v10173, 10
      %v10466 = vpop.permute.xlu0 %10465
      %10467 = vrot.lane.b32.xlu0 %v10174, 10
      %v10468 = vpop.permute.xlu0 %10467
      %10469 = vrot.lane.b32.xlu0 %v10175, 10
      %v10470 = vpop.permute.xlu0 %10469
      %10471 = vrot.lane.b32.xlu0 %v10176, 10
      %v10472 = vpop.permute.xlu0 %10471
      %10473 = vrot.lane.b32.xlu0 %v10177, 10
      %v10474 = vpop.permute.xlu0 %10473
      %10475 = vrot.lane.b32.xlu0 %v10178, 10
      %v10476 = vpop.permute.xlu0 %10475
      %10477 = vrot.lane.b32.xlu0 %v10179, 10
      %v10478 = vpop.permute.xlu0 %10477
      %10479 = vrot.lane.b32.xlu0 %v10180, 10
      %v10480 = vpop.permute.xlu0 %10479
      %10481 = vrot.lane.b32.xlu0 %v10181, 10
      %v10482 = vpop.permute.xlu0 %10481
      %10483 = vrot.lane.b32.xlu0 %v10182, 10
      %v10484 = vpop.permute.xlu0 %10483
      %10485 = vrot.lane.b32.xlu0 %v10183, 10
      %v10486 = vpop.permute.xlu0 %10485
      %10487 = vrot.lane.b32.xlu0 %v10184, 10
      %v10488 = vpop.permute.xlu0 %10487
      %10489 = vrot.lane.b32.xlu0 %v10185, 10
      %v10490 = vpop.permute.xlu0 %10489
      %10491 = vrot.lane.b32.xlu0 %v10186, 10
      %v10492 = vpop.permute.xlu0 %10491
      %10493 = vrot.lane.b32.xlu0 %v10187, 10
      %v10494 = vpop.permute.xlu0 %10493
      %10495 = vrot.lane.b32.xlu0 %v10188, 10
      %v10496 = vpop.permute.xlu0 %10495
      %10497 = vrot.lane.b32.xlu0 %v10189, 10
      %v10498 = vpop.permute.xlu0 %10497
      %10499 = vrot.lane.b32.xlu0 %v10190, 10
      %v10500 = vpop.permute.xlu0 %10499
      %10501 = vrot.lane.b32.xlu0 %v10191, 10
      %v10502 = vpop.permute.xlu0 %10501
      %10503 = vrot.lane.b32.xlu0 %v10192, 10
      %v10504 = vpop.permute.xlu0 %10503
      %10505 = vrot.lane.b32.xlu0 %v10193, 10
      %v10506 = vpop.permute.xlu0 %10505
      %10507 = vrot.lane.b32.xlu0 %v10194, 10
      %v10508 = vpop.permute.xlu0 %10507
      %10509 = vrot.lane.b32.xlu0 %v10195, 10
      %v10510 = vpop.permute.xlu0 %10509
      %10511 = vrot.lane.b32.xlu0 %v10196, 10
      %v10512 = vpop.permute.xlu0 %10511
      %10513 = vrot.lane.b32.xlu0 %v10197, 10
      %v10514 = vpop.permute.xlu0 %10513
      %10515 = vrot.lane.b32.xlu0 %v10198, 10
      %v10516 = vpop.permute.xlu0 %10515
      %10517 = vrot.lane.b32.xlu0 %v10199, 10
      %v10518 = vpop.permute.xlu0 %10517
      %10519 = vrot.lane.b32.xlu0 %v10200, 10
      %v10520 = vpop.permute.xlu0 %10519
      %10585 = vrot.lane.b32.xlu0 %v10201, 20
      %v10586 = vpop.permute.xlu0 %10585
      %10587 = vrot.lane.b32.xlu0 %v10202, 20
      %v10588 = vpop.permute.xlu0 %10587
      %10589 = vrot.lane.b32.xlu0 %v10203, 20
      %v10590 = vpop.permute.xlu0 %10589
      %10591 = vrot.lane.b32.xlu0 %v10204, 20
      %v10592 = vpop.permute.xlu0 %10591
      %10593 = vrot.lane.b32.xlu0 %v10205, 20
      %v10594 = vpop.permute.xlu0 %10593
      %10595 = vrot.lane.b32.xlu0 %v10206, 20
      %v10596 = vpop.permute.xlu0 %10595
      %10597 = vrot.lane.b32.xlu0 %v10207, 20
      %v10598 = vpop.permute.xlu0 %10597
      %10599 = vrot.lane.b32.xlu0 %v10208, 20
      %v10600 = vpop.permute.xlu0 %10599
      %10601 = vrot.lane.b32.xlu0 %v10209, 20
      %v10602 = vpop.permute.xlu0 %10601
      %10603 = vrot.lane.b32.xlu0 %v10210, 20
      %v10604 = vpop.permute.xlu0 %10603
      %10605 = vrot.lane.b32.xlu0 %v10211, 20
      %v10606 = vpop.permute.xlu0 %10605
      %10607 = vrot.lane.b32.xlu0 %v10212, 20
      %v10608 = vpop.permute.xlu0 %10607
      %10609 = vrot.lane.b32.xlu0 %v10213, 20
      %v10610 = vpop.permute.xlu0 %10609
      %10611 = vrot.lane.b32.xlu0 %v10214, 20
      %v10612 = vpop.permute.xlu0 %10611
      %10613 = vrot.lane.b32.xlu0 %v10215, 20
      %v10614 = vpop.permute.xlu0 %10613
      %10615 = vrot.lane.b32.xlu0 %v10216, 20
      %v10616 = vpop.permute.xlu0 %10615
      %10617 = vrot.lane.b32.xlu0 %v10217, 20
      %v10618 = vpop.permute.xlu0 %10617
      %10619 = vrot.lane.b32.xlu0 %v10218, 20
      %v10620 = vpop.permute.xlu0 %10619
      %10621 = vrot.lane.b32.xlu0 %v10219, 20
      %v10622 = vpop.permute.xlu0 %10621
      %10623 = vrot.lane.b32.xlu0 %v10220, 20
      %v10624 = vpop.permute.xlu0 %10623
      %10625 = vrot.lane.b32.xlu0 %v10221, 20
      %v10626 = vpop.permute.xlu0 %10625
      %10627 = vrot.lane.b32.xlu0 %v10222, 20
      %v10628 = vpop.permute.xlu0 %10627
      %10629 = vrot.lane.b32.xlu0 %v10223, 20
      %v10630 = vpop.permute.xlu0 %10629
      %10631 = vrot.lane.b32.xlu0 %v10224, 20
      %v10632 = vpop.permute.xlu0 %10631
      %10633 = vrot.lane.b32.xlu0 %v10225, 20
      %v10634 = vpop.permute.xlu0 %10633
      %10635 = vrot.lane.b32.xlu0 %v10226, 20
      %v10636 = vpop.permute.xlu0 %10635
      %10637 = vrot.lane.b32.xlu0 %v10227, 20
      %v10638 = vpop.permute.xlu0 %10637
      %10639 = vrot.lane.b32.xlu0 %v10228, 20
      %v10640 = vpop.permute.xlu0 %10639
      %10641 = vrot.lane.b32.xlu0 %v10229, 20
      %v10642 = vpop.permute.xlu0 %10641
      %10643 = vrot.lane.b32.xlu0 %v10230, 20
      %v10644 = vpop.permute.xlu0 %10643
      %10645 = vrot.lane.b32.xlu0 %v10231, 20
      %v10646 = vpop.permute.xlu0 %10645
      %10647 = vrot.lane.b32.xlu0 %v10232, 20
      %v10648 = vpop.permute.xlu0 %10647
      %10713 = vrot.lane.b32.xlu0 %v10233, 30
      %v10714 = vpop.permute.xlu0 %10713
      %10715 = vrot.lane.b32.xlu0 %v10234, 30
      %v10716 = vpop.permute.xlu0 %10715
      %10717 = vrot.lane.b32.xlu0 %v10235, 30
      %v10718 = vpop.permute.xlu0 %10717
      %10719 = vrot.lane.b32.xlu0 %v10236, 30
      %v10720 = vpop.permute.xlu0 %10719
      %10721 = vrot.lane.b32.xlu0 %v10237, 30
      %v10722 = vpop.permute.xlu0 %10721
      %10723 = vrot.lane.b32.xlu0 %v10238, 30
      %v10724 = vpop.permute.xlu0 %10723
      %10725 = vrot.lane.b32.xlu0 %v10239, 30
      %v10726 = vpop.permute.xlu0 %10725
      %10727 = vrot.lane.b32.xlu0 %v10240, 30
      %v10728 = vpop.permute.xlu0 %10727
      %10729 = vrot.lane.b32.xlu0 %v10241, 30
      %v10730 = vpop.permute.xlu0 %10729
      %10731 = vrot.lane.b32.xlu0 %v10242, 30
      %v10732 = vpop.permute.xlu0 %10731
      %10733 = vrot.lane.b32.xlu0 %v10243, 30
      %v10734 = vpop.permute.xlu0 %10733
      %10735 = vrot.lane.b32.xlu0 %v10244, 30
      %v10736 = vpop.permute.xlu0 %10735
      %10737 = vrot.lane.b32.xlu0 %v10245, 30
      %v10738 = vpop.permute.xlu0 %10737
      %10739 = vrot.lane.b32.xlu0 %v10246, 30
      %v10740 = vpop.permute.xlu0 %10739
      %10741 = vrot.lane.b32.xlu0 %v10247, 30
      %v10742 = vpop.permute.xlu0 %10741
      %10743 = vrot.lane.b32.xlu0 %v10248, 30
      %v10744 = vpop.permute.xlu0 %10743
      %10745 = vrot.lane.b32.xlu0 %v10249, 30
      %v10746 = vpop.permute.xlu0 %10745
      %10747 = vrot.lane.b32.xlu0 %v10250, 30
      %v10748 = vpop.permute.xlu0 %10747
      %10749 = vrot.lane.b32.xlu0 %v10251, 30
      %v10750 = vpop.permute.xlu0 %10749
      %10751 = vrot.lane.b32.xlu0 %v10252, 30
      %v10752 = vpop.permute.xlu0 %10751
      %10753 = vrot.lane.b32.xlu0 %v10253, 30
      %v10754 = vpop.permute.xlu0 %10753
      %10755 = vrot.lane.b32.xlu0 %v10254, 30
      %v10756 = vpop.permute.xlu0 %10755
      %10757 = vrot.lane.b32.xlu0 %v10255, 30
      %v10758 = vpop.permute.xlu0 %10757
      %10759 = vrot.lane.b32.xlu0 %v10256, 30
      %v10760 = vpop.permute.xlu0 %10759
      %10761 = vrot.lane.b32.xlu0 %v10257, 30
      %v10762 = vpop.permute.xlu0 %10761
      %10763 = vrot.lane.b32.xlu0 %v10258, 30
      %v10764 = vpop.permute.xlu0 %10763
      %10765 = vrot.lane.b32.xlu0 %v10259, 30
      %v10766 = vpop.permute.xlu0 %10765
      %10767 = vrot.lane.b32.xlu0 %v10260, 30
      %v10768 = vpop.permute.xlu0 %10767
      %10769 = vrot.lane.b32.xlu0 %v10261, 30
      %v10770 = vpop.permute.xlu0 %10769
      %10771 = vrot.lane.b32.xlu0 %v10262, 30
      %v10772 = vpop.permute.xlu0 %10771
      %10773 = vrot.lane.b32.xlu0 %v10263, 30
      %v10774 = vpop.permute.xlu0 %10773
      %10775 = vrot.lane.b32.xlu0 %v10264, 30
      %v10776 = vpop.permute.xlu0 %10775
      %10841 = vrot.lane.b32.xlu0 %v10265, 40
      %v10842 = vpop.permute.xlu0 %10841
      %10843 = vrot.lane.b32.xlu0 %v10266, 40
      %v10844 = vpop.permute.xlu0 %10843
      %10845 = vrot.lane.b32.xlu0 %v10267, 40
      %v10846 = vpop.permute.xlu0 %10845
      %10847 = vrot.lane.b32.xlu0 %v10268, 40
      %v10848 = vpop.permute.xlu0 %10847
      %10849 = vrot.lane.b32.xlu0 %v10269, 40
      %v10850 = vpop.permute.xlu0 %10849
      %10851 = vrot.lane.b32.xlu0 %v10270, 40
      %v10852 = vpop.permute.xlu0 %10851
      %10853 = vrot.lane.b32.xlu0 %v10271, 40
      %v10854 = vpop.permute.xlu0 %10853
      %10855 = vrot.lane.b32.xlu0 %v10272, 40
      %v10856 = vpop.permute.xlu0 %10855
      %10857 = vrot.lane.b32.xlu0 %v10273, 40
      %v10858 = vpop.permute.xlu0 %10857
      %10859 = vrot.lane.b32.xlu0 %v10274, 40
      %v10860 = vpop.permute.xlu0 %10859
      %10861 = vrot.lane.b32.xlu0 %v10275, 40
      %v10862 = vpop.permute.xlu0 %10861
      %10863 = vrot.lane.b32.xlu0 %v10276, 40
      %v10864 = vpop.permute.xlu0 %10863
      %10865 = vrot.lane.b32.xlu0 %v10277, 40
      %v10866 = vpop.permute.xlu0 %10865
      %10867 = vrot.lane.b32.xlu0 %v10278, 40
      %v10868 = vpop.permute.xlu0 %10867
      %10869 = vrot.lane.b32.xlu0 %v10279, 40
      %v10870 = vpop.permute.xlu0 %10869
      %10871 = vrot.lane.b32.xlu0 %v10280, 40
      %v10872 = vpop.permute.xlu0 %10871
      %10873 = vrot.lane.b32.xlu0 %v10281, 40
      %v10874 = vpop.permute.xlu0 %10873
      %10875 = vrot.lane.b32.xlu0 %v10282, 40
      %v10876 = vpop.permute.xlu0 %10875
      %10877 = vrot.lane.b32.xlu0 %v10283, 40
      %v10878 = vpop.permute.xlu0 %10877
      %10879 = vrot.lane.b32.xlu0 %v10284, 40
      %v10880 = vpop.permute.xlu0 %10879
      %10881 = vrot.lane.b32.xlu0 %v10285, 40
      %v10882 = vpop.permute.xlu0 %10881
      %10883 = vrot.lane.b32.xlu0 %v10286, 40
      %v10884 = vpop.permute.xlu0 %10883
      %10885 = vrot.lane.b32.xlu0 %v10287, 40
      %v10886 = vpop.permute.xlu0 %10885
      %10887 = vrot.lane.b32.xlu0 %v10288, 40
      %v10888 = vpop.permute.xlu0 %10887
      %10889 = vrot.lane.b32.xlu0 %v10289, 40
      %v10890 = vpop.permute.xlu0 %10889
      %10891 = vrot.lane.b32.xlu0 %v10290, 40
      %v10892 = vpop.permute.xlu0 %10891
      %10893 = vrot.lane.b32.xlu0 %v10291, 40
      %v10894 = vpop.permute.xlu0 %10893
      %10895 = vrot.lane.b32.xlu0 %v10292, 40
      %v10896 = vpop.permute.xlu0 %10895
      %10897 = vrot.lane.b32.xlu0 %v10293, 40
      %v10898 = vpop.permute.xlu0 %10897
      %10899 = vrot.lane.b32.xlu0 %v10294, 40
      %v10900 = vpop.permute.xlu0 %10899
      %10901 = vrot.lane.b32.xlu0 %v10295, 40
      %v10902 = vpop.permute.xlu0 %10901
      %10903 = vrot.lane.b32.xlu0 %v10296, 40
      %v10904 = vpop.permute.xlu0 %10903
      %10969 = vrot.lane.b32.xlu0 %v10297, 50
      %v10970 = vpop.permute.xlu0 %10969
      %10971 = vrot.lane.b32.xlu0 %v10298, 50
      %v10972 = vpop.permute.xlu0 %10971
      %10973 = vrot.lane.b32.xlu0 %v10299, 50
      %v10974 = vpop.permute.xlu0 %10973
      %10975 = vrot.lane.b32.xlu0 %v10300, 50
      %v10976 = vpop.permute.xlu0 %10975
      %10977 = vrot.lane.b32.xlu0 %v10301, 50
      %v10978 = vpop.permute.xlu0 %10977
      %10979 = vrot.lane.b32.xlu0 %v10302, 50
      %v10980 = vpop.permute.xlu0 %10979
      %10981 = vrot.lane.b32.xlu0 %v10303, 50
      %v10982 = vpop.permute.xlu0 %10981
      %10983 = vrot.lane.b32.xlu0 %v10304, 50
      %v10984 = vpop.permute.xlu0 %10983
      %10985 = vrot.lane.b32.xlu0 %v10305, 50
      %v10986 = vpop.permute.xlu0 %10985
      %10987 = vrot.lane.b32.xlu0 %v10306, 50
      %v10988 = vpop.permute.xlu0 %10987
      %10989 = vrot.lane.b32.xlu0 %v10307, 50
      %v10990 = vpop.permute.xlu0 %10989
      %10991 = vrot.lane.b32.xlu0 %v10308, 50
      %v10992 = vpop.permute.xlu0 %10991
      %10993 = vrot.lane.b32.xlu0 %v10309, 50
      %v10994 = vpop.permute.xlu0 %10993
      %10995 = vrot.lane.b32.xlu0 %v10310, 50
      %v10996 = vpop.permute.xlu0 %10995
      %10997 = vrot.lane.b32.xlu0 %v10311, 50
      %v10998 = vpop.permute.xlu0 %10997
      %10999 = vrot.lane.b32.xlu0 %v10312, 50
      %v11000 = vpop.permute.xlu0 %10999
      %11001 = vrot.lane.b32.xlu0 %v10313, 50
      %v11002 = vpop.permute.xlu0 %11001
      %11003 = vrot.lane.b32.xlu0 %v10314, 50
      %v11004 = vpop.permute.xlu0 %11003
      %11005 = vrot.lane.b32.xlu0 %v10315, 50
      %v11006 = vpop.permute.xlu0 %11005
      %11007 = vrot.lane.b32.xlu0 %v10316, 50
      %v11008 = vpop.permute.xlu0 %11007
      %11009 = vrot.lane.b32.xlu0 %v10317, 50
      %v11010 = vpop.permute.xlu0 %11009
      %11011 = vrot.lane.b32.xlu0 %v10318, 50
      %v11012 = vpop.permute.xlu0 %11011
      %11013 = vrot.lane.b32.xlu0 %v10319, 50
      %v11014 = vpop.permute.xlu0 %11013
      %11015 = vrot.lane.b32.xlu0 %v10320, 50
      %v11016 = vpop.permute.xlu0 %11015
      %11017 = vrot.lane.b32.xlu0 %v10321, 50
      %v11018 = vpop.permute.xlu0 %11017
      %11019 = vrot.lane.b32.xlu0 %v10322, 50
      %v11020 = vpop.permute.xlu0 %11019
      %11021 = vrot.lane.b32.xlu0 %v10323, 50
      %v11022 = vpop.permute.xlu0 %11021
      %11023 = vrot.lane.b32.xlu0 %v10324, 50
      %v11024 = vpop.permute.xlu0 %11023
      %11025 = vrot.lane.b32.xlu0 %v10325, 50
      %v11026 = vpop.permute.xlu0 %11025
      %11027 = vrot.lane.b32.xlu0 %v10326, 50
      %v11028 = vpop.permute.xlu0 %11027
      %11029 = vrot.lane.b32.xlu0 %v10327, 50
      %v11030 = vpop.permute.xlu0 %11029
      %11031 = vrot.lane.b32.xlu0 %v10328, 50
      %v11032 = vpop.permute.xlu0 %11031
      %11097 = vrot.lane.b32.xlu0 %v10329, 60
      %v11098 = vpop.permute.xlu0 %11097
      %11099 = vrot.lane.b32.xlu0 %v10330, 60
      %v11100 = vpop.permute.xlu0 %11099
      %11101 = vrot.lane.b32.xlu0 %v10331, 60
      %v11102 = vpop.permute.xlu0 %11101
      %11103 = vrot.lane.b32.xlu0 %v10332, 60
      %v11104 = vpop.permute.xlu0 %11103
      %11105 = vrot.lane.b32.xlu0 %v10333, 60
      %v11106 = vpop.permute.xlu0 %11105
      %11107 = vrot.lane.b32.xlu0 %v10334, 60
      %v11108 = vpop.permute.xlu0 %11107
      %11109 = vrot.lane.b32.xlu0 %v10335, 60
      %v11110 = vpop.permute.xlu0 %11109
      %11111 = vrot.lane.b32.xlu0 %v10336, 60
      %v11112 = vpop.permute.xlu0 %11111
      %11113 = vrot.lane.b32.xlu0 %v10337, 60
      %v11114 = vpop.permute.xlu0 %11113
      %11115 = vrot.lane.b32.xlu0 %v10338, 60
      %v11116 = vpop.permute.xlu0 %11115
      %11117 = vrot.lane.b32.xlu0 %v10339, 60
      %v11118 = vpop.permute.xlu0 %11117
      %11119 = vrot.lane.b32.xlu0 %v10340, 60
      %v11120 = vpop.permute.xlu0 %11119
      %11121 = vrot.lane.b32.xlu0 %v10341, 60
      %v11122 = vpop.permute.xlu0 %11121
      %11123 = vrot.lane.b32.xlu0 %v10342, 60
      %v11124 = vpop.permute.xlu0 %11123
      %11125 = vrot.lane.b32.xlu0 %v10343, 60
      %v11126 = vpop.permute.xlu0 %11125
      %11127 = vrot.lane.b32.xlu0 %v10344, 60
      %v11128 = vpop.permute.xlu0 %11127
      %11129 = vrot.lane.b32.xlu0 %v10345, 60
      %v11130 = vpop.permute.xlu0 %11129
      %11131 = vrot.lane.b32.xlu0 %v10346, 60
      %v11132 = vpop.permute.xlu0 %11131
      %11133 = vrot.lane.b32.xlu0 %v10347, 60
      %v11134 = vpop.permute.xlu0 %11133
      %11135 = vrot.lane.b32.xlu0 %v10348, 60
      %v11136 = vpop.permute.xlu0 %11135
      %11137 = vrot.lane.b32.xlu0 %v10349, 60
      %v11138 = vpop.permute.xlu0 %11137
      %11139 = vrot.lane.b32.xlu0 %v10350, 60
      %v11140 = vpop.permute.xlu0 %11139
      %11141 = vrot.lane.b32.xlu0 %v10351, 60
      %v11142 = vpop.permute.xlu0 %11141
      %11143 = vrot.lane.b32.xlu0 %v10352, 60
      %v11144 = vpop.permute.xlu0 %11143
      %11145 = vrot.lane.b32.xlu0 %v10353, 60
      %v11146 = vpop.permute.xlu0 %11145
      %11147 = vrot.lane.b32.xlu0 %v10354, 60
      %v11148 = vpop.permute.xlu0 %11147
      %11149 = vrot.lane.b32.xlu0 %v10355, 60
      %v11150 = vpop.permute.xlu0 %11149
      %11151 = vrot.lane.b32.xlu0 %v10356, 60
      %v11152 = vpop.permute.xlu0 %11151
      %11153 = vrot.lane.b32.xlu0 %v10357, 60
      %v11154 = vpop.permute.xlu0 %11153
      %11155 = vrot.lane.b32.xlu0 %v10358, 60
      %v11156 = vpop.permute.xlu0 %11155
      %11157 = vrot.lane.b32.xlu0 %v10359, 60
      %v11158 = vpop.permute.xlu0 %11157
      %11159 = vrot.lane.b32.xlu0 %v10360, 60
      %v11160 = vpop.permute.xlu0 %11159
      %11225 = vrot.lane.b32.xlu0 %v10361, 70
      %v11226 = vpop.permute.xlu0 %11225
      %11227 = vrot.lane.b32.xlu0 %v10362, 70
      %v11228 = vpop.permute.xlu0 %11227
      %11229 = vrot.lane.b32.xlu0 %v10363, 70
      %v11230 = vpop.permute.xlu0 %11229
      %11231 = vrot.lane.b32.xlu0 %v10364, 70
      %v11232 = vpop.permute.xlu0 %11231
      %11233 = vrot.lane.b32.xlu0 %v10365, 70
      %v11234 = vpop.permute.xlu0 %11233
      %11235 = vrot.lane.b32.xlu0 %v10366, 70
      %v11236 = vpop.permute.xlu0 %11235
      %11237 = vrot.lane.b32.xlu0 %v10367, 70
      %v11238 = vpop.permute.xlu0 %11237
      %11239 = vrot.lane.b32.xlu0 %v10368, 70
      %v11240 = vpop.permute.xlu0 %11239
      %11241 = vrot.lane.b32.xlu0 %v10369, 70
      %v11242 = vpop.permute.xlu0 %11241
      %11243 = vrot.lane.b32.xlu0 %v10370, 70
      %v11244 = vpop.permute.xlu0 %11243
      %11245 = vrot.lane.b32.xlu0 %v10371, 70
      %v11246 = vpop.permute.xlu0 %11245
      %11247 = vrot.lane.b32.xlu0 %v10372, 70
      %v11248 = vpop.permute.xlu0 %11247
      %11249 = vrot.lane.b32.xlu0 %v10373, 70
      %v11250 = vpop.permute.xlu0 %11249
      %11251 = vrot.lane.b32.xlu0 %v10374, 70
      %v11252 = vpop.permute.xlu0 %11251
      %11253 = vrot.lane.b32.xlu0 %v10375, 70
      %v11254 = vpop.permute.xlu0 %11253
      %11255 = vrot.lane.b32.xlu0 %v10376, 70
      %v11256 = vpop.permute.xlu0 %11255
      %11257 = vrot.lane.b32.xlu0 %v10377, 70
      %v11258 = vpop.permute.xlu0 %11257
      %11259 = vrot.lane.b32.xlu0 %v10378, 70
      %v11260 = vpop.permute.xlu0 %11259
      %11261 = vrot.lane.b32.xlu0 %v10379, 70
      %v11262 = vpop.permute.xlu0 %11261
      %11263 = vrot.lane.b32.xlu0 %v10380, 70
      %v11264 = vpop.permute.xlu0 %11263
      %11265 = vrot.lane.b32.xlu0 %v10381, 70
      %v11266 = vpop.permute.xlu0 %11265
      %11267 = vrot.lane.b32.xlu0 %v10382, 70
      %v11268 = vpop.permute.xlu0 %11267
      %11269 = vrot.lane.b32.xlu0 %v10383, 70
      %v11270 = vpop.permute.xlu0 %11269
      %11271 = vrot.lane.b32.xlu0 %v10384, 70
      %v11272 = vpop.permute.xlu0 %11271
      %11273 = vrot.lane.b32.xlu0 %v10385, 70
      %v11274 = vpop.permute.xlu0 %11273
      %11275 = vrot.lane.b32.xlu0 %v10386, 70
      %v11276 = vpop.permute.xlu0 %11275
      %11277 = vrot.lane.b32.xlu0 %v10387, 70
      %v11278 = vpop.permute.xlu0 %11277
      %11279 = vrot.lane.b32.xlu0 %v10388, 70
      %v11280 = vpop.permute.xlu0 %11279
      %11281 = vrot.lane.b32.xlu0 %v10389, 70
      %v11282 = vpop.permute.xlu0 %11281
      %11283 = vrot.lane.b32.xlu0 %v10390, 70
      %v11284 = vpop.permute.xlu0 %11283
      %11285 = vrot.lane.b32.xlu0 %v10391, 70
      %v11286 = vpop.permute.xlu0 %11285
      %11287 = vrot.lane.b32.xlu0 %v10392, 70
      %v11288 = vpop.permute.xlu0 %11287
      %11353 = vrot.lane.b32.xlu0 %v10393, 80
      %v11354 = vpop.permute.xlu0 %11353
      %11355 = vrot.lane.b32.xlu0 %v10394, 80
      %v11356 = vpop.permute.xlu0 %11355
      %11357 = vrot.lane.b32.xlu0 %v10395, 80
      %v11358 = vpop.permute.xlu0 %11357
      %11359 = vrot.lane.b32.xlu0 %v10396, 80
      %v11360 = vpop.permute.xlu0 %11359
      %11361 = vrot.lane.b32.xlu0 %v10397, 80
      %v11362 = vpop.permute.xlu0 %11361
      %11363 = vrot.lane.b32.xlu0 %v10398, 80
      %v11364 = vpop.permute.xlu0 %11363
      %11365 = vrot.lane.b32.xlu0 %v10399, 80
      %v11366 = vpop.permute.xlu0 %11365
      %11367 = vrot.lane.b32.xlu0 %v10400, 80
      %v11368 = vpop.permute.xlu0 %11367
      %11369 = vrot.lane.b32.xlu0 %v10401, 80
      %v11370 = vpop.permute.xlu0 %11369
      %11371 = vrot.lane.b32.xlu0 %v10402, 80
      %v11372 = vpop.permute.xlu0 %11371
      %11373 = vrot.lane.b32.xlu0 %v10403, 80
      %v11374 = vpop.permute.xlu0 %11373
      %11375 = vrot.lane.b32.xlu0 %v10404, 80
      %v11376 = vpop.permute.xlu0 %11375
      %11377 = vrot.lane.b32.xlu0 %v10405, 80
      %v11378 = vpop.permute.xlu0 %11377
      %11379 = vrot.lane.b32.xlu0 %v10406, 80
      %v11380 = vpop.permute.xlu0 %11379
      %11381 = vrot.lane.b32.xlu0 %v10407, 80
      %v11382 = vpop.permute.xlu0 %11381
      %11383 = vrot.lane.b32.xlu0 %v10408, 80
      %v11384 = vpop.permute.xlu0 %11383
      %11385 = vrot.lane.b32.xlu0 %v10409, 80
      %v11386 = vpop.permute.xlu0 %11385
      %11387 = vrot.lane.b32.xlu0 %v10410, 80
      %v11388 = vpop.permute.xlu0 %11387
      %11389 = vrot.lane.b32.xlu0 %v10411, 80
      %v11390 = vpop.permute.xlu0 %11389
      %11391 = vrot.lane.b32.xlu0 %v10412, 80
      %v11392 = vpop.permute.xlu0 %11391
      %11393 = vrot.lane.b32.xlu0 %v10413, 80
      %v11394 = vpop.permute.xlu0 %11393
      %11395 = vrot.lane.b32.xlu0 %v10414, 80
      %v11396 = vpop.permute.xlu0 %11395
      %11397 = vrot.lane.b32.xlu0 %v10415, 80
      %v11398 = vpop.permute.xlu0 %11397
      %11399 = vrot.lane.b32.xlu0 %v10416, 80
      %v11400 = vpop.permute.xlu0 %11399
      %11401 = vrot.lane.b32.xlu0 %v10417, 80
      %v11402 = vpop.permute.xlu0 %11401
      %11403 = vrot.lane.b32.xlu0 %v10418, 80
      %v11404 = vpop.permute.xlu0 %11403
      %11405 = vrot.lane.b32.xlu0 %v10419, 80
      %v11406 = vpop.permute.xlu0 %11405
      %11407 = vrot.lane.b32.xlu0 %v10420, 80
      %v11408 = vpop.permute.xlu0 %11407
      %11409 = vrot.lane.b32.xlu0 %v10421, 80
      %v11410 = vpop.permute.xlu0 %11409
      %11411 = vrot.lane.b32.xlu0 %v10422, 80
      %v11412 = vpop.permute.xlu0 %11411
      %11413 = vrot.lane.b32.xlu0 %v10423, 80
      %v11414 = vpop.permute.xlu0 %11413
      %11415 = vrot.lane.b32.xlu0 %v10424, 80
      %v11416 = vpop.permute.xlu0 %11415
      %v11449 = vsel %vm442, %v10137, %v10458
      %v11450 = vsel %vm442, %v10138, %v10460
      %v11451 = vsel %vm442, %v10139, %v10462
      %v11452 = vsel %vm442, %v10140, %v10464
      %v11453 = vsel %vm442, %v10141, %v10466
      %v11454 = vsel %vm442, %v10142, %v10468
      %v11455 = vsel %vm442, %v10143, %v10470
      %v11456 = vsel %vm442, %v10144, %v10472
      %v11457 = vsel %vm442, %v10145, %v10474
      %v11458 = vsel %vm442, %v10146, %v10476
      %v11459 = vsel %vm442, %v10147, %v10478
      %v11460 = vsel %vm442, %v10148, %v10480
      %v11461 = vsel %vm442, %v10149, %v10482
      %v11462 = vsel %vm442, %v10150, %v10484
      %v11463 = vsel %vm442, %v10151, %v10486
      %v11464 = vsel %vm442, %v10152, %v10488
      %v11465 = vsel %vm442, %v10153, %v10490
      %v11466 = vsel %vm442, %v10154, %v10492
      %v11467 = vsel %vm442, %v10155, %v10494
      %v11468 = vsel %vm442, %v10156, %v10496
      %v11469 = vsel %vm442, %v10157, %v10498
      %v11470 = vsel %vm442, %v10158, %v10500
      %v11471 = vsel %vm442, %v10159, %v10502
      %v11472 = vsel %vm442, %v10160, %v10504
      %v11473 = vsel %vm442, %v10161, %v10506
      %v11474 = vsel %vm442, %v10162, %v10508
      %v11475 = vsel %vm442, %v10163, %v10510
      %v11476 = vsel %vm442, %v10164, %v10512
      %v11477 = vsel %vm442, %v10165, %v10514
      %v11478 = vsel %vm442, %v10166, %v10516
      %v11479 = vsel %vm442, %v10167, %v10518
      %v11480 = vsel %vm442, %v10168, %v10520
      %v11481 = vsel %vm3853, %v11449, %v10586
      %v11482 = vsel %vm3853, %v11450, %v10588
      %v11483 = vsel %vm3853, %v11451, %v10590
      %v11484 = vsel %vm3853, %v11452, %v10592
      %v11485 = vsel %vm3853, %v11453, %v10594
      %v11486 = vsel %vm3853, %v11454, %v10596
      %v11487 = vsel %vm3853, %v11455, %v10598
      %v11488 = vsel %vm3853, %v11456, %v10600
      %v11489 = vsel %vm3853, %v11457, %v10602
      %v11490 = vsel %vm3853, %v11458, %v10604
      %v11491 = vsel %vm3853, %v11459, %v10606
      %v11492 = vsel %vm3853, %v11460, %v10608
      %v11493 = vsel %vm3853, %v11461, %v10610
      %v11494 = vsel %vm3853, %v11462, %v10612
      %v11495 = vsel %vm3853, %v11463, %v10614
      %v11496 = vsel %vm3853, %v11464, %v10616
      %v11497 = vsel %vm3853, %v11465, %v10618
      %v11498 = vsel %vm3853, %v11466, %v10620
      %v11499 = vsel %vm3853, %v11467, %v10622
      %v11500 = vsel %vm3853, %v11468, %v10624
      %v11501 = vsel %vm3853, %v11469, %v10626
      %v11502 = vsel %vm3853, %v11470, %v10628
      %v11503 = vsel %vm3853, %v11471, %v10630
      %v11504 = vsel %vm3853, %v11472, %v10632
      %v11505 = vsel %vm3853, %v11473, %v10634
      %v11506 = vsel %vm3853, %v11474, %v10636
      %v11507 = vsel %vm3853, %v11475, %v10638
      %v11508 = vsel %vm3853, %v11476, %v10640
      %v11509 = vsel %vm3853, %v11477, %v10642
      %v11510 = vsel %vm3853, %v11478, %v10644
      %v11511 = vsel %vm3853, %v11479, %v10646
      %v11512 = vsel %vm3853, %v11480, %v10648
      %v11513 = vsel %vm2042, %v11481, %v10714
      %v11514 = vsel %vm2042, %v11482, %v10716
      %v11515 = vsel %vm2042, %v11483, %v10718
      %v11516 = vsel %vm2042, %v11484, %v10720
      %v11517 = vsel %vm2042, %v11485, %v10722
      %v11518 = vsel %vm2042, %v11486, %v10724
      %v11519 = vsel %vm2042, %v11487, %v10726
      %v11520 = vsel %vm2042, %v11488, %v10728
      %v11521 = vsel %vm2042, %v11489, %v10730
      %v11522 = vsel %vm2042, %v11490, %v10732
      %v11523 = vsel %vm2042, %v11491, %v10734
      %v11524 = vsel %vm2042, %v11492, %v10736
      %v11525 = vsel %vm2042, %v11493, %v10738
      %v11526 = vsel %vm2042, %v11494, %v10740
      %v11527 = vsel %vm2042, %v11495, %v10742
      %v11528 = vsel %vm2042, %v11496, %v10744
      %v11529 = vsel %vm2042, %v11497, %v10746
      %v11530 = vsel %vm2042, %v11498, %v10748
      %v11531 = vsel %vm2042, %v11499, %v10750
      %v11532 = vsel %vm2042, %v11500, %v10752
      %v11533 = vsel %vm2042, %v11501, %v10754
      %v11534 = vsel %vm2042, %v11502, %v10756
      %v11535 = vsel %vm2042, %v11503, %v10758
      %v11536 = vsel %vm2042, %v11504, %v10760
      %v11537 = vsel %vm2042, %v11505, %v10762
      %v11538 = vsel %vm2042, %v11506, %v10764
      %v11539 = vsel %vm2042, %v11507, %v10766
      %v11540 = vsel %vm2042, %v11508, %v10768
      %v11541 = vsel %vm2042, %v11509, %v10770
      %v11542 = vsel %vm2042, %v11510, %v10772
      %v11543 = vsel %vm2042, %v11511, %v10774
      %v11544 = vsel %vm2042, %v11512, %v10776
      %v11545 = vsel %vm3918, %v11513, %v10842
      %v11546 = vsel %vm3918, %v11514, %v10844
      %v11547 = vsel %vm3918, %v11515, %v10846
      %v11548 = vsel %vm3918, %v11516, %v10848
      %v11549 = vsel %vm3918, %v11517, %v10850
      %v11550 = vsel %vm3918, %v11518, %v10852
      %v11551 = vsel %vm3918, %v11519, %v10854
      %v11552 = vsel %vm3918, %v11520, %v10856
      %v11553 = vsel %vm3918, %v11521, %v10858
      %v11554 = vsel %vm3918, %v11522, %v10860
      %v11555 = vsel %vm3918, %v11523, %v10862
      %v11556 = vsel %vm3918, %v11524, %v10864
      %v11557 = vsel %vm3918, %v11525, %v10866
      %v11558 = vsel %vm3918, %v11526, %v10868
      %v11559 = vsel %vm3918, %v11527, %v10870
      %v11560 = vsel %vm3918, %v11528, %v10872
      %v11561 = vsel %vm3918, %v11529, %v10874
      %v11562 = vsel %vm3918, %v11530, %v10876
      %v11563 = vsel %vm3918, %v11531, %v10878
      %v11564 = vsel %vm3918, %v11532, %v10880
      %v11565 = vsel %vm3918, %v11533, %v10882
      %v11566 = vsel %vm3918, %v11534, %v10884
      %v11567 = vsel %vm3918, %v11535, %v10886
      %v11568 = vsel %vm3918, %v11536, %v10888
      %v11569 = vsel %vm3918, %v11537, %v10890
      %v11570 = vsel %vm3918, %v11538, %v10892
      %v11571 = vsel %vm3918, %v11539, %v10894
      %v11572 = vsel %vm3918, %v11540, %v10896
      %v11573 = vsel %vm3918, %v11541, %v10898
      %v11574 = vsel %vm3918, %v11542, %v10900
      %v11575 = vsel %vm3918, %v11543, %v10902
      %v11576 = vsel %vm3918, %v11544, %v10904
      %v11577 = vsel %vm3951, %v11545, %v10970
      %v11578 = vsel %vm3951, %v11546, %v10972
      %v11579 = vsel %vm3951, %v11547, %v10974
      %v11580 = vsel %vm3951, %v11548, %v10976
      %v11581 = vsel %vm3951, %v11549, %v10978
      %v11582 = vsel %vm3951, %v11550, %v10980
      %v11583 = vsel %vm3951, %v11551, %v10982
      %v11584 = vsel %vm3951, %v11552, %v10984
      %v11585 = vsel %vm3951, %v11553, %v10986
      %v11586 = vsel %vm3951, %v11554, %v10988
      %v11587 = vsel %vm3951, %v11555, %v10990
      %v11588 = vsel %vm3951, %v11556, %v10992
      %v11589 = vsel %vm3951, %v11557, %v10994
      %v11590 = vsel %vm3951, %v11558, %v10996
      %v11591 = vsel %vm3951, %v11559, %v10998
      %v11592 = vsel %vm3951, %v11560, %v11000
      %v11593 = vsel %vm3951, %v11561, %v11002
      %v11594 = vsel %vm3951, %v11562, %v11004
      %v11595 = vsel %vm3951, %v11563, %v11006
      %v11596 = vsel %vm3951, %v11564, %v11008
      %v11597 = vsel %vm3951, %v11565, %v11010
      %v11598 = vsel %vm3951, %v11566, %v11012
      %v11599 = vsel %vm3951, %v11567, %v11014
      %v11600 = vsel %vm3951, %v11568, %v11016
      %v11601 = vsel %vm3951, %v11569, %v11018
      %v11602 = vsel %vm3951, %v11570, %v11020
      %v11603 = vsel %vm3951, %v11571, %v11022
      %v11604 = vsel %vm3951, %v11572, %v11024
      %v11605 = vsel %vm3951, %v11573, %v11026
      %v11606 = vsel %vm3951, %v11574, %v11028
      %v11607 = vsel %vm3951, %v11575, %v11030
      %v11608 = vsel %vm3951, %v11576, %v11032
      %v11609 = vsel %vm3984, %v11577, %v11098
      %v11610 = vsel %vm3984, %v11578, %v11100
      %v11611 = vsel %vm3984, %v11579, %v11102
      %v11612 = vsel %vm3984, %v11580, %v11104
      %v11613 = vsel %vm3984, %v11581, %v11106
      %v11614 = vsel %vm3984, %v11582, %v11108
      %v11615 = vsel %vm3984, %v11583, %v11110
      %v11616 = vsel %vm3984, %v11584, %v11112
      %v11617 = vsel %vm3984, %v11585, %v11114
      %v11618 = vsel %vm3984, %v11586, %v11116
      %v11619 = vsel %vm3984, %v11587, %v11118
      %v11620 = vsel %vm3984, %v11588, %v11120
      %v11621 = vsel %vm3984, %v11589, %v11122
      %v11622 = vsel %vm3984, %v11590, %v11124
      %v11623 = vsel %vm3984, %v11591, %v11126
      %v11624 = vsel %vm3984, %v11592, %v11128
      %v11625 = vsel %vm3984, %v11593, %v11130
      %v11626 = vsel %vm3984, %v11594, %v11132
      %v11627 = vsel %vm3984, %v11595, %v11134
      %v11628 = vsel %vm3984, %v11596, %v11136
      %v11629 = vsel %vm3984, %v11597, %v11138
      %v11630 = vsel %vm3984, %v11598, %v11140
      %v11631 = vsel %vm3984, %v11599, %v11142
      %v11632 = vsel %vm3984, %v11600, %v11144
      %v11633 = vsel %vm3984, %v11601, %v11146
      %v11634 = vsel %vm3984, %v11602, %v11148
      %v11635 = vsel %vm3984, %v11603, %v11150
      %v11636 = vsel %vm3984, %v11604, %v11152
      %v11637 = vsel %vm3984, %v11605, %v11154
      %v11638 = vsel %vm3984, %v11606, %v11156
      %v11639 = vsel %vm3984, %v11607, %v11158
      %v11640 = vsel %vm3984, %v11608, %v11160
      %v11641 = vsel %vm4017, %v11609, %v11226
      %v11642 = vsel %vm4017, %v11610, %v11228
      %v11643 = vsel %vm4017, %v11611, %v11230
      %v11644 = vsel %vm4017, %v11612, %v11232
      %v11645 = vsel %vm4017, %v11613, %v11234
      %v11646 = vsel %vm4017, %v11614, %v11236
      %v11647 = vsel %vm4017, %v11615, %v11238
      %v11648 = vsel %vm4017, %v11616, %v11240
      %v11649 = vsel %vm4017, %v11617, %v11242
      %v11650 = vsel %vm4017, %v11618, %v11244
      %v11651 = vsel %vm4017, %v11619, %v11246
      %v11652 = vsel %vm4017, %v11620, %v11248
      %v11653 = vsel %vm4017, %v11621, %v11250
      %v11654 = vsel %vm4017, %v11622, %v11252
      %v11655 = vsel %vm4017, %v11623, %v11254
      %v11656 = vsel %vm4017, %v11624, %v11256
      %v11657 = vsel %vm4017, %v11625, %v11258
      %v11658 = vsel %vm4017, %v11626, %v11260
      %v11659 = vsel %vm4017, %v11627, %v11262
      %v11660 = vsel %vm4017, %v11628, %v11264
      %v11661 = vsel %vm4017, %v11629, %v11266
      %v11662 = vsel %vm4017, %v11630, %v11268
      %v11663 = vsel %vm4017, %v11631, %v11270
      %v11664 = vsel %vm4017, %v11632, %v11272
      %v11665 = vsel %vm4017, %v11633, %v11274
      %v11666 = vsel %vm4017, %v11634, %v11276
      %v11667 = vsel %vm4017, %v11635, %v11278
      %v11668 = vsel %vm4017, %v11636, %v11280
      %v11669 = vsel %vm4017, %v11637, %v11282
      %v11670 = vsel %vm4017, %v11638, %v11284
      %v11671 = vsel %vm4017, %v11639, %v11286
      %v11672 = vsel %vm4017, %v11640, %v11288
      %v11673 = vsel %vm4050, %v11641, %v11354
      %v11674 = vsel %vm4050, %v11642, %v11356
      %v11675 = vsel %vm4050, %v11643, %v11358
      %v11676 = vsel %vm4050, %v11644, %v11360
      %v11677 = vsel %vm4050, %v11645, %v11362
      %v11678 = vsel %vm4050, %v11646, %v11364
      %v11679 = vsel %vm4050, %v11647, %v11366
      %v11680 = vsel %vm4050, %v11648, %v11368
      %v11681 = vsel %vm4050, %v11649, %v11370
      %v11682 = vsel %vm4050, %v11650, %v11372
      %v11683 = vsel %vm4050, %v11651, %v11374
      %v11684 = vsel %vm4050, %v11652, %v11376
      %v11685 = vsel %vm4050, %v11653, %v11378
      %v11686 = vsel %vm4050, %v11654, %v11380
      %v11687 = vsel %vm4050, %v11655, %v11382
      %v11688 = vsel %vm4050, %v11656, %v11384
      %v11689 = vsel %vm4050, %v11657, %v11386
      %v11690 = vsel %vm4050, %v11658, %v11388
      %v11691 = vsel %vm4050, %v11659, %v11390
      %v11692 = vsel %vm4050, %v11660, %v11392
      %v11693 = vsel %vm4050, %v11661, %v11394
      %v11694 = vsel %vm4050, %v11662, %v11396
      %v11695 = vsel %vm4050, %v11663, %v11398
      %v11696 = vsel %vm4050, %v11664, %v11400
      %v11697 = vsel %vm4050, %v11665, %v11402
      %v11698 = vsel %vm4050, %v11666, %v11404
      %v11699 = vsel %vm4050, %v11667, %v11406
      %v11700 = vsel %vm4050, %v11668, %v11408
      %v11701 = vsel %vm4050, %v11669, %v11410
      %v11702 = vsel %vm4050, %v11670, %v11412
      %v11703 = vsel %vm4050, %v11671, %v11414
      %v11704 = vsel %vm4050, %v11672, %v11416
      %v11705 = vpack.c.bf16 %v11674, %v11673
      %v11706 = vpack.c.bf16 %v11676, %v11675
      %v11707 = vpack.c.bf16 %v11678, %v11677
      %v11708 = vpack.c.bf16 %v11680, %v11679
      %v11709 = vpack.c.bf16 %v11682, %v11681
      %v11710 = vpack.c.bf16 %v11684, %v11683
      %v11711 = vpack.c.bf16 %v11686, %v11685
      %v11712 = vpack.c.bf16 %v11688, %v11687
      %v11713 = vpack.c.bf16 %v11690, %v11689
      %v11714 = vpack.c.bf16 %v11692, %v11691
      %v11715 = vpack.c.bf16 %v11694, %v11693
      %v11716 = vpack.c.bf16 %v11696, %v11695
      %v11717 = vpack.c.bf16 %v11698, %v11697
      %v11718 = vpack.c.bf16 %v11700, %v11699
      %v11719 = vpack.c.bf16 %v11702, %v11701
      %v11720 = vpack.c.bf16 %v11704, %v11703
      %v11722 = vlaneseq
      %v11723 = vshrl.u32 %v11722, 7
      %v11724 = vsub.s32 0, %v11723
      %v11725 = vrot.slane %v10136, %v11724
      %v11739 = vunpack.c.l.b16 %v10124
      %v11740 = vunpack.c.l.b16 %v10125
      %v11741 = vunpack.c.l.b16 %v10126
      %v11742 = vunpack.c.l.b16 %v10127
      %v11743 = vunpack.c.l.b16 %v10128
      %v11744 = vunpack.c.l.b16 %v10129
      %v11745 = vunpack.c.l.b16 %v10130
      %v11746 = vunpack.c.l.b16 %v10131
      %v11747 = vunpack.c.l.b16 %v10132
      %v11748 = vunpack.c.l.b16 %v10133
      %v11749 = vunpack.c.l.b16 %v10134
      %v11750 = vunpack.c.l.b16 %v10135
      %v11751 = vpack.c.b16 %v11740, %v11739
      %v11752 = vpack.c.b16 %v11742, %v11741
      %v11753 = vpack.c.b16 %v11744, %v11743
      %v11754 = vpack.c.b16 %v11746, %v11745
      %v11755 = vpack.c.b16 %v11748, %v11747
      %v11756 = vpack.c.b16 %v11750, %v11749
      %v11763 = vsel %vm4140, %v11705, 0
      %v11766 = vsel %vm4140, %v11706, 0
      %v11769 = vsel %vm4140, %v11707, 0
      %v11772 = vsel %vm4140, %v11708, 0
      %v11775 = vsel %vm4140, %v11709, 0
      %v11778 = vsel %vm4140, %v11710, 0
      %v11781 = vsel %vm4140, %v11711, 0
      %v11784 = vsel %vm4140, %v11712, 0
      %v11787 = vsel %vm4140, %v11713, 0
      %v11790 = vsel %vm4140, %v11714, 0
      %v11793 = vsel %vm4140, %v11715, 0
      %v11796 = vsel %vm4140, %v11716, 0
      %v11799 = vsel %vm4140, %v11717, 0
      %v11802 = vsel %vm4140, %v11718, 0
      %v11805 = vsel %vm4140, %v11719, 0
      %v11808 = vsel %vm4140, %v11720, 0
      %v11811 = vsel %vm4189, %v11756, 0
      %11813 = vmatprep.subr.bf16.mxu0 0
      %11814 = vmatpush1.bf16.msra.mxu0 %v11751
      %11815 = vmatprep.subr.bf16.mxu0 0
      %11816 = vmatpush1.bf16.msra.mxu0 %v11752
      %11817 = vmatprep.subr.bf16.mxu0 0
      %11818 = vmatpush1.bf16.msra.mxu0 %v11753
      %11819 = vmatprep.subr.bf16.mxu0 0
      %11820 = vmatpush1.bf16.msra.mxu0 %v11754
      %11821 = vmatprep.subr.bf16.mxu0 0
      %11822 = vmatpush1.bf16.msra.mxu0 %v11755
      %11823 = vmatprep.subr.bf16.mxu0 0
      %11824 = vmatpush1.bf16.msra.mxu0 %v11811
      %11825 = vmatprep.subr.bf16.mxu0 0
      %11826 = vmatpush1.bf16.msra.mxu0 0
      %11827 = vmatprep.subr.bf16.mxu0 0
      %11828 = vmatpush1.bf16.msra.mxu0 0
      %11829 = vmatprep.subr.bf16.mxu0 0
      %11830 = vmatpush1.bf16.msra.mxu0 0
      %11831 = vmatprep.subr.bf16.mxu0 0
      %11832 = vmatpush1.bf16.msra.mxu0 0
      %11833 = vmatprep.subr.bf16.mxu0 0
      %11834 = vmatpush1.bf16.msra.mxu0 0
      %11835 = vmatprep.subr.bf16.mxu0 0
      %11836 = vmatpush1.bf16.msra.mxu0 0
      %11837 = vmatprep.subr.bf16.mxu0 0
      %11838 = vmatpush1.bf16.msra.mxu0 0
      %11839 = vmatprep.subr.bf16.mxu0 0
      %11840 = vmatpush1.bf16.msra.mxu0 0
      %11841 = vmatprep.subr.bf16.mxu0 0
      %11842 = vmatpush1.bf16.msra.mxu0 0
      %11843 = vmatprep.subr.bf16.mxu0 0
      %11844 = vmatpush1.bf16.msra.mxu0 0
      %11845 = vmatprep.mubr.bf16.mxu0 0
      %11846 = vmatmul.mubr.bf16.gmra.mrb[0].mxu0 %v11763
      %v11847 = vpop.f32.mrb[0].mxu0
      %v11848 = vadd.f32 %v11725, %v11847
      %v11849 = vpop.f32.mrb[0].mxu0
      %v11850 = vpop.f32.mrb[0].mxu0
      %v11851 = vadd.f32 %v11725, %v11850
      %v11852 = vpop.f32.mrb[0].mxu0
      %11853 = vmatprep.mubr.bf16.mxu0 0
      %11854 = vmatmul.mubr.bf16.gmra.mrb[0].mxu0 %v11766
      %v11855 = vpop.f32.mrb[0].mxu0
      %v11856 = vadd.f32 %v11725, %v11855
      %v11857 = vpop.f32.mrb[0].mxu0
      %v11858 = vpop.f32.mrb[0].mxu0
      %v11859 = vadd.f32 %v11725, %v11858
      %v11860 = vpop.f32.mrb[0].mxu0
      %11861 = vmatprep.mubr.bf16.mxu0 0
      %11862 = vmatmul.mubr.bf16.gmra.mrb[0].mxu0 %v11769
      %v11863 = vpop.f32.mrb[0].mxu0
      %v11864 = vadd.f32 %v11725, %v11863
      %v11865 = vpop.f32.mrb[0].mxu0
      %v11866 = vpop.f32.mrb[0].mxu0
      %v11867 = vadd.f32 %v11725, %v11866
      %v11868 = vpop.f32.mrb[0].mxu0
      %11869 = vmatprep.mubr.bf16.mxu0 0
      %11870 = vmatmul.mubr.bf16.gmra.mrb[0].mxu0 %v11772
      %v11871 = vpop.f32.mrb[0].mxu0
      %v11872 = vadd.f32 %v11725, %v11871
      %v11873 = vpop.f32.mrb[0].mxu0
      %v11874 = vpop.f32.mrb[0].mxu0
      %v11875 = vadd.f32 %v11725, %v11874
      %v11876 = vpop.f32.mrb[0].mxu0
      %11877 = vmatprep.mubr.bf16.mxu0 0
      %11878 = vmatmul.mubr.bf16.gmra.mrb[0].mxu0 %v11775
      %v11879 = vpop.f32.mrb[0].mxu0
      %v11880 = vadd.f32 %v11725, %v11879
      %v11881 = vpop.f32.mrb[0].mxu0
      %v11882 = vpop.f32.mrb[0].mxu0
      %v11883 = vadd.f32 %v11725, %v11882
      %v11884 = vpop.f32.mrb[0].mxu0
      %11885 = vmatprep.mubr.bf16.mxu0 0
      %11886 = vmatmul.mubr.bf16.gmra.mrb[0].mxu0 %v11778
      %v11887 = vpop.f32.mrb[0].mxu0
      %v11888 = vadd.f32 %v11725, %v11887
      %v11889 = vpop.f32.mrb[0].mxu0
      %v11890 = vpop.f32.mrb[0].mxu0
      %v11891 = vadd.f32 %v11725, %v11890
      %v11892 = vpop.f32.mrb[0].mxu0
      %11893 = vmatprep.mubr.bf16.mxu0 0
      %11894 = vmatmul.mubr.bf16.gmra.mrb[0].mxu0 %v11781
      %v11895 = vpop.f32.mrb[0].mxu0
      %v11896 = vadd.f32 %v11725, %v11895
      %v11897 = vpop.f32.mrb[0].mxu0
      %v11898 = vpop.f32.mrb[0].mxu0
      %v11899 = vadd.f32 %v11725, %v11898
      %v11900 = vpop.f32.mrb[0].mxu0
      %11901 = vmatprep.mubr.bf16.mxu0 0
      %11902 = vmatmul.mubr.bf16.gmra.mrb[0].mxu0 %v11784
      %v11903 = vpop.f32.mrb[0].mxu0
      %v11904 = vadd.f32 %v11725, %v11903
      %v11905 = vpop.f32.mrb[0].mxu0
      %v11906 = vpop.f32.mrb[0].mxu0
      %v11907 = vadd.f32 %v11725, %v11906
      %v11908 = vpop.f32.mrb[0].mxu0
      %11909 = vmatprep.mubr.bf16.mxu0 0
      %11910 = vmatmul.mubr.bf16.gmra.mrb[0].mxu0 %v11787
      %v11911 = vpop.f32.mrb[0].mxu0
      %v11912 = vadd.f32 %v11725, %v11911
      %v11913 = vpop.f32.mrb[0].mxu0
      %v11914 = vpop.f32.mrb[0].mxu0
      %v11915 = vadd.f32 %v11725, %v11914
      %v11916 = vpop.f32.mrb[0].mxu0
      %11917 = vmatprep.mubr.bf16.mxu0 0
      %11918 = vmatmul.mubr.bf16.gmra.mrb[0].mxu0 %v11790
      %v11919 = vpop.f32.mrb[0].mxu0
      %v11920 = vadd.f32 %v11725, %v11919
      %v11921 = vpop.f32.mrb[0].mxu0
      %v11922 = vpop.f32.mrb[0].mxu0
      %v11923 = vadd.f32 %v11725, %v11922
      %v11924 = vpop.f32.mrb[0].mxu0
      %11925 = vmatprep.mubr.bf16.mxu0 0
      %11926 = vmatmul.mubr.bf16.gmra.mrb[0].mxu0 %v11793
      %v11927 = vpop.f32.mrb[0].mxu0
      %v11928 = vadd.f32 %v11725, %v11927
      %v11929 = vpop.f32.mrb[0].mxu0
      %v11930 = vpop.f32.mrb[0].mxu0
      %v11931 = vadd.f32 %v11725, %v11930
      %v11932 = vpop.f32.mrb[0].mxu0
      %11933 = vmatprep.mubr.bf16.mxu0 0
      %11934 = vmatmul.mubr.bf16.gmra.mrb[0].mxu0 %v11796
      %v11935 = vpop.f32.mrb[0].mxu0
      %v11936 = vadd.f32 %v11725, %v11935
      %v11937 = vpop.f32.mrb[0].mxu0
      %v11938 = vpop.f32.mrb[0].mxu0
      %v11939 = vadd.f32 %v11725, %v11938
      %v11940 = vpop.f32.mrb[0].mxu0
      %11941 = vmatprep.mubr.bf16.mxu0 0
      %11942 = vmatmul.mubr.bf16.gmra.mrb[0].mxu0 %v11799
      %v11943 = vpop.f32.mrb[0].mxu0
      %v11944 = vadd.f32 %v11725, %v11943
      %v11945 = vpop.f32.mrb[0].mxu0
      %v11946 = vpop.f32.mrb[0].mxu0
      %v11947 = vadd.f32 %v11725, %v11946
      %v11948 = vpop.f32.mrb[0].mxu0
      %11949 = vmatprep.mubr.bf16.mxu0 0
      %11950 = vmatmul.mubr.bf16.gmra.mrb[0].mxu0 %v11802
      %v11951 = vpop.f32.mrb[0].mxu0
      %v11952 = vadd.f32 %v11725, %v11951
      %v11953 = vpop.f32.mrb[0].mxu0
      %v11954 = vpop.f32.mrb[0].mxu0
      %v11955 = vadd.f32 %v11725, %v11954
      %v11956 = vpop.f32.mrb[0].mxu0
      %11957 = vmatprep.mubr.bf16.mxu0 0
      %11958 = vmatmul.mubr.bf16.gmra.mrb[0].mxu0 %v11805
      %v11959 = vpop.f32.mrb[0].mxu0
      %v11960 = vadd.f32 %v11725, %v11959
      %v11961 = vpop.f32.mrb[0].mxu0
      %v11962 = vpop.f32.mrb[0].mxu0
      %v11963 = vadd.f32 %v11725, %v11962
      %v11964 = vpop.f32.mrb[0].mxu0
      %11965 = vmatprep.mubr.bf16.mxu0 0
      %11966 = vmatmul.mubr.bf16.gmra.mrb[0].mxu0 %v11808
      %v11967 = vpop.f32.mrb[0].mxu0
      %v11968 = vadd.f32 %v11725, %v11967
      %v11969 = vpop.f32.mrb[0].mxu0
      %v11970 = vpop.f32.mrb[0].mxu0
      %v11971 = vadd.f32 %v11725, %v11970
      %v11972 = vpop.f32.mrb[0].mxu0
      %11973 = vdwg.mxu0
      %vm11974 = vcmask 39936
      %11975 = vst.msk [vmem:[%s440] sm:$0xff] %vm11974, %v11848
      %11976 = vst.msk [vmem:[%s440 + $0x8] sm:$0xff] %vm11974, %v11851
      %11977 = vst.msk [vmem:[%s440 + $0x10] sm:$0xff] %vm11974, %v11856
      %11978 = vst.msk [vmem:[%s440 + $0x18] sm:$0xff] %vm11974, %v11859
      %11979 = vst.msk [vmem:[%s440 + $0x20] sm:$0xff] %vm11974, %v11864
      %11980 = vst.msk [vmem:[%s440 + $0x28] sm:$0xff] %vm11974, %v11867
      %11981 = vst.msk [vmem:[%s440 + $0x30] sm:$0xff] %vm11974, %v11872
      %11982 = vst.msk [vmem:[%s440 + $0x38] sm:$0xff] %vm11974, %v11875
      %11983 = vst.msk [vmem:[%s440 + $0x40] sm:$0xff] %vm11974, %v11880
      %11984 = vst.msk [vmem:[%s440 + $0x48] sm:$0xff] %vm11974, %v11883
      %11985 = vst.msk [vmem:[%s440 + $0x50] sm:$0xff] %vm11974, %v11888
      %11986 = vst.msk [vmem:[%s440 + $0x58] sm:$0xff] %vm11974, %v11891
      %11987 = vst.msk [vmem:[%s440 + $0x60] sm:$0xff] %vm11974, %v11896
      %11988 = vst.msk [vmem:[%s440 + $0x68] sm:$0xff] %vm11974, %v11899
      %11989 = vst.msk [vmem:[%s440 + $0x70] sm:$0xff] %vm11974, %v11904
      %11990 = vst.msk [vmem:[%s440 + $0x78] sm:$0xff] %vm11974, %v11907
      %11991 = vst.msk [vmem:[%s440 + $0x80] sm:$0xff] %vm11974, %v11912
      %11992 = vst.msk [vmem:[%s440 + $0x88] sm:$0xff] %vm11974, %v11915
      %11993 = vst.msk [vmem:[%s440 + $0x90] sm:$0xff] %vm11974, %v11920
      %11994 = vst.msk [vmem:[%s440 + $0x98] sm:$0xff] %vm11974, %v11923
      %11995 = vst.msk [vmem:[%s440 + $0xa0] sm:$0xff] %vm11974, %v11928
      %11996 = vst.msk [vmem:[%s440 + $0xa8] sm:$0xff] %vm11974, %v11931
      %11997 = vst.msk [vmem:[%s440 + $0xb0] sm:$0xff] %vm11974, %v11936
      %11998 = vst.msk [vmem:[%s440 + $0xb8] sm:$0xff] %vm11974, %v11939
      %11999 = vst.msk [vmem:[%s440 + $0xc0] sm:$0xff] %vm11974, %v11944
      %12000 = vst.msk [vmem:[%s440 + $0xc8] sm:$0xff] %vm11974, %v11947
      %12001 = vst.msk [vmem:[%s440 + $0xd0] sm:$0xff] %vm11974, %v11952
      %12002 = vst.msk [vmem:[%s440 + $0xd8] sm:$0xff] %vm11974, %v11955
      %12003 = vst.msk [vmem:[%s440 + $0xe0] sm:$0xff] %vm11974, %v11960
      %12004 = vst.msk [vmem:[%s440 + $0xe8] sm:$0xff] %vm11974, %v11963
      %12005 = vst.msk [vmem:[%s440 + $0xf0] sm:$0xff] %vm11974, %v11968
      %12006 = vst.msk [vmem:[%s440 + $0xf8] sm:$0xff] %vm11974, %v11971
      %p12007 = scmp.lt.s32.totalorder %s24, 1
      %s12008 = scalar_select %p12007, %s24, 1
      %s12009 = smul.addr %s12008, 32
      %s12010 = smul.addr %s12009, 8
      %s12011 = scalar_lea.vmem %s13, %s12010
      // Predicated region
      $region73: #{tpu_custom_call.1} parent=71 // pred_check
        %p12012 = pneg %p320
      $region74: #{tpu_custom_call.1} parent=71 // pred_check_branch
        %12014 = sbr.rel (%p12012) target = $region76
      $region75: #{tpu_custom_call.1} parent=71 // pred_region
        _
      $region76: #{tpu_custom_call.1} parent=71 // pred_fallthru
        _
    $region72: #{tpu_custom_call.1} parent=5 // pred_fallthru
      _
    %p12015 = scmp.le.s32.totalorder 2, %s19
    // Predicated region
    $region77: #{tpu_custom_call.1} parent=5 // pred_check
      %p12016 = pneg %p12015
    $region78: #{tpu_custom_call.1} parent=5 // pred_check_branch
      %12018 = sbr.rel (%p12016) target = $region80
    $region79: #{tpu_custom_call.1} parent=5 // pred_region
      %s12019 = ssub.s32 %s19, 2
      // Predicated region
      $region81: #{tpu_custom_call.1} parent=79 // pred_check
        %p12020 = pneg %p326
      $region82: #{tpu_custom_call.1} parent=79 // pred_check_branch
        %12022 = sbr.rel (%p12020) target = $region84
      $region83: #{tpu_custom_call.1} parent=79 // pred_region
        %p12023 = scmp.lt.s32.totalorder %s25, 1
        %s12024 = scalar_select %p12023, %s25, 1
        %s12025 = smul.addr %s12024, 32
        %s12026 = smul.addr %s12025, 8
        %s12027 = scalar_lea.vmem %s13, %s12026
      $region84: #{tpu_custom_call.1} parent=79 // pred_fallthru
        _
    $region80: #{tpu_custom_call.1} parent=5 // pred_fallthru
      _
  $region6: #{tpu_custom_call.1} parent=0 // loop_footer
    %s23 = sadd.s32 1, %s19
  $region7: #{tpu_custom_call.1} parent=0 // loop_footer_branch
    %18 = sbr.rel target = $region3
  $region8: #{tpu_custom_call.1} parent=0 // loop_exit
    _

</llo_original>
